<compile_context>
chip_gen: v7x
topology: tpu7x:2x2x1
jax: 0.10.0
libtpu: 0.0.40
codegen_flags: <defaults>
</compile_context>

<pallas_src>
import jax
import jax.numpy as jnp
from jax.experimental import pallas as pl
from jax.experimental.pallas import tpu as pltpu


def _sigmoid(x):
    # Explicit form (exp + reciprocal) — guaranteed Mosaic lowering.
    return 1.0 / (1.0 + jnp.exp(-x))


def _lstm_direction(x, Wih, Whh, b, reverse):
    """One LSTM direction on values (not refs). Gate order: i, f, g, o.

    x:   (S, H)      input sequence
    Wih: (4, H, Hh)  per-gate input weights
    Whh: (4, Hh, Hh) per-gate recurrent weights
    b:   (4, 1, Hh)  per-gate bias (b_ih + b_hh combined)
    Returns (H_dir (S, Hh) in original time order, final hidden (1, Hh)).
    """
    S = x.shape[0]
    Hh = Whh.shape[-1]

    # Loop-invariant input projections, hoisted out of the recurrence.
    xi = jnp.dot(x, Wih[0], preferred_element_type=jnp.float32) + b[0]
    xf = jnp.dot(x, Wih[1], preferred_element_type=jnp.float32) + b[1]
    xg = jnp.dot(x, Wih[2], preferred_element_type=jnp.float32) + b[2]
    xo = jnp.dot(x, Wih[3], preferred_element_type=jnp.float32) + b[3]

    h = jnp.zeros((1, Hh), jnp.float32)
    c = jnp.zeros((1, Hh), jnp.float32)
    hs = [None] * S
    order = range(S - 1, -1, -1) if reverse else range(S)
    for t in order:  # static unroll; state stays in vregs
        i = _sigmoid(xi[t:t + 1, :] + jnp.dot(h, Whh[0], preferred_element_type=jnp.float32))
        f = _sigmoid(xf[t:t + 1, :] + jnp.dot(h, Whh[1], preferred_element_type=jnp.float32))
        g = jnp.tanh(xg[t:t + 1, :] + jnp.dot(h, Whh[2], preferred_element_type=jnp.float32))
        o = _sigmoid(xo[t:t + 1, :] + jnp.dot(h, Whh[3], preferred_element_type=jnp.float32))
        c = f * c + i * g
        h = o * jnp.tanh(c)
        hs[t] = h
    return jnp.concatenate(hs, axis=0), h


def encoder_kernel(ids_ref, video_ref, pos_ref,
                   Wv_ref, bv_ref,
                   emb_ref, Wp_ref, bp_ref,
                   Wih_f_ref, Whh_f_ref, b_f_ref,
                   Wih_b_ref, Whh_b_ref, b_b_ref,
                   Fv_ref, Fq_ref, q_ref):
    S = ids_ref.shape[0]
    V = emb_ref.shape[0]

    # ---- visual branch: F_v = ReLU(video @ Wv + bv) + pos[:T] -------------
    seg = jnp.dot(video_ref[...], Wv_ref[...],
                  preferred_element_type=jnp.float32) + bv_ref[...]
    Fv_ref[...] = jnp.maximum(seg, 0.0) + pos_ref[...]

    # ---- text branch -------------------------------------------------------
    # Embedding lookup as a one-hot matmul (MXU-friendly gather).
    ids = ids_ref[...]                                            # (S, 1) int32
    iota = jax.lax.broadcasted_iota(jnp.int32, (S, V), 1)
    onehot = jnp.where(ids == iota, 1.0, 0.0).astype(jnp.float32)  # (S, V)
    emb = jnp.dot(onehot, emb_ref[...], preferred_element_type=jnp.float32)   # (S, De)
    x = jnp.dot(emb, Wp_ref[...], preferred_element_type=jnp.float32) + bp_ref[...]  # (S, H)

    # Bidirectional LSTM, unrolled in-kernel.
    H_fwd, h_fwd_last = _lstm_direction(
        x, Wih_f_ref[...], Whh_f_ref[...], b_f_ref[...], reverse=False)
    H_bwd, h_bwd_last = _lstm_direction(
        x, Wih_b_ref[...], Whh_b_ref[...], b_b_ref[...], reverse=True)

    # Single full-block writes.
    Fq_ref[...] = jnp.concatenate([H_fwd, H_bwd], axis=1)          # (S, H)
    q_ref[...] = jnp.concatenate([h_fwd_last, h_bwd_last], axis=1)  # (1, H)


def _split_lstm_params(Wih, Whh, bih, bhh, Hh):
    """PyTorch-style combined [i|f|g|o] matrices -> per-gate stacks."""
    Wih_s = jnp.stack([Wih[:, g * Hh:(g + 1) * Hh] for g in range(4)], axis=0)  # (4, H, Hh)
    Whh_s = jnp.stack([Whh[:, g * Hh:(g + 1) * Hh] for g in range(4)], axis=0)  # (4, Hh, Hh)
    b = bih + bhh                                                               # (1, 4Hh)
    b_s = jnp.stack([b[:, g * Hh:(g + 1) * Hh] for g in range(4)], axis=0)       # (4, 1, Hh)
    return Wih_s, Whh_s, b_s


def encoder_forward(video, query_ids, params):
    T, _ = video.shape
    S = query_ids.shape[0]
    H = params["Wv"].shape[1]
    Hh = H // 2

    # position_embedding(arange(T)) == first T rows of the table.
    pos_rows = params["pos"][:T]
    ids2 = query_ids.astype(jnp.int32).reshape(S, 1)

    Wih_f, Whh_f, b_f = _split_lstm_params(
        params["Wih_f"], params["Whh_f"], params["bih_f"], params["bhh_f"], Hh)
    Wih_b, Whh_b, b_b = _split_lstm_params(
        params["Wih_b"], params["Whh_b"], params["bih_b"], params["bhh_b"], Hh)

    args = (ids2, video.astype(jnp.float32), pos_rows,
            params["Wv"], params["bv"],
            params["emb"], params["Wp"], params["bp"],
            Wih_f, Whh_f, b_f,
            Wih_b, Whh_b, b_b)

    def full_spec(shape):
        return pl.BlockSpec(shape, lambda i, _s=shape: tuple(0 for _ in _s))

    in_specs = [full_spec(a.shape) for a in args]
    out_specs = [full_spec((T, H)), full_spec((S, H)), full_spec((1, H))]
    out_shape = (jax.ShapeDtypeStruct((T, H), jnp.float32),
                 jax.ShapeDtypeStruct((S, H), jnp.float32),
                 jax.ShapeDtypeStruct((1, H), jnp.float32))

    Fv, Fq, q = pl.pallas_call(
        encoder_kernel,
        out_shape=out_shape,
        grid_spec=pltpu.PrefetchScalarGridSpec(
            num_scalar_prefetch=0,
            grid=(1,),                       # single grid step: whole forward at once
            in_specs=in_specs,
            out_specs=out_specs,
        ),
        compiler_params=pltpu.CompilerParams(
            dimension_semantics=("arbitrary",)),
    )(*args)
    return Fv, Fq, q.reshape(H)


def encoder_reference(video, query_ids, params):
    """Pure-JAX reference using the combined PyTorch-style gate matrices."""
    T = video.shape[0]
    H = params["Wv"].shape[1]
    Hh = H // 2

    Fv = jnp.maximum(video @ params["Wv"] + params["bv"][0], 0.0) + params["pos"][:T]
    x = params["emb"][query_ids] @ params["Wp"] + params["bp"][0]    # (S, H)
    S = x.shape[0]

    def run_dir(Wih, Whh, bih, bhh, reverse):
        h = jnp.zeros((Hh,), jnp.float32)
        c = jnp.zeros((Hh,), jnp.float32)
        hs = [None] * S
        order = range(S - 1, -1, -1) if reverse else range(S)
        for t in order:
            gates = x[t] @ Wih + bih[0] + h @ Whh + bhh[0]
            i = jax.nn.sigmoid(gates[0:Hh])
            f = jax.nn.sigmoid(gates[Hh:2 * Hh])
            g = jnp.tanh(gates[2 * Hh:3 * Hh])
            o = jax.nn.sigmoid(gates[3 * Hh:4 * Hh])
            c = f * c + i * g
            h = o * jnp.tanh(c)
            hs[t] = h
        return jnp.stack(hs, axis=0), h

    Hf, hf = run_dir(params["Wih_f"], params["Whh_f"],
                     params["bih_f"], params["bhh_f"], reverse=False)
    Hb, hb = run_dir(params["Wih_b"], params["Whh_b"],
                     params["bih_b"], params["bhh_b"], reverse=True)
    Fq = jnp.concatenate([Hf, Hb], axis=1)
    q = jnp.concatenate([hf, hb])
    return Fv, Fq, q


def init_params(key, video_feature_dim, hidden_dim, vocab_size, word_embed_dim, max_len):
    Hh = hidden_dim // 2
    ks = jax.random.split(key, 14)
    s = 0.1

    def n(k, shape):
        return s * jax.random.normal(k, shape, jnp.float32)

    # LSTM matrices stored transposed vs PyTorch (in_features, 4*Hh), gate
    # order [i | f | g | o]; b_ih / b_hh kept separate like PyTorch.
    return {
        "Wv": n(ks[0], (video_feature_dim, hidden_dim)),
        "bv": n(ks[1], (1, hidden_dim)),
        "pos": n(ks[2], (max_len, hidden_dim)),
        "emb": n(ks[3], (vocab_size, word_embed_dim)),
        "Wp": n(ks[4], (word_embed_dim, hidden_dim)),
        "bp": n(ks[5], (1, hidden_dim)),
        "Wih_f": n(ks[6], (hidden_dim, 4 * Hh)),
        "Whh_f": n(ks[7], (Hh, 4 * Hh)),
        "bih_f": n(ks[8], (1, 4 * Hh)),
        "bhh_f": n(ks[9], (1, 4 * Hh)),
        "Wih_b": n(ks[10], (hidden_dim, 4 * Hh)),
        "Whh_b": n(ks[11], (Hh, 4 * Hh)),
        "bih_b": n(ks[12], (1, 4 * Hh)),
        "bhh_b": n(ks[13], (1, 4 * Hh)),
    }


if __name__ == "__main__":
    T, Dv = 16, 64      # video: (T, video_feature_dim)
    S = 8               # query length (token ids)
    H = 32              # hidden_dim (must be even)
    V, De = 64, 48      # vocab_size, word_embed_dim
    max_len = 200

    key = jax.random.PRNGKey(0)
    kv, kq, kp = jax.random.split(key, 3)
    video = jax.random.normal(kv, (T, Dv), jnp.float32)
    query_ids = jax.random.randint(kq, (S,), 0, V, dtype=jnp.int32)
    params = init_params(kp, Dv, H, V, De, max_len)

    Fv, Fq, q = encoder_forward(video, query_ids, params)
    Fv, Fq, q = jax.block_until_ready((Fv, Fq, q))

    Fv_r, Fq_r, q_r = encoder_reference(video, query_ids, params)
    assert Fv.shape == (T, H) and Fq.shape == (S, H) and q.shape == (H,)
    assert jnp.allclose(Fv, Fv_r, atol=1e-4, rtol=1e-4)
    assert jnp.allclose(Fq, Fq_r, atol=1e-4, rtol=1e-4)
    assert jnp.allclose(q, q_r, atol=1e-4, rtol=1e-4)

    print("KERNEL_OK")
</pallas_src>

<mosaic_0001>
module attributes {stable_mosaic.version = 11 : i64} {
  func.func @encoder_kernel(%arg0: i32, %arg1: memref<8x1xi32, #tpu.memory_space<vmem>>, %arg2: memref<16x64xf32, #tpu.memory_space<vmem>>, %arg3: memref<16x32xf32, #tpu.memory_space<vmem>>, %arg4: memref<64x32xf32, #tpu.memory_space<vmem>>, %arg5: memref<1x32xf32, #tpu.memory_space<vmem>>, %arg6: memref<64x48xf32, #tpu.memory_space<vmem>>, %arg7: memref<48x32xf32, #tpu.memory_space<vmem>>, %arg8: memref<1x32xf32, #tpu.memory_space<vmem>>, %arg9: memref<4x32x16xf32, #tpu.memory_space<vmem>>, %arg10: memref<4x16x16xf32, #tpu.memory_space<vmem>>, %arg11: memref<4x1x16xf32, #tpu.memory_space<vmem>>, %arg12: memref<4x32x16xf32, #tpu.memory_space<vmem>>, %arg13: memref<4x16x16xf32, #tpu.memory_space<vmem>>, %arg14: memref<4x1x16xf32, #tpu.memory_space<vmem>>, %arg15: memref<16x32xf32, #tpu.memory_space<vmem>>, %arg16: memref<8x32xf32, #tpu.memory_space<vmem>>, %arg17: memref<1x32xf32, #tpu.memory_space<vmem>>) attributes {dimension_semantics = [#tpu.dimension_semantics<arbitrary>], iteration_bounds = array<i64: 1>, scalar_prefetch = 0 : i64, scratch_operands = 0 : i64, tpu.core_type = #tpu.core_type<tc>, window_params = [{pipeline_mode = #tpu.pipeline_mode<synchronous>, transform_indices = @transform_0, window_bounds = array<i64: 8, 1>}, {pipeline_mode = #tpu.pipeline_mode<synchronous>, transform_indices = @transform_1, window_bounds = array<i64: 16, 64>}, {pipeline_mode = #tpu.pipeline_mode<synchronous>, transform_indices = @transform_2, window_bounds = array<i64: 16, 32>}, {pipeline_mode = #tpu.pipeline_mode<synchronous>, transform_indices = @transform_3, window_bounds = array<i64: 64, 32>}, {pipeline_mode = #tpu.pipeline_mode<synchronous>, transform_indices = @transform_4, window_bounds = array<i64: 1, 32>}, {pipeline_mode = #tpu.pipeline_mode<synchronous>, transform_indices = @transform_5, window_bounds = array<i64: 64, 48>}, {pipeline_mode = #tpu.pipeline_mode<synchronous>, transform_indices = @transform_6, window_bounds = array<i64: 48, 32>}, {pipeline_mode = #tpu.pipeline_mode<synchronous>, transform_indices = @transform_7, window_bounds = array<i64: 1, 32>}, {pipeline_mode = #tpu.pipeline_mode<synchronous>, transform_indices = @transform_8, window_bounds = array<i64: 4, 32, 16>}, {pipeline_mode = #tpu.pipeline_mode<synchronous>, transform_indices = @transform_9, window_bounds = array<i64: 4, 16, 16>}, {pipeline_mode = #tpu.pipeline_mode<synchronous>, transform_indices = @transform_10, window_bounds = array<i64: 4, 1, 16>}, {pipeline_mode = #tpu.pipeline_mode<synchronous>, transform_indices = @transform_11, window_bounds = array<i64: 4, 32, 16>}, {pipeline_mode = #tpu.pipeline_mode<synchronous>, transform_indices = @transform_12, window_bounds = array<i64: 4, 16, 16>}, {pipeline_mode = #tpu.pipeline_mode<synchronous>, transform_indices = @transform_13, window_bounds = array<i64: 4, 1, 16>}, {pipeline_mode = #tpu.pipeline_mode<synchronous>, transform_indices = @transform_14, window_bounds = array<i64: 16, 32>}, {pipeline_mode = #tpu.pipeline_mode<synchronous>, transform_indices = @transform_15, window_bounds = array<i64: 8, 32>}, {pipeline_mode = #tpu.pipeline_mode<synchronous>, transform_indices = @transform_16, window_bounds = array<i64: 1, 32>}]} {
    %c0 = arith.constant 0 : index
    %c0_0 = arith.constant 0 : index
    %0 = vector.load %arg2[%c0, %c0_0] : memref<16x64xf32, #tpu.memory_space<vmem>>, vector<16x64xf32>
    %c0_1 = arith.constant 0 : index
    %c0_2 = arith.constant 0 : index
    %1 = vector.load %arg4[%c0_1, %c0_2] : memref<64x32xf32, #tpu.memory_space<vmem>>, vector<64x32xf32>
    %cst = arith.constant dense<0.000000e+00> : vector<16x32xf32>
    %2 = tpu.matmul %0, %1, %cst {dimension_numbers = #tpu.dot_dimension_numbers<[1], [0], [0], [1], [0, 0, 1, 1], [], []>} : vector<16x64xf32>, vector<64x32xf32>, vector<16x32xf32> -> vector<16x32xf32>
    %c0_3 = arith.constant 0 : index
    %c0_4 = arith.constant 0 : index
    %3 = vector.load %arg5[%c0_3, %c0_4] : memref<1x32xf32, #tpu.memory_space<vmem>>, vector<1x32xf32>
    %4 = vector.broadcast %3 : vector<1x32xf32> to vector<16x32xf32>
    %5 = arith.addf %2, %4 : vector<16x32xf32>
    %cst_5 = arith.constant 0.000000e+00 : f32
    %6 = vector.broadcast %cst_5 : f32 to vector<16x32xf32>
    %7 = arith.maximumf %5, %6 : vector<16x32xf32>
    %c0_6 = arith.constant 0 : index
    %c0_7 = arith.constant 0 : index
    %8 = vector.load %arg3[%c0_6, %c0_7] : memref<16x32xf32, #tpu.memory_space<vmem>>, vector<16x32xf32>
    %9 = arith.addf %7, %8 : vector<16x32xf32>
    %c0_8 = arith.constant 0 : index
    %c0_9 = arith.constant 0 : index
    %10 = vector.load %arg15[%c0_8, %c0_9] : memref<16x32xf32, #tpu.memory_space<vmem>>, vector<16x32xf32>
    tpu.vector_store %arg15[%c0_8, %c0_9], %9 {strides = array<i32>} : memref<16x32xf32, #tpu.memory_space<vmem>>, vector<16x32xf32>,
    %c0_10 = arith.constant 0 : index
    %c0_11 = arith.constant 0 : index
    %11 = vector.load %arg1[%c0_10, %c0_11] : memref<8x1xi32, #tpu.memory_space<vmem>>, vector<8x1xi32>
    %12 = tpu.iota {dimensions = array<i32: 1>} : vector<8x64xi32>
    %13 = vector.broadcast %11 : vector<8x1xi32> to vector<8x64xi32>
    %14 = arith.cmpi eq, %13, %12 : vector<8x64xi32>
    %cst_12 = arith.constant 1.000000e+00 : f32
    %cst_13 = arith.constant 0.000000e+00 : f32
    %15 = vector.broadcast %cst_12 : f32 to vector<8x64xf32>
    %16 = vector.broadcast %cst_13 : f32 to vector<8x64xf32>
    %17 = arith.select %14, %15, %16 : vector<8x64xi1>, vector<8x64xf32>
    %c0_14 = arith.constant 0 : index
    %c0_15 = arith.constant 0 : index
    %18 = vector.load %arg6[%c0_14, %c0_15] : memref<64x48xf32, #tpu.memory_space<vmem>>, vector<64x48xf32>
    %cst_16 = arith.constant dense<0.000000e+00> : vector<8x48xf32>
    %19 = tpu.matmul %17, %18, %cst_16 {dimension_numbers = #tpu.dot_dimension_numbers<[1], [0], [0], [1], [0, 0, 1, 1], [], []>} : vector<8x64xf32>, vector<64x48xf32>, vector<8x48xf32> -> vector<8x48xf32>
    %c0_17 = arith.constant 0 : index
    %c0_18 = arith.constant 0 : index
    %20 = vector.load %arg7[%c0_17, %c0_18] : memref<48x32xf32, #tpu.memory_space<vmem>>, vector<48x32xf32>
    %cst_19 = arith.constant dense<0.000000e+00> : vector<8x32xf32>
    %21 = tpu.matmul %19, %20, %cst_19 {dimension_numbers = #tpu.dot_dimension_numbers<[1], [0], [0], [1], [0, 0, 1, 1], [], []>} : vector<8x48xf32>, vector<48x32xf32>, vector<8x32xf32> -> vector<8x32xf32>
    %c0_20 = arith.constant 0 : index
    %c0_21 = arith.constant 0 : index
    %22 = vector.load %arg8[%c0_20, %c0_21] : memref<1x32xf32, #tpu.memory_space<vmem>>, vector<1x32xf32>
    %23 = vector.broadcast %22 : vector<1x32xf32> to vector<8x32xf32>
    %24 = arith.addf %21, %23 : vector<8x32xf32>
    %c0_22 = arith.constant 0 : index
    %c0_23 = arith.constant 0 : index
    %c0_24 = arith.constant 0 : index
    %25 = vector.load %arg9[%c0_22, %c0_23, %c0_24] : memref<4x32x16xf32, #tpu.memory_space<vmem>>, vector<4x32x16xf32>
    %c0_25 = arith.constant 0 : index
    %c0_26 = arith.constant 0 : index
    %c0_27 = arith.constant 0 : index
    %26 = vector.load %arg10[%c0_25, %c0_26, %c0_27] : memref<4x16x16xf32, #tpu.memory_space<vmem>>, vector<4x16x16xf32>
    %c0_28 = arith.constant 0 : index
    %c0_29 = arith.constant 0 : index
    %c0_30 = arith.constant 0 : index
    %27 = vector.load %arg11[%c0_28, %c0_29, %c0_30] : memref<4x1x16xf32, #tpu.memory_space<vmem>>, vector<4x1x16xf32>
    %28 = vector.extract_strided_slice %25 {offsets = [0, 0, 0], sizes = [1, 32, 16], strides = [1, 1, 1]} : vector<4x32x16xf32> to vector<1x32x16xf32>
    %29 = vector.shape_cast %28 : vector<1x32x16xf32> to vector<32x16xf32>
    %cst_31 = arith.constant dense<0.000000e+00> : vector<8x16xf32>
    %30 = tpu.matmul %24, %29, %cst_31 {dimension_numbers = #tpu.dot_dimension_numbers<[1], [0], [0], [1], [0, 0, 1, 1], [], []>} : vector<8x32xf32>, vector<32x16xf32>, vector<8x16xf32> -> vector<8x16xf32>
    %31 = vector.extract_strided_slice %27 {offsets = [0, 0, 0], sizes = [1, 1, 16], strides = [1, 1, 1]} : vector<4x1x16xf32> to vector<1x1x16xf32>
    %32 = vector.shape_cast %31 : vector<1x1x16xf32> to vector<1x16xf32>
    %33 = vector.broadcast %32 : vector<1x16xf32> to vector<8x16xf32>
    %34 = arith.addf %30, %33 : vector<8x16xf32>
    %35 = vector.extract_strided_slice %25 {offsets = [1, 0, 0], sizes = [1, 32, 16], strides = [1, 1, 1]} : vector<4x32x16xf32> to vector<1x32x16xf32>
    %36 = vector.shape_cast %35 : vector<1x32x16xf32> to vector<32x16xf32>
    %cst_32 = arith.constant dense<0.000000e+00> : vector<8x16xf32>
    %37 = tpu.matmul %24, %36, %cst_32 {dimension_numbers = #tpu.dot_dimension_numbers<[1], [0], [0], [1], [0, 0, 1, 1], [], []>} : vector<8x32xf32>, vector<32x16xf32>, vector<8x16xf32> -> vector<8x16xf32>
    %38 = vector.extract_strided_slice %27 {offsets = [1, 0, 0], sizes = [1, 1, 16], strides = [1, 1, 1]} : vector<4x1x16xf32> to vector<1x1x16xf32>
    %39 = vector.shape_cast %38 : vector<1x1x16xf32> to vector<1x16xf32>
    %40 = vector.broadcast %39 : vector<1x16xf32> to vector<8x16xf32>
    %41 = arith.addf %37, %40 : vector<8x16xf32>
    %42 = vector.extract_strided_slice %25 {offsets = [2, 0, 0], sizes = [1, 32, 16], strides = [1, 1, 1]} : vector<4x32x16xf32> to vector<1x32x16xf32>
    %43 = vector.shape_cast %42 : vector<1x32x16xf32> to vector<32x16xf32>
    %cst_33 = arith.constant dense<0.000000e+00> : vector<8x16xf32>
    %44 = tpu.matmul %24, %43, %cst_33 {dimension_numbers = #tpu.dot_dimension_numbers<[1], [0], [0], [1], [0, 0, 1, 1], [], []>} : vector<8x32xf32>, vector<32x16xf32>, vector<8x16xf32> -> vector<8x16xf32>
    %45 = vector.extract_strided_slice %27 {offsets = [2, 0, 0], sizes = [1, 1, 16], strides = [1, 1, 1]} : vector<4x1x16xf32> to vector<1x1x16xf32>
    %46 = vector.shape_cast %45 : vector<1x1x16xf32> to vector<1x16xf32>
    %47 = vector.broadcast %46 : vector<1x16xf32> to vector<8x16xf32>
    %48 = arith.addf %44, %47 : vector<8x16xf32>
    %49 = vector.extract_strided_slice %25 {offsets = [3, 0, 0], sizes = [1, 32, 16], strides = [1, 1, 1]} : vector<4x32x16xf32> to vector<1x32x16xf32>
    %50 = vector.shape_cast %49 : vector<1x32x16xf32> to vector<32x16xf32>
    %cst_34 = arith.constant dense<0.000000e+00> : vector<8x16xf32>
    %51 = tpu.matmul %24, %50, %cst_34 {dimension_numbers = #tpu.dot_dimension_numbers<[1], [0], [0], [1], [0, 0, 1, 1], [], []>} : vector<8x32xf32>, vector<32x16xf32>, vector<8x16xf32> -> vector<8x16xf32>
    %52 = vector.extract_strided_slice %27 {offsets = [3, 0, 0], sizes = [1, 1, 16], strides = [1, 1, 1]} : vector<4x1x16xf32> to vector<1x1x16xf32>
    %53 = vector.shape_cast %52 : vector<1x1x16xf32> to vector<1x16xf32>
    %54 = vector.broadcast %53 : vector<1x16xf32> to vector<8x16xf32>
    %55 = arith.addf %51, %54 : vector<8x16xf32>
    %cst_35 = arith.constant 0.000000e+00 : f32
    %56 = vector.broadcast %cst_35 : f32 to vector<1x16xf32>
    %cst_36 = arith.constant 0.000000e+00 : f32
    %57 = vector.broadcast %cst_36 : f32 to vector<1x16xf32>
    %58 = vector.extract_strided_slice %34 {offsets = [0, 0], sizes = [1, 16], strides = [1, 1]} : vector<8x16xf32> to vector<1x16xf32>
    %59 = vector.extract_strided_slice %26 {offsets = [0, 0, 0], sizes = [1, 16, 16], strides = [1, 1, 1]} : vector<4x16x16xf32> to vector<1x16x16xf32>
    %60 = vector.shape_cast %59 : vector<1x16x16xf32> to vector<16x16xf32>
    %cst_37 = arith.constant dense<0.000000e+00> : vector<1x16xf32>
    %61 = tpu.matmul %56, %60, %cst_37 {dimension_numbers = #tpu.dot_dimension_numbers<[1], [0], [0], [1], [0, 0, 1, 1], [], []>} : vector<1x16xf32>, vector<16x16xf32>, vector<1x16xf32> -> vector<1x16xf32>
    %62 = arith.addf %58, %61 : vector<1x16xf32>
    %cst_38 = arith.constant 0.000000e+00 : f32
    %63 = vector.broadcast %cst_38 : f32 to vector<1x16xf32>
    %64 = arith.subf %63, %62 : vector<1x16xf32>
    %65 = math.exp %64 : vector<1x16xf32>
    %cst_39 = arith.constant 1.000000e+00 : f32
    %66 = vector.broadcast %cst_39 : f32 to vector<1x16xf32>
    %67 = arith.addf %66, %65 : vector<1x16xf32>
    %cst_40 = arith.constant 1.000000e+00 : f32
    %68 = vector.broadcast %cst_40 : f32 to vector<1x16xf32>
    %69 = arith.divf %68, %67 : vector<1x16xf32>
    %70 = vector.extract_strided_slice %41 {offsets = [0, 0], sizes = [1, 16], strides = [1, 1]} : vector<8x16xf32> to vector<1x16xf32>
    %71 = vector.extract_strided_slice %26 {offsets = [1, 0, 0], sizes = [1, 16, 16], strides = [1, 1, 1]} : vector<4x16x16xf32> to vector<1x16x16xf32>
    %72 = vector.shape_cast %71 : vector<1x16x16xf32> to vector<16x16xf32>
    %cst_41 = arith.constant dense<0.000000e+00> : vector<1x16xf32>
    %73 = tpu.matmul %56, %72, %cst_41 {dimension_numbers = #tpu.dot_dimension_numbers<[1], [0], [0], [1], [0, 0, 1, 1], [], []>} : vector<1x16xf32>, vector<16x16xf32>, vector<1x16xf32> -> vector<1x16xf32>
    %74 = arith.addf %70, %73 : vector<1x16xf32>
    %cst_42 = arith.constant 0.000000e+00 : f32
    %75 = vector.broadcast %cst_42 : f32 to vector<1x16xf32>
    %76 = arith.subf %75, %74 : vector<1x16xf32>
    %77 = math.exp %76 : vector<1x16xf32>
    %cst_43 = arith.constant 1.000000e+00 : f32
    %78 = vector.broadcast %cst_43 : f32 to vector<1x16xf32>
    %79 = arith.addf %78, %77 : vector<1x16xf32>
    %cst_44 = arith.constant 1.000000e+00 : f32
    %80 = vector.broadcast %cst_44 : f32 to vector<1x16xf32>
    %81 = arith.divf %80, %79 : vector<1x16xf32>
    %82 = vector.extract_strided_slice %48 {offsets = [0, 0], sizes = [1, 16], strides = [1, 1]} : vector<8x16xf32> to vector<1x16xf32>
    %83 = vector.extract_strided_slice %26 {offsets = [2, 0, 0], sizes = [1, 16, 16], strides = [1, 1, 1]} : vector<4x16x16xf32> to vector<1x16x16xf32>
    %84 = vector.shape_cast %83 : vector<1x16x16xf32> to vector<16x16xf32>
    %cst_45 = arith.constant dense<0.000000e+00> : vector<1x16xf32>
    %85 = tpu.matmul %56, %84, %cst_45 {dimension_numbers = #tpu.dot_dimension_numbers<[1], [0], [0], [1], [0, 0, 1, 1], [], []>} : vector<1x16xf32>, vector<16x16xf32>, vector<1x16xf32> -> vector<1x16xf32>
    %86 = arith.addf %82, %85 : vector<1x16xf32>
    %87 = math.tanh %86 : vector<1x16xf32>
    %88 = vector.extract_strided_slice %55 {offsets = [0, 0], sizes = [1, 16], strides = [1, 1]} : vector<8x16xf32> to vector<1x16xf32>
    %89 = vector.extract_strided_slice %26 {offsets = [3, 0, 0], sizes = [1, 16, 16], strides = [1, 1, 1]} : vector<4x16x16xf32> to vector<1x16x16xf32>
    %90 = vector.shape_cast %89 : vector<1x16x16xf32> to vector<16x16xf32>
    %cst_46 = arith.constant dense<0.000000e+00> : vector<1x16xf32>
    %91 = tpu.matmul %56, %90, %cst_46 {dimension_numbers = #tpu.dot_dimension_numbers<[1], [0], [0], [1], [0, 0, 1, 1], [], []>} : vector<1x16xf32>, vector<16x16xf32>, vector<1x16xf32> -> vector<1x16xf32>
    %92 = arith.addf %88, %91 : vector<1x16xf32>
    %cst_47 = arith.constant 0.000000e+00 : f32
    %93 = vector.broadcast %cst_47 : f32 to vector<1x16xf32>
    %94 = arith.subf %93, %92 : vector<1x16xf32>
    %95 = math.exp %94 : vector<1x16xf32>
    %cst_48 = arith.constant 1.000000e+00 : f32
    %96 = vector.broadcast %cst_48 : f32 to vector<1x16xf32>
    %97 = arith.addf %96, %95 : vector<1x16xf32>
    %cst_49 = arith.constant 1.000000e+00 : f32
    %98 = vector.broadcast %cst_49 : f32 to vector<1x16xf32>
    %99 = arith.divf %98, %97 : vector<1x16xf32>
    %100 = arith.mulf %81, %57 : vector<1x16xf32>
    %101 = arith.mulf %69, %87 : vector<1x16xf32>
    %102 = arith.addf %100, %101 : vector<1x16xf32>
    %103 = math.tanh %102 : vector<1x16xf32>
    %104 = arith.mulf %99, %103 : vector<1x16xf32>
    %105 = vector.extract_strided_slice %34 {offsets = [1, 0], sizes = [1, 16], strides = [1, 1]} : vector<8x16xf32> to vector<1x16xf32>
    %106 = vector.extract_strided_slice %26 {offsets = [0, 0, 0], sizes = [1, 16, 16], strides = [1, 1, 1]} : vector<4x16x16xf32> to vector<1x16x16xf32>
    %107 = vector.shape_cast %106 : vector<1x16x16xf32> to vector<16x16xf32>
    %cst_50 = arith.constant dense<0.000000e+00> : vector<1x16xf32>
    %108 = tpu.matmul %104, %107, %cst_50 {dimension_numbers = #tpu.dot_dimension_numbers<[1], [0], [0], [1], [0, 0, 1, 1], [], []>} : vector<1x16xf32>, vector<16x16xf32>, vector<1x16xf32> -> vector<1x16xf32>
    %109 = arith.addf %105, %108 : vector<1x16xf32>
    %cst_51 = arith.constant 0.000000e+00 : f32
    %110 = vector.broadcast %cst_51 : f32 to vector<1x16xf32>
    %111 = arith.subf %110, %109 : vector<1x16xf32>
    %112 = math.exp %111 : vector<1x16xf32>
    %cst_52 = arith.constant 1.000000e+00 : f32
    %113 = vector.broadcast %cst_52 : f32 to vector<1x16xf32>
    %114 = arith.addf %113, %112 : vector<1x16xf32>
    %cst_53 = arith.constant 1.000000e+00 : f32
    %115 = vector.broadcast %cst_53 : f32 to vector<1x16xf32>
    %116 = arith.divf %115, %114 : vector<1x16xf32>
    %117 = vector.extract_strided_slice %41 {offsets = [1, 0], sizes = [1, 16], strides = [1, 1]} : vector<8x16xf32> to vector<1x16xf32>
    %118 = vector.extract_strided_slice %26 {offsets = [1, 0, 0], sizes = [1, 16, 16], strides = [1, 1, 1]} : vector<4x16x16xf32> to vector<1x16x16xf32>
    %119 = vector.shape_cast %118 : vector<1x16x16xf32> to vector<16x16xf32>
    %cst_54 = arith.constant dense<0.000000e+00> : vector<1x16xf32>
    %120 = tpu.matmul %104, %119, %cst_54 {dimension_numbers = #tpu.dot_dimension_numbers<[1], [0], [0], [1], [0, 0, 1, 1], [], []>} : vector<1x16xf32>, vector<16x16xf32>, vector<1x16xf32> -> vector<1x16xf32>
    %121 = arith.addf %117, %120 : vector<1x16xf32>
    %cst_55 = arith.constant 0.000000e+00 : f32
    %122 = vector.broadcast %cst_55 : f32 to vector<1x16xf32>
    %123 = arith.subf %122, %121 : vector<1x16xf32>
    %124 = math.exp %123 : vector<1x16xf32>
    %cst_56 = arith.constant 1.000000e+00 : f32
    %125 = vector.broadcast %cst_56 : f32 to vector<1x16xf32>
    %126 = arith.addf %125, %124 : vector<1x16xf32>
    %cst_57 = arith.constant 1.000000e+00 : f32
    %127 = vector.broadcast %cst_57 : f32 to vector<1x16xf32>
    %128 = arith.divf %127, %126 : vector<1x16xf32>
    %129 = vector.extract_strided_slice %48 {offsets = [1, 0], sizes = [1, 16], strides = [1, 1]} : vector<8x16xf32> to vector<1x16xf32>
    %130 = vector.extract_strided_slice %26 {offsets = [2, 0, 0], sizes = [1, 16, 16], strides = [1, 1, 1]} : vector<4x16x16xf32> to vector<1x16x16xf32>
    %131 = vector.shape_cast %130 : vector<1x16x16xf32> to vector<16x16xf32>
    %cst_58 = arith.constant dense<0.000000e+00> : vector<1x16xf32>
    %132 = tpu.matmul %104, %131, %cst_58 {dimension_numbers = #tpu.dot_dimension_numbers<[1], [0], [0], [1], [0, 0, 1, 1], [], []>} : vector<1x16xf32>, vector<16x16xf32>, vector<1x16xf32> -> vector<1x16xf32>
    %133 = arith.addf %129, %132 : vector<1x16xf32>
    %134 = math.tanh %133 : vector<1x16xf32>
    %135 = vector.extract_strided_slice %55 {offsets = [1, 0], sizes = [1, 16], strides = [1, 1]} : vector<8x16xf32> to vector<1x16xf32>
    %136 = vector.extract_strided_slice %26 {offsets = [3, 0, 0], sizes = [1, 16, 16], strides = [1, 1, 1]} : vector<4x16x16xf32> to vector<1x16x16xf32>
    %137 = vector.shape_cast %136 : vector<1x16x16xf32> to vector<16x16xf32>
    %cst_59 = arith.constant dense<0.000000e+00> : vector<1x16xf32>
    %138 = tpu.matmul %104, %137, %cst_59 {dimension_numbers = #tpu.dot_dimension_numbers<[1], [0], [0], [1], [0, 0, 1, 1], [], []>} : vector<1x16xf32>, vector<16x16xf32>, vector<1x16xf32> -> vector<1x16xf32>
    %139 = arith.addf %135, %138 : vector<1x16xf32>
    %cst_60 = arith.constant 0.000000e+00 : f32
    %140 = vector.broadcast %cst_60 : f32 to vector<1x16xf32>
    %141 = arith.subf %140, %139 : vector<1x16xf32>
    %142 = math.exp %141 : vector<1x16xf32>
    %cst_61 = arith.constant 1.000000e+00 : f32
    %143 = vector.broadcast %cst_61 : f32 to vector<1x16xf32>
    %144 = arith.addf %143, %142 : vector<1x16xf32>
    %cst_62 = arith.constant 1.000000e+00 : f32
    %145 = vector.broadcast %cst_62 : f32 to vector<1x16xf32>
    %146 = arith.divf %145, %144 : vector<1x16xf32>
    %147 = arith.mulf %128, %102 : vector<1x16xf32>
    %148 = arith.mulf %116, %134 : vector<1x16xf32>
    %149 = arith.addf %147, %148 : vector<1x16xf32>
    %150 = math.tanh %149 : vector<1x16xf32>
    %151 = arith.mulf %146, %150 : vector<1x16xf32>
    %152 = vector.extract_strided_slice %34 {offsets = [2, 0], sizes = [1, 16], strides = [1, 1]} : vector<8x16xf32> to vector<1x16xf32>
    %153 = vector.extract_strided_slice %26 {offsets = [0, 0, 0], sizes = [1, 16, 16], strides = [1, 1, 1]} : vector<4x16x16xf32> to vector<1x16x16xf32>
    %154 = vector.shape_cast %153 : vector<1x16x16xf32> to vector<16x16xf32>
    %cst_63 = arith.constant dense<0.000000e+00> : vector<1x16xf32>
    %155 = tpu.matmul %151, %154, %cst_63 {dimension_numbers = #tpu.dot_dimension_numbers<[1], [0], [0], [1], [0, 0, 1, 1], [], []>} : vector<1x16xf32>, vector<16x16xf32>, vector<1x16xf32> -> vector<1x16xf32>
    %156 = arith.addf %152, %155 : vector<1x16xf32>
    %cst_64 = arith.constant 0.000000e+00 : f32
    %157 = vector.broadcast %cst_64 : f32 to vector<1x16xf32>
    %158 = arith.subf %157, %156 : vector<1x16xf32>
    %159 = math.exp %158 : vector<1x16xf32>
    %cst_65 = arith.constant 1.000000e+00 : f32
    %160 = vector.broadcast %cst_65 : f32 to vector<1x16xf32>
    %161 = arith.addf %160, %159 : vector<1x16xf32>
    %cst_66 = arith.constant 1.000000e+00 : f32
    %162 = vector.broadcast %cst_66 : f32 to vector<1x16xf32>
    %163 = arith.divf %162, %161 : vector<1x16xf32>
    %164 = vector.extract_strided_slice %41 {offsets = [2, 0], sizes = [1, 16], strides = [1, 1]} : vector<8x16xf32> to vector<1x16xf32>
    %165 = vector.extract_strided_slice %26 {offsets = [1, 0, 0], sizes = [1, 16, 16], strides = [1, 1, 1]} : vector<4x16x16xf32> to vector<1x16x16xf32>
    %166 = vector.shape_cast %165 : vector<1x16x16xf32> to vector<16x16xf32>
    %cst_67 = arith.constant dense<0.000000e+00> : vector<1x16xf32>
    %167 = tpu.matmul %151, %166, %cst_67 {dimension_numbers = #tpu.dot_dimension_numbers<[1], [0], [0], [1], [0, 0, 1, 1], [], []>} : vector<1x16xf32>, vector<16x16xf32>, vector<1x16xf32> -> vector<1x16xf32>
    %168 = arith.addf %164, %167 : vector<1x16xf32>
    %cst_68 = arith.constant 0.000000e+00 : f32
    %169 = vector.broadcast %cst_68 : f32 to vector<1x16xf32>
    %170 = arith.subf %169, %168 : vector<1x16xf32>
    %171 = math.exp %170 : vector<1x16xf32>
    %cst_69 = arith.constant 1.000000e+00 : f32
    %172 = vector.broadcast %cst_69 : f32 to vector<1x16xf32>
    %173 = arith.addf %172, %171 : vector<1x16xf32>
    %cst_70 = arith.constant 1.000000e+00 : f32
    %174 = vector.broadcast %cst_70 : f32 to vector<1x16xf32>
    %175 = arith.divf %174, %173 : vector<1x16xf32>
    %176 = vector.extract_strided_slice %48 {offsets = [2, 0], sizes = [1, 16], strides = [1, 1]} : vector<8x16xf32> to vector<1x16xf32>
    %177 = vector.extract_strided_slice %26 {offsets = [2, 0, 0], sizes = [1, 16, 16], strides = [1, 1, 1]} : vector<4x16x16xf32> to vector<1x16x16xf32>
    %178 = vector.shape_cast %177 : vector<1x16x16xf32> to vector<16x16xf32>
    %cst_71 = arith.constant dense<0.000000e+00> : vector<1x16xf32>
    %179 = tpu.matmul %151, %178, %cst_71 {dimension_numbers = #tpu.dot_dimension_numbers<[1], [0], [0], [1], [0, 0, 1, 1], [], []>} : vector<1x16xf32>, vector<16x16xf32>, vector<1x16xf32> -> vector<1x16xf32>
    %180 = arith.addf %176, %179 : vector<1x16xf32>
    %181 = math.tanh %180 : vector<1x16xf32>
    %182 = vector.extract_strided_slice %55 {offsets = [2, 0], sizes = [1, 16], strides = [1, 1]} : vector<8x16xf32> to vector<1x16xf32>
    %183 = vector.extract_strided_slice %26 {offsets = [3, 0, 0], sizes = [1, 16, 16], strides = [1, 1, 1]} : vector<4x16x16xf32> to vector<1x16x16xf32>
    %184 = vector.shape_cast %183 : vector<1x16x16xf32> to vector<16x16xf32>
    %cst_72 = arith.constant dense<0.000000e+00> : vector<1x16xf32>
    %185 = tpu.matmul %151, %184, %cst_72 {dimension_numbers = #tpu.dot_dimension_numbers<[1], [0], [0], [1], [0, 0, 1, 1], [], []>} : vector<1x16xf32>, vector<16x16xf32>, vector<1x16xf32> -> vector<1x16xf32>
    %186 = arith.addf %182, %185 : vector<1x16xf32>
    %cst_73 = arith.constant 0.000000e+00 : f32
    %187 = vector.broadcast %cst_73 : f32 to vector<1x16xf32>
    %188 = arith.subf %187, %186 : vector<1x16xf32>
    %189 = math.exp %188 : vector<1x16xf32>
    %cst_74 = arith.constant 1.000000e+00 : f32
    %190 = vector.broadcast %cst_74 : f32 to vector<1x16xf32>
    %191 = arith.addf %190, %189 : vector<1x16xf32>
    %cst_75 = arith.constant 1.000000e+00 : f32
    %192 = vector.broadcast %cst_75 : f32 to vector<1x16xf32>
    %193 = arith.divf %192, %191 : vector<1x16xf32>
    %194 = arith.mulf %175, %149 : vector<1x16xf32>
    %195 = arith.mulf %163, %181 : vector<1x16xf32>
    %196 = arith.addf %194, %195 : vector<1x16xf32>
    %197 = math.tanh %196 : vector<1x16xf32>
    %198 = arith.mulf %193, %197 : vector<1x16xf32>
    %199 = vector.extract_strided_slice %34 {offsets = [3, 0], sizes = [1, 16], strides = [1, 1]} : vector<8x16xf32> to vector<1x16xf32>
    %200 = vector.extract_strided_slice %26 {offsets = [0, 0, 0], sizes = [1, 16, 16], strides = [1, 1, 1]} : vector<4x16x16xf32> to vector<1x16x16xf32>
    %201 = vector.shape_cast %200 : vector<1x16x16xf32> to vector<16x16xf32>
    %cst_76 = arith.constant dense<0.000000e+00> : vector<1x16xf32>
    %202 = tpu.matmul %198, %201, %cst_76 {dimension_numbers = #tpu.dot_dimension_numbers<[1], [0], [0], [1], [0, 0, 1, 1], [], []>} : vector<1x16xf32>, vector<16x16xf32>, vector<1x16xf32> -> vector<1x16xf32>
    %203 = arith.addf %199, %202 : vector<1x16xf32>
    %cst_77 = arith.constant 0.000000e+00 : f32
    %204 = vector.broadcast %cst_77 : f32 to vector<1x16xf32>
    %205 = arith.subf %204, %203 : vector<1x16xf32>
    %206 = math.exp %205 : vector<1x16xf32>
    %cst_78 = arith.constant 1.000000e+00 : f32
    %207 = vector.broadcast %cst_78 : f32 to vector<1x16xf32>
    %208 = arith.addf %207, %206 : vector<1x16xf32>
    %cst_79 = arith.constant 1.000000e+00 : f32
    %209 = vector.broadcast %cst_79 : f32 to vector<1x16xf32>
    %210 = arith.divf %209, %208 : vector<1x16xf32>
    %211 = vector.extract_strided_slice %41 {offsets = [3, 0], sizes = [1, 16], strides = [1, 1]} : vector<8x16xf32> to vector<1x16xf32>
    %212 = vector.extract_strided_slice %26 {offsets = [1, 0, 0], sizes = [1, 16, 16], strides = [1, 1, 1]} : vector<4x16x16xf32> to vector<1x16x16xf32>
    %213 = vector.shape_cast %212 : vector<1x16x16xf32> to vector<16x16xf32>
    %cst_80 = arith.constant dense<0.000000e+00> : vector<1x16xf32>
    %214 = tpu.matmul %198, %213, %cst_80 {dimension_numbers = #tpu.dot_dimension_numbers<[1], [0], [0], [1], [0, 0, 1, 1], [], []>} : vector<1x16xf32>, vector<16x16xf32>, vector<1x16xf32> -> vector<1x16xf32>
    %215 = arith.addf %211, %214 : vector<1x16xf32>
    %cst_81 = arith.constant 0.000000e+00 : f32
    %216 = vector.broadcast %cst_81 : f32 to vector<1x16xf32>
    %217 = arith.subf %216, %215 : vector<1x16xf32>
    %218 = math.exp %217 : vector<1x16xf32>
    %cst_82 = arith.constant 1.000000e+00 : f32
    %219 = vector.broadcast %cst_82 : f32 to vector<1x16xf32>
    %220 = arith.addf %219, %218 : vector<1x16xf32>
    %cst_83 = arith.constant 1.000000e+00 : f32
    %221 = vector.broadcast %cst_83 : f32 to vector<1x16xf32>
    %222 = arith.divf %221, %220 : vector<1x16xf32>
    %223 = vector.extract_strided_slice %48 {offsets = [3, 0], sizes = [1, 16], strides = [1, 1]} : vector<8x16xf32> to vector<1x16xf32>
    %224 = vector.extract_strided_slice %26 {offsets = [2, 0, 0], sizes = [1, 16, 16], strides = [1, 1, 1]} : vector<4x16x16xf32> to vector<1x16x16xf32>
    %225 = vector.shape_cast %224 : vector<1x16x16xf32> to vector<16x16xf32>
    %cst_84 = arith.constant dense<0.000000e+00> : vector<1x16xf32>
    %226 = tpu.matmul %198, %225, %cst_84 {dimension_numbers = #tpu.dot_dimension_numbers<[1], [0], [0], [1], [0, 0, 1, 1], [], []>} : vector<1x16xf32>, vector<16x16xf32>, vector<1x16xf32> -> vector<1x16xf32>
    %227 = arith.addf %223, %226 : vector<1x16xf32>
    %228 = math.tanh %227 : vector<1x16xf32>
    %229 = vector.extract_strided_slice %55 {offsets = [3, 0], sizes = [1, 16], strides = [1, 1]} : vector<8x16xf32> to vector<1x16xf32>
    %230 = vector.extract_strided_slice %26 {offsets = [3, 0, 0], sizes = [1, 16, 16], strides = [1, 1, 1]} : vector<4x16x16xf32> to vector<1x16x16xf32>
    %231 = vector.shape_cast %230 : vector<1x16x16xf32> to vector<16x16xf32>
    %cst_85 = arith.constant dense<0.000000e+00> : vector<1x16xf32>
    %232 = tpu.matmul %198, %231, %cst_85 {dimension_numbers = #tpu.dot_dimension_numbers<[1], [0], [0], [1], [0, 0, 1, 1], [], []>} : vector<1x16xf32>, vector<16x16xf32>, vector<1x16xf32> -> vector<1x16xf32>
    %233 = arith.addf %229, %232 : vector<1x16xf32>
    %cst_86 = arith.constant 0.000000e+00 : f32
    %234 = vector.broadcast %cst_86 : f32 to vector<1x16xf32>
    %235 = arith.subf %234, %233 : vector<1x16xf32>
    %236 = math.exp %235 : vector<1x16xf32>
    %cst_87 = arith.constant 1.000000e+00 : f32
    %237 = vector.broadcast %cst_87 : f32 to vector<1x16xf32>
    %238 = arith.addf %237, %236 : vector<1x16xf32>
    %cst_88 = arith.constant 1.000000e+00 : f32
    %239 = vector.broadcast %cst_88 : f32 to vector<1x16xf32>
    %240 = arith.divf %239, %238 : vector<1x16xf32>
    %241 = arith.mulf %222, %196 : vector<1x16xf32>
    %242 = arith.mulf %210, %228 : vector<1x16xf32>
    %243 = arith.addf %241, %242 : vector<1x16xf32>
    %244 = math.tanh %243 : vector<1x16xf32>
    %245 = arith.mulf %240, %244 : vector<1x16xf32>
    %246 = vector.extract_strided_slice %34 {offsets = [4, 0], sizes = [1, 16], strides = [1, 1]} : vector<8x16xf32> to vector<1x16xf32>
    %247 = vector.extract_strided_slice %26 {offsets = [0, 0, 0], sizes = [1, 16, 16], strides = [1, 1, 1]} : vector<4x16x16xf32> to vector<1x16x16xf32>
    %248 = vector.shape_cast %247 : vector<1x16x16xf32> to vector<16x16xf32>
    %cst_89 = arith.constant dense<0.000000e+00> : vector<1x16xf32>
    %249 = tpu.matmul %245, %248, %cst_89 {dimension_numbers = #tpu.dot_dimension_numbers<[1], [0], [0], [1], [0, 0, 1, 1], [], []>} : vector<1x16xf32>, vector<16x16xf32>, vector<1x16xf32> -> vector<1x16xf32>
    %250 = arith.addf %246, %249 : vector<1x16xf32>
    %cst_90 = arith.constant 0.000000e+00 : f32
    %251 = vector.broadcast %cst_90 : f32 to vector<1x16xf32>
    %252 = arith.subf %251, %250 : vector<1x16xf32>
    %253 = math.exp %252 : vector<1x16xf32>
    %cst_91 = arith.constant 1.000000e+00 : f32
    %254 = vector.broadcast %cst_91 : f32 to vector<1x16xf32>
    %255 = arith.addf %254, %253 : vector<1x16xf32>
    %cst_92 = arith.constant 1.000000e+00 : f32
    %256 = vector.broadcast %cst_92 : f32 to vector<1x16xf32>
    %257 = arith.divf %256, %255 : vector<1x16xf32>
    %258 = vector.extract_strided_slice %41 {offsets = [4, 0], sizes = [1, 16], strides = [1, 1]} : vector<8x16xf32> to vector<1x16xf32>
    %259 = vector.extract_strided_slice %26 {offsets = [1, 0, 0], sizes = [1, 16, 16], strides = [1, 1, 1]} : vector<4x16x16xf32> to vector<1x16x16xf32>
    %260 = vector.shape_cast %259 : vector<1x16x16xf32> to vector<16x16xf32>
    %cst_93 = arith.constant dense<0.000000e+00> : vector<1x16xf32>
    %261 = tpu.matmul %245, %260, %cst_93 {dimension_numbers = #tpu.dot_dimension_numbers<[1], [0], [0], [1], [0, 0, 1, 1], [], []>} : vector<1x16xf32>, vector<16x16xf32>, vector<1x16xf32> -> vector<1x16xf32>
    %262 = arith.addf %258, %261 : vector<1x16xf32>
    %cst_94 = arith.constant 0.000000e+00 : f32
    %263 = vector.broadcast %cst_94 : f32 to vector<1x16xf32>
    %264 = arith.subf %263, %262 : vector<1x16xf32>
    %265 = math.exp %264 : vector<1x16xf32>
    %cst_95 = arith.constant 1.000000e+00 : f32
    %266 = vector.broadcast %cst_95 : f32 to vector<1x16xf32>
    %267 = arith.addf %266, %265 : vector<1x16xf32>
    %cst_96 = arith.constant 1.000000e+00 : f32
    %268 = vector.broadcast %cst_96 : f32 to vector<1x16xf32>
    %269 = arith.divf %268, %267 : vector<1x16xf32>
    %270 = vector.extract_strided_slice %48 {offsets = [4, 0], sizes = [1, 16], strides = [1, 1]} : vector<8x16xf32> to vector<1x16xf32>
    %271 = vector.extract_strided_slice %26 {offsets = [2, 0, 0], sizes = [1, 16, 16], strides = [1, 1, 1]} : vector<4x16x16xf32> to vector<1x16x16xf32>
    %272 = vector.shape_cast %271 : vector<1x16x16xf32> to vector<16x16xf32>
    %cst_97 = arith.constant dense<0.000000e+00> : vector<1x16xf32>
    %273 = tpu.matmul %245, %272, %cst_97 {dimension_numbers = #tpu.dot_dimension_numbers<[1], [0], [0], [1], [0, 0, 1, 1], [], []>} : vector<1x16xf32>, vector<16x16xf32>, vector<1x16xf32> -> vector<1x16xf32>
    %274 = arith.addf %270, %273 : vector<1x16xf32>
    %275 = math.tanh %274 : vector<1x16xf32>
    %276 = vector.extract_strided_slice %55 {offsets = [4, 0], sizes = [1, 16], strides = [1, 1]} : vector<8x16xf32> to vector<1x16xf32>
    %277 = vector.extract_strided_slice %26 {offsets = [3, 0, 0], sizes = [1, 16, 16], strides = [1, 1, 1]} : vector<4x16x16xf32> to vector<1x16x16xf32>
    %278 = vector.shape_cast %277 : vector<1x16x16xf32> to vector<16x16xf32>
    %cst_98 = arith.constant dense<0.000000e+00> : vector<1x16xf32>
    %279 = tpu.matmul %245, %278, %cst_98 {dimension_numbers = #tpu.dot_dimension_numbers<[1], [0], [0], [1], [0, 0, 1, 1], [], []>} : vector<1x16xf32>, vector<16x16xf32>, vector<1x16xf32> -> vector<1x16xf32>
    %280 = arith.addf %276, %279 : vector<1x16xf32>
    %cst_99 = arith.constant 0.000000e+00 : f32
    %281 = vector.broadcast %cst_99 : f32 to vector<1x16xf32>
    %282 = arith.subf %281, %280 : vector<1x16xf32>
    %283 = math.exp %282 : vector<1x16xf32>
    %cst_100 = arith.constant 1.000000e+00 : f32
    %284 = vector.broadcast %cst_100 : f32 to vector<1x16xf32>
    %285 = arith.addf %284, %283 : vector<1x16xf32>
    %cst_101 = arith.constant 1.000000e+00 : f32
    %286 = vector.broadcast %cst_101 : f32 to vector<1x16xf32>
    %287 = arith.divf %286, %285 : vector<1x16xf32>
    %288 = arith.mulf %269, %243 : vector<1x16xf32>
    %289 = arith.mulf %257, %275 : vector<1x16xf32>
    %290 = arith.addf %288, %289 : vector<1x16xf32>
    %291 = math.tanh %290 : vector<1x16xf32>
    %292 = arith.mulf %287, %291 : vector<1x16xf32>
    %293 = vector.extract_strided_slice %34 {offsets = [5, 0], sizes = [1, 16], strides = [1, 1]} : vector<8x16xf32> to vector<1x16xf32>
    %294 = vector.extract_strided_slice %26 {offsets = [0, 0, 0], sizes = [1, 16, 16], strides = [1, 1, 1]} : vector<4x16x16xf32> to vector<1x16x16xf32>
    %295 = vector.shape_cast %294 : vector<1x16x16xf32> to vector<16x16xf32>
    %cst_102 = arith.constant dense<0.000000e+00> : vector<1x16xf32>
    %296 = tpu.matmul %292, %295, %cst_102 {dimension_numbers = #tpu.dot_dimension_numbers<[1], [0], [0], [1], [0, 0, 1, 1], [], []>} : vector<1x16xf32>, vector<16x16xf32>, vector<1x16xf32> -> vector<1x16xf32>
    %297 = arith.addf %293, %296 : vector<1x16xf32>
    %cst_103 = arith.constant 0.000000e+00 : f32
    %298 = vector.broadcast %cst_103 : f32 to vector<1x16xf32>
    %299 = arith.subf %298, %297 : vector<1x16xf32>
    %300 = math.exp %299 : vector<1x16xf32>
    %cst_104 = arith.constant 1.000000e+00 : f32
    %301 = vector.broadcast %cst_104 : f32 to vector<1x16xf32>
    %302 = arith.addf %301, %300 : vector<1x16xf32>
    %cst_105 = arith.constant 1.000000e+00 : f32
    %303 = vector.broadcast %cst_105 : f32 to vector<1x16xf32>
    %304 = arith.divf %303, %302 : vector<1x16xf32>
    %305 = vector.extract_strided_slice %41 {offsets = [5, 0], sizes = [1, 16], strides = [1, 1]} : vector<8x16xf32> to vector<1x16xf32>
    %306 = vector.extract_strided_slice %26 {offsets = [1, 0, 0], sizes = [1, 16, 16], strides = [1, 1, 1]} : vector<4x16x16xf32> to vector<1x16x16xf32>
    %307 = vector.shape_cast %306 : vector<1x16x16xf32> to vector<16x16xf32>
    %cst_106 = arith.constant dense<0.000000e+00> : vector<1x16xf32>
    %308 = tpu.matmul %292, %307, %cst_106 {dimension_numbers = #tpu.dot_dimension_numbers<[1], [0], [0], [1], [0, 0, 1, 1], [], []>} : vector<1x16xf32>, vector<16x16xf32>, vector<1x16xf32> -> vector<1x16xf32>
    %309 = arith.addf %305, %308 : vector<1x16xf32>
    %cst_107 = arith.constant 0.000000e+00 : f32
    %310 = vector.broadcast %cst_107 : f32 to vector<1x16xf32>
    %311 = arith.subf %310, %309 : vector<1x16xf32>
    %312 = math.exp %311 : vector<1x16xf32>
    %cst_108 = arith.constant 1.000000e+00 : f32
    %313 = vector.broadcast %cst_108 : f32 to vector<1x16xf32>
    %314 = arith.addf %313, %312 : vector<1x16xf32>
    %cst_109 = arith.constant 1.000000e+00 : f32
    %315 = vector.broadcast %cst_109 : f32 to vector<1x16xf32>
    %316 = arith.divf %315, %314 : vector<1x16xf32>
    %317 = vector.extract_strided_slice %48 {offsets = [5, 0], sizes = [1, 16], strides = [1, 1]} : vector<8x16xf32> to vector<1x16xf32>
    %318 = vector.extract_strided_slice %26 {offsets = [2, 0, 0], sizes = [1, 16, 16], strides = [1, 1, 1]} : vector<4x16x16xf32> to vector<1x16x16xf32>
    %319 = vector.shape_cast %318 : vector<1x16x16xf32> to vector<16x16xf32>
    %cst_110 = arith.constant dense<0.000000e+00> : vector<1x16xf32>
    %320 = tpu.matmul %292, %319, %cst_110 {dimension_numbers = #tpu.dot_dimension_numbers<[1], [0], [0], [1], [0, 0, 1, 1], [], []>} : vector<1x16xf32>, vector<16x16xf32>, vector<1x16xf32> -> vector<1x16xf32>
    %321 = arith.addf %317, %320 : vector<1x16xf32>
    %322 = math.tanh %321 : vector<1x16xf32>
    %323 = vector.extract_strided_slice %55 {offsets = [5, 0], sizes = [1, 16], strides = [1, 1]} : vector<8x16xf32> to vector<1x16xf32>
    %324 = vector.extract_strided_slice %26 {offsets = [3, 0, 0], sizes = [1, 16, 16], strides = [1, 1, 1]} : vector<4x16x16xf32> to vector<1x16x16xf32>
    %325 = vector.shape_cast %324 : vector<1x16x16xf32> to vector<16x16xf32>
    %cst_111 = arith.constant dense<0.000000e+00> : vector<1x16xf32>
    %326 = tpu.matmul %292, %325, %cst_111 {dimension_numbers = #tpu.dot_dimension_numbers<[1], [0], [0], [1], [0, 0, 1, 1], [], []>} : vector<1x16xf32>, vector<16x16xf32>, vector<1x16xf32> -> vector<1x16xf32>
    %327 = arith.addf %323, %326 : vector<1x16xf32>
    %cst_112 = arith.constant 0.000000e+00 : f32
    %328 = vector.broadcast %cst_112 : f32 to vector<1x16xf32>
    %329 = arith.subf %328, %327 : vector<1x16xf32>
    %330 = math.exp %329 : vector<1x16xf32>
    %cst_113 = arith.constant 1.000000e+00 : f32
    %331 = vector.broadcast %cst_113 : f32 to vector<1x16xf32>
    %332 = arith.addf %331, %330 : vector<1x16xf32>
    %cst_114 = arith.constant 1.000000e+00 : f32
    %333 = vector.broadcast %cst_114 : f32 to vector<1x16xf32>
    %334 = arith.divf %333, %332 : vector<1x16xf32>
    %335 = arith.mulf %316, %290 : vector<1x16xf32>
    %336 = arith.mulf %304, %322 : vector<1x16xf32>
    %337 = arith.addf %335, %336 : vector<1x16xf32>
    %338 = math.tanh %337 : vector<1x16xf32>
    %339 = arith.mulf %334, %338 : vector<1x16xf32>
    %340 = vector.extract_strided_slice %34 {offsets = [6, 0], sizes = [1, 16], strides = [1, 1]} : vector<8x16xf32> to vector<1x16xf32>
    %341 = vector.extract_strided_slice %26 {offsets = [0, 0, 0], sizes = [1, 16, 16], strides = [1, 1, 1]} : vector<4x16x16xf32> to vector<1x16x16xf32>
    %342 = vector.shape_cast %341 : vector<1x16x16xf32> to vector<16x16xf32>
    %cst_115 = arith.constant dense<0.000000e+00> : vector<1x16xf32>
    %343 = tpu.matmul %339, %342, %cst_115 {dimension_numbers = #tpu.dot_dimension_numbers<[1], [0], [0], [1], [0, 0, 1, 1], [], []>} : vector<1x16xf32>, vector<16x16xf32>, vector<1x16xf32> -> vector<1x16xf32>
    %344 = arith.addf %340, %343 : vector<1x16xf32>
    %cst_116 = arith.constant 0.000000e+00 : f32
    %345 = vector.broadcast %cst_116 : f32 to vector<1x16xf32>
    %346 = arith.subf %345, %344 : vector<1x16xf32>
    %347 = math.exp %346 : vector<1x16xf32>
    %cst_117 = arith.constant 1.000000e+00 : f32
    %348 = vector.broadcast %cst_117 : f32 to vector<1x16xf32>
    %349 = arith.addf %348, %347 : vector<1x16xf32>
    %cst_118 = arith.constant 1.000000e+00 : f32
    %350 = vector.broadcast %cst_118 : f32 to vector<1x16xf32>
    %351 = arith.divf %350, %349 : vector<1x16xf32>
    %352 = vector.extract_strided_slice %41 {offsets = [6, 0], sizes = [1, 16], strides = [1, 1]} : vector<8x16xf32> to vector<1x16xf32>
    %353 = vector.extract_strided_slice %26 {offsets = [1, 0, 0], sizes = [1, 16, 16], strides = [1, 1, 1]} : vector<4x16x16xf32> to vector<1x16x16xf32>
    %354 = vector.shape_cast %353 : vector<1x16x16xf32> to vector<16x16xf32>
    %cst_119 = arith.constant dense<0.000000e+00> : vector<1x16xf32>
    %355 = tpu.matmul %339, %354, %cst_119 {dimension_numbers = #tpu.dot_dimension_numbers<[1], [0], [0], [1], [0, 0, 1, 1], [], []>} : vector<1x16xf32>, vector<16x16xf32>, vector<1x16xf32> -> vector<1x16xf32>
    %356 = arith.addf %352, %355 : vector<1x16xf32>
    %cst_120 = arith.constant 0.000000e+00 : f32
    %357 = vector.broadcast %cst_120 : f32 to vector<1x16xf32>
    %358 = arith.subf %357, %356 : vector<1x16xf32>
    %359 = math.exp %358 : vector<1x16xf32>
    %cst_121 = arith.constant 1.000000e+00 : f32
    %360 = vector.broadcast %cst_121 : f32 to vector<1x16xf32>
    %361 = arith.addf %360, %359 : vector<1x16xf32>
    %cst_122 = arith.constant 1.000000e+00 : f32
    %362 = vector.broadcast %cst_122 : f32 to vector<1x16xf32>
    %363 = arith.divf %362, %361 : vector<1x16xf32>
    %364 = vector.extract_strided_slice %48 {offsets = [6, 0], sizes = [1, 16], strides = [1, 1]} : vector<8x16xf32> to vector<1x16xf32>
    %365 = vector.extract_strided_slice %26 {offsets = [2, 0, 0], sizes = [1, 16, 16], strides = [1, 1, 1]} : vector<4x16x16xf32> to vector<1x16x16xf32>
    %366 = vector.shape_cast %365 : vector<1x16x16xf32> to vector<16x16xf32>
    %cst_123 = arith.constant dense<0.000000e+00> : vector<1x16xf32>
    %367 = tpu.matmul %339, %366, %cst_123 {dimension_numbers = #tpu.dot_dimension_numbers<[1], [0], [0], [1], [0, 0, 1, 1], [], []>} : vector<1x16xf32>, vector<16x16xf32>, vector<1x16xf32> -> vector<1x16xf32>
    %368 = arith.addf %364, %367 : vector<1x16xf32>
    %369 = math.tanh %368 : vector<1x16xf32>
    %370 = vector.extract_strided_slice %55 {offsets = [6, 0], sizes = [1, 16], strides = [1, 1]} : vector<8x16xf32> to vector<1x16xf32>
    %371 = vector.extract_strided_slice %26 {offsets = [3, 0, 0], sizes = [1, 16, 16], strides = [1, 1, 1]} : vector<4x16x16xf32> to vector<1x16x16xf32>
    %372 = vector.shape_cast %371 : vector<1x16x16xf32> to vector<16x16xf32>
    %cst_124 = arith.constant dense<0.000000e+00> : vector<1x16xf32>
    %373 = tpu.matmul %339, %372, %cst_124 {dimension_numbers = #tpu.dot_dimension_numbers<[1], [0], [0], [1], [0, 0, 1, 1], [], []>} : vector<1x16xf32>, vector<16x16xf32>, vector<1x16xf32> -> vector<1x16xf32>
    %374 = arith.addf %370, %373 : vector<1x16xf32>
    %cst_125 = arith.constant 0.000000e+00 : f32
    %375 = vector.broadcast %cst_125 : f32 to vector<1x16xf32>
    %376 = arith.subf %375, %374 : vector<1x16xf32>
    %377 = math.exp %376 : vector<1x16xf32>
    %cst_126 = arith.constant 1.000000e+00 : f32
    %378 = vector.broadcast %cst_126 : f32 to vector<1x16xf32>
    %379 = arith.addf %378, %377 : vector<1x16xf32>
    %cst_127 = arith.constant 1.000000e+00 : f32
    %380 = vector.broadcast %cst_127 : f32 to vector<1x16xf32>
    %381 = arith.divf %380, %379 : vector<1x16xf32>
    %382 = arith.mulf %363, %337 : vector<1x16xf32>
    %383 = arith.mulf %351, %369 : vector<1x16xf32>
    %384 = arith.addf %382, %383 : vector<1x16xf32>
    %385 = math.tanh %384 : vector<1x16xf32>
    %386 = arith.mulf %381, %385 : vector<1x16xf32>
    %387 = vector.extract_strided_slice %34 {offsets = [7, 0], sizes = [1, 16], strides = [1, 1]} : vector<8x16xf32> to vector<1x16xf32>
    %388 = vector.extract_strided_slice %26 {offsets = [0, 0, 0], sizes = [1, 16, 16], strides = [1, 1, 1]} : vector<4x16x16xf32> to vector<1x16x16xf32>
    %389 = vector.shape_cast %388 : vector<1x16x16xf32> to vector<16x16xf32>
    %cst_128 = arith.constant dense<0.000000e+00> : vector<1x16xf32>
    %390 = tpu.matmul %386, %389, %cst_128 {dimension_numbers = #tpu.dot_dimension_numbers<[1], [0], [0], [1], [0, 0, 1, 1], [], []>} : vector<1x16xf32>, vector<16x16xf32>, vector<1x16xf32> -> vector<1x16xf32>
    %391 = arith.addf %387, %390 : vector<1x16xf32>
    %cst_129 = arith.constant 0.000000e+00 : f32
    %392 = vector.broadcast %cst_129 : f32 to vector<1x16xf32>
    %393 = arith.subf %392, %391 : vector<1x16xf32>
    %394 = math.exp %393 : vector<1x16xf32>
    %cst_130 = arith.constant 1.000000e+00 : f32
    %395 = vector.broadcast %cst_130 : f32 to vector<1x16xf32>
    %396 = arith.addf %395, %394 : vector<1x16xf32>
    %cst_131 = arith.constant 1.000000e+00 : f32
    %397 = vector.broadcast %cst_131 : f32 to vector<1x16xf32>
    %398 = arith.divf %397, %396 : vector<1x16xf32>
    %399 = vector.extract_strided_slice %41 {offsets = [7, 0], sizes = [1, 16], strides = [1, 1]} : vector<8x16xf32> to vector<1x16xf32>
    %400 = vector.extract_strided_slice %26 {offsets = [1, 0, 0], sizes = [1, 16, 16], strides = [1, 1, 1]} : vector<4x16x16xf32> to vector<1x16x16xf32>
    %401 = vector.shape_cast %400 : vector<1x16x16xf32> to vector<16x16xf32>
    %cst_132 = arith.constant dense<0.000000e+00> : vector<1x16xf32>
    %402 = tpu.matmul %386, %401, %cst_132 {dimension_numbers = #tpu.dot_dimension_numbers<[1], [0], [0], [1], [0, 0, 1, 1], [], []>} : vector<1x16xf32>, vector<16x16xf32>, vector<1x16xf32> -> vector<1x16xf32>
    %403 = arith.addf %399, %402 : vector<1x16xf32>
    %cst_133 = arith.constant 0.000000e+00 : f32
    %404 = vector.broadcast %cst_133 : f32 to vector<1x16xf32>
    %405 = arith.subf %404, %403 : vector<1x16xf32>
    %406 = math.exp %405 : vector<1x16xf32>
    %cst_134 = arith.constant 1.000000e+00 : f32
    %407 = vector.broadcast %cst_134 : f32 to vector<1x16xf32>
    %408 = arith.addf %407, %406 : vector<1x16xf32>
    %cst_135 = arith.constant 1.000000e+00 : f32
    %409 = vector.broadcast %cst_135 : f32 to vector<1x16xf32>
    %410 = arith.divf %409, %408 : vector<1x16xf32>
    %411 = vector.extract_strided_slice %48 {offsets = [7, 0], sizes = [1, 16], strides = [1, 1]} : vector<8x16xf32> to vector<1x16xf32>
    %412 = vector.extract_strided_slice %26 {offsets = [2, 0, 0], sizes = [1, 16, 16], strides = [1, 1, 1]} : vector<4x16x16xf32> to vector<1x16x16xf32>
    %413 = vector.shape_cast %412 : vector<1x16x16xf32> to vector<16x16xf32>
    %cst_136 = arith.constant dense<0.000000e+00> : vector<1x16xf32>
    %414 = tpu.matmul %386, %413, %cst_136 {dimension_numbers = #tpu.dot_dimension_numbers<[1], [0], [0], [1], [0, 0, 1, 1], [], []>} : vector<1x16xf32>, vector<16x16xf32>, vector<1x16xf32> -> vector<1x16xf32>
    %415 = arith.addf %411, %414 : vector<1x16xf32>
    %416 = math.tanh %415 : vector<1x16xf32>
    %417 = vector.extract_strided_slice %55 {offsets = [7, 0], sizes = [1, 16], strides = [1, 1]} : vector<8x16xf32> to vector<1x16xf32>
    %418 = vector.extract_strided_slice %26 {offsets = [3, 0, 0], sizes = [1, 16, 16], strides = [1, 1, 1]} : vector<4x16x16xf32> to vector<1x16x16xf32>
    %419 = vector.shape_cast %418 : vector<1x16x16xf32> to vector<16x16xf32>
    %cst_137 = arith.constant dense<0.000000e+00> : vector<1x16xf32>
    %420 = tpu.matmul %386, %419, %cst_137 {dimension_numbers = #tpu.dot_dimension_numbers<[1], [0], [0], [1], [0, 0, 1, 1], [], []>} : vector<1x16xf32>, vector<16x16xf32>, vector<1x16xf32> -> vector<1x16xf32>
    %421 = arith.addf %417, %420 : vector<1x16xf32>
    %cst_138 = arith.constant 0.000000e+00 : f32
    %422 = vector.broadcast %cst_138 : f32 to vector<1x16xf32>
    %423 = arith.subf %422, %421 : vector<1x16xf32>
    %424 = math.exp %423 : vector<1x16xf32>
    %cst_139 = arith.constant 1.000000e+00 : f32
    %425 = vector.broadcast %cst_139 : f32 to vector<1x16xf32>
    %426 = arith.addf %425, %424 : vector<1x16xf32>
    %cst_140 = arith.constant 1.000000e+00 : f32
    %427 = vector.broadcast %cst_140 : f32 to vector<1x16xf32>
    %428 = arith.divf %427, %426 : vector<1x16xf32>
    %429 = arith.mulf %410, %384 : vector<1x16xf32>
    %430 = arith.mulf %398, %416 : vector<1x16xf32>
    %431 = arith.addf %429, %430 : vector<1x16xf32>
    %432 = math.tanh %431 : vector<1x16xf32>
    %433 = arith.mulf %428, %432 : vector<1x16xf32>
    %434 = tpu.concatenate %104, %151, %198, %245, %292, %339, %386, %433 in 0 : vector<1x16xf32>, vector<1x16xf32>, vector<1x16xf32>, vector<1x16xf32>, vector<1x16xf32>, vector<1x16xf32>, vector<1x16xf32>, vector<1x16xf32> -> vector<8x16xf32>
    %c0_141 = arith.constant 0 : index
    %c0_142 = arith.constant 0 : index
    %c0_143 = arith.constant 0 : index
    %435 = vector.load %arg12[%c0_141, %c0_142, %c0_143] : memref<4x32x16xf32, #tpu.memory_space<vmem>>, vector<4x32x16xf32>
    %c0_144 = arith.constant 0 : index
    %c0_145 = arith.constant 0 : index
    %c0_146 = arith.constant 0 : index
    %436 = vector.load %arg13[%c0_144, %c0_145, %c0_146] : memref<4x16x16xf32, #tpu.memory_space<vmem>>, vector<4x16x16xf32>
    %c0_147 = arith.constant 0 : index
    %c0_148 = arith.constant 0 : index
    %c0_149 = arith.constant 0 : index
    %437 = vector.load %arg14[%c0_147, %c0_148, %c0_149] : memref<4x1x16xf32, #tpu.memory_space<vmem>>, vector<4x1x16xf32>
    %438 = vector.extract_strided_slice %435 {offsets = [0, 0, 0], sizes = [1, 32, 16], strides = [1, 1, 1]} : vector<4x32x16xf32> to vector<1x32x16xf32>
    %439 = vector.shape_cast %438 : vector<1x32x16xf32> to vector<32x16xf32>
    %cst_150 = arith.constant dense<0.000000e+00> : vector<8x16xf32>
    %440 = tpu.matmul %24, %439, %cst_150 {dimension_numbers = #tpu.dot_dimension_numbers<[1], [0], [0], [1], [0, 0, 1, 1], [], []>} : vector<8x32xf32>, vector<32x16xf32>, vector<8x16xf32> -> vector<8x16xf32>
    %441 = vector.extract_strided_slice %437 {offsets = [0, 0, 0], sizes = [1, 1, 16], strides = [1, 1, 1]} : vector<4x1x16xf32> to vector<1x1x16xf32>
    %442 = vector.shape_cast %441 : vector<1x1x16xf32> to vector<1x16xf32>
    %443 = vector.broadcast %442 : vector<1x16xf32> to vector<8x16xf32>
    %444 = arith.addf %440, %443 : vector<8x16xf32>
    %445 = vector.extract_strided_slice %435 {offsets = [1, 0, 0], sizes = [1, 32, 16], strides = [1, 1, 1]} : vector<4x32x16xf32> to vector<1x32x16xf32>
    %446 = vector.shape_cast %445 : vector<1x32x16xf32> to vector<32x16xf32>
    %cst_151 = arith.constant dense<0.000000e+00> : vector<8x16xf32>
    %447 = tpu.matmul %24, %446, %cst_151 {dimension_numbers = #tpu.dot_dimension_numbers<[1], [0], [0], [1], [0, 0, 1, 1], [], []>} : vector<8x32xf32>, vector<32x16xf32>, vector<8x16xf32> -> vector<8x16xf32>
    %448 = vector.extract_strided_slice %437 {offsets = [1, 0, 0], sizes = [1, 1, 16], strides = [1, 1, 1]} : vector<4x1x16xf32> to vector<1x1x16xf32>
    %449 = vector.shape_cast %448 : vector<1x1x16xf32> to vector<1x16xf32>
    %450 = vector.broadcast %449 : vector<1x16xf32> to vector<8x16xf32>
    %451 = arith.addf %447, %450 : vector<8x16xf32>
    %452 = vector.extract_strided_slice %435 {offsets = [2, 0, 0], sizes = [1, 32, 16], strides = [1, 1, 1]} : vector<4x32x16xf32> to vector<1x32x16xf32>
    %453 = vector.shape_cast %452 : vector<1x32x16xf32> to vector<32x16xf32>
    %cst_152 = arith.constant dense<0.000000e+00> : vector<8x16xf32>
    %454 = tpu.matmul %24, %453, %cst_152 {dimension_numbers = #tpu.dot_dimension_numbers<[1], [0], [0], [1], [0, 0, 1, 1], [], []>} : vector<8x32xf32>, vector<32x16xf32>, vector<8x16xf32> -> vector<8x16xf32>
    %455 = vector.extract_strided_slice %437 {offsets = [2, 0, 0], sizes = [1, 1, 16], strides = [1, 1, 1]} : vector<4x1x16xf32> to vector<1x1x16xf32>
    %456 = vector.shape_cast %455 : vector<1x1x16xf32> to vector<1x16xf32>
    %457 = vector.broadcast %456 : vector<1x16xf32> to vector<8x16xf32>
    %458 = arith.addf %454, %457 : vector<8x16xf32>
    %459 = vector.extract_strided_slice %435 {offsets = [3, 0, 0], sizes = [1, 32, 16], strides = [1, 1, 1]} : vector<4x32x16xf32> to vector<1x32x16xf32>
    %460 = vector.shape_cast %459 : vector<1x32x16xf32> to vector<32x16xf32>
    %cst_153 = arith.constant dense<0.000000e+00> : vector<8x16xf32>
    %461 = tpu.matmul %24, %460, %cst_153 {dimension_numbers = #tpu.dot_dimension_numbers<[1], [0], [0], [1], [0, 0, 1, 1], [], []>} : vector<8x32xf32>, vector<32x16xf32>, vector<8x16xf32> -> vector<8x16xf32>
    %462 = vector.extract_strided_slice %437 {offsets = [3, 0, 0], sizes = [1, 1, 16], strides = [1, 1, 1]} : vector<4x1x16xf32> to vector<1x1x16xf32>
    %463 = vector.shape_cast %462 : vector<1x1x16xf32> to vector<1x16xf32>
    %464 = vector.broadcast %463 : vector<1x16xf32> to vector<8x16xf32>
    %465 = arith.addf %461, %464 : vector<8x16xf32>
    %cst_154 = arith.constant 0.000000e+00 : f32
    %466 = vector.broadcast %cst_154 : f32 to vector<1x16xf32>
    %cst_155 = arith.constant 0.000000e+00 : f32
    %467 = vector.broadcast %cst_155 : f32 to vector<1x16xf32>
    %468 = vector.extract_strided_slice %444 {offsets = [7, 0], sizes = [1, 16], strides = [1, 1]} : vector<8x16xf32> to vector<1x16xf32>
    %469 = vector.extract_strided_slice %436 {offsets = [0, 0, 0], sizes = [1, 16, 16], strides = [1, 1, 1]} : vector<4x16x16xf32> to vector<1x16x16xf32>
    %470 = vector.shape_cast %469 : vector<1x16x16xf32> to vector<16x16xf32>
    %cst_156 = arith.constant dense<0.000000e+00> : vector<1x16xf32>
    %471 = tpu.matmul %466, %470, %cst_156 {dimension_numbers = #tpu.dot_dimension_numbers<[1], [0], [0], [1], [0, 0, 1, 1], [], []>} : vector<1x16xf32>, vector<16x16xf32>, vector<1x16xf32> -> vector<1x16xf32>
    %472 = arith.addf %468, %471 : vector<1x16xf32>
    %cst_157 = arith.constant 0.000000e+00 : f32
    %473 = vector.broadcast %cst_157 : f32 to vector<1x16xf32>
    %474 = arith.subf %473, %472 : vector<1x16xf32>
    %475 = math.exp %474 : vector<1x16xf32>
    %cst_158 = arith.constant 1.000000e+00 : f32
    %476 = vector.broadcast %cst_158 : f32 to vector<1x16xf32>
    %477 = arith.addf %476, %475 : vector<1x16xf32>
    %cst_159 = arith.constant 1.000000e+00 : f32
    %478 = vector.broadcast %cst_159 : f32 to vector<1x16xf32>
    %479 = arith.divf %478, %477 : vector<1x16xf32>
    %480 = vector.extract_strided_slice %451 {offsets = [7, 0], sizes = [1, 16], strides = [1, 1]} : vector<8x16xf32> to vector<1x16xf32>
    %481 = vector.extract_strided_slice %436 {offsets = [1, 0, 0], sizes = [1, 16, 16], strides = [1, 1, 1]} : vector<4x16x16xf32> to vector<1x16x16xf32>
    %482 = vector.shape_cast %481 : vector<1x16x16xf32> to vector<16x16xf32>
    %cst_160 = arith.constant dense<0.000000e+00> : vector<1x16xf32>
    %483 = tpu.matmul %466, %482, %cst_160 {dimension_numbers = #tpu.dot_dimension_numbers<[1], [0], [0], [1], [0, 0, 1, 1], [], []>} : vector<1x16xf32>, vector<16x16xf32>, vector<1x16xf32> -> vector<1x16xf32>
    %484 = arith.addf %480, %483 : vector<1x16xf32>
    %cst_161 = arith.constant 0.000000e+00 : f32
    %485 = vector.broadcast %cst_161 : f32 to vector<1x16xf32>
    %486 = arith.subf %485, %484 : vector<1x16xf32>
    %487 = math.exp %486 : vector<1x16xf32>
    %cst_162 = arith.constant 1.000000e+00 : f32
    %488 = vector.broadcast %cst_162 : f32 to vector<1x16xf32>
    %489 = arith.addf %488, %487 : vector<1x16xf32>
    %cst_163 = arith.constant 1.000000e+00 : f32
    %490 = vector.broadcast %cst_163 : f32 to vector<1x16xf32>
    %491 = arith.divf %490, %489 : vector<1x16xf32>
    %492 = vector.extract_strided_slice %458 {offsets = [7, 0], sizes = [1, 16], strides = [1, 1]} : vector<8x16xf32> to vector<1x16xf32>
    %493 = vector.extract_strided_slice %436 {offsets = [2, 0, 0], sizes = [1, 16, 16], strides = [1, 1, 1]} : vector<4x16x16xf32> to vector<1x16x16xf32>
    %494 = vector.shape_cast %493 : vector<1x16x16xf32> to vector<16x16xf32>
    %cst_164 = arith.constant dense<0.000000e+00> : vector<1x16xf32>
    %495 = tpu.matmul %466, %494, %cst_164 {dimension_numbers = #tpu.dot_dimension_numbers<[1], [0], [0], [1], [0, 0, 1, 1], [], []>} : vector<1x16xf32>, vector<16x16xf32>, vector<1x16xf32> -> vector<1x16xf32>
    %496 = arith.addf %492, %495 : vector<1x16xf32>
    %497 = math.tanh %496 : vector<1x16xf32>
    %498 = vector.extract_strided_slice %465 {offsets = [7, 0], sizes = [1, 16], strides = [1, 1]} : vector<8x16xf32> to vector<1x16xf32>
    %499 = vector.extract_strided_slice %436 {offsets = [3, 0, 0], sizes = [1, 16, 16], strides = [1, 1, 1]} : vector<4x16x16xf32> to vector<1x16x16xf32>
    %500 = vector.shape_cast %499 : vector<1x16x16xf32> to vector<16x16xf32>
    %cst_165 = arith.constant dense<0.000000e+00> : vector<1x16xf32>
    %501 = tpu.matmul %466, %500, %cst_165 {dimension_numbers = #tpu.dot_dimension_numbers<[1], [0], [0], [1], [0, 0, 1, 1], [], []>} : vector<1x16xf32>, vector<16x16xf32>, vector<1x16xf32> -> vector<1x16xf32>
    %502 = arith.addf %498, %501 : vector<1x16xf32>
    %cst_166 = arith.constant 0.000000e+00 : f32
    %503 = vector.broadcast %cst_166 : f32 to vector<1x16xf32>
    %504 = arith.subf %503, %502 : vector<1x16xf32>
    %505 = math.exp %504 : vector<1x16xf32>
    %cst_167 = arith.constant 1.000000e+00 : f32
    %506 = vector.broadcast %cst_167 : f32 to vector<1x16xf32>
    %507 = arith.addf %506, %505 : vector<1x16xf32>
    %cst_168 = arith.constant 1.000000e+00 : f32
    %508 = vector.broadcast %cst_168 : f32 to vector<1x16xf32>
    %509 = arith.divf %508, %507 : vector<1x16xf32>
    %510 = arith.mulf %491, %467 : vector<1x16xf32>
    %511 = arith.mulf %479, %497 : vector<1x16xf32>
    %512 = arith.addf %510, %511 : vector<1x16xf32>
    %513 = math.tanh %512 : vector<1x16xf32>
    %514 = arith.mulf %509, %513 : vector<1x16xf32>
    %515 = vector.extract_strided_slice %444 {offsets = [6, 0], sizes = [1, 16], strides = [1, 1]} : vector<8x16xf32> to vector<1x16xf32>
    %516 = vector.extract_strided_slice %436 {offsets = [0, 0, 0], sizes = [1, 16, 16], strides = [1, 1, 1]} : vector<4x16x16xf32> to vector<1x16x16xf32>
    %517 = vector.shape_cast %516 : vector<1x16x16xf32> to vector<16x16xf32>
    %cst_169 = arith.constant dense<0.000000e+00> : vector<1x16xf32>
    %518 = tpu.matmul %514, %517, %cst_169 {dimension_numbers = #tpu.dot_dimension_numbers<[1], [0], [0], [1], [0, 0, 1, 1], [], []>} : vector<1x16xf32>, vector<16x16xf32>, vector<1x16xf32> -> vector<1x16xf32>
    %519 = arith.addf %515, %518 : vector<1x16xf32>
    %cst_170 = arith.constant 0.000000e+00 : f32
    %520 = vector.broadcast %cst_170 : f32 to vector<1x16xf32>
    %521 = arith.subf %520, %519 : vector<1x16xf32>
    %522 = math.exp %521 : vector<1x16xf32>
    %cst_171 = arith.constant 1.000000e+00 : f32
    %523 = vector.broadcast %cst_171 : f32 to vector<1x16xf32>
    %524 = arith.addf %523, %522 : vector<1x16xf32>
    %cst_172 = arith.constant 1.000000e+00 : f32
    %525 = vector.broadcast %cst_172 : f32 to vector<1x16xf32>
    %526 = arith.divf %525, %524 : vector<1x16xf32>
    %527 = vector.extract_strided_slice %451 {offsets = [6, 0], sizes = [1, 16], strides = [1, 1]} : vector<8x16xf32> to vector<1x16xf32>
    %528 = vector.extract_strided_slice %436 {offsets = [1, 0, 0], sizes = [1, 16, 16], strides = [1, 1, 1]} : vector<4x16x16xf32> to vector<1x16x16xf32>
    %529 = vector.shape_cast %528 : vector<1x16x16xf32> to vector<16x16xf32>
    %cst_173 = arith.constant dense<0.000000e+00> : vector<1x16xf32>
    %530 = tpu.matmul %514, %529, %cst_173 {dimension_numbers = #tpu.dot_dimension_numbers<[1], [0], [0], [1], [0, 0, 1, 1], [], []>} : vector<1x16xf32>, vector<16x16xf32>, vector<1x16xf32> -> vector<1x16xf32>
    %531 = arith.addf %527, %530 : vector<1x16xf32>
    %cst_174 = arith.constant 0.000000e+00 : f32
    %532 = vector.broadcast %cst_174 : f32 to vector<1x16xf32>
    %533 = arith.subf %532, %531 : vector<1x16xf32>
    %534 = math.exp %533 : vector<1x16xf32>
    %cst_175 = arith.constant 1.000000e+00 : f32
    %535 = vector.broadcast %cst_175 : f32 to vector<1x16xf32>
    %536 = arith.addf %535, %534 : vector<1x16xf32>
    %cst_176 = arith.constant 1.000000e+00 : f32
    %537 = vector.broadcast %cst_176 : f32 to vector<1x16xf32>
    %538 = arith.divf %537, %536 : vector<1x16xf32>
    %539 = vector.extract_strided_slice %458 {offsets = [6, 0], sizes = [1, 16], strides = [1, 1]} : vector<8x16xf32> to vector<1x16xf32>
    %540 = vector.extract_strided_slice %436 {offsets = [2, 0, 0], sizes = [1, 16, 16], strides = [1, 1, 1]} : vector<4x16x16xf32> to vector<1x16x16xf32>
    %541 = vector.shape_cast %540 : vector<1x16x16xf32> to vector<16x16xf32>
    %cst_177 = arith.constant dense<0.000000e+00> : vector<1x16xf32>
    %542 = tpu.matmul %514, %541, %cst_177 {dimension_numbers = #tpu.dot_dimension_numbers<[1], [0], [0], [1], [0, 0, 1, 1], [], []>} : vector<1x16xf32>, vector<16x16xf32>, vector<1x16xf32> -> vector<1x16xf32>
    %543 = arith.addf %539, %542 : vector<1x16xf32>
    %544 = math.tanh %543 : vector<1x16xf32>
    %545 = vector.extract_strided_slice %465 {offsets = [6, 0], sizes = [1, 16], strides = [1, 1]} : vector<8x16xf32> to vector<1x16xf32>
    %546 = vector.extract_strided_slice %436 {offsets = [3, 0, 0], sizes = [1, 16, 16], strides = [1, 1, 1]} : vector<4x16x16xf32> to vector<1x16x16xf32>
    %547 = vector.shape_cast %546 : vector<1x16x16xf32> to vector<16x16xf32>
    %cst_178 = arith.constant dense<0.000000e+00> : vector<1x16xf32>
    %548 = tpu.matmul %514, %547, %cst_178 {dimension_numbers = #tpu.dot_dimension_numbers<[1], [0], [0], [1], [0, 0, 1, 1], [], []>} : vector<1x16xf32>, vector<16x16xf32>, vector<1x16xf32> -> vector<1x16xf32>
    %549 = arith.addf %545, %548 : vector<1x16xf32>
    %cst_179 = arith.constant 0.000000e+00 : f32
    %550 = vector.broadcast %cst_179 : f32 to vector<1x16xf32>
    %551 = arith.subf %550, %549 : vector<1x16xf32>
    %552 = math.exp %551 : vector<1x16xf32>
    %cst_180 = arith.constant 1.000000e+00 : f32
    %553 = vector.broadcast %cst_180 : f32 to vector<1x16xf32>
    %554 = arith.addf %553, %552 : vector<1x16xf32>
    %cst_181 = arith.constant 1.000000e+00 : f32
    %555 = vector.broadcast %cst_181 : f32 to vector<1x16xf32>
    %556 = arith.divf %555, %554 : vector<1x16xf32>
    %557 = arith.mulf %538, %512 : vector<1x16xf32>
    %558 = arith.mulf %526, %544 : vector<1x16xf32>
    %559 = arith.addf %557, %558 : vector<1x16xf32>
    %560 = math.tanh %559 : vector<1x16xf32>
    %561 = arith.mulf %556, %560 : vector<1x16xf32>
    %562 = vector.extract_strided_slice %444 {offsets = [5, 0], sizes = [1, 16], strides = [1, 1]} : vector<8x16xf32> to vector<1x16xf32>
    %563 = vector.extract_strided_slice %436 {offsets = [0, 0, 0], sizes = [1, 16, 16], strides = [1, 1, 1]} : vector<4x16x16xf32> to vector<1x16x16xf32>
    %564 = vector.shape_cast %563 : vector<1x16x16xf32> to vector<16x16xf32>
    %cst_182 = arith.constant dense<0.000000e+00> : vector<1x16xf32>
    %565 = tpu.matmul %561, %564, %cst_182 {dimension_numbers = #tpu.dot_dimension_numbers<[1], [0], [0], [1], [0, 0, 1, 1], [], []>} : vector<1x16xf32>, vector<16x16xf32>, vector<1x16xf32> -> vector<1x16xf32>
    %566 = arith.addf %562, %565 : vector<1x16xf32>
    %cst_183 = arith.constant 0.000000e+00 : f32
    %567 = vector.broadcast %cst_183 : f32 to vector<1x16xf32>
    %568 = arith.subf %567, %566 : vector<1x16xf32>
    %569 = math.exp %568 : vector<1x16xf32>
    %cst_184 = arith.constant 1.000000e+00 : f32
    %570 = vector.broadcast %cst_184 : f32 to vector<1x16xf32>
    %571 = arith.addf %570, %569 : vector<1x16xf32>
    %cst_185 = arith.constant 1.000000e+00 : f32
    %572 = vector.broadcast %cst_185 : f32 to vector<1x16xf32>
    %573 = arith.divf %572, %571 : vector<1x16xf32>
    %574 = vector.extract_strided_slice %451 {offsets = [5, 0], sizes = [1, 16], strides = [1, 1]} : vector<8x16xf32> to vector<1x16xf32>
    %575 = vector.extract_strided_slice %436 {offsets = [1, 0, 0], sizes = [1, 16, 16], strides = [1, 1, 1]} : vector<4x16x16xf32> to vector<1x16x16xf32>
    %576 = vector.shape_cast %575 : vector<1x16x16xf32> to vector<16x16xf32>
    %cst_186 = arith.constant dense<0.000000e+00> : vector<1x16xf32>
    %577 = tpu.matmul %561, %576, %cst_186 {dimension_numbers = #tpu.dot_dimension_numbers<[1], [0], [0], [1], [0, 0, 1, 1], [], []>} : vector<1x16xf32>, vector<16x16xf32>, vector<1x16xf32> -> vector<1x16xf32>
    %578 = arith.addf %574, %577 : vector<1x16xf32>
    %cst_187 = arith.constant 0.000000e+00 : f32
    %579 = vector.broadcast %cst_187 : f32 to vector<1x16xf32>
    %580 = arith.subf %579, %578 : vector<1x16xf32>
    %581 = math.exp %580 : vector<1x16xf32>
    %cst_188 = arith.constant 1.000000e+00 : f32
    %582 = vector.broadcast %cst_188 : f32 to vector<1x16xf32>
    %583 = arith.addf %582, %581 : vector<1x16xf32>
    %cst_189 = arith.constant 1.000000e+00 : f32
    %584 = vector.broadcast %cst_189 : f32 to vector<1x16xf32>
    %585 = arith.divf %584, %583 : vector<1x16xf32>
    %586 = vector.extract_strided_slice %458 {offsets = [5, 0], sizes = [1, 16], strides = [1, 1]} : vector<8x16xf32> to vector<1x16xf32>
    %587 = vector.extract_strided_slice %436 {offsets = [2, 0, 0], sizes = [1, 16, 16], strides = [1, 1, 1]} : vector<4x16x16xf32> to vector<1x16x16xf32>
    %588 = vector.shape_cast %587 : vector<1x16x16xf32> to vector<16x16xf32>
    %cst_190 = arith.constant dense<0.000000e+00> : vector<1x16xf32>
    %589 = tpu.matmul %561, %588, %cst_190 {dimension_numbers = #tpu.dot_dimension_numbers<[1], [0], [0], [1], [0, 0, 1, 1], [], []>} : vector<1x16xf32>, vector<16x16xf32>, vector<1x16xf32> -> vector<1x16xf32>
    %590 = arith.addf %586, %589 : vector<1x16xf32>
    %591 = math.tanh %590 : vector<1x16xf32>
    %592 = vector.extract_strided_slice %465 {offsets = [5, 0], sizes = [1, 16], strides = [1, 1]} : vector<8x16xf32> to vector<1x16xf32>
    %593 = vector.extract_strided_slice %436 {offsets = [3, 0, 0], sizes = [1, 16, 16], strides = [1, 1, 1]} : vector<4x16x16xf32> to vector<1x16x16xf32>
    %594 = vector.shape_cast %593 : vector<1x16x16xf32> to vector<16x16xf32>
    %cst_191 = arith.constant dense<0.000000e+00> : vector<1x16xf32>
    %595 = tpu.matmul %561, %594, %cst_191 {dimension_numbers = #tpu.dot_dimension_numbers<[1], [0], [0], [1], [0, 0, 1, 1], [], []>} : vector<1x16xf32>, vector<16x16xf32>, vector<1x16xf32> -> vector<1x16xf32>
    %596 = arith.addf %592, %595 : vector<1x16xf32>
    %cst_192 = arith.constant 0.000000e+00 : f32
    %597 = vector.broadcast %cst_192 : f32 to vector<1x16xf32>
    %598 = arith.subf %597, %596 : vector<1x16xf32>
    %599 = math.exp %598 : vector<1x16xf32>
    %cst_193 = arith.constant 1.000000e+00 : f32
    %600 = vector.broadcast %cst_193 : f32 to vector<1x16xf32>
    %601 = arith.addf %600, %599 : vector<1x16xf32>
    %cst_194 = arith.constant 1.000000e+00 : f32
    %602 = vector.broadcast %cst_194 : f32 to vector<1x16xf32>
    %603 = arith.divf %602, %601 : vector<1x16xf32>
    %604 = arith.mulf %585, %559 : vector<1x16xf32>
    %605 = arith.mulf %573, %591 : vector<1x16xf32>
    %606 = arith.addf %604, %605 : vector<1x16xf32>
    %607 = math.tanh %606 : vector<1x16xf32>
    %608 = arith.mulf %603, %607 : vector<1x16xf32>
    %609 = vector.extract_strided_slice %444 {offsets = [4, 0], sizes = [1, 16], strides = [1, 1]} : vector<8x16xf32> to vector<1x16xf32>
    %610 = vector.extract_strided_slice %436 {offsets = [0, 0, 0], sizes = [1, 16, 16], strides = [1, 1, 1]} : vector<4x16x16xf32> to vector<1x16x16xf32>
    %611 = vector.shape_cast %610 : vector<1x16x16xf32> to vector<16x16xf32>
    %cst_195 = arith.constant dense<0.000000e+00> : vector<1x16xf32>
    %612 = tpu.matmul %608, %611, %cst_195 {dimension_numbers = #tpu.dot_dimension_numbers<[1], [0], [0], [1], [0, 0, 1, 1], [], []>} : vector<1x16xf32>, vector<16x16xf32>, vector<1x16xf32> -> vector<1x16xf32>
    %613 = arith.addf %609, %612 : vector<1x16xf32>
    %cst_196 = arith.constant 0.000000e+00 : f32
    %614 = vector.broadcast %cst_196 : f32 to vector<1x16xf32>
    %615 = arith.subf %614, %613 : vector<1x16xf32>
    %616 = math.exp %615 : vector<1x16xf32>
    %cst_197 = arith.constant 1.000000e+00 : f32
    %617 = vector.broadcast %cst_197 : f32 to vector<1x16xf32>
    %618 = arith.addf %617, %616 : vector<1x16xf32>
    %cst_198 = arith.constant 1.000000e+00 : f32
    %619 = vector.broadcast %cst_198 : f32 to vector<1x16xf32>
    %620 = arith.divf %619, %618 : vector<1x16xf32>
    %621 = vector.extract_strided_slice %451 {offsets = [4, 0], sizes = [1, 16], strides = [1, 1]} : vector<8x16xf32> to vector<1x16xf32>
    %622 = vector.extract_strided_slice %436 {offsets = [1, 0, 0], sizes = [1, 16, 16], strides = [1, 1, 1]} : vector<4x16x16xf32> to vector<1x16x16xf32>
    %623 = vector.shape_cast %622 : vector<1x16x16xf32> to vector<16x16xf32>
    %cst_199 = arith.constant dense<0.000000e+00> : vector<1x16xf32>
    %624 = tpu.matmul %608, %623, %cst_199 {dimension_numbers = #tpu.dot_dimension_numbers<[1], [0], [0], [1], [0, 0, 1, 1], [], []>} : vector<1x16xf32>, vector<16x16xf32>, vector<1x16xf32> -> vector<1x16xf32>
    %625 = arith.addf %621, %624 : vector<1x16xf32>
    %cst_200 = arith.constant 0.000000e+00 : f32
    %626 = vector.broadcast %cst_200 : f32 to vector<1x16xf32>
    %627 = arith.subf %626, %625 : vector<1x16xf32>
    %628 = math.exp %627 : vector<1x16xf32>
    %cst_201 = arith.constant 1.000000e+00 : f32
    %629 = vector.broadcast %cst_201 : f32 to vector<1x16xf32>
    %630 = arith.addf %629, %628 : vector<1x16xf32>
    %cst_202 = arith.constant 1.000000e+00 : f32
    %631 = vector.broadcast %cst_202 : f32 to vector<1x16xf32>
    %632 = arith.divf %631, %630 : vector<1x16xf32>
    %633 = vector.extract_strided_slice %458 {offsets = [4, 0], sizes = [1, 16], strides = [1, 1]} : vector<8x16xf32> to vector<1x16xf32>
    %634 = vector.extract_strided_slice %436 {offsets = [2, 0, 0], sizes = [1, 16, 16], strides = [1, 1, 1]} : vector<4x16x16xf32> to vector<1x16x16xf32>
    %635 = vector.shape_cast %634 : vector<1x16x16xf32> to vector<16x16xf32>
    %cst_203 = arith.constant dense<0.000000e+00> : vector<1x16xf32>
    %636 = tpu.matmul %608, %635, %cst_203 {dimension_numbers = #tpu.dot_dimension_numbers<[1], [0], [0], [1], [0, 0, 1, 1], [], []>} : vector<1x16xf32>, vector<16x16xf32>, vector<1x16xf32> -> vector<1x16xf32>
    %637 = arith.addf %633, %636 : vector<1x16xf32>
    %638 = math.tanh %637 : vector<1x16xf32>
    %639 = vector.extract_strided_slice %465 {offsets = [4, 0], sizes = [1, 16], strides = [1, 1]} : vector<8x16xf32> to vector<1x16xf32>
    %640 = vector.extract_strided_slice %436 {offsets = [3, 0, 0], sizes = [1, 16, 16], strides = [1, 1, 1]} : vector<4x16x16xf32> to vector<1x16x16xf32>
    %641 = vector.shape_cast %640 : vector<1x16x16xf32> to vector<16x16xf32>
    %cst_204 = arith.constant dense<0.000000e+00> : vector<1x16xf32>
    %642 = tpu.matmul %608, %641, %cst_204 {dimension_numbers = #tpu.dot_dimension_numbers<[1], [0], [0], [1], [0, 0, 1, 1], [], []>} : vector<1x16xf32>, vector<16x16xf32>, vector<1x16xf32> -> vector<1x16xf32>
    %643 = arith.addf %639, %642 : vector<1x16xf32>
    %cst_205 = arith.constant 0.000000e+00 : f32
    %644 = vector.broadcast %cst_205 : f32 to vector<1x16xf32>
    %645 = arith.subf %644, %643 : vector<1x16xf32>
    %646 = math.exp %645 : vector<1x16xf32>
    %cst_206 = arith.constant 1.000000e+00 : f32
    %647 = vector.broadcast %cst_206 : f32 to vector<1x16xf32>
    %648 = arith.addf %647, %646 : vector<1x16xf32>
    %cst_207 = arith.constant 1.000000e+00 : f32
    %649 = vector.broadcast %cst_207 : f32 to vector<1x16xf32>
    %650 = arith.divf %649, %648 : vector<1x16xf32>
    %651 = arith.mulf %632, %606 : vector<1x16xf32>
    %652 = arith.mulf %620, %638 : vector<1x16xf32>
    %653 = arith.addf %651, %652 : vector<1x16xf32>
    %654 = math.tanh %653 : vector<1x16xf32>
    %655 = arith.mulf %650, %654 : vector<1x16xf32>
    %656 = vector.extract_strided_slice %444 {offsets = [3, 0], sizes = [1, 16], strides = [1, 1]} : vector<8x16xf32> to vector<1x16xf32>
    %657 = vector.extract_strided_slice %436 {offsets = [0, 0, 0], sizes = [1, 16, 16], strides = [1, 1, 1]} : vector<4x16x16xf32> to vector<1x16x16xf32>
    %658 = vector.shape_cast %657 : vector<1x16x16xf32> to vector<16x16xf32>
    %cst_208 = arith.constant dense<0.000000e+00> : vector<1x16xf32>
    %659 = tpu.matmul %655, %658, %cst_208 {dimension_numbers = #tpu.dot_dimension_numbers<[1], [0], [0], [1], [0, 0, 1, 1], [], []>} : vector<1x16xf32>, vector<16x16xf32>, vector<1x16xf32> -> vector<1x16xf32>
    %660 = arith.addf %656, %659 : vector<1x16xf32>
    %cst_209 = arith.constant 0.000000e+00 : f32
    %661 = vector.broadcast %cst_209 : f32 to vector<1x16xf32>
    %662 = arith.subf %661, %660 : vector<1x16xf32>
    %663 = math.exp %662 : vector<1x16xf32>
    %cst_210 = arith.constant 1.000000e+00 : f32
    %664 = vector.broadcast %cst_210 : f32 to vector<1x16xf32>
    %665 = arith.addf %664, %663 : vector<1x16xf32>
    %cst_211 = arith.constant 1.000000e+00 : f32
    %666 = vector.broadcast %cst_211 : f32 to vector<1x16xf32>
    %667 = arith.divf %666, %665 : vector<1x16xf32>
    %668 = vector.extract_strided_slice %451 {offsets = [3, 0], sizes = [1, 16], strides = [1, 1]} : vector<8x16xf32> to vector<1x16xf32>
    %669 = vector.extract_strided_slice %436 {offsets = [1, 0, 0], sizes = [1, 16, 16], strides = [1, 1, 1]} : vector<4x16x16xf32> to vector<1x16x16xf32>
    %670 = vector.shape_cast %669 : vector<1x16x16xf32> to vector<16x16xf32>
    %cst_212 = arith.constant dense<0.000000e+00> : vector<1x16xf32>
    %671 = tpu.matmul %655, %670, %cst_212 {dimension_numbers = #tpu.dot_dimension_numbers<[1], [0], [0], [1], [0, 0, 1, 1], [], []>} : vector<1x16xf32>, vector<16x16xf32>, vector<1x16xf32> -> vector<1x16xf32>
    %672 = arith.addf %668, %671 : vector<1x16xf32>
    %cst_213 = arith.constant 0.000000e+00 : f32
    %673 = vector.broadcast %cst_213 : f32 to vector<1x16xf32>
    %674 = arith.subf %673, %672 : vector<1x16xf32>
    %675 = math.exp %674 : vector<1x16xf32>
    %cst_214 = arith.constant 1.000000e+00 : f32
    %676 = vector.broadcast %cst_214 : f32 to vector<1x16xf32>
    %677 = arith.addf %676, %675 : vector<1x16xf32>
    %cst_215 = arith.constant 1.000000e+00 : f32
    %678 = vector.broadcast %cst_215 : f32 to vector<1x16xf32>
    %679 = arith.divf %678, %677 : vector<1x16xf32>
    %680 = vector.extract_strided_slice %458 {offsets = [3, 0], sizes = [1, 16], strides = [1, 1]} : vector<8x16xf32> to vector<1x16xf32>
    %681 = vector.extract_strided_slice %436 {offsets = [2, 0, 0], sizes = [1, 16, 16], strides = [1, 1, 1]} : vector<4x16x16xf32> to vector<1x16x16xf32>
    %682 = vector.shape_cast %681 : vector<1x16x16xf32> to vector<16x16xf32>
    %cst_216 = arith.constant dense<0.000000e+00> : vector<1x16xf32>
    %683 = tpu.matmul %655, %682, %cst_216 {dimension_numbers = #tpu.dot_dimension_numbers<[1], [0], [0], [1], [0, 0, 1, 1], [], []>} : vector<1x16xf32>, vector<16x16xf32>, vector<1x16xf32> -> vector<1x16xf32>
    %684 = arith.addf %680, %683 : vector<1x16xf32>
    %685 = math.tanh %684 : vector<1x16xf32>
    %686 = vector.extract_strided_slice %465 {offsets = [3, 0], sizes = [1, 16], strides = [1, 1]} : vector<8x16xf32> to vector<1x16xf32>
    %687 = vector.extract_strided_slice %436 {offsets = [3, 0, 0], sizes = [1, 16, 16], strides = [1, 1, 1]} : vector<4x16x16xf32> to vector<1x16x16xf32>
    %688 = vector.shape_cast %687 : vector<1x16x16xf32> to vector<16x16xf32>
    %cst_217 = arith.constant dense<0.000000e+00> : vector<1x16xf32>
    %689 = tpu.matmul %655, %688, %cst_217 {dimension_numbers = #tpu.dot_dimension_numbers<[1], [0], [0], [1], [0, 0, 1, 1], [], []>} : vector<1x16xf32>, vector<16x16xf32>, vector<1x16xf32> -> vector<1x16xf32>
    %690 = arith.addf %686, %689 : vector<1x16xf32>
    %cst_218 = arith.constant 0.000000e+00 : f32
    %691 = vector.broadcast %cst_218 : f32 to vector<1x16xf32>
    %692 = arith.subf %691, %690 : vector<1x16xf32>
    %693 = math.exp %692 : vector<1x16xf32>
    %cst_219 = arith.constant 1.000000e+00 : f32
    %694 = vector.broadcast %cst_219 : f32 to vector<1x16xf32>
    %695 = arith.addf %694, %693 : vector<1x16xf32>
    %cst_220 = arith.constant 1.000000e+00 : f32
    %696 = vector.broadcast %cst_220 : f32 to vector<1x16xf32>
    %697 = arith.divf %696, %695 : vector<1x16xf32>
    %698 = arith.mulf %679, %653 : vector<1x16xf32>
    %699 = arith.mulf %667, %685 : vector<1x16xf32>
    %700 = arith.addf %698, %699 : vector<1x16xf32>
    %701 = math.tanh %700 : vector<1x16xf32>
    %702 = arith.mulf %697, %701 : vector<1x16xf32>
    %703 = vector.extract_strided_slice %444 {offsets = [2, 0], sizes = [1, 16], strides = [1, 1]} : vector<8x16xf32> to vector<1x16xf32>
    %704 = vector.extract_strided_slice %436 {offsets = [0, 0, 0], sizes = [1, 16, 16], strides = [1, 1, 1]} : vector<4x16x16xf32> to vector<1x16x16xf32>
    %705 = vector.shape_cast %704 : vector<1x16x16xf32> to vector<16x16xf32>
    %cst_221 = arith.constant dense<0.000000e+00> : vector<1x16xf32>
    %706 = tpu.matmul %702, %705, %cst_221 {dimension_numbers = #tpu.dot_dimension_numbers<[1], [0], [0], [1], [0, 0, 1, 1], [], []>} : vector<1x16xf32>, vector<16x16xf32>, vector<1x16xf32> -> vector<1x16xf32>
    %707 = arith.addf %703, %706 : vector<1x16xf32>
    %cst_222 = arith.constant 0.000000e+00 : f32
    %708 = vector.broadcast %cst_222 : f32 to vector<1x16xf32>
    %709 = arith.subf %708, %707 : vector<1x16xf32>
    %710 = math.exp %709 : vector<1x16xf32>
    %cst_223 = arith.constant 1.000000e+00 : f32
    %711 = vector.broadcast %cst_223 : f32 to vector<1x16xf32>
    %712 = arith.addf %711, %710 : vector<1x16xf32>
    %cst_224 = arith.constant 1.000000e+00 : f32
    %713 = vector.broadcast %cst_224 : f32 to vector<1x16xf32>
    %714 = arith.divf %713, %712 : vector<1x16xf32>
    %715 = vector.extract_strided_slice %451 {offsets = [2, 0], sizes = [1, 16], strides = [1, 1]} : vector<8x16xf32> to vector<1x16xf32>
    %716 = vector.extract_strided_slice %436 {offsets = [1, 0, 0], sizes = [1, 16, 16], strides = [1, 1, 1]} : vector<4x16x16xf32> to vector<1x16x16xf32>
    %717 = vector.shape_cast %716 : vector<1x16x16xf32> to vector<16x16xf32>
    %cst_225 = arith.constant dense<0.000000e+00> : vector<1x16xf32>
    %718 = tpu.matmul %702, %717, %cst_225 {dimension_numbers = #tpu.dot_dimension_numbers<[1], [0], [0], [1], [0, 0, 1, 1], [], []>} : vector<1x16xf32>, vector<16x16xf32>, vector<1x16xf32> -> vector<1x16xf32>
    %719 = arith.addf %715, %718 : vector<1x16xf32>
    %cst_226 = arith.constant 0.000000e+00 : f32
    %720 = vector.broadcast %cst_226 : f32 to vector<1x16xf32>
    %721 = arith.subf %720, %719 : vector<1x16xf32>
    %722 = math.exp %721 : vector<1x16xf32>
    %cst_227 = arith.constant 1.000000e+00 : f32
    %723 = vector.broadcast %cst_227 : f32 to vector<1x16xf32>
    %724 = arith.addf %723, %722 : vector<1x16xf32>
    %cst_228 = arith.constant 1.000000e+00 : f32
    %725 = vector.broadcast %cst_228 : f32 to vector<1x16xf32>
    %726 = arith.divf %725, %724 : vector<1x16xf32>
    %727 = vector.extract_strided_slice %458 {offsets = [2, 0], sizes = [1, 16], strides = [1, 1]} : vector<8x16xf32> to vector<1x16xf32>
    %728 = vector.extract_strided_slice %436 {offsets = [2, 0, 0], sizes = [1, 16, 16], strides = [1, 1, 1]} : vector<4x16x16xf32> to vector<1x16x16xf32>
    %729 = vector.shape_cast %728 : vector<1x16x16xf32> to vector<16x16xf32>
    %cst_229 = arith.constant dense<0.000000e+00> : vector<1x16xf32>
    %730 = tpu.matmul %702, %729, %cst_229 {dimension_numbers = #tpu.dot_dimension_numbers<[1], [0], [0], [1], [0, 0, 1, 1], [], []>} : vector<1x16xf32>, vector<16x16xf32>, vector<1x16xf32> -> vector<1x16xf32>
    %731 = arith.addf %727, %730 : vector<1x16xf32>
    %732 = math.tanh %731 : vector<1x16xf32>
    %733 = vector.extract_strided_slice %465 {offsets = [2, 0], sizes = [1, 16], strides = [1, 1]} : vector<8x16xf32> to vector<1x16xf32>
    %734 = vector.extract_strided_slice %436 {offsets = [3, 0, 0], sizes = [1, 16, 16], strides = [1, 1, 1]} : vector<4x16x16xf32> to vector<1x16x16xf32>
    %735 = vector.shape_cast %734 : vector<1x16x16xf32> to vector<16x16xf32>
    %cst_230 = arith.constant dense<0.000000e+00> : vector<1x16xf32>
    %736 = tpu.matmul %702, %735, %cst_230 {dimension_numbers = #tpu.dot_dimension_numbers<[1], [0], [0], [1], [0, 0, 1, 1], [], []>} : vector<1x16xf32>, vector<16x16xf32>, vector<1x16xf32> -> vector<1x16xf32>
    %737 = arith.addf %733, %736 : vector<1x16xf32>
    %cst_231 = arith.constant 0.000000e+00 : f32
    %738 = vector.broadcast %cst_231 : f32 to vector<1x16xf32>
    %739 = arith.subf %738, %737 : vector<1x16xf32>
    %740 = math.exp %739 : vector<1x16xf32>
    %cst_232 = arith.constant 1.000000e+00 : f32
    %741 = vector.broadcast %cst_232 : f32 to vector<1x16xf32>
    %742 = arith.addf %741, %740 : vector<1x16xf32>
    %cst_233 = arith.constant 1.000000e+00 : f32
    %743 = vector.broadcast %cst_233 : f32 to vector<1x16xf32>
    %744 = arith.divf %743, %742 : vector<1x16xf32>
    %745 = arith.mulf %726, %700 : vector<1x16xf32>
    %746 = arith.mulf %714, %732 : vector<1x16xf32>
    %747 = arith.addf %745, %746 : vector<1x16xf32>
    %748 = math.tanh %747 : vector<1x16xf32>
    %749 = arith.mulf %744, %748 : vector<1x16xf32>
    %750 = vector.extract_strided_slice %444 {offsets = [1, 0], sizes = [1, 16], strides = [1, 1]} : vector<8x16xf32> to vector<1x16xf32>
    %751 = vector.extract_strided_slice %436 {offsets = [0, 0, 0], sizes = [1, 16, 16], strides = [1, 1, 1]} : vector<4x16x16xf32> to vector<1x16x16xf32>
    %752 = vector.shape_cast %751 : vector<1x16x16xf32> to vector<16x16xf32>
    %cst_234 = arith.constant dense<0.000000e+00> : vector<1x16xf32>
    %753 = tpu.matmul %749, %752, %cst_234 {dimension_numbers = #tpu.dot_dimension_numbers<[1], [0], [0], [1], [0, 0, 1, 1], [], []>} : vector<1x16xf32>, vector<16x16xf32>, vector<1x16xf32> -> vector<1x16xf32>
    %754 = arith.addf %750, %753 : vector<1x16xf32>
    %cst_235 = arith.constant 0.000000e+00 : f32
    %755 = vector.broadcast %cst_235 : f32 to vector<1x16xf32>
    %756 = arith.subf %755, %754 : vector<1x16xf32>
    %757 = math.exp %756 : vector<1x16xf32>
    %cst_236 = arith.constant 1.000000e+00 : f32
    %758 = vector.broadcast %cst_236 : f32 to vector<1x16xf32>
    %759 = arith.addf %758, %757 : vector<1x16xf32>
    %cst_237 = arith.constant 1.000000e+00 : f32
    %760 = vector.broadcast %cst_237 : f32 to vector<1x16xf32>
    %761 = arith.divf %760, %759 : vector<1x16xf32>
    %762 = vector.extract_strided_slice %451 {offsets = [1, 0], sizes = [1, 16], strides = [1, 1]} : vector<8x16xf32> to vector<1x16xf32>
    %763 = vector.extract_strided_slice %436 {offsets = [1, 0, 0], sizes = [1, 16, 16], strides = [1, 1, 1]} : vector<4x16x16xf32> to vector<1x16x16xf32>
    %764 = vector.shape_cast %763 : vector<1x16x16xf32> to vector<16x16xf32>
    %cst_238 = arith.constant dense<0.000000e+00> : vector<1x16xf32>
    %765 = tpu.matmul %749, %764, %cst_238 {dimension_numbers = #tpu.dot_dimension_numbers<[1], [0], [0], [1], [0, 0, 1, 1], [], []>} : vector<1x16xf32>, vector<16x16xf32>, vector<1x16xf32> -> vector<1x16xf32>
    %766 = arith.addf %762, %765 : vector<1x16xf32>
    %cst_239 = arith.constant 0.000000e+00 : f32
    %767 = vector.broadcast %cst_239 : f32 to vector<1x16xf32>
    %768 = arith.subf %767, %766 : vector<1x16xf32>
    %769 = math.exp %768 : vector<1x16xf32>
    %cst_240 = arith.constant 1.000000e+00 : f32
    %770 = vector.broadcast %cst_240 : f32 to vector<1x16xf32>
    %771 = arith.addf %770, %769 : vector<1x16xf32>
    %cst_241 = arith.constant 1.000000e+00 : f32
    %772 = vector.broadcast %cst_241 : f32 to vector<1x16xf32>
    %773 = arith.divf %772, %771 : vector<1x16xf32>
    %774 = vector.extract_strided_slice %458 {offsets = [1, 0], sizes = [1, 16], strides = [1, 1]} : vector<8x16xf32> to vector<1x16xf32>
    %775 = vector.extract_strided_slice %436 {offsets = [2, 0, 0], sizes = [1, 16, 16], strides = [1, 1, 1]} : vector<4x16x16xf32> to vector<1x16x16xf32>
    %776 = vector.shape_cast %775 : vector<1x16x16xf32> to vector<16x16xf32>
    %cst_242 = arith.constant dense<0.000000e+00> : vector<1x16xf32>
    %777 = tpu.matmul %749, %776, %cst_242 {dimension_numbers = #tpu.dot_dimension_numbers<[1], [0], [0], [1], [0, 0, 1, 1], [], []>} : vector<1x16xf32>, vector<16x16xf32>, vector<1x16xf32> -> vector<1x16xf32>
    %778 = arith.addf %774, %777 : vector<1x16xf32>
    %779 = math.tanh %778 : vector<1x16xf32>
    %780 = vector.extract_strided_slice %465 {offsets = [1, 0], sizes = [1, 16], strides = [1, 1]} : vector<8x16xf32> to vector<1x16xf32>
    %781 = vector.extract_strided_slice %436 {offsets = [3, 0, 0], sizes = [1, 16, 16], strides = [1, 1, 1]} : vector<4x16x16xf32> to vector<1x16x16xf32>
    %782 = vector.shape_cast %781 : vector<1x16x16xf32> to vector<16x16xf32>
    %cst_243 = arith.constant dense<0.000000e+00> : vector<1x16xf32>
    %783 = tpu.matmul %749, %782, %cst_243 {dimension_numbers = #tpu.dot_dimension_numbers<[1], [0], [0], [1], [0, 0, 1, 1], [], []>} : vector<1x16xf32>, vector<16x16xf32>, vector<1x16xf32> -> vector<1x16xf32>
    %784 = arith.addf %780, %783 : vector<1x16xf32>
    %cst_244 = arith.constant 0.000000e+00 : f32
    %785 = vector.broadcast %cst_244 : f32 to vector<1x16xf32>
    %786 = arith.subf %785, %784 : vector<1x16xf32>
    %787 = math.exp %786 : vector<1x16xf32>
    %cst_245 = arith.constant 1.000000e+00 : f32
    %788 = vector.broadcast %cst_245 : f32 to vector<1x16xf32>
    %789 = arith.addf %788, %787 : vector<1x16xf32>
    %cst_246 = arith.constant 1.000000e+00 : f32
    %790 = vector.broadcast %cst_246 : f32 to vector<1x16xf32>
    %791 = arith.divf %790, %789 : vector<1x16xf32>
    %792 = arith.mulf %773, %747 : vector<1x16xf32>
    %793 = arith.mulf %761, %779 : vector<1x16xf32>
    %794 = arith.addf %792, %793 : vector<1x16xf32>
    %795 = math.tanh %794 : vector<1x16xf32>
    %796 = arith.mulf %791, %795 : vector<1x16xf32>
    %797 = vector.extract_strided_slice %444 {offsets = [0, 0], sizes = [1, 16], strides = [1, 1]} : vector<8x16xf32> to vector<1x16xf32>
    %798 = vector.extract_strided_slice %436 {offsets = [0, 0, 0], sizes = [1, 16, 16], strides = [1, 1, 1]} : vector<4x16x16xf32> to vector<1x16x16xf32>
    %799 = vector.shape_cast %798 : vector<1x16x16xf32> to vector<16x16xf32>
    %cst_247 = arith.constant dense<0.000000e+00> : vector<1x16xf32>
    %800 = tpu.matmul %796, %799, %cst_247 {dimension_numbers = #tpu.dot_dimension_numbers<[1], [0], [0], [1], [0, 0, 1, 1], [], []>} : vector<1x16xf32>, vector<16x16xf32>, vector<1x16xf32> -> vector<1x16xf32>
    %801 = arith.addf %797, %800 : vector<1x16xf32>
    %cst_248 = arith.constant 0.000000e+00 : f32
    %802 = vector.broadcast %cst_248 : f32 to vector<1x16xf32>
    %803 = arith.subf %802, %801 : vector<1x16xf32>
    %804 = math.exp %803 : vector<1x16xf32>
    %cst_249 = arith.constant 1.000000e+00 : f32
    %805 = vector.broadcast %cst_249 : f32 to vector<1x16xf32>
    %806 = arith.addf %805, %804 : vector<1x16xf32>
    %cst_250 = arith.constant 1.000000e+00 : f32
    %807 = vector.broadcast %cst_250 : f32 to vector<1x16xf32>
    %808 = arith.divf %807, %806 : vector<1x16xf32>
    %809 = vector.extract_strided_slice %451 {offsets = [0, 0], sizes = [1, 16], strides = [1, 1]} : vector<8x16xf32> to vector<1x16xf32>
    %810 = vector.extract_strided_slice %436 {offsets = [1, 0, 0], sizes = [1, 16, 16], strides = [1, 1, 1]} : vector<4x16x16xf32> to vector<1x16x16xf32>
    %811 = vector.shape_cast %810 : vector<1x16x16xf32> to vector<16x16xf32>
    %cst_251 = arith.constant dense<0.000000e+00> : vector<1x16xf32>
    %812 = tpu.matmul %796, %811, %cst_251 {dimension_numbers = #tpu.dot_dimension_numbers<[1], [0], [0], [1], [0, 0, 1, 1], [], []>} : vector<1x16xf32>, vector<16x16xf32>, vector<1x16xf32> -> vector<1x16xf32>
    %813 = arith.addf %809, %812 : vector<1x16xf32>
    %cst_252 = arith.constant 0.000000e+00 : f32
    %814 = vector.broadcast %cst_252 : f32 to vector<1x16xf32>
    %815 = arith.subf %814, %813 : vector<1x16xf32>
    %816 = math.exp %815 : vector<1x16xf32>
    %cst_253 = arith.constant 1.000000e+00 : f32
    %817 = vector.broadcast %cst_253 : f32 to vector<1x16xf32>
    %818 = arith.addf %817, %816 : vector<1x16xf32>
    %cst_254 = arith.constant 1.000000e+00 : f32
    %819 = vector.broadcast %cst_254 : f32 to vector<1x16xf32>
    %820 = arith.divf %819, %818 : vector<1x16xf32>
    %821 = vector.extract_strided_slice %458 {offsets = [0, 0], sizes = [1, 16], strides = [1, 1]} : vector<8x16xf32> to vector<1x16xf32>
    %822 = vector.extract_strided_slice %436 {offsets = [2, 0, 0], sizes = [1, 16, 16], strides = [1, 1, 1]} : vector<4x16x16xf32> to vector<1x16x16xf32>
    %823 = vector.shape_cast %822 : vector<1x16x16xf32> to vector<16x16xf32>
    %cst_255 = arith.constant dense<0.000000e+00> : vector<1x16xf32>
    %824 = tpu.matmul %796, %823, %cst_255 {dimension_numbers = #tpu.dot_dimension_numbers<[1], [0], [0], [1], [0, 0, 1, 1], [], []>} : vector<1x16xf32>, vector<16x16xf32>, vector<1x16xf32> -> vector<1x16xf32>
    %825 = arith.addf %821, %824 : vector<1x16xf32>
    %826 = math.tanh %825 : vector<1x16xf32>
    %827 = vector.extract_strided_slice %465 {offsets = [0, 0], sizes = [1, 16], strides = [1, 1]} : vector<8x16xf32> to vector<1x16xf32>
    %828 = vector.extract_strided_slice %436 {offsets = [3, 0, 0], sizes = [1, 16, 16], strides = [1, 1, 1]} : vector<4x16x16xf32> to vector<1x16x16xf32>
    %829 = vector.shape_cast %828 : vector<1x16x16xf32> to vector<16x16xf32>
    %cst_256 = arith.constant dense<0.000000e+00> : vector<1x16xf32>
    %830 = tpu.matmul %796, %829, %cst_256 {dimension_numbers = #tpu.dot_dimension_numbers<[1], [0], [0], [1], [0, 0, 1, 1], [], []>} : vector<1x16xf32>, vector<16x16xf32>, vector<1x16xf32> -> vector<1x16xf32>
    %831 = arith.addf %827, %830 : vector<1x16xf32>
    %cst_257 = arith.constant 0.000000e+00 : f32
    %832 = vector.broadcast %cst_257 : f32 to vector<1x16xf32>
    %833 = arith.subf %832, %831 : vector<1x16xf32>
    %834 = math.exp %833 : vector<1x16xf32>
    %cst_258 = arith.constant 1.000000e+00 : f32
    %835 = vector.broadcast %cst_258 : f32 to vector<1x16xf32>
    %836 = arith.addf %835, %834 : vector<1x16xf32>
    %cst_259 = arith.constant 1.000000e+00 : f32
    %837 = vector.broadcast %cst_259 : f32 to vector<1x16xf32>
    %838 = arith.divf %837, %836 : vector<1x16xf32>
    %839 = arith.mulf %820, %794 : vector<1x16xf32>
    %840 = arith.mulf %808, %826 : vector<1x16xf32>
    %841 = arith.addf %839, %840 : vector<1x16xf32>
    %842 = math.tanh %841 : vector<1x16xf32>
    %843 = arith.mulf %838, %842 : vector<1x16xf32>
    %844 = tpu.concatenate %843, %796, %749, %702, %655, %608, %561, %514 in 0 : vector<1x16xf32>, vector<1x16xf32>, vector<1x16xf32>, vector<1x16xf32>, vector<1x16xf32>, vector<1x16xf32>, vector<1x16xf32>, vector<1x16xf32> -> vector<8x16xf32>
    %845 = tpu.concatenate %434, %844 in 1 : vector<8x16xf32>, vector<8x16xf32> -> vector<8x32xf32>
    %c0_260 = arith.constant 0 : index
    %c0_261 = arith.constant 0 : index
    %846 = vector.load %arg16[%c0_260, %c0_261] : memref<8x32xf32, #tpu.memory_space<vmem>>, vector<8x32xf32>
    tpu.vector_store %arg16[%c0_260, %c0_261], %845 {strides = array<i32>} : memref<8x32xf32, #tpu.memory_space<vmem>>, vector<8x32xf32>,
    %847 = tpu.concatenate %433, %843 in 1 : vector<1x16xf32>, vector<1x16xf32> -> vector<1x32xf32>
    %c0_262 = arith.constant 0 : index
    %c0_263 = arith.constant 0 : index
    %848 = vector.load %arg17[%c0_262, %c0_263] : memref<1x32xf32, #tpu.memory_space<vmem>>, vector<1x32xf32>
    tpu.vector_store %arg17[%c0_262, %c0_263], %847 {strides = array<i32>} : memref<1x32xf32, #tpu.memory_space<vmem>>, vector<1x32xf32>,
    return
  }
  func.func @transform_0(%arg0: i32) -> (i32, i32) {
    %c0_i32 = arith.constant 0 : i32
    %c0_i32_0 = arith.constant 0 : i32
    %c0_i32_1 = arith.constant 0 : i32
    return %c0_i32, %c0_i32_0 : i32, i32
  }
  func.func @transform_1(%arg0: i32) -> (i32, i32) {
    %c0_i32 = arith.constant 0 : i32
    %c0_i32_0 = arith.constant 0 : i32
    %c0_i32_1 = arith.constant 0 : i32
    return %c0_i32, %c0_i32_0 : i32, i32
  }
  func.func @transform_2(%arg0: i32) -> (i32, i32) {
    %c0_i32 = arith.constant 0 : i32
    %c0_i32_0 = arith.constant 0 : i32
    %c0_i32_1 = arith.constant 0 : i32
    return %c0_i32, %c0_i32_0 : i32, i32
  }
  func.func @transform_3(%arg0: i32) -> (i32, i32) {
    %c0_i32 = arith.constant 0 : i32
    %c0_i32_0 = arith.constant 0 : i32
    %c0_i32_1 = arith.constant 0 : i32
    return %c0_i32, %c0_i32_0 : i32, i32
  }
  func.func @transform_4(%arg0: i32) -> (i32, i32) {
    %c0_i32 = arith.constant 0 : i32
    %c0_i32_0 = arith.constant 0 : i32
    %c0_i32_1 = arith.constant 0 : i32
    return %c0_i32, %c0_i32_0 : i32, i32
  }
  func.func @transform_5(%arg0: i32) -> (i32, i32) {
    %c0_i32 = arith.constant 0 : i32
    %c0_i32_0 = arith.constant 0 : i32
    %c0_i32_1 = arith.constant 0 : i32
    return %c0_i32, %c0_i32_0 : i32, i32
  }
  func.func @transform_6(%arg0: i32) -> (i32, i32) {
    %c0_i32 = arith.constant 0 : i32
    %c0_i32_0 = arith.constant 0 : i32
    %c0_i32_1 = arith.constant 0 : i32
    return %c0_i32, %c0_i32_0 : i32, i32
  }
  func.func @transform_7(%arg0: i32) -> (i32, i32) {
    %c0_i32 = arith.constant 0 : i32
    %c0_i32_0 = arith.constant 0 : i32
    %c0_i32_1 = arith.constant 0 : i32
    return %c0_i32, %c0_i32_0 : i32, i32
  }
  func.func @transform_8(%arg0: i32) -> (i32, i32, i32) {
    %c0_i32 = arith.constant 0 : i32
    %c0_i32_0 = arith.constant 0 : i32
    %c0_i32_1 = arith.constant 0 : i32
    %c0_i32_2 = arith.constant 0 : i32
    return %c0_i32, %c0_i32_0, %c0_i32_1 : i32, i32, i32
  }
  func.func @transform_9(%arg0: i32) -> (i32, i32, i32) {
    %c0_i32 = arith.constant 0 : i32
    %c0_i32_0 = arith.constant 0 : i32
    %c0_i32_1 = arith.constant 0 : i32
    %c0_i32_2 = arith.constant 0 : i32
    return %c0_i32, %c0_i32_0, %c0_i32_1 : i32, i32, i32
  }
  func.func @transform_10(%arg0: i32) -> (i32, i32, i32) {
    %c0_i32 = arith.constant 0 : i32
    %c0_i32_0 = arith.constant 0 : i32
    %c0_i32_1 = arith.constant 0 : i32
    %c0_i32_2 = arith.constant 0 : i32
    return %c0_i32, %c0_i32_0, %c0_i32_1 : i32, i32, i32
  }
  func.func @transform_11(%arg0: i32) -> (i32, i32, i32) {
    %c0_i32 = arith.constant 0 : i32
    %c0_i32_0 = arith.constant 0 : i32
    %c0_i32_1 = arith.constant 0 : i32
    %c0_i32_2 = arith.constant 0 : i32
    return %c0_i32, %c0_i32_0, %c0_i32_1 : i32, i32, i32
  }
  func.func @transform_12(%arg0: i32) -> (i32, i32, i32) {
    %c0_i32 = arith.constant 0 : i32
    %c0_i32_0 = arith.constant 0 : i32
    %c0_i32_1 = arith.constant 0 : i32
    %c0_i32_2 = arith.constant 0 : i32
    return %c0_i32, %c0_i32_0, %c0_i32_1 : i32, i32, i32
  }
  func.func @transform_13(%arg0: i32) -> (i32, i32, i32) {
    %c0_i32 = arith.constant 0 : i32
    %c0_i32_0 = arith.constant 0 : i32
    %c0_i32_1 = arith.constant 0 : i32
    %c0_i32_2 = arith.constant 0 : i32
    return %c0_i32, %c0_i32_0, %c0_i32_1 : i32, i32, i32
  }
  func.func @transform_14(%arg0: i32) -> (i32, i32) {
    %c0_i32 = arith.constant 0 : i32
    %c0_i32_0 = arith.constant 0 : i32
    %c0_i32_1 = arith.constant 0 : i32
    return %c0_i32, %c0_i32_0 : i32, i32
  }
  func.func @transform_15(%arg0: i32) -> (i32, i32) {
    %c0_i32 = arith.constant 0 : i32
    %c0_i32_0 = arith.constant 0 : i32
    %c0_i32_1 = arith.constant 0 : i32
    return %c0_i32, %c0_i32_0 : i32, i32
  }
  func.func @transform_16(%arg0: i32) -> (i32, i32) {
    %c0_i32 = arith.constant 0 : i32
    %c0_i32_0 = arith.constant 0 : i32
    %c0_i32_1 = arith.constant 0 : i32
    return %c0_i32, %c0_i32_0 : i32, i32
  }
}

</mosaic_0001>

<llo_original>
// kernel: tpu_custom_call.1
$region0: #{tpu_custom_call.1}
  #allocation0 [shape = 'u32[]', space=smem, size = 0x4, offset = 0x4, fixed_abs, tag = 'smem constant byte address 0x4 - core index']
  #allocation1 [shape = 'u32[144,128]{1,0:T(1,128)}', space=vmem, size = 0x12000, scoped, tag = 'internal scratch']
  %s0 = inlined_call_operand.vmem [shape: s32[8,1], index: 0, kind: input, shape index: {}]
  %s1 = inlined_call_operand.vmem [shape: f32[16,64], index: 1, kind: input, shape index: {}]
  %s2 = inlined_call_operand.vmem [shape: f32[16,32], index: 2, kind: input, shape index: {}]
  %s3 = inlined_call_operand.vmem [shape: f32[64,32], index: 3, kind: input, shape index: {}]
  %s4 = inlined_call_operand.vmem [shape: f32[1,32], index: 4, kind: input, shape index: {}]
  %s5 = inlined_call_operand.vmem [shape: f32[64,48], index: 5, kind: input, shape index: {}]
  %s6 = inlined_call_operand.vmem [shape: f32[48,32], index: 6, kind: input, shape index: {}]
  %s7 = inlined_call_operand.vmem [shape: f32[1,32], index: 7, kind: input, shape index: {}]
  %s8 = inlined_call_operand.vmem [shape: f32[4,32,16], index: 8, kind: input, shape index: {}]
  %s9 = inlined_call_operand.vmem [shape: f32[4,16,16], index: 9, kind: input, shape index: {}]
  %s10 = inlined_call_operand.vmem [shape: f32[4,1,16], index: 10, kind: input, shape index: {}]
  %s11 = inlined_call_operand.vmem [shape: f32[4,32,16], index: 11, kind: input, shape index: {}]
  %s12 = inlined_call_operand.vmem [shape: f32[4,16,16], index: 12, kind: input, shape index: {}]
  %s13 = inlined_call_operand.vmem [shape: f32[4,1,16], index: 13, kind: input, shape index: {}]
  %s14 = inlined_call_operand.hbm [shape: f32[16,32], index: 14, kind: output, shape index: {0}]
  %s15 = inlined_call_operand.hbm [shape: f32[8,32], index: 15, kind: output, shape index: {1}]
  %s16 = inlined_call_operand.hbm [shape: f32[1,32], index: 16, kind: output, shape index: {2}]
  %17 = xla_tuple %s14, %s15, %s16
  %s18 = sld [smem:[#allocation0]]
  $region82: #{tpu_custom_call.1} parent=0
    _
  %s20 = ssub.s32 1, %s18
  %s21 = scalar_select 0, %s20, %s18
  $region1: #{tpu_custom_call.1} parent=0
    #allocation2 [shape = 'u8[8192]{0}', space=vmem, size = 0x2000, scoped, tag = 'output window, operand 0, single buffered']
    #allocation3 [shape = 's32[1]{0}', space=sflag, size = 0x4, scoped, tag = 'scoped memory for tpu_custom_call.1']
    #allocation4 [shape = 'u8[4096]{0}', space=vmem, size = 0x1000, scoped, tag = 'output window, operand 1, single buffered']
    #allocation5 [shape = 's32[1]{0}', space=sflag, size = 0x4, scoped, tag = 'scoped memory for tpu_custom_call.1']
    #allocation6 [shape = 'u8[512]{0}', space=vmem, size = 0x400, scoped, tag = 'output window, operand 2, single buffered']
    %22 = vsyncpa [#allocation3], 0
    %23 = vsyncpa [#allocation5], 0
    // Predicated region
    $region2: #{tpu_custom_call.1} parent=1 // pred_check
      _
    $region3: #{tpu_custom_call.1} parent=1 // pred_check_branch
      %25 = sbr.rel (0) target = $region5
    $region4: #{tpu_custom_call.1} parent=1 // pred_region
      _
    $region5: #{tpu_custom_call.1} parent=1 // pred_fallthru
      _
    // Predicated region
    $region6: #{tpu_custom_call.1} parent=1 // pred_check
      _
    $region7: #{tpu_custom_call.1} parent=1 // pred_check_branch
      %27 = sbr.rel (0) target = $region9
    $region8: #{tpu_custom_call.1} parent=1 // pred_region
      _
    $region9: #{tpu_custom_call.1} parent=1 // pred_fallthru
      _
    // Predicated region
    $region10: #{tpu_custom_call.1} parent=1 // pred_check
      _
    $region11: #{tpu_custom_call.1} parent=1 // pred_check_branch
      %29 = sbr.rel (0) target = $region13
    $region12: #{tpu_custom_call.1} parent=1 // pred_region
      _
    $region13: #{tpu_custom_call.1} parent=1 // pred_fallthru
      _
    // Predicated region
    $region14: #{tpu_custom_call.1} parent=1 // pred_check
      _
    $region15: #{tpu_custom_call.1} parent=1 // pred_check_branch
      %31 = sbr.rel (0) target = $region17
    $region16: #{tpu_custom_call.1} parent=1 // pred_region
      _
    $region17: #{tpu_custom_call.1} parent=1 // pred_fallthru
      _
    // Predicated region
    $region18: #{tpu_custom_call.1} parent=1 // pred_check
      _
    $region19: #{tpu_custom_call.1} parent=1 // pred_check_branch
      %33 = sbr.rel (0) target = $region21
    $region20: #{tpu_custom_call.1} parent=1 // pred_region
      _
    $region21: #{tpu_custom_call.1} parent=1 // pred_fallthru
      _
    // Predicated region
    $region22: #{tpu_custom_call.1} parent=1 // pred_check
      _
    $region23: #{tpu_custom_call.1} parent=1 // pred_check_branch
      %35 = sbr.rel (0) target = $region25
    $region24: #{tpu_custom_call.1} parent=1 // pred_region
      _
    $region25: #{tpu_custom_call.1} parent=1 // pred_fallthru
      _
    // Predicated region
    $region26: #{tpu_custom_call.1} parent=1 // pred_check
      _
    $region27: #{tpu_custom_call.1} parent=1 // pred_check_branch
      %37 = sbr.rel (0) target = $region29
    $region28: #{tpu_custom_call.1} parent=1 // pred_region
      _
    $region29: #{tpu_custom_call.1} parent=1 // pred_fallthru
      _
    // Predicated region
    $region30: #{tpu_custom_call.1} parent=1 // pred_check
      _
    $region31: #{tpu_custom_call.1} parent=1 // pred_check_branch
      %39 = sbr.rel (0) target = $region33
    $region32: #{tpu_custom_call.1} parent=1 // pred_region
      _
    $region33: #{tpu_custom_call.1} parent=1 // pred_fallthru
      _
    // Predicated region
    $region34: #{tpu_custom_call.1} parent=1 // pred_check
      _
    $region35: #{tpu_custom_call.1} parent=1 // pred_check_branch
      %41 = sbr.rel (0) target = $region37
    $region36: #{tpu_custom_call.1} parent=1 // pred_region
      _
    $region37: #{tpu_custom_call.1} parent=1 // pred_fallthru
      _
    // Predicated region
    $region38: #{tpu_custom_call.1} parent=1 // pred_check
      _
    $region39: #{tpu_custom_call.1} parent=1 // pred_check_branch
      %43 = sbr.rel (0) target = $region41
    $region40: #{tpu_custom_call.1} parent=1 // pred_region
      _
    $region41: #{tpu_custom_call.1} parent=1 // pred_fallthru
      _
    // Predicated region
    $region42: #{tpu_custom_call.1} parent=1 // pred_check
      _
    $region43: #{tpu_custom_call.1} parent=1 // pred_check_branch
      %45 = sbr.rel (0) target = $region45
    $region44: #{tpu_custom_call.1} parent=1 // pred_region
      _
    $region45: #{tpu_custom_call.1} parent=1 // pred_fallthru
      _
    // Predicated region
    $region46: #{tpu_custom_call.1} parent=1 // pred_check
      _
    $region47: #{tpu_custom_call.1} parent=1 // pred_check_branch
      %47 = sbr.rel (0) target = $region49
    $region48: #{tpu_custom_call.1} parent=1 // pred_region
      _
    $region49: #{tpu_custom_call.1} parent=1 // pred_fallthru
      _
    // Predicated region
    $region50: #{tpu_custom_call.1} parent=1 // pred_check
      _
    $region51: #{tpu_custom_call.1} parent=1 // pred_check_branch
      %49 = sbr.rel (0) target = $region53
    $region52: #{tpu_custom_call.1} parent=1 // pred_region
      _
    $region53: #{tpu_custom_call.1} parent=1 // pred_fallthru
      _
    // Predicated region
    $region54: #{tpu_custom_call.1} parent=1 // pred_check
      _
    $region55: #{tpu_custom_call.1} parent=1 // pred_check_branch
      %51 = sbr.rel (0) target = $region57
    $region56: #{tpu_custom_call.1} parent=1 // pred_region
      _
    $region57: #{tpu_custom_call.1} parent=1 // pred_fallthru
      _
    %v52 = vld [vmem:[%s1] sm:$0xff]
    %v53 = vld [vmem:[%s1 + $0x8] sm:$0xff]
    %v54 = vld [vmem:[%s3] sm:$0xff]
    %v55 = vld [vmem:[%s3 + $0x8] sm:$0xff]
    %v56 = vld [vmem:[%s3 + $0x10] sm:$0xff]
    %v57 = vld [vmem:[%s3 + $0x18] sm:$0xff]
    %v58 = vld [vmem:[%s3 + $0x20] sm:$0xff]
    %v59 = vld [vmem:[%s3 + $0x28] sm:$0xff]
    %v60 = vld [vmem:[%s3 + $0x30] sm:$0xff]
    %v61 = vld [vmem:[%s3 + $0x38] sm:$0xff]
    %v62 = vld [vmem:[%s4] sm:$0x1]
    %v64 = vlaneseq
    %v65 = vshrl.u32 %v64, 7
    %v66 = vsub.s32 0, %v65
    %v67 = vrot.slane %v62, %v66
    %vm69 = vcmask 523264
    %v71 = vsel %vm69, %v52, 0
    %v74 = vsel %vm69, %v53, 0
    %76 = vmatprep.subr.mxu0 0.0
    %77 = vmatpush1.msra.mxu0 %v54
    %78 = vmatprep.subr.mxu0 0.0
    %79 = vmatpush1.msra.mxu0 %v55
    %80 = vmatprep.subr.mxu0 0.0
    %81 = vmatpush1.msra.mxu0 %v56
    %82 = vmatprep.subr.mxu0 0.0
    %83 = vmatpush1.msra.mxu0 %v57
    %84 = vmatprep.subr.mxu0 0.0
    %85 = vmatpush1.msra.mxu0 %v58
    %86 = vmatprep.subr.mxu0 0.0
    %87 = vmatpush1.msra.mxu0 %v59
    %88 = vmatprep.subr.mxu0 0.0
    %89 = vmatpush1.msra.mxu0 %v60
    %90 = vmatprep.subr.mxu0 0.0
    %91 = vmatpush1.msra.mxu0 %v61
    %92 = vmatprep.subr.mxu0 0.0
    %93 = vmatpush1.msra.mxu0 0.0
    %94 = vmatprep.subr.mxu0 0.0
    %95 = vmatpush1.msra.mxu0 0.0
    %96 = vmatprep.subr.mxu0 0.0
    %97 = vmatpush1.msra.mxu0 0.0
    %98 = vmatprep.subr.mxu0 0.0
    %99 = vmatpush1.msra.mxu0 0.0
    %100 = vmatprep.subr.mxu0 0.0
    %101 = vmatpush1.msra.mxu0 0.0
    %102 = vmatprep.subr.mxu0 0.0
    %103 = vmatpush1.msra.mxu0 0.0
    %104 = vmatprep.subr.mxu0 0.0
    %105 = vmatpush1.msra.mxu0 0.0
    %106 = vmatprep.subr.mxu0 0.0
    %107 = vmatpush1.msra.mxu0 0.0
    %108 = vmatprep.subr.mxu0 0.0
    %109 = vmatpush1.msra.mxu0 0.0
    %110 = vmatprep.subr.mxu0 0.0
    %111 = vmatpush1.msra.mxu0 0.0
    %112 = vmatprep.subr.mxu0 0.0
    %113 = vmatpush1.msra.mxu0 0.0
    %114 = vmatprep.subr.mxu0 0.0
    %115 = vmatpush1.msra.mxu0 0.0
    %116 = vmatprep.subr.mxu0 0.0
    %117 = vmatpush1.msra.mxu0 0.0
    %118 = vmatprep.subr.mxu0 0.0
    %119 = vmatpush1.msra.mxu0 0.0
    %120 = vmatprep.subr.mxu0 0.0
    %121 = vmatpush1.msra.mxu0 0.0
    %122 = vmatprep.subr.mxu0 0.0
    %123 = vmatpush1.msra.mxu0 0.0
    %124 = vmatprep.subr.mxu0 0.0
    %125 = vmatpush1.msra.mxu0 0.0
    %126 = vmatprep.subr.mxu0 0.0
    %127 = vmatpush1.msra.mxu0 0.0
    %128 = vmatprep.subr.mxu0 0.0
    %129 = vmatpush1.msra.mxu0 0.0
    %130 = vmatprep.subr.mxu0 0.0
    %131 = vmatpush1.msra.mxu0 0.0
    %132 = vmatprep.subr.mxu0 0.0
    %133 = vmatpush1.msra.mxu0 0.0
    %134 = vmatprep.subr.mxu0 0.0
    %135 = vmatpush1.msra.mxu0 0.0
    %136 = vmatprep.subr.mxu0 0.0
    %137 = vmatpush1.msra.mxu0 0.0
    %138 = vmatprep.subr.mxu0 0.0
    %139 = vmatpush1.msra.mxu0 0.0
    %140 = vmatprep.mubr.f32.mxu0 0.0
    %141 = vmatmul.mubr.f32.gmra.mrb[0].mxu0 %v71
    %v142 = vpop.f32.mrb[0].mxu0
    %v143 = vadd.f32 %v67, %v142
    %v144 = vpop.f32.mrb[0].mxu0
    %145 = vmatprep.mubr.f32.mxu0 0.0
    %146 = vmatmul.mubr.f32.gmra.mrb[0].mxu0 %v74
    %v147 = vpop.f32.mrb[0].mxu0
    %v148 = vadd.f32 %v67, %v147
    %v149 = vpop.f32.mrb[0].mxu0
    %150 = vdwg.mxu0
    %v151 = vmax.f32 %v143, 0.0
    %v152 = vmax.f32 %v148, 0.0
    %v153 = vld [vmem:[%s2] sm:$0xff]
    %v154 = vld [vmem:[%s2 + $0x8] sm:$0xff]
    %v155 = vadd.f32 %v151, %v153
    %v156 = vadd.f32 %v152, %v154
    %vm157 = vcmask 261120
    %158 = vst.msk [vmem:[#allocation2] sm:$0xff] %vm157, %v155
    %159 = vst.msk [vmem:[#allocation2 + $0x8] sm:$0xff] %vm157, %v156
    %v160 = vld [vmem:[%s0] sm:$0xff]
    %v161 = vlaneseq
    %v162 = vand.u32 %v161, 127
    %163 = vset.pattern.permute.xlu0 0
    %164 = vperm.xlu0 %163, %v160
    %v165 = vpop.permute.xlu0 %164
    %vm166 = vcmp.eq.s32.totalorder %v165, %v162
    %v167 = vsel %vm166, 1.0, 0.0
    %v168 = vld [vmem:[%s5] sm:$0xff]
    %v169 = vld [vmem:[%s5 + $0x8] sm:$0xff]
    %v170 = vld [vmem:[%s5 + $0x10] sm:$0xff]
    %v171 = vld [vmem:[%s5 + $0x18] sm:$0xff]
    %v172 = vld [vmem:[%s5 + $0x20] sm:$0xff]
    %v173 = vld [vmem:[%s5 + $0x28] sm:$0xff]
    %v174 = vld [vmem:[%s5 + $0x30] sm:$0xff]
    %v175 = vld [vmem:[%s5 + $0x38] sm:$0xff]
    %v177 = vsel %vm69, %v167, 0
    %179 = vmatprep.subr.mxu0 0.0
    %180 = vmatpush1.msra.mxu0 %v168
    %181 = vmatprep.subr.mxu0 0.0
    %182 = vmatpush1.msra.mxu0 %v169
    %183 = vmatprep.subr.mxu0 0.0
    %184 = vmatpush1.msra.mxu0 %v170
    %185 = vmatprep.subr.mxu0 0.0
    %186 = vmatpush1.msra.mxu0 %v171
    %187 = vmatprep.subr.mxu0 0.0
    %188 = vmatpush1.msra.mxu0 %v172
    %189 = vmatprep.subr.mxu0 0.0
    %190 = vmatpush1.msra.mxu0 %v173
    %191 = vmatprep.subr.mxu0 0.0
    %192 = vmatpush1.msra.mxu0 %v174
    %193 = vmatprep.subr.mxu0 0.0
    %194 = vmatpush1.msra.mxu0 %v175
    %195 = vmatprep.subr.mxu0 0.0
    %196 = vmatpush1.msra.mxu0 0.0
    %197 = vmatprep.subr.mxu0 0.0
    %198 = vmatpush1.msra.mxu0 0.0
    %199 = vmatprep.subr.mxu0 0.0
    %200 = vmatpush1.msra.mxu0 0.0
    %201 = vmatprep.subr.mxu0 0.0
    %202 = vmatpush1.msra.mxu0 0.0
    %203 = vmatprep.subr.mxu0 0.0
    %204 = vmatpush1.msra.mxu0 0.0
    %205 = vmatprep.subr.mxu0 0.0
    %206 = vmatpush1.msra.mxu0 0.0
    %207 = vmatprep.subr.mxu0 0.0
    %208 = vmatpush1.msra.mxu0 0.0
    %209 = vmatprep.subr.mxu0 0.0
    %210 = vmatpush1.msra.mxu0 0.0
    %211 = vmatprep.subr.mxu0 0.0
    %212 = vmatpush1.msra.mxu0 0.0
    %213 = vmatprep.subr.mxu0 0.0
    %214 = vmatpush1.msra.mxu0 0.0
    %215 = vmatprep.subr.mxu0 0.0
    %216 = vmatpush1.msra.mxu0 0.0
    %217 = vmatprep.subr.mxu0 0.0
    %218 = vmatpush1.msra.mxu0 0.0
    %219 = vmatprep.subr.mxu0 0.0
    %220 = vmatpush1.msra.mxu0 0.0
    %221 = vmatprep.subr.mxu0 0.0
    %222 = vmatpush1.msra.mxu0 0.0
    %223 = vmatprep.subr.mxu0 0.0
    %224 = vmatpush1.msra.mxu0 0.0
    %225 = vmatprep.subr.mxu0 0.0
    %226 = vmatpush1.msra.mxu0 0.0
    %227 = vmatprep.subr.mxu0 0.0
    %228 = vmatpush1.msra.mxu0 0.0
    %229 = vmatprep.subr.mxu0 0.0
    %230 = vmatpush1.msra.mxu0 0.0
    %231 = vmatprep.subr.mxu0 0.0
    %232 = vmatpush1.msra.mxu0 0.0
    %233 = vmatprep.subr.mxu0 0.0
    %234 = vmatpush1.msra.mxu0 0.0
    %235 = vmatprep.subr.mxu0 0.0
    %236 = vmatpush1.msra.mxu0 0.0
    %237 = vmatprep.subr.mxu0 0.0
    %238 = vmatpush1.msra.mxu0 0.0
    %239 = vmatprep.subr.mxu0 0.0
    %240 = vmatpush1.msra.mxu0 0.0
    %241 = vmatprep.subr.mxu0 0.0
    %242 = vmatpush1.msra.mxu0 0.0
    %243 = vmatprep.mubr.f32.mxu0 0.0
    %244 = vmatmul.mubr.f32.gmra.mrb[0].mxu0 %v177
    %v245 = vpop.f32.mrb[0].mxu0
    %v246 = vadd.f32 0.0, %v245
    %v247 = vpop.f32.mrb[0].mxu0
    %248 = vdwg.mxu0
    %v249 = vld [vmem:[%s6] sm:$0xff]
    %v250 = vld [vmem:[%s6 + $0x8] sm:$0xff]
    %v251 = vld [vmem:[%s6 + $0x10] sm:$0xff]
    %v252 = vld [vmem:[%s6 + $0x18] sm:$0xff]
    %v253 = vld [vmem:[%s6 + $0x20] sm:$0xff]
    %v254 = vld [vmem:[%s6 + $0x28] sm:$0xff]
    %v255 = vld [vmem:[%s7] sm:$0x1]
    %v257 = vlaneseq
    %v258 = vshrl.u32 %v257, 7
    %v259 = vsub.s32 0, %v258
    %v260 = vrot.slane %v255, %v259
    %vm262 = vcmask 392192
    %v264 = vsel %vm262, %v246, 0
    %266 = vmatprep.subr.mxu0 0.0
    %267 = vmatpush1.msra.mxu0 %v249
    %268 = vmatprep.subr.mxu0 0.0
    %269 = vmatpush1.msra.mxu0 %v250
    %270 = vmatprep.subr.mxu0 0.0
    %271 = vmatpush1.msra.mxu0 %v251
    %272 = vmatprep.subr.mxu0 0.0
    %273 = vmatpush1.msra.mxu0 %v252
    %274 = vmatprep.subr.mxu0 0.0
    %275 = vmatpush1.msra.mxu0 %v253
    %276 = vmatprep.subr.mxu0 0.0
    %277 = vmatpush1.msra.mxu0 %v254
    %278 = vmatprep.subr.mxu0 0.0
    %279 = vmatpush1.msra.mxu0 0.0
    %280 = vmatprep.subr.mxu0 0.0
    %281 = vmatpush1.msra.mxu0 0.0
    %282 = vmatprep.subr.mxu0 0.0
    %283 = vmatpush1.msra.mxu0 0.0
    %284 = vmatprep.subr.mxu0 0.0
    %285 = vmatpush1.msra.mxu0 0.0
    %286 = vmatprep.subr.mxu0 0.0
    %287 = vmatpush1.msra.mxu0 0.0
    %288 = vmatprep.subr.mxu0 0.0
    %289 = vmatpush1.msra.mxu0 0.0
    %290 = vmatprep.subr.mxu0 0.0
    %291 = vmatpush1.msra.mxu0 0.0
    %292 = vmatprep.subr.mxu0 0.0
    %293 = vmatpush1.msra.mxu0 0.0
    %294 = vmatprep.subr.mxu0 0.0
    %295 = vmatpush1.msra.mxu0 0.0
    %296 = vmatprep.subr.mxu0 0.0
    %297 = vmatpush1.msra.mxu0 0.0
    %298 = vmatprep.subr.mxu0 0.0
    %299 = vmatpush1.msra.mxu0 0.0
    %300 = vmatprep.subr.mxu0 0.0
    %301 = vmatpush1.msra.mxu0 0.0
    %302 = vmatprep.subr.mxu0 0.0
    %303 = vmatpush1.msra.mxu0 0.0
    %304 = vmatprep.subr.mxu0 0.0
    %305 = vmatpush1.msra.mxu0 0.0
    %306 = vmatprep.subr.mxu0 0.0
    %307 = vmatpush1.msra.mxu0 0.0
    %308 = vmatprep.subr.mxu0 0.0
    %309 = vmatpush1.msra.mxu0 0.0
    %310 = vmatprep.subr.mxu0 0.0
    %311 = vmatpush1.msra.mxu0 0.0
    %312 = vmatprep.subr.mxu0 0.0
    %313 = vmatpush1.msra.mxu0 0.0
    %314 = vmatprep.subr.mxu0 0.0
    %315 = vmatpush1.msra.mxu0 0.0
    %316 = vmatprep.subr.mxu0 0.0
    %317 = vmatpush1.msra.mxu0 0.0
    %318 = vmatprep.subr.mxu0 0.0
    %319 = vmatpush1.msra.mxu0 0.0
    %320 = vmatprep.subr.mxu0 0.0
    %321 = vmatpush1.msra.mxu0 0.0
    %322 = vmatprep.subr.mxu0 0.0
    %323 = vmatpush1.msra.mxu0 0.0
    %324 = vmatprep.subr.mxu0 0.0
    %325 = vmatpush1.msra.mxu0 0.0
    %326 = vmatprep.subr.mxu0 0.0
    %327 = vmatpush1.msra.mxu0 0.0
    %328 = vmatprep.subr.mxu0 0.0
    %329 = vmatpush1.msra.mxu0 0.0
    %330 = vmatprep.mubr.f32.mxu0 0.0
    %331 = vmatmul.mubr.f32.gmra.mrb[0].mxu0 %v264
    %v332 = vpop.f32.mrb[0].mxu0
    %v333 = vadd.f32 %v260, %v332
    %v334 = vpop.f32.mrb[0].mxu0
    %335 = vdwg.mxu0
    %v336 = vld [vmem:[%s8] sm:$0xff]
    %v337 = vld [vmem:[%s8 + $0x8] sm:$0xff]
    %v338 = vld [vmem:[%s8 + $0x10] sm:$0xff]
    %v339 = vld [vmem:[%s8 + $0x18] sm:$0xff]
    %v340 = vld [vmem:[%s8 + $0x20] sm:$0xff]
    %v341 = vld [vmem:[%s8 + $0x28] sm:$0xff]
    %v342 = vld [vmem:[%s8 + $0x30] sm:$0xff]
    %v343 = vld [vmem:[%s8 + $0x38] sm:$0xff]
    %v344 = vld [vmem:[%s8 + $0x40] sm:$0xff]
    %v345 = vld [vmem:[%s8 + $0x48] sm:$0xff]
    %v346 = vld [vmem:[%s8 + $0x50] sm:$0xff]
    %v347 = vld [vmem:[%s8 + $0x58] sm:$0xff]
    %v348 = vld [vmem:[%s8 + $0x60] sm:$0xff]
    %v349 = vld [vmem:[%s8 + $0x68] sm:$0xff]
    %v350 = vld [vmem:[%s8 + $0x70] sm:$0xff]
    %v351 = vld [vmem:[%s8 + $0x78] sm:$0xff]
    %v352 = vld [vmem:[%s9] sm:$0xff]
    %v353 = vld [vmem:[%s9 + $0x8] sm:$0xff]
    %v354 = vld [vmem:[%s9 + $0x10] sm:$0xff]
    %v355 = vld [vmem:[%s9 + $0x18] sm:$0xff]
    %v356 = vld [vmem:[%s9 + $0x20] sm:$0xff]
    %v357 = vld [vmem:[%s9 + $0x28] sm:$0xff]
    %v358 = vld [vmem:[%s9 + $0x30] sm:$0xff]
    %v359 = vld [vmem:[%s9 + $0x38] sm:$0xff]
    %v360 = vld [vmem:[%s10] sm:$0x1]
    %v361 = vld [vmem:[%s10 + $0x1] sm:$0x1]
    %v362 = vld [vmem:[%s10 + $0x2] sm:$0x1]
    %v363 = vld [vmem:[%s10 + $0x3] sm:$0x1]
    %v365 = vlaneseq
    %v366 = vshrl.u32 %v365, 7
    %v367 = vsub.s32 0, %v366
    %v368 = vrot.slane %v360, %v367
    %v371 = vsel %vm157, %v333, 0
    %373 = vmatprep.subr.mxu0 0.0
    %374 = vmatpush1.msra.mxu0 %v336
    %375 = vmatprep.subr.mxu0 0.0
    %376 = vmatpush1.msra.mxu0 %v337
    %377 = vmatprep.subr.mxu0 0.0
    %378 = vmatpush1.msra.mxu0 %v338
    %379 = vmatprep.subr.mxu0 0.0
    %380 = vmatpush1.msra.mxu0 %v339
    %381 = vmatprep.subr.mxu0 0.0
    %382 = vmatpush1.msra.mxu0 0.0
    %383 = vmatprep.subr.mxu0 0.0
    %384 = vmatpush1.msra.mxu0 0.0
    %385 = vmatprep.subr.mxu0 0.0
    %386 = vmatpush1.msra.mxu0 0.0
    %387 = vmatprep.subr.mxu0 0.0
    %388 = vmatpush1.msra.mxu0 0.0
    %389 = vmatprep.subr.mxu0 0.0
    %390 = vmatpush1.msra.mxu0 0.0
    %391 = vmatprep.subr.mxu0 0.0
    %392 = vmatpush1.msra.mxu0 0.0
    %393 = vmatprep.subr.mxu0 0.0
    %394 = vmatpush1.msra.mxu0 0.0
    %395 = vmatprep.subr.mxu0 0.0
    %396 = vmatpush1.msra.mxu0 0.0
    %397 = vmatprep.subr.mxu0 0.0
    %398 = vmatpush1.msra.mxu0 0.0
    %399 = vmatprep.subr.mxu0 0.0
    %400 = vmatpush1.msra.mxu0 0.0
    %401 = vmatprep.subr.mxu0 0.0
    %402 = vmatpush1.msra.mxu0 0.0
    %403 = vmatprep.subr.mxu0 0.0
    %404 = vmatpush1.msra.mxu0 0.0
    %405 = vmatprep.subr.mxu0 0.0
    %406 = vmatpush1.msra.mxu0 0.0
    %407 = vmatprep.subr.mxu0 0.0
    %408 = vmatpush1.msra.mxu0 0.0
    %409 = vmatprep.subr.mxu0 0.0
    %410 = vmatpush1.msra.mxu0 0.0
    %411 = vmatprep.subr.mxu0 0.0
    %412 = vmatpush1.msra.mxu0 0.0
    %413 = vmatprep.subr.mxu0 0.0
    %414 = vmatpush1.msra.mxu0 0.0
    %415 = vmatprep.subr.mxu0 0.0
    %416 = vmatpush1.msra.mxu0 0.0
    %417 = vmatprep.subr.mxu0 0.0
    %418 = vmatpush1.msra.mxu0 0.0
    %419 = vmatprep.subr.mxu0 0.0
    %420 = vmatpush1.msra.mxu0 0.0
    %421 = vmatprep.subr.mxu0 0.0
    %422 = vmatpush1.msra.mxu0 0.0
    %423 = vmatprep.subr.mxu0 0.0
    %424 = vmatpush1.msra.mxu0 0.0
    %425 = vmatprep.subr.mxu0 0.0
    %426 = vmatpush1.msra.mxu0 0.0
    %427 = vmatprep.subr.mxu0 0.0
    %428 = vmatpush1.msra.mxu0 0.0
    %429 = vmatprep.subr.mxu0 0.0
    %430 = vmatpush1.msra.mxu0 0.0
    %431 = vmatprep.subr.mxu0 0.0
    %432 = vmatpush1.msra.mxu0 0.0
    %433 = vmatprep.subr.mxu0 0.0
    %434 = vmatpush1.msra.mxu0 0.0
    %435 = vmatprep.subr.mxu0 0.0
    %436 = vmatpush1.msra.mxu0 0.0
    %437 = vmatprep.mubr.f32.mxu0 0.0
    %438 = vmatmul.mubr.f32.gmra.mrb[0].mxu0 %v371
    %v439 = vpop.f32.mrb[0].mxu0
    %v440 = vadd.f32 %v368, %v439
    %v441 = vpop.f32.mrb[0].mxu0
    %442 = vdwg.mxu0
    %v444 = vlaneseq
    %v445 = vshrl.u32 %v444, 7
    %v446 = vsub.s32 0, %v445
    %v447 = vrot.slane %v361, %v446
    %449 = vmatprep.subr.mxu0 0.0
    %450 = vmatpush1.msra.mxu0 %v340
    %451 = vmatprep.subr.mxu0 0.0
    %452 = vmatpush1.msra.mxu0 %v341
    %453 = vmatprep.subr.mxu0 0.0
    %454 = vmatpush1.msra.mxu0 %v342
    %455 = vmatprep.subr.mxu0 0.0
    %456 = vmatpush1.msra.mxu0 %v343
    %457 = vmatprep.subr.mxu0 0.0
    %458 = vmatpush1.msra.mxu0 0.0
    %459 = vmatprep.subr.mxu0 0.0
    %460 = vmatpush1.msra.mxu0 0.0
    %461 = vmatprep.subr.mxu0 0.0
    %462 = vmatpush1.msra.mxu0 0.0
    %463 = vmatprep.subr.mxu0 0.0
    %464 = vmatpush1.msra.mxu0 0.0
    %465 = vmatprep.subr.mxu0 0.0
    %466 = vmatpush1.msra.mxu0 0.0
    %467 = vmatprep.subr.mxu0 0.0
    %468 = vmatpush1.msra.mxu0 0.0
    %469 = vmatprep.subr.mxu0 0.0
    %470 = vmatpush1.msra.mxu0 0.0
    %471 = vmatprep.subr.mxu0 0.0
    %472 = vmatpush1.msra.mxu0 0.0
    %473 = vmatprep.subr.mxu0 0.0
    %474 = vmatpush1.msra.mxu0 0.0
    %475 = vmatprep.subr.mxu0 0.0
    %476 = vmatpush1.msra.mxu0 0.0
    %477 = vmatprep.subr.mxu0 0.0
    %478 = vmatpush1.msra.mxu0 0.0
    %479 = vmatprep.subr.mxu0 0.0
    %480 = vmatpush1.msra.mxu0 0.0
    %481 = vmatprep.subr.mxu0 0.0
    %482 = vmatpush1.msra.mxu0 0.0
    %483 = vmatprep.subr.mxu0 0.0
    %484 = vmatpush1.msra.mxu0 0.0
    %485 = vmatprep.subr.mxu0 0.0
    %486 = vmatpush1.msra.mxu0 0.0
    %487 = vmatprep.subr.mxu0 0.0
    %488 = vmatpush1.msra.mxu0 0.0
    %489 = vmatprep.subr.mxu0 0.0
    %490 = vmatpush1.msra.mxu0 0.0
    %491 = vmatprep.subr.mxu0 0.0
    %492 = vmatpush1.msra.mxu0 0.0
    %493 = vmatprep.subr.mxu0 0.0
    %494 = vmatpush1.msra.mxu0 0.0
    %495 = vmatprep.subr.mxu0 0.0
    %496 = vmatpush1.msra.mxu0 0.0
    %497 = vmatprep.subr.mxu0 0.0
    %498 = vmatpush1.msra.mxu0 0.0
    %499 = vmatprep.subr.mxu0 0.0
    %500 = vmatpush1.msra.mxu0 0.0
    %501 = vmatprep.subr.mxu0 0.0
    %502 = vmatpush1.msra.mxu0 0.0
    %503 = vmatprep.subr.mxu0 0.0
    %504 = vmatpush1.msra.mxu0 0.0
    %505 = vmatprep.subr.mxu0 0.0
    %506 = vmatpush1.msra.mxu0 0.0
    %507 = vmatprep.subr.mxu0 0.0
    %508 = vmatpush1.msra.mxu0 0.0
    %509 = vmatprep.subr.mxu0 0.0
    %510 = vmatpush1.msra.mxu0 0.0
    %511 = vmatprep.subr.mxu0 0.0
    %512 = vmatpush1.msra.mxu0 0.0
    %513 = vmatprep.mubr.f32.mxu0 0.0
    %514 = vmatmul.mubr.f32.gmra.mrb[0].mxu0 %v371
    %v515 = vpop.f32.mrb[0].mxu0
    %v516 = vadd.f32 %v447, %v515
    %v517 = vpop.f32.mrb[0].mxu0
    %518 = vdwg.mxu0
    %v520 = vlaneseq
    %v521 = vshrl.u32 %v520, 7
    %v522 = vsub.s32 0, %v521
    %v523 = vrot.slane %v362, %v522
    %525 = vmatprep.subr.mxu0 0.0
    %526 = vmatpush1.msra.mxu0 %v344
    %527 = vmatprep.subr.mxu0 0.0
    %528 = vmatpush1.msra.mxu0 %v345
    %529 = vmatprep.subr.mxu0 0.0
    %530 = vmatpush1.msra.mxu0 %v346
    %531 = vmatprep.subr.mxu0 0.0
    %532 = vmatpush1.msra.mxu0 %v347
    %533 = vmatprep.subr.mxu0 0.0
    %534 = vmatpush1.msra.mxu0 0.0
    %535 = vmatprep.subr.mxu0 0.0
    %536 = vmatpush1.msra.mxu0 0.0
    %537 = vmatprep.subr.mxu0 0.0
    %538 = vmatpush1.msra.mxu0 0.0
    %539 = vmatprep.subr.mxu0 0.0
    %540 = vmatpush1.msra.mxu0 0.0
    %541 = vmatprep.subr.mxu0 0.0
    %542 = vmatpush1.msra.mxu0 0.0
    %543 = vmatprep.subr.mxu0 0.0
    %544 = vmatpush1.msra.mxu0 0.0
    %545 = vmatprep.subr.mxu0 0.0
    %546 = vmatpush1.msra.mxu0 0.0
    %547 = vmatprep.subr.mxu0 0.0
    %548 = vmatpush1.msra.mxu0 0.0
    %549 = vmatprep.subr.mxu0 0.0
    %550 = vmatpush1.msra.mxu0 0.0
    %551 = vmatprep.subr.mxu0 0.0
    %552 = vmatpush1.msra.mxu0 0.0
    %553 = vmatprep.subr.mxu0 0.0
    %554 = vmatpush1.msra.mxu0 0.0
    %555 = vmatprep.subr.mxu0 0.0
    %556 = vmatpush1.msra.mxu0 0.0
    %557 = vmatprep.subr.mxu0 0.0
    %558 = vmatpush1.msra.mxu0 0.0
    %559 = vmatprep.subr.mxu0 0.0
    %560 = vmatpush1.msra.mxu0 0.0
    %561 = vmatprep.subr.mxu0 0.0
    %562 = vmatpush1.msra.mxu0 0.0
    %563 = vmatprep.subr.mxu0 0.0
    %564 = vmatpush1.msra.mxu0 0.0
    %565 = vmatprep.subr.mxu0 0.0
    %566 = vmatpush1.msra.mxu0 0.0
    %567 = vmatprep.subr.mxu0 0.0
    %568 = vmatpush1.msra.mxu0 0.0
    %569 = vmatprep.subr.mxu0 0.0
    %570 = vmatpush1.msra.mxu0 0.0
    %571 = vmatprep.subr.mxu0 0.0
    %572 = vmatpush1.msra.mxu0 0.0
    %573 = vmatprep.subr.mxu0 0.0
    %574 = vmatpush1.msra.mxu0 0.0
    %575 = vmatprep.subr.mxu0 0.0
    %576 = vmatpush1.msra.mxu0 0.0
    %577 = vmatprep.subr.mxu0 0.0
    %578 = vmatpush1.msra.mxu0 0.0
    %579 = vmatprep.subr.mxu0 0.0
    %580 = vmatpush1.msra.mxu0 0.0
    %581 = vmatprep.subr.mxu0 0.0
    %582 = vmatpush1.msra.mxu0 0.0
    %583 = vmatprep.subr.mxu0 0.0
    %584 = vmatpush1.msra.mxu0 0.0
    %585 = vmatprep.subr.mxu0 0.0
    %586 = vmatpush1.msra.mxu0 0.0
    %587 = vmatprep.subr.mxu0 0.0
    %588 = vmatpush1.msra.mxu0 0.0
    %589 = vmatprep.mubr.f32.mxu0 0.0
    %590 = vmatmul.mubr.f32.gmra.mrb[0].mxu0 %v371
    %v591 = vpop.f32.mrb[0].mxu0
    %v592 = vadd.f32 %v523, %v591
    %v593 = vpop.f32.mrb[0].mxu0
    %594 = vdwg.mxu0
    %v596 = vlaneseq
    %v597 = vshrl.u32 %v596, 7
    %v598 = vsub.s32 0, %v597
    %v599 = vrot.slane %v363, %v598
    %601 = vmatprep.subr.mxu0 0.0
    %602 = vmatpush1.msra.mxu0 %v348
    %603 = vmatprep.subr.mxu0 0.0
    %604 = vmatpush1.msra.mxu0 %v349
    %605 = vmatprep.subr.mxu0 0.0
    %606 = vmatpush1.msra.mxu0 %v350
    %607 = vmatprep.subr.mxu0 0.0
    %608 = vmatpush1.msra.mxu0 %v351
    %609 = vmatprep.subr.mxu0 0.0
    %610 = vmatpush1.msra.mxu0 0.0
    %611 = vmatprep.subr.mxu0 0.0
    %612 = vmatpush1.msra.mxu0 0.0
    %613 = vmatprep.subr.mxu0 0.0
    %614 = vmatpush1.msra.mxu0 0.0
    %615 = vmatprep.subr.mxu0 0.0
    %616 = vmatpush1.msra.mxu0 0.0
    %617 = vmatprep.subr.mxu0 0.0
    %618 = vmatpush1.msra.mxu0 0.0
    %619 = vmatprep.subr.mxu0 0.0
    %620 = vmatpush1.msra.mxu0 0.0
    %621 = vmatprep.subr.mxu0 0.0
    %622 = vmatpush1.msra.mxu0 0.0
    %623 = vmatprep.subr.mxu0 0.0
    %624 = vmatpush1.msra.mxu0 0.0
    %625 = vmatprep.subr.mxu0 0.0
    %626 = vmatpush1.msra.mxu0 0.0
    %627 = vmatprep.subr.mxu0 0.0
    %628 = vmatpush1.msra.mxu0 0.0
    %629 = vmatprep.subr.mxu0 0.0
    %630 = vmatpush1.msra.mxu0 0.0
    %631 = vmatprep.subr.mxu0 0.0
    %632 = vmatpush1.msra.mxu0 0.0
    %633 = vmatprep.subr.mxu0 0.0
    %634 = vmatpush1.msra.mxu0 0.0
    %635 = vmatprep.subr.mxu0 0.0
    %636 = vmatpush1.msra.mxu0 0.0
    %637 = vmatprep.subr.mxu0 0.0
    %638 = vmatpush1.msra.mxu0 0.0
    %639 = vmatprep.subr.mxu0 0.0
    %640 = vmatpush1.msra.mxu0 0.0
    %641 = vmatprep.subr.mxu0 0.0
    %642 = vmatpush1.msra.mxu0 0.0
    %643 = vmatprep.subr.mxu0 0.0
    %644 = vmatpush1.msra.mxu0 0.0
    %645 = vmatprep.subr.mxu0 0.0
    %646 = vmatpush1.msra.mxu0 0.0
    %647 = vmatprep.subr.mxu0 0.0
    %648 = vmatpush1.msra.mxu0 0.0
    %649 = vmatprep.subr.mxu0 0.0
    %650 = vmatpush1.msra.mxu0 0.0
    %651 = vmatprep.subr.mxu0 0.0
    %652 = vmatpush1.msra.mxu0 0.0
    %653 = vmatprep.subr.mxu0 0.0
    %654 = vmatpush1.msra.mxu0 0.0
    %655 = vmatprep.subr.mxu0 0.0
    %656 = vmatpush1.msra.mxu0 0.0
    %657 = vmatprep.subr.mxu0 0.0
    %658 = vmatpush1.msra.mxu0 0.0
    %659 = vmatprep.subr.mxu0 0.0
    %660 = vmatpush1.msra.mxu0 0.0
    %661 = vmatprep.subr.mxu0 0.0
    %662 = vmatpush1.msra.mxu0 0.0
    %663 = vmatprep.subr.mxu0 0.0
    %664 = vmatpush1.msra.mxu0 0.0
    %665 = vmatprep.mubr.f32.mxu0 0.0
    %666 = vmatmul.mubr.f32.gmra.mrb[0].mxu0 %v371
    %v667 = vpop.f32.mrb[0].mxu0
    %v668 = vadd.f32 %v599, %v667
    %v669 = vpop.f32.mrb[0].mxu0
    %670 = vdwg.mxu0
    %vm671 = vcmask 130048
    %v673 = vsel %vm671, 0.0, 0
    %675 = vmatprep.subr.mxu0 0.0
    %676 = vmatpush1.msra.mxu0 %v352
    %677 = vmatprep.subr.mxu0 0.0
    %678 = vmatpush1.msra.mxu0 %v353
    %679 = vmatprep.subr.mxu0 0.0
    %680 = vmatpush1.msra.mxu0 0.0
    %681 = vmatprep.subr.mxu0 0.0
    %682 = vmatpush1.msra.mxu0 0.0
    %683 = vmatprep.subr.mxu0 0.0
    %684 = vmatpush1.msra.mxu0 0.0
    %685 = vmatprep.subr.mxu0 0.0
    %686 = vmatpush1.msra.mxu0 0.0
    %687 = vmatprep.subr.mxu0 0.0
    %688 = vmatpush1.msra.mxu0 0.0
    %689 = vmatprep.subr.mxu0 0.0
    %690 = vmatpush1.msra.mxu0 0.0
    %691 = vmatprep.subr.mxu0 0.0
    %692 = vmatpush1.msra.mxu0 0.0
    %693 = vmatprep.subr.mxu0 0.0
    %694 = vmatpush1.msra.mxu0 0.0
    %695 = vmatprep.subr.mxu0 0.0
    %696 = vmatpush1.msra.mxu0 0.0
    %697 = vmatprep.subr.mxu0 0.0
    %698 = vmatpush1.msra.mxu0 0.0
    %699 = vmatprep.subr.mxu0 0.0
    %700 = vmatpush1.msra.mxu0 0.0
    %701 = vmatprep.subr.mxu0 0.0
    %702 = vmatpush1.msra.mxu0 0.0
    %703 = vmatprep.subr.mxu0 0.0
    %704 = vmatpush1.msra.mxu0 0.0
    %705 = vmatprep.subr.mxu0 0.0
    %706 = vmatpush1.msra.mxu0 0.0
    %707 = vmatprep.subr.mxu0 0.0
    %708 = vmatpush1.msra.mxu0 0.0
    %709 = vmatprep.subr.mxu0 0.0
    %710 = vmatpush1.msra.mxu0 0.0
    %711 = vmatprep.subr.mxu0 0.0
    %712 = vmatpush1.msra.mxu0 0.0
    %713 = vmatprep.subr.mxu0 0.0
    %714 = vmatpush1.msra.mxu0 0.0
    %715 = vmatprep.subr.mxu0 0.0
    %716 = vmatpush1.msra.mxu0 0.0
    %717 = vmatprep.subr.mxu0 0.0
    %718 = vmatpush1.msra.mxu0 0.0
    %719 = vmatprep.subr.mxu0 0.0
    %720 = vmatpush1.msra.mxu0 0.0
    %721 = vmatprep.subr.mxu0 0.0
    %722 = vmatpush1.msra.mxu0 0.0
    %723 = vmatprep.subr.mxu0 0.0
    %724 = vmatpush1.msra.mxu0 0.0
    %725 = vmatprep.subr.mxu0 0.0
    %726 = vmatpush1.msra.mxu0 0.0
    %727 = vmatprep.subr.mxu0 0.0
    %728 = vmatpush1.msra.mxu0 0.0
    %729 = vmatprep.subr.mxu0 0.0
    %730 = vmatpush1.msra.mxu0 0.0
    %731 = vmatprep.subr.mxu0 0.0
    %732 = vmatpush1.msra.mxu0 0.0
    %733 = vmatprep.subr.mxu0 0.0
    %734 = vmatpush1.msra.mxu0 0.0
    %735 = vmatprep.subr.mxu0 0.0
    %736 = vmatpush1.msra.mxu0 0.0
    %737 = vmatprep.subr.mxu0 0.0
    %738 = vmatpush1.msra.mxu0 0.0
    %739 = vmatprep.mubr.f32.mxu0 0.0
    %740 = vmatmul.mubr.f32.gmra.mrb[0].mxu0 %v673
    %v741 = vpop.f32.mrb[0].mxu0
    %v742 = vadd.f32 0.0, %v741
    %v743 = vpop.f32.mrb[0].mxu0
    %744 = vdwg.mxu0
    %v745 = vadd.f32 %v440, %v742
    %v746 = vsub.f32 0.0, %v745
    %v747 = vmul.f32 %v746, 1.442695
    %v748 = vpow.pop %v747
    %v749 = vadd.f32 %v748, 1.0
    %v750 = vrcp.pop %v749
    %v751 = vmul.f32 1.0, %v750
    %752 = vmatprep.subr.mxu0 0.0
    %753 = vmatpush1.msra.mxu0 %v354
    %754 = vmatprep.subr.mxu0 0.0
    %755 = vmatpush1.msra.mxu0 %v355
    %756 = vmatprep.subr.mxu0 0.0
    %757 = vmatpush1.msra.mxu0 0.0
    %758 = vmatprep.subr.mxu0 0.0
    %759 = vmatpush1.msra.mxu0 0.0
    %760 = vmatprep.subr.mxu0 0.0
    %761 = vmatpush1.msra.mxu0 0.0
    %762 = vmatprep.subr.mxu0 0.0
    %763 = vmatpush1.msra.mxu0 0.0
    %764 = vmatprep.subr.mxu0 0.0
    %765 = vmatpush1.msra.mxu0 0.0
    %766 = vmatprep.subr.mxu0 0.0
    %767 = vmatpush1.msra.mxu0 0.0
    %768 = vmatprep.subr.mxu0 0.0
    %769 = vmatpush1.msra.mxu0 0.0
    %770 = vmatprep.subr.mxu0 0.0
    %771 = vmatpush1.msra.mxu0 0.0
    %772 = vmatprep.subr.mxu0 0.0
    %773 = vmatpush1.msra.mxu0 0.0
    %774 = vmatprep.subr.mxu0 0.0
    %775 = vmatpush1.msra.mxu0 0.0
    %776 = vmatprep.subr.mxu0 0.0
    %777 = vmatpush1.msra.mxu0 0.0
    %778 = vmatprep.subr.mxu0 0.0
    %779 = vmatpush1.msra.mxu0 0.0
    %780 = vmatprep.subr.mxu0 0.0
    %781 = vmatpush1.msra.mxu0 0.0
    %782 = vmatprep.subr.mxu0 0.0
    %783 = vmatpush1.msra.mxu0 0.0
    %784 = vmatprep.subr.mxu0 0.0
    %785 = vmatpush1.msra.mxu0 0.0
    %786 = vmatprep.subr.mxu0 0.0
    %787 = vmatpush1.msra.mxu0 0.0
    %788 = vmatprep.subr.mxu0 0.0
    %789 = vmatpush1.msra.mxu0 0.0
    %790 = vmatprep.subr.mxu0 0.0
    %791 = vmatpush1.msra.mxu0 0.0
    %792 = vmatprep.subr.mxu0 0.0
    %793 = vmatpush1.msra.mxu0 0.0
    %794 = vmatprep.subr.mxu0 0.0
    %795 = vmatpush1.msra.mxu0 0.0
    %796 = vmatprep.subr.mxu0 0.0
    %797 = vmatpush1.msra.mxu0 0.0
    %798 = vmatprep.subr.mxu0 0.0
    %799 = vmatpush1.msra.mxu0 0.0
    %800 = vmatprep.subr.mxu0 0.0
    %801 = vmatpush1.msra.mxu0 0.0
    %802 = vmatprep.subr.mxu0 0.0
    %803 = vmatpush1.msra.mxu0 0.0
    %804 = vmatprep.subr.mxu0 0.0
    %805 = vmatpush1.msra.mxu0 0.0
    %806 = vmatprep.subr.mxu0 0.0
    %807 = vmatpush1.msra.mxu0 0.0
    %808 = vmatprep.subr.mxu0 0.0
    %809 = vmatpush1.msra.mxu0 0.0
    %810 = vmatprep.subr.mxu0 0.0
    %811 = vmatpush1.msra.mxu0 0.0
    %812 = vmatprep.subr.mxu0 0.0
    %813 = vmatpush1.msra.mxu0 0.0
    %814 = vmatprep.subr.mxu0 0.0
    %815 = vmatpush1.msra.mxu0 0.0
    %816 = vmatprep.mubr.f32.mxu0 0.0
    %817 = vmatmul.mubr.f32.gmra.mrb[0].mxu0 %v673
    %v818 = vpop.f32.mrb[0].mxu0
    %v819 = vadd.f32 0.0, %v818
    %v820 = vpop.f32.mrb[0].mxu0
    %821 = vdwg.mxu0
    %v822 = vadd.f32 %v516, %v819
    %v823 = vsub.f32 0.0, %v822
    %v824 = vmul.f32 %v823, 1.442695
    %v825 = vpow.pop %v824
    %v826 = vadd.f32 %v825, 1.0
    %v827 = vrcp.pop %v826
    %v828 = vmul.f32 1.0, %v827
    %829 = vmatprep.subr.mxu0 0.0
    %830 = vmatpush1.msra.mxu0 %v356
    %831 = vmatprep.subr.mxu0 0.0
    %832 = vmatpush1.msra.mxu0 %v357
    %833 = vmatprep.subr.mxu0 0.0
    %834 = vmatpush1.msra.mxu0 0.0
    %835 = vmatprep.subr.mxu0 0.0
    %836 = vmatpush1.msra.mxu0 0.0
    %837 = vmatprep.subr.mxu0 0.0
    %838 = vmatpush1.msra.mxu0 0.0
    %839 = vmatprep.subr.mxu0 0.0
    %840 = vmatpush1.msra.mxu0 0.0
    %841 = vmatprep.subr.mxu0 0.0
    %842 = vmatpush1.msra.mxu0 0.0
    %843 = vmatprep.subr.mxu0 0.0
    %844 = vmatpush1.msra.mxu0 0.0
    %845 = vmatprep.subr.mxu0 0.0
    %846 = vmatpush1.msra.mxu0 0.0
    %847 = vmatprep.subr.mxu0 0.0
    %848 = vmatpush1.msra.mxu0 0.0
    %849 = vmatprep.subr.mxu0 0.0
    %850 = vmatpush1.msra.mxu0 0.0
    %851 = vmatprep.subr.mxu0 0.0
    %852 = vmatpush1.msra.mxu0 0.0
    %853 = vmatprep.subr.mxu0 0.0
    %854 = vmatpush1.msra.mxu0 0.0
    %855 = vmatprep.subr.mxu0 0.0
    %856 = vmatpush1.msra.mxu0 0.0
    %857 = vmatprep.subr.mxu0 0.0
    %858 = vmatpush1.msra.mxu0 0.0
    %859 = vmatprep.subr.mxu0 0.0
    %860 = vmatpush1.msra.mxu0 0.0
    %861 = vmatprep.subr.mxu0 0.0
    %862 = vmatpush1.msra.mxu0 0.0
    %863 = vmatprep.subr.mxu0 0.0
    %864 = vmatpush1.msra.mxu0 0.0
    %865 = vmatprep.subr.mxu0 0.0
    %866 = vmatpush1.msra.mxu0 0.0
    %867 = vmatprep.subr.mxu0 0.0
    %868 = vmatpush1.msra.mxu0 0.0
    %869 = vmatprep.subr.mxu0 0.0
    %870 = vmatpush1.msra.mxu0 0.0
    %871 = vmatprep.subr.mxu0 0.0
    %872 = vmatpush1.msra.mxu0 0.0
    %873 = vmatprep.subr.mxu0 0.0
    %874 = vmatpush1.msra.mxu0 0.0
    %875 = vmatprep.subr.mxu0 0.0
    %876 = vmatpush1.msra.mxu0 0.0
    %877 = vmatprep.subr.mxu0 0.0
    %878 = vmatpush1.msra.mxu0 0.0
    %879 = vmatprep.subr.mxu0 0.0
    %880 = vmatpush1.msra.mxu0 0.0
    %881 = vmatprep.subr.mxu0 0.0
    %882 = vmatpush1.msra.mxu0 0.0
    %883 = vmatprep.subr.mxu0 0.0
    %884 = vmatpush1.msra.mxu0 0.0
    %885 = vmatprep.subr.mxu0 0.0
    %886 = vmatpush1.msra.mxu0 0.0
    %887 = vmatprep.subr.mxu0 0.0
    %888 = vmatpush1.msra.mxu0 0.0
    %889 = vmatprep.subr.mxu0 0.0
    %890 = vmatpush1.msra.mxu0 0.0
    %891 = vmatprep.subr.mxu0 0.0
    %892 = vmatpush1.msra.mxu0 0.0
    %893 = vmatprep.mubr.f32.mxu0 0.0
    %894 = vmatmul.mubr.f32.gmra.mrb[0].mxu0 %v673
    %v895 = vpop.f32.mrb[0].mxu0
    %v896 = vadd.f32 0.0, %v895
    %v897 = vpop.f32.mrb[0].mxu0
    %898 = vdwg.mxu0
    %v899 = vadd.f32 %v592, %v896
    %v900 = vtanh.pop %v899
    %901 = vmatprep.subr.mxu0 0.0
    %902 = vmatpush1.msra.mxu0 %v358
    %903 = vmatprep.subr.mxu0 0.0
    %904 = vmatpush1.msra.mxu0 %v359
    %905 = vmatprep.subr.mxu0 0.0
    %906 = vmatpush1.msra.mxu0 0.0
    %907 = vmatprep.subr.mxu0 0.0
    %908 = vmatpush1.msra.mxu0 0.0
    %909 = vmatprep.subr.mxu0 0.0
    %910 = vmatpush1.msra.mxu0 0.0
    %911 = vmatprep.subr.mxu0 0.0
    %912 = vmatpush1.msra.mxu0 0.0
    %913 = vmatprep.subr.mxu0 0.0
    %914 = vmatpush1.msra.mxu0 0.0
    %915 = vmatprep.subr.mxu0 0.0
    %916 = vmatpush1.msra.mxu0 0.0
    %917 = vmatprep.subr.mxu0 0.0
    %918 = vmatpush1.msra.mxu0 0.0
    %919 = vmatprep.subr.mxu0 0.0
    %920 = vmatpush1.msra.mxu0 0.0
    %921 = vmatprep.subr.mxu0 0.0
    %922 = vmatpush1.msra.mxu0 0.0
    %923 = vmatprep.subr.mxu0 0.0
    %924 = vmatpush1.msra.mxu0 0.0
    %925 = vmatprep.subr.mxu0 0.0
    %926 = vmatpush1.msra.mxu0 0.0
    %927 = vmatprep.subr.mxu0 0.0
    %928 = vmatpush1.msra.mxu0 0.0
    %929 = vmatprep.subr.mxu0 0.0
    %930 = vmatpush1.msra.mxu0 0.0
    %931 = vmatprep.subr.mxu0 0.0
    %932 = vmatpush1.msra.mxu0 0.0
    %933 = vmatprep.subr.mxu0 0.0
    %934 = vmatpush1.msra.mxu0 0.0
    %935 = vmatprep.subr.mxu0 0.0
    %936 = vmatpush1.msra.mxu0 0.0
    %937 = vmatprep.subr.mxu0 0.0
    %938 = vmatpush1.msra.mxu0 0.0
    %939 = vmatprep.subr.mxu0 0.0
    %940 = vmatpush1.msra.mxu0 0.0
    %941 = vmatprep.subr.mxu0 0.0
    %942 = vmatpush1.msra.mxu0 0.0
    %943 = vmatprep.subr.mxu0 0.0
    %944 = vmatpush1.msra.mxu0 0.0
    %945 = vmatprep.subr.mxu0 0.0
    %946 = vmatpush1.msra.mxu0 0.0
    %947 = vmatprep.subr.mxu0 0.0
    %948 = vmatpush1.msra.mxu0 0.0
    %949 = vmatprep.subr.mxu0 0.0
    %950 = vmatpush1.msra.mxu0 0.0
    %951 = vmatprep.subr.mxu0 0.0
    %952 = vmatpush1.msra.mxu0 0.0
    %953 = vmatprep.subr.mxu0 0.0
    %954 = vmatpush1.msra.mxu0 0.0
    %955 = vmatprep.subr.mxu0 0.0
    %956 = vmatpush1.msra.mxu0 0.0
    %957 = vmatprep.subr.mxu0 0.0
    %958 = vmatpush1.msra.mxu0 0.0
    %959 = vmatprep.subr.mxu0 0.0
    %960 = vmatpush1.msra.mxu0 0.0
    %961 = vmatprep.subr.mxu0 0.0
    %962 = vmatpush1.msra.mxu0 0.0
    %963 = vmatprep.subr.mxu0 0.0
    %964 = vmatpush1.msra.mxu0 0.0
    %965 = vmatprep.mubr.f32.mxu0 0.0
    %966 = vmatmul.mubr.f32.gmra.mrb[0].mxu0 %v673
    %v967 = vpop.f32.mrb[0].mxu0
    %v968 = vadd.f32 0.0, %v967
    %v969 = vpop.f32.mrb[0].mxu0
    %970 = vdwg.mxu0
    %v971 = vadd.f32 %v668, %v968
    %v972 = vsub.f32 0.0, %v971
    %v973 = vmul.f32 %v972, 1.442695
    %v974 = vpow.pop %v973
    %v975 = vadd.f32 %v974, 1.0
    %v976 = vrcp.pop %v975
    %v977 = vmul.f32 1.0, %v976
    %v978 = vmul.f32 %v828, 0.0
    %v979 = vmul.f32 %v751, %v900
    %v980 = vadd.f32 %v978, %v979
    %v981 = vtanh.pop %v980
    %v982 = vmul.f32 %v977, %v981
    %v984 = vsel %vm671, %v982, 0
    %986 = vmatprep.subr.mxu0 0.0
    %987 = vmatpush1.msra.mxu0 %v352
    %988 = vmatprep.subr.mxu0 0.0
    %989 = vmatpush1.msra.mxu0 %v353
    %990 = vmatprep.subr.mxu0 0.0
    %991 = vmatpush1.msra.mxu0 0.0
    %992 = vmatprep.subr.mxu0 0.0
    %993 = vmatpush1.msra.mxu0 0.0
    %994 = vmatprep.subr.mxu0 0.0
    %995 = vmatpush1.msra.mxu0 0.0
    %996 = vmatprep.subr.mxu0 0.0
    %997 = vmatpush1.msra.mxu0 0.0
    %998 = vmatprep.subr.mxu0 0.0
    %999 = vmatpush1.msra.mxu0 0.0
    %1000 = vmatprep.subr.mxu0 0.0
    %1001 = vmatpush1.msra.mxu0 0.0
    %1002 = vmatprep.subr.mxu0 0.0
    %1003 = vmatpush1.msra.mxu0 0.0
    %1004 = vmatprep.subr.mxu0 0.0
    %1005 = vmatpush1.msra.mxu0 0.0
    %1006 = vmatprep.subr.mxu0 0.0
    %1007 = vmatpush1.msra.mxu0 0.0
    %1008 = vmatprep.subr.mxu0 0.0
    %1009 = vmatpush1.msra.mxu0 0.0
    %1010 = vmatprep.subr.mxu0 0.0
    %1011 = vmatpush1.msra.mxu0 0.0
    %1012 = vmatprep.subr.mxu0 0.0
    %1013 = vmatpush1.msra.mxu0 0.0
    %1014 = vmatprep.subr.mxu0 0.0
    %1015 = vmatpush1.msra.mxu0 0.0
    %1016 = vmatprep.subr.mxu0 0.0
    %1017 = vmatpush1.msra.mxu0 0.0
    %1018 = vmatprep.subr.mxu0 0.0
    %1019 = vmatpush1.msra.mxu0 0.0
    %1020 = vmatprep.subr.mxu0 0.0
    %1021 = vmatpush1.msra.mxu0 0.0
    %1022 = vmatprep.subr.mxu0 0.0
    %1023 = vmatpush1.msra.mxu0 0.0
    %1024 = vmatprep.subr.mxu0 0.0
    %1025 = vmatpush1.msra.mxu0 0.0
    %1026 = vmatprep.subr.mxu0 0.0
    %1027 = vmatpush1.msra.mxu0 0.0
    %1028 = vmatprep.subr.mxu0 0.0
    %1029 = vmatpush1.msra.mxu0 0.0
    %1030 = vmatprep.subr.mxu0 0.0
    %1031 = vmatpush1.msra.mxu0 0.0
    %1032 = vmatprep.subr.mxu0 0.0
    %1033 = vmatpush1.msra.mxu0 0.0
    %1034 = vmatprep.subr.mxu0 0.0
    %1035 = vmatpush1.msra.mxu0 0.0
    %1036 = vmatprep.subr.mxu0 0.0
    %1037 = vmatpush1.msra.mxu0 0.0
    %1038 = vmatprep.subr.mxu0 0.0
    %1039 = vmatpush1.msra.mxu0 0.0
    %1040 = vmatprep.subr.mxu0 0.0
    %1041 = vmatpush1.msra.mxu0 0.0
    %1042 = vmatprep.subr.mxu0 0.0
    %1043 = vmatpush1.msra.mxu0 0.0
    %1044 = vmatprep.subr.mxu0 0.0
    %1045 = vmatpush1.msra.mxu0 0.0
    %1046 = vmatprep.subr.mxu0 0.0
    %1047 = vmatpush1.msra.mxu0 0.0
    %1048 = vmatprep.subr.mxu0 0.0
    %1049 = vmatpush1.msra.mxu0 0.0
    %1050 = vmatprep.mubr.f32.mxu0 0.0
    %1051 = vmatmul.mubr.f32.gmra.mrb[0].mxu0 %v984
    %v1052 = vpop.f32.mrb[0].mxu0
    %v1053 = vadd.f32 0.0, %v1052
    %v1054 = vpop.f32.mrb[0].mxu0
    %1055 = vdwg.mxu0
    %v1057 = vrot.slane %v1053, 7
    %v1059 = vadd.f32 %v440, %v1057
    %v1060 = vsub.f32 0.0, %v1059
    %v1061 = vmul.f32 %v1060, 1.442695
    %v1062 = vpow.pop %v1061
    %v1063 = vadd.f32 %v1062, 1.0
    %v1064 = vrcp.pop %v1063
    %v1065 = vmul.f32 1.0, %v1064
    %1066 = vmatprep.subr.mxu0 0.0
    %1067 = vmatpush1.msra.mxu0 %v354
    %1068 = vmatprep.subr.mxu0 0.0
    %1069 = vmatpush1.msra.mxu0 %v355
    %1070 = vmatprep.subr.mxu0 0.0
    %1071 = vmatpush1.msra.mxu0 0.0
    %1072 = vmatprep.subr.mxu0 0.0
    %1073 = vmatpush1.msra.mxu0 0.0
    %1074 = vmatprep.subr.mxu0 0.0
    %1075 = vmatpush1.msra.mxu0 0.0
    %1076 = vmatprep.subr.mxu0 0.0
    %1077 = vmatpush1.msra.mxu0 0.0
    %1078 = vmatprep.subr.mxu0 0.0
    %1079 = vmatpush1.msra.mxu0 0.0
    %1080 = vmatprep.subr.mxu0 0.0
    %1081 = vmatpush1.msra.mxu0 0.0
    %1082 = vmatprep.subr.mxu0 0.0
    %1083 = vmatpush1.msra.mxu0 0.0
    %1084 = vmatprep.subr.mxu0 0.0
    %1085 = vmatpush1.msra.mxu0 0.0
    %1086 = vmatprep.subr.mxu0 0.0
    %1087 = vmatpush1.msra.mxu0 0.0
    %1088 = vmatprep.subr.mxu0 0.0
    %1089 = vmatpush1.msra.mxu0 0.0
    %1090 = vmatprep.subr.mxu0 0.0
    %1091 = vmatpush1.msra.mxu0 0.0
    %1092 = vmatprep.subr.mxu0 0.0
    %1093 = vmatpush1.msra.mxu0 0.0
    %1094 = vmatprep.subr.mxu0 0.0
    %1095 = vmatpush1.msra.mxu0 0.0
    %1096 = vmatprep.subr.mxu0 0.0
    %1097 = vmatpush1.msra.mxu0 0.0
    %1098 = vmatprep.subr.mxu0 0.0
    %1099 = vmatpush1.msra.mxu0 0.0
    %1100 = vmatprep.subr.mxu0 0.0
    %1101 = vmatpush1.msra.mxu0 0.0
    %1102 = vmatprep.subr.mxu0 0.0
    %1103 = vmatpush1.msra.mxu0 0.0
    %1104 = vmatprep.subr.mxu0 0.0
    %1105 = vmatpush1.msra.mxu0 0.0
    %1106 = vmatprep.subr.mxu0 0.0
    %1107 = vmatpush1.msra.mxu0 0.0
    %1108 = vmatprep.subr.mxu0 0.0
    %1109 = vmatpush1.msra.mxu0 0.0
    %1110 = vmatprep.subr.mxu0 0.0
    %1111 = vmatpush1.msra.mxu0 0.0
    %1112 = vmatprep.subr.mxu0 0.0
    %1113 = vmatpush1.msra.mxu0 0.0
    %1114 = vmatprep.subr.mxu0 0.0
    %1115 = vmatpush1.msra.mxu0 0.0
    %1116 = vmatprep.subr.mxu0 0.0
    %1117 = vmatpush1.msra.mxu0 0.0
    %1118 = vmatprep.subr.mxu0 0.0
    %1119 = vmatpush1.msra.mxu0 0.0
    %1120 = vmatprep.subr.mxu0 0.0
    %1121 = vmatpush1.msra.mxu0 0.0
    %1122 = vmatprep.subr.mxu0 0.0
    %1123 = vmatpush1.msra.mxu0 0.0
    %1124 = vmatprep.subr.mxu0 0.0
    %1125 = vmatpush1.msra.mxu0 0.0
    %1126 = vmatprep.subr.mxu0 0.0
    %1127 = vmatpush1.msra.mxu0 0.0
    %1128 = vmatprep.subr.mxu0 0.0
    %1129 = vmatpush1.msra.mxu0 0.0
    %1130 = vmatprep.mubr.f32.mxu0 0.0
    %1131 = vmatmul.mubr.f32.gmra.mrb[0].mxu0 %v984
    %v1132 = vpop.f32.mrb[0].mxu0
    %v1133 = vadd.f32 0.0, %v1132
    %v1134 = vpop.f32.mrb[0].mxu0
    %1135 = vdwg.mxu0
    %v1137 = vrot.slane %v1133, 7
    %v1139 = vadd.f32 %v516, %v1137
    %v1140 = vsub.f32 0.0, %v1139
    %v1141 = vmul.f32 %v1140, 1.442695
    %v1142 = vpow.pop %v1141
    %v1143 = vadd.f32 %v1142, 1.0
    %v1144 = vrcp.pop %v1143
    %v1145 = vmul.f32 1.0, %v1144
    %1146 = vmatprep.subr.mxu0 0.0
    %1147 = vmatpush1.msra.mxu0 %v356
    %1148 = vmatprep.subr.mxu0 0.0
    %1149 = vmatpush1.msra.mxu0 %v357
    %1150 = vmatprep.subr.mxu0 0.0
    %1151 = vmatpush1.msra.mxu0 0.0
    %1152 = vmatprep.subr.mxu0 0.0
    %1153 = vmatpush1.msra.mxu0 0.0
    %1154 = vmatprep.subr.mxu0 0.0
    %1155 = vmatpush1.msra.mxu0 0.0
    %1156 = vmatprep.subr.mxu0 0.0
    %1157 = vmatpush1.msra.mxu0 0.0
    %1158 = vmatprep.subr.mxu0 0.0
    %1159 = vmatpush1.msra.mxu0 0.0
    %1160 = vmatprep.subr.mxu0 0.0
    %1161 = vmatpush1.msra.mxu0 0.0
    %1162 = vmatprep.subr.mxu0 0.0
    %1163 = vmatpush1.msra.mxu0 0.0
    %1164 = vmatprep.subr.mxu0 0.0
    %1165 = vmatpush1.msra.mxu0 0.0
    %1166 = vmatprep.subr.mxu0 0.0
    %1167 = vmatpush1.msra.mxu0 0.0
    %1168 = vmatprep.subr.mxu0 0.0
    %1169 = vmatpush1.msra.mxu0 0.0
    %1170 = vmatprep.subr.mxu0 0.0
    %1171 = vmatpush1.msra.mxu0 0.0
    %1172 = vmatprep.subr.mxu0 0.0
    %1173 = vmatpush1.msra.mxu0 0.0
    %1174 = vmatprep.subr.mxu0 0.0
    %1175 = vmatpush1.msra.mxu0 0.0
    %1176 = vmatprep.subr.mxu0 0.0
    %1177 = vmatpush1.msra.mxu0 0.0
    %1178 = vmatprep.subr.mxu0 0.0
    %1179 = vmatpush1.msra.mxu0 0.0
    %1180 = vmatprep.subr.mxu0 0.0
    %1181 = vmatpush1.msra.mxu0 0.0
    %1182 = vmatprep.subr.mxu0 0.0
    %1183 = vmatpush1.msra.mxu0 0.0
    %1184 = vmatprep.subr.mxu0 0.0
    %1185 = vmatpush1.msra.mxu0 0.0
    %1186 = vmatprep.subr.mxu0 0.0
    %1187 = vmatpush1.msra.mxu0 0.0
    %1188 = vmatprep.subr.mxu0 0.0
    %1189 = vmatpush1.msra.mxu0 0.0
    %1190 = vmatprep.subr.mxu0 0.0
    %1191 = vmatpush1.msra.mxu0 0.0
    %1192 = vmatprep.subr.mxu0 0.0
    %1193 = vmatpush1.msra.mxu0 0.0
    %1194 = vmatprep.subr.mxu0 0.0
    %1195 = vmatpush1.msra.mxu0 0.0
    %1196 = vmatprep.subr.mxu0 0.0
    %1197 = vmatpush1.msra.mxu0 0.0
    %1198 = vmatprep.subr.mxu0 0.0
    %1199 = vmatpush1.msra.mxu0 0.0
    %1200 = vmatprep.subr.mxu0 0.0
    %1201 = vmatpush1.msra.mxu0 0.0
    %1202 = vmatprep.subr.mxu0 0.0
    %1203 = vmatpush1.msra.mxu0 0.0
    %1204 = vmatprep.subr.mxu0 0.0
    %1205 = vmatpush1.msra.mxu0 0.0
    %1206 = vmatprep.subr.mxu0 0.0
    %1207 = vmatpush1.msra.mxu0 0.0
    %1208 = vmatprep.subr.mxu0 0.0
    %1209 = vmatpush1.msra.mxu0 0.0
    %1210 = vmatprep.mubr.f32.mxu0 0.0
    %1211 = vmatmul.mubr.f32.gmra.mrb[0].mxu0 %v984
    %v1212 = vpop.f32.mrb[0].mxu0
    %v1213 = vadd.f32 0.0, %v1212
    %v1214 = vpop.f32.mrb[0].mxu0
    %1215 = vdwg.mxu0
    %v1217 = vrot.slane %v1213, 7
    %v1219 = vadd.f32 %v592, %v1217
    %v1220 = vtanh.pop %v1219
    %1221 = vmatprep.subr.mxu0 0.0
    %1222 = vmatpush1.msra.mxu0 %v358
    %1223 = vmatprep.subr.mxu0 0.0
    %1224 = vmatpush1.msra.mxu0 %v359
    %1225 = vmatprep.subr.mxu0 0.0
    %1226 = vmatpush1.msra.mxu0 0.0
    %1227 = vmatprep.subr.mxu0 0.0
    %1228 = vmatpush1.msra.mxu0 0.0
    %1229 = vmatprep.subr.mxu0 0.0
    %1230 = vmatpush1.msra.mxu0 0.0
    %1231 = vmatprep.subr.mxu0 0.0
    %1232 = vmatpush1.msra.mxu0 0.0
    %1233 = vmatprep.subr.mxu0 0.0
    %1234 = vmatpush1.msra.mxu0 0.0
    %1235 = vmatprep.subr.mxu0 0.0
    %1236 = vmatpush1.msra.mxu0 0.0
    %1237 = vmatprep.subr.mxu0 0.0
    %1238 = vmatpush1.msra.mxu0 0.0
    %1239 = vmatprep.subr.mxu0 0.0
    %1240 = vmatpush1.msra.mxu0 0.0
    %1241 = vmatprep.subr.mxu0 0.0
    %1242 = vmatpush1.msra.mxu0 0.0
    %1243 = vmatprep.subr.mxu0 0.0
    %1244 = vmatpush1.msra.mxu0 0.0
    %1245 = vmatprep.subr.mxu0 0.0
    %1246 = vmatpush1.msra.mxu0 0.0
    %1247 = vmatprep.subr.mxu0 0.0
    %1248 = vmatpush1.msra.mxu0 0.0
    %1249 = vmatprep.subr.mxu0 0.0
    %1250 = vmatpush1.msra.mxu0 0.0
    %1251 = vmatprep.subr.mxu0 0.0
    %1252 = vmatpush1.msra.mxu0 0.0
    %1253 = vmatprep.subr.mxu0 0.0
    %1254 = vmatpush1.msra.mxu0 0.0
    %1255 = vmatprep.subr.mxu0 0.0
    %1256 = vmatpush1.msra.mxu0 0.0
    %1257 = vmatprep.subr.mxu0 0.0
    %1258 = vmatpush1.msra.mxu0 0.0
    %1259 = vmatprep.subr.mxu0 0.0
    %1260 = vmatpush1.msra.mxu0 0.0
    %1261 = vmatprep.subr.mxu0 0.0
    %1262 = vmatpush1.msra.mxu0 0.0
    %1263 = vmatprep.subr.mxu0 0.0
    %1264 = vmatpush1.msra.mxu0 0.0
    %1265 = vmatprep.subr.mxu0 0.0
    %1266 = vmatpush1.msra.mxu0 0.0
    %1267 = vmatprep.subr.mxu0 0.0
    %1268 = vmatpush1.msra.mxu0 0.0
    %1269 = vmatprep.subr.mxu0 0.0
    %1270 = vmatpush1.msra.mxu0 0.0
    %1271 = vmatprep.subr.mxu0 0.0
    %1272 = vmatpush1.msra.mxu0 0.0
    %1273 = vmatprep.subr.mxu0 0.0
    %1274 = vmatpush1.msra.mxu0 0.0
    %1275 = vmatprep.subr.mxu0 0.0
    %1276 = vmatpush1.msra.mxu0 0.0
    %1277 = vmatprep.subr.mxu0 0.0
    %1278 = vmatpush1.msra.mxu0 0.0
    %1279 = vmatprep.subr.mxu0 0.0
    %1280 = vmatpush1.msra.mxu0 0.0
    %1281 = vmatprep.subr.mxu0 0.0
    %1282 = vmatpush1.msra.mxu0 0.0
    %1283 = vmatprep.subr.mxu0 0.0
    %1284 = vmatpush1.msra.mxu0 0.0
    %1285 = vmatprep.mubr.f32.mxu0 0.0
    %1286 = vmatmul.mubr.f32.gmra.mrb[0].mxu0 %v984
    %v1287 = vpop.f32.mrb[0].mxu0
    %v1288 = vadd.f32 0.0, %v1287
    %v1289 = vpop.f32.mrb[0].mxu0
    %1290 = vdwg.mxu0
    %v1292 = vrot.slane %v1288, 7
    %v1294 = vadd.f32 %v668, %v1292
    %v1295 = vsub.f32 0.0, %v1294
    %v1296 = vmul.f32 %v1295, 1.442695
    %v1297 = vpow.pop %v1296
    %v1298 = vadd.f32 %v1297, 1.0
    %v1299 = vrcp.pop %v1298
    %v1300 = vmul.f32 1.0, %v1299
    %v1302 = vrot.slane %v980, 7
    %v1304 = vmul.f32 %v1145, %v1302
    %v1305 = vmul.f32 %v1065, %v1220
    %v1306 = vadd.f32 %v1304, %v1305
    %v1307 = vtanh.pop %v1306
    %v1308 = vmul.f32 %v1300, %v1307
    %v1310 = vrot.slane %v1308, 1
    %v1311 = vsel %vm671, %v1310, 0
    %1313 = vmatprep.subr.mxu0 0.0
    %1314 = vmatpush1.msra.mxu0 %v352
    %1315 = vmatprep.subr.mxu0 0.0
    %1316 = vmatpush1.msra.mxu0 %v353
    %1317 = vmatprep.subr.mxu0 0.0
    %1318 = vmatpush1.msra.mxu0 0.0
    %1319 = vmatprep.subr.mxu0 0.0
    %1320 = vmatpush1.msra.mxu0 0.0
    %1321 = vmatprep.subr.mxu0 0.0
    %1322 = vmatpush1.msra.mxu0 0.0
    %1323 = vmatprep.subr.mxu0 0.0
    %1324 = vmatpush1.msra.mxu0 0.0
    %1325 = vmatprep.subr.mxu0 0.0
    %1326 = vmatpush1.msra.mxu0 0.0
    %1327 = vmatprep.subr.mxu0 0.0
    %1328 = vmatpush1.msra.mxu0 0.0
    %1329 = vmatprep.subr.mxu0 0.0
    %1330 = vmatpush1.msra.mxu0 0.0
    %1331 = vmatprep.subr.mxu0 0.0
    %1332 = vmatpush1.msra.mxu0 0.0
    %1333 = vmatprep.subr.mxu0 0.0
    %1334 = vmatpush1.msra.mxu0 0.0
    %1335 = vmatprep.subr.mxu0 0.0
    %1336 = vmatpush1.msra.mxu0 0.0
    %1337 = vmatprep.subr.mxu0 0.0
    %1338 = vmatpush1.msra.mxu0 0.0
    %1339 = vmatprep.subr.mxu0 0.0
    %1340 = vmatpush1.msra.mxu0 0.0
    %1341 = vmatprep.subr.mxu0 0.0
    %1342 = vmatpush1.msra.mxu0 0.0
    %1343 = vmatprep.subr.mxu0 0.0
    %1344 = vmatpush1.msra.mxu0 0.0
    %1345 = vmatprep.subr.mxu0 0.0
    %1346 = vmatpush1.msra.mxu0 0.0
    %1347 = vmatprep.subr.mxu0 0.0
    %1348 = vmatpush1.msra.mxu0 0.0
    %1349 = vmatprep.subr.mxu0 0.0
    %1350 = vmatpush1.msra.mxu0 0.0
    %1351 = vmatprep.subr.mxu0 0.0
    %1352 = vmatpush1.msra.mxu0 0.0
    %1353 = vmatprep.subr.mxu0 0.0
    %1354 = vmatpush1.msra.mxu0 0.0
    %1355 = vmatprep.subr.mxu0 0.0
    %1356 = vmatpush1.msra.mxu0 0.0
    %1357 = vmatprep.subr.mxu0 0.0
    %1358 = vmatpush1.msra.mxu0 0.0
    %1359 = vmatprep.subr.mxu0 0.0
    %1360 = vmatpush1.msra.mxu0 0.0
    %1361 = vmatprep.subr.mxu0 0.0
    %1362 = vmatpush1.msra.mxu0 0.0
    %1363 = vmatprep.subr.mxu0 0.0
    %1364 = vmatpush1.msra.mxu0 0.0
    %1365 = vmatprep.subr.mxu0 0.0
    %1366 = vmatpush1.msra.mxu0 0.0
    %1367 = vmatprep.subr.mxu0 0.0
    %1368 = vmatpush1.msra.mxu0 0.0
    %1369 = vmatprep.subr.mxu0 0.0
    %1370 = vmatpush1.msra.mxu0 0.0
    %1371 = vmatprep.subr.mxu0 0.0
    %1372 = vmatpush1.msra.mxu0 0.0
    %1373 = vmatprep.subr.mxu0 0.0
    %1374 = vmatpush1.msra.mxu0 0.0
    %1375 = vmatprep.subr.mxu0 0.0
    %1376 = vmatpush1.msra.mxu0 0.0
    %1377 = vmatprep.mubr.f32.mxu0 0.0
    %1378 = vmatmul.mubr.f32.gmra.mrb[0].mxu0 %v1311
    %v1379 = vpop.f32.mrb[0].mxu0
    %v1380 = vadd.f32 0.0, %v1379
    %v1381 = vpop.f32.mrb[0].mxu0
    %1382 = vdwg.mxu0
    %v1384 = vrot.slane %v1380, 6
    %v1386 = vadd.f32 %v440, %v1384
    %v1387 = vsub.f32 0.0, %v1386
    %v1388 = vmul.f32 %v1387, 1.442695
    %v1389 = vpow.pop %v1388
    %v1390 = vadd.f32 %v1389, 1.0
    %v1391 = vrcp.pop %v1390
    %v1392 = vmul.f32 1.0, %v1391
    %1393 = vmatprep.subr.mxu0 0.0
    %1394 = vmatpush1.msra.mxu0 %v354
    %1395 = vmatprep.subr.mxu0 0.0
    %1396 = vmatpush1.msra.mxu0 %v355
    %1397 = vmatprep.subr.mxu0 0.0
    %1398 = vmatpush1.msra.mxu0 0.0
    %1399 = vmatprep.subr.mxu0 0.0
    %1400 = vmatpush1.msra.mxu0 0.0
    %1401 = vmatprep.subr.mxu0 0.0
    %1402 = vmatpush1.msra.mxu0 0.0
    %1403 = vmatprep.subr.mxu0 0.0
    %1404 = vmatpush1.msra.mxu0 0.0
    %1405 = vmatprep.subr.mxu0 0.0
    %1406 = vmatpush1.msra.mxu0 0.0
    %1407 = vmatprep.subr.mxu0 0.0
    %1408 = vmatpush1.msra.mxu0 0.0
    %1409 = vmatprep.subr.mxu0 0.0
    %1410 = vmatpush1.msra.mxu0 0.0
    %1411 = vmatprep.subr.mxu0 0.0
    %1412 = vmatpush1.msra.mxu0 0.0
    %1413 = vmatprep.subr.mxu0 0.0
    %1414 = vmatpush1.msra.mxu0 0.0
    %1415 = vmatprep.subr.mxu0 0.0
    %1416 = vmatpush1.msra.mxu0 0.0
    %1417 = vmatprep.subr.mxu0 0.0
    %1418 = vmatpush1.msra.mxu0 0.0
    %1419 = vmatprep.subr.mxu0 0.0
    %1420 = vmatpush1.msra.mxu0 0.0
    %1421 = vmatprep.subr.mxu0 0.0
    %1422 = vmatpush1.msra.mxu0 0.0
    %1423 = vmatprep.subr.mxu0 0.0
    %1424 = vmatpush1.msra.mxu0 0.0
    %1425 = vmatprep.subr.mxu0 0.0
    %1426 = vmatpush1.msra.mxu0 0.0
    %1427 = vmatprep.subr.mxu0 0.0
    %1428 = vmatpush1.msra.mxu0 0.0
    %1429 = vmatprep.subr.mxu0 0.0
    %1430 = vmatpush1.msra.mxu0 0.0
    %1431 = vmatprep.subr.mxu0 0.0
    %1432 = vmatpush1.msra.mxu0 0.0
    %1433 = vmatprep.subr.mxu0 0.0
    %1434 = vmatpush1.msra.mxu0 0.0
    %1435 = vmatprep.subr.mxu0 0.0
    %1436 = vmatpush1.msra.mxu0 0.0
    %1437 = vmatprep.subr.mxu0 0.0
    %1438 = vmatpush1.msra.mxu0 0.0
    %1439 = vmatprep.subr.mxu0 0.0
    %1440 = vmatpush1.msra.mxu0 0.0
    %1441 = vmatprep.subr.mxu0 0.0
    %1442 = vmatpush1.msra.mxu0 0.0
    %1443 = vmatprep.subr.mxu0 0.0
    %1444 = vmatpush1.msra.mxu0 0.0
    %1445 = vmatprep.subr.mxu0 0.0
    %1446 = vmatpush1.msra.mxu0 0.0
    %1447 = vmatprep.subr.mxu0 0.0
    %1448 = vmatpush1.msra.mxu0 0.0
    %1449 = vmatprep.subr.mxu0 0.0
    %1450 = vmatpush1.msra.mxu0 0.0
    %1451 = vmatprep.subr.mxu0 0.0
    %1452 = vmatpush1.msra.mxu0 0.0
    %1453 = vmatprep.subr.mxu0 0.0
    %1454 = vmatpush1.msra.mxu0 0.0
    %1455 = vmatprep.subr.mxu0 0.0
    %1456 = vmatpush1.msra.mxu0 0.0
    %1457 = vmatprep.mubr.f32.mxu0 0.0
    %1458 = vmatmul.mubr.f32.gmra.mrb[0].mxu0 %v1311
    %v1459 = vpop.f32.mrb[0].mxu0
    %v1460 = vadd.f32 0.0, %v1459
    %v1461 = vpop.f32.mrb[0].mxu0
    %1462 = vdwg.mxu0
    %v1464 = vrot.slane %v1460, 6
    %v1466 = vadd.f32 %v516, %v1464
    %v1467 = vsub.f32 0.0, %v1466
    %v1468 = vmul.f32 %v1467, 1.442695
    %v1469 = vpow.pop %v1468
    %v1470 = vadd.f32 %v1469, 1.0
    %v1471 = vrcp.pop %v1470
    %v1472 = vmul.f32 1.0, %v1471
    %1473 = vmatprep.subr.mxu0 0.0
    %1474 = vmatpush1.msra.mxu0 %v356
    %1475 = vmatprep.subr.mxu0 0.0
    %1476 = vmatpush1.msra.mxu0 %v357
    %1477 = vmatprep.subr.mxu0 0.0
    %1478 = vmatpush1.msra.mxu0 0.0
    %1479 = vmatprep.subr.mxu0 0.0
    %1480 = vmatpush1.msra.mxu0 0.0
    %1481 = vmatprep.subr.mxu0 0.0
    %1482 = vmatpush1.msra.mxu0 0.0
    %1483 = vmatprep.subr.mxu0 0.0
    %1484 = vmatpush1.msra.mxu0 0.0
    %1485 = vmatprep.subr.mxu0 0.0
    %1486 = vmatpush1.msra.mxu0 0.0
    %1487 = vmatprep.subr.mxu0 0.0
    %1488 = vmatpush1.msra.mxu0 0.0
    %1489 = vmatprep.subr.mxu0 0.0
    %1490 = vmatpush1.msra.mxu0 0.0
    %1491 = vmatprep.subr.mxu0 0.0
    %1492 = vmatpush1.msra.mxu0 0.0
    %1493 = vmatprep.subr.mxu0 0.0
    %1494 = vmatpush1.msra.mxu0 0.0
    %1495 = vmatprep.subr.mxu0 0.0
    %1496 = vmatpush1.msra.mxu0 0.0
    %1497 = vmatprep.subr.mxu0 0.0
    %1498 = vmatpush1.msra.mxu0 0.0
    %1499 = vmatprep.subr.mxu0 0.0
    %1500 = vmatpush1.msra.mxu0 0.0
    %1501 = vmatprep.subr.mxu0 0.0
    %1502 = vmatpush1.msra.mxu0 0.0
    %1503 = vmatprep.subr.mxu0 0.0
    %1504 = vmatpush1.msra.mxu0 0.0
    %1505 = vmatprep.subr.mxu0 0.0
    %1506 = vmatpush1.msra.mxu0 0.0
    %1507 = vmatprep.subr.mxu0 0.0
    %1508 = vmatpush1.msra.mxu0 0.0
    %1509 = vmatprep.subr.mxu0 0.0
    %1510 = vmatpush1.msra.mxu0 0.0
    %1511 = vmatprep.subr.mxu0 0.0
    %1512 = vmatpush1.msra.mxu0 0.0
    %1513 = vmatprep.subr.mxu0 0.0
    %1514 = vmatpush1.msra.mxu0 0.0
    %1515 = vmatprep.subr.mxu0 0.0
    %1516 = vmatpush1.msra.mxu0 0.0
    %1517 = vmatprep.subr.mxu0 0.0
    %1518 = vmatpush1.msra.mxu0 0.0
    %1519 = vmatprep.subr.mxu0 0.0
    %1520 = vmatpush1.msra.mxu0 0.0
    %1521 = vmatprep.subr.mxu0 0.0
    %1522 = vmatpush1.msra.mxu0 0.0
    %1523 = vmatprep.subr.mxu0 0.0
    %1524 = vmatpush1.msra.mxu0 0.0
    %1525 = vmatprep.subr.mxu0 0.0
    %1526 = vmatpush1.msra.mxu0 0.0
    %1527 = vmatprep.subr.mxu0 0.0
    %1528 = vmatpush1.msra.mxu0 0.0
    %1529 = vmatprep.subr.mxu0 0.0
    %1530 = vmatpush1.msra.mxu0 0.0
    %1531 = vmatprep.subr.mxu0 0.0
    %1532 = vmatpush1.msra.mxu0 0.0
    %1533 = vmatprep.subr.mxu0 0.0
    %1534 = vmatpush1.msra.mxu0 0.0
    %1535 = vmatprep.subr.mxu0 0.0
    %1536 = vmatpush1.msra.mxu0 0.0
    %1537 = vmatprep.mubr.f32.mxu0 0.0
    %1538 = vmatmul.mubr.f32.gmra.mrb[0].mxu0 %v1311
    %v1539 = vpop.f32.mrb[0].mxu0
    %v1540 = vadd.f32 0.0, %v1539
    %v1541 = vpop.f32.mrb[0].mxu0
    %1542 = vdwg.mxu0
    %v1544 = vrot.slane %v1540, 6
    %v1546 = vadd.f32 %v592, %v1544
    %v1547 = vtanh.pop %v1546
    %1548 = vmatprep.subr.mxu0 0.0
    %1549 = vmatpush1.msra.mxu0 %v358
    %1550 = vmatprep.subr.mxu0 0.0
    %1551 = vmatpush1.msra.mxu0 %v359
    %1552 = vmatprep.subr.mxu0 0.0
    %1553 = vmatpush1.msra.mxu0 0.0
    %1554 = vmatprep.subr.mxu0 0.0
    %1555 = vmatpush1.msra.mxu0 0.0
    %1556 = vmatprep.subr.mxu0 0.0
    %1557 = vmatpush1.msra.mxu0 0.0
    %1558 = vmatprep.subr.mxu0 0.0
    %1559 = vmatpush1.msra.mxu0 0.0
    %1560 = vmatprep.subr.mxu0 0.0
    %1561 = vmatpush1.msra.mxu0 0.0
    %1562 = vmatprep.subr.mxu0 0.0
    %1563 = vmatpush1.msra.mxu0 0.0
    %1564 = vmatprep.subr.mxu0 0.0
    %1565 = vmatpush1.msra.mxu0 0.0
    %1566 = vmatprep.subr.mxu0 0.0
    %1567 = vmatpush1.msra.mxu0 0.0
    %1568 = vmatprep.subr.mxu0 0.0
    %1569 = vmatpush1.msra.mxu0 0.0
    %1570 = vmatprep.subr.mxu0 0.0
    %1571 = vmatpush1.msra.mxu0 0.0
    %1572 = vmatprep.subr.mxu0 0.0
    %1573 = vmatpush1.msra.mxu0 0.0
    %1574 = vmatprep.subr.mxu0 0.0
    %1575 = vmatpush1.msra.mxu0 0.0
    %1576 = vmatprep.subr.mxu0 0.0
    %1577 = vmatpush1.msra.mxu0 0.0
    %1578 = vmatprep.subr.mxu0 0.0
    %1579 = vmatpush1.msra.mxu0 0.0
    %1580 = vmatprep.subr.mxu0 0.0
    %1581 = vmatpush1.msra.mxu0 0.0
    %1582 = vmatprep.subr.mxu0 0.0
    %1583 = vmatpush1.msra.mxu0 0.0
    %1584 = vmatprep.subr.mxu0 0.0
    %1585 = vmatpush1.msra.mxu0 0.0
    %1586 = vmatprep.subr.mxu0 0.0
    %1587 = vmatpush1.msra.mxu0 0.0
    %1588 = vmatprep.subr.mxu0 0.0
    %1589 = vmatpush1.msra.mxu0 0.0
    %1590 = vmatprep.subr.mxu0 0.0
    %1591 = vmatpush1.msra.mxu0 0.0
    %1592 = vmatprep.subr.mxu0 0.0
    %1593 = vmatpush1.msra.mxu0 0.0
    %1594 = vmatprep.subr.mxu0 0.0
    %1595 = vmatpush1.msra.mxu0 0.0
    %1596 = vmatprep.subr.mxu0 0.0
    %1597 = vmatpush1.msra.mxu0 0.0
    %1598 = vmatprep.subr.mxu0 0.0
    %1599 = vmatpush1.msra.mxu0 0.0
    %1600 = vmatprep.subr.mxu0 0.0
    %1601 = vmatpush1.msra.mxu0 0.0
    %1602 = vmatprep.subr.mxu0 0.0
    %1603 = vmatpush1.msra.mxu0 0.0
    %1604 = vmatprep.subr.mxu0 0.0
    %1605 = vmatpush1.msra.mxu0 0.0
    %1606 = vmatprep.subr.mxu0 0.0
    %1607 = vmatpush1.msra.mxu0 0.0
    %1608 = vmatprep.subr.mxu0 0.0
    %1609 = vmatpush1.msra.mxu0 0.0
    %1610 = vmatprep.subr.mxu0 0.0
    %1611 = vmatpush1.msra.mxu0 0.0
    %1612 = vmatprep.mubr.f32.mxu0 0.0
    %1613 = vmatmul.mubr.f32.gmra.mrb[0].mxu0 %v1311
    %v1614 = vpop.f32.mrb[0].mxu0
    %v1615 = vadd.f32 0.0, %v1614
    %v1616 = vpop.f32.mrb[0].mxu0
    %1617 = vdwg.mxu0
    %v1619 = vrot.slane %v1615, 6
    %v1621 = vadd.f32 %v668, %v1619
    %v1622 = vsub.f32 0.0, %v1621
    %v1623 = vmul.f32 %v1622, 1.442695
    %v1624 = vpow.pop %v1623
    %v1625 = vadd.f32 %v1624, 1.0
    %v1626 = vrcp.pop %v1625
    %v1627 = vmul.f32 1.0, %v1626
    %v1629 = vrot.slane %v1306, 7
    %v1631 = vmul.f32 %v1472, %v1629
    %v1632 = vmul.f32 %v1392, %v1547
    %v1633 = vadd.f32 %v1631, %v1632
    %v1634 = vtanh.pop %v1633
    %v1635 = vmul.f32 %v1627, %v1634
    %v1637 = vrot.slane %v1635, 2
    %v1638 = vsel %vm671, %v1637, 0
    %1640 = vmatprep.subr.mxu0 0.0
    %1641 = vmatpush1.msra.mxu0 %v352
    %1642 = vmatprep.subr.mxu0 0.0
    %1643 = vmatpush1.msra.mxu0 %v353
    %1644 = vmatprep.subr.mxu0 0.0
    %1645 = vmatpush1.msra.mxu0 0.0
    %1646 = vmatprep.subr.mxu0 0.0
    %1647 = vmatpush1.msra.mxu0 0.0
    %1648 = vmatprep.subr.mxu0 0.0
    %1649 = vmatpush1.msra.mxu0 0.0
    %1650 = vmatprep.subr.mxu0 0.0
    %1651 = vmatpush1.msra.mxu0 0.0
    %1652 = vmatprep.subr.mxu0 0.0
    %1653 = vmatpush1.msra.mxu0 0.0
    %1654 = vmatprep.subr.mxu0 0.0
    %1655 = vmatpush1.msra.mxu0 0.0
    %1656 = vmatprep.subr.mxu0 0.0
    %1657 = vmatpush1.msra.mxu0 0.0
    %1658 = vmatprep.subr.mxu0 0.0
    %1659 = vmatpush1.msra.mxu0 0.0
    %1660 = vmatprep.subr.mxu0 0.0
    %1661 = vmatpush1.msra.mxu0 0.0
    %1662 = vmatprep.subr.mxu0 0.0
    %1663 = vmatpush1.msra.mxu0 0.0
    %1664 = vmatprep.subr.mxu0 0.0
    %1665 = vmatpush1.msra.mxu0 0.0
    %1666 = vmatprep.subr.mxu0 0.0
    %1667 = vmatpush1.msra.mxu0 0.0
    %1668 = vmatprep.subr.mxu0 0.0
    %1669 = vmatpush1.msra.mxu0 0.0
    %1670 = vmatprep.subr.mxu0 0.0
    %1671 = vmatpush1.msra.mxu0 0.0
    %1672 = vmatprep.subr.mxu0 0.0
    %1673 = vmatpush1.msra.mxu0 0.0
    %1674 = vmatprep.subr.mxu0 0.0
    %1675 = vmatpush1.msra.mxu0 0.0
    %1676 = vmatprep.subr.mxu0 0.0
    %1677 = vmatpush1.msra.mxu0 0.0
    %1678 = vmatprep.subr.mxu0 0.0
    %1679 = vmatpush1.msra.mxu0 0.0
    %1680 = vmatprep.subr.mxu0 0.0
    %1681 = vmatpush1.msra.mxu0 0.0
    %1682 = vmatprep.subr.mxu0 0.0
    %1683 = vmatpush1.msra.mxu0 0.0
    %1684 = vmatprep.subr.mxu0 0.0
    %1685 = vmatpush1.msra.mxu0 0.0
    %1686 = vmatprep.subr.mxu0 0.0
    %1687 = vmatpush1.msra.mxu0 0.0
    %1688 = vmatprep.subr.mxu0 0.0
    %1689 = vmatpush1.msra.mxu0 0.0
    %1690 = vmatprep.subr.mxu0 0.0
    %1691 = vmatpush1.msra.mxu0 0.0
    %1692 = vmatprep.subr.mxu0 0.0
    %1693 = vmatpush1.msra.mxu0 0.0
    %1694 = vmatprep.subr.mxu0 0.0
    %1695 = vmatpush1.msra.mxu0 0.0
    %1696 = vmatprep.subr.mxu0 0.0
    %1697 = vmatpush1.msra.mxu0 0.0
    %1698 = vmatprep.subr.mxu0 0.0
    %1699 = vmatpush1.msra.mxu0 0.0
    %1700 = vmatprep.subr.mxu0 0.0
    %1701 = vmatpush1.msra.mxu0 0.0
    %1702 = vmatprep.subr.mxu0 0.0
    %1703 = vmatpush1.msra.mxu0 0.0
    %1704 = vmatprep.mubr.f32.mxu0 0.0
    %1705 = vmatmul.mubr.f32.gmra.mrb[0].mxu0 %v1638
    %v1706 = vpop.f32.mrb[0].mxu0
    %v1707 = vadd.f32 0.0, %v1706
    %v1708 = vpop.f32.mrb[0].mxu0
    %1709 = vdwg.mxu0
    %v1711 = vrot.slane %v1707, 5
    %v1713 = vadd.f32 %v440, %v1711
    %v1714 = vsub.f32 0.0, %v1713
    %v1715 = vmul.f32 %v1714, 1.442695
    %v1716 = vpow.pop %v1715
    %v1717 = vadd.f32 %v1716, 1.0
    %v1718 = vrcp.pop %v1717
    %v1719 = vmul.f32 1.0, %v1718
    %1720 = vmatprep.subr.mxu0 0.0
    %1721 = vmatpush1.msra.mxu0 %v354
    %1722 = vmatprep.subr.mxu0 0.0
    %1723 = vmatpush1.msra.mxu0 %v355
    %1724 = vmatprep.subr.mxu0 0.0
    %1725 = vmatpush1.msra.mxu0 0.0
    %1726 = vmatprep.subr.mxu0 0.0
    %1727 = vmatpush1.msra.mxu0 0.0
    %1728 = vmatprep.subr.mxu0 0.0
    %1729 = vmatpush1.msra.mxu0 0.0
    %1730 = vmatprep.subr.mxu0 0.0
    %1731 = vmatpush1.msra.mxu0 0.0
    %1732 = vmatprep.subr.mxu0 0.0
    %1733 = vmatpush1.msra.mxu0 0.0
    %1734 = vmatprep.subr.mxu0 0.0
    %1735 = vmatpush1.msra.mxu0 0.0
    %1736 = vmatprep.subr.mxu0 0.0
    %1737 = vmatpush1.msra.mxu0 0.0
    %1738 = vmatprep.subr.mxu0 0.0
    %1739 = vmatpush1.msra.mxu0 0.0
    %1740 = vmatprep.subr.mxu0 0.0
    %1741 = vmatpush1.msra.mxu0 0.0
    %1742 = vmatprep.subr.mxu0 0.0
    %1743 = vmatpush1.msra.mxu0 0.0
    %1744 = vmatprep.subr.mxu0 0.0
    %1745 = vmatpush1.msra.mxu0 0.0
    %1746 = vmatprep.subr.mxu0 0.0
    %1747 = vmatpush1.msra.mxu0 0.0
    %1748 = vmatprep.subr.mxu0 0.0
    %1749 = vmatpush1.msra.mxu0 0.0
    %1750 = vmatprep.subr.mxu0 0.0
    %1751 = vmatpush1.msra.mxu0 0.0
    %1752 = vmatprep.subr.mxu0 0.0
    %1753 = vmatpush1.msra.mxu0 0.0
    %1754 = vmatprep.subr.mxu0 0.0
    %1755 = vmatpush1.msra.mxu0 0.0
    %1756 = vmatprep.subr.mxu0 0.0
    %1757 = vmatpush1.msra.mxu0 0.0
    %1758 = vmatprep.subr.mxu0 0.0
    %1759 = vmatpush1.msra.mxu0 0.0
    %1760 = vmatprep.subr.mxu0 0.0
    %1761 = vmatpush1.msra.mxu0 0.0
    %1762 = vmatprep.subr.mxu0 0.0
    %1763 = vmatpush1.msra.mxu0 0.0
    %1764 = vmatprep.subr.mxu0 0.0
    %1765 = vmatpush1.msra.mxu0 0.0
    %1766 = vmatprep.subr.mxu0 0.0
    %1767 = vmatpush1.msra.mxu0 0.0
    %1768 = vmatprep.subr.mxu0 0.0
    %1769 = vmatpush1.msra.mxu0 0.0
    %1770 = vmatprep.subr.mxu0 0.0
    %1771 = vmatpush1.msra.mxu0 0.0
    %1772 = vmatprep.subr.mxu0 0.0
    %1773 = vmatpush1.msra.mxu0 0.0
    %1774 = vmatprep.subr.mxu0 0.0
    %1775 = vmatpush1.msra.mxu0 0.0
    %1776 = vmatprep.subr.mxu0 0.0
    %1777 = vmatpush1.msra.mxu0 0.0
    %1778 = vmatprep.subr.mxu0 0.0
    %1779 = vmatpush1.msra.mxu0 0.0
    %1780 = vmatprep.subr.mxu0 0.0
    %1781 = vmatpush1.msra.mxu0 0.0
    %1782 = vmatprep.subr.mxu0 0.0
    %1783 = vmatpush1.msra.mxu0 0.0
    %1784 = vmatprep.mubr.f32.mxu0 0.0
    %1785 = vmatmul.mubr.f32.gmra.mrb[0].mxu0 %v1638
    %v1786 = vpop.f32.mrb[0].mxu0
    %v1787 = vadd.f32 0.0, %v1786
    %v1788 = vpop.f32.mrb[0].mxu0
    %1789 = vdwg.mxu0
    %v1791 = vrot.slane %v1787, 5
    %v1793 = vadd.f32 %v516, %v1791
    %v1794 = vsub.f32 0.0, %v1793
    %v1795 = vmul.f32 %v1794, 1.442695
    %v1796 = vpow.pop %v1795
    %v1797 = vadd.f32 %v1796, 1.0
    %v1798 = vrcp.pop %v1797
    %v1799 = vmul.f32 1.0, %v1798
    %1800 = vmatprep.subr.mxu0 0.0
    %1801 = vmatpush1.msra.mxu0 %v356
    %1802 = vmatprep.subr.mxu0 0.0
    %1803 = vmatpush1.msra.mxu0 %v357
    %1804 = vmatprep.subr.mxu0 0.0
    %1805 = vmatpush1.msra.mxu0 0.0
    %1806 = vmatprep.subr.mxu0 0.0
    %1807 = vmatpush1.msra.mxu0 0.0
    %1808 = vmatprep.subr.mxu0 0.0
    %1809 = vmatpush1.msra.mxu0 0.0
    %1810 = vmatprep.subr.mxu0 0.0
    %1811 = vmatpush1.msra.mxu0 0.0
    %1812 = vmatprep.subr.mxu0 0.0
    %1813 = vmatpush1.msra.mxu0 0.0
    %1814 = vmatprep.subr.mxu0 0.0
    %1815 = vmatpush1.msra.mxu0 0.0
    %1816 = vmatprep.subr.mxu0 0.0
    %1817 = vmatpush1.msra.mxu0 0.0
    %1818 = vmatprep.subr.mxu0 0.0
    %1819 = vmatpush1.msra.mxu0 0.0
    %1820 = vmatprep.subr.mxu0 0.0
    %1821 = vmatpush1.msra.mxu0 0.0
    %1822 = vmatprep.subr.mxu0 0.0
    %1823 = vmatpush1.msra.mxu0 0.0
    %1824 = vmatprep.subr.mxu0 0.0
    %1825 = vmatpush1.msra.mxu0 0.0
    %1826 = vmatprep.subr.mxu0 0.0
    %1827 = vmatpush1.msra.mxu0 0.0
    %1828 = vmatprep.subr.mxu0 0.0
    %1829 = vmatpush1.msra.mxu0 0.0
    %1830 = vmatprep.subr.mxu0 0.0
    %1831 = vmatpush1.msra.mxu0 0.0
    %1832 = vmatprep.subr.mxu0 0.0
    %1833 = vmatpush1.msra.mxu0 0.0
    %1834 = vmatprep.subr.mxu0 0.0
    %1835 = vmatpush1.msra.mxu0 0.0
    %1836 = vmatprep.subr.mxu0 0.0
    %1837 = vmatpush1.msra.mxu0 0.0
    %1838 = vmatprep.subr.mxu0 0.0
    %1839 = vmatpush1.msra.mxu0 0.0
    %1840 = vmatprep.subr.mxu0 0.0
    %1841 = vmatpush1.msra.mxu0 0.0
    %1842 = vmatprep.subr.mxu0 0.0
    %1843 = vmatpush1.msra.mxu0 0.0
    %1844 = vmatprep.subr.mxu0 0.0
    %1845 = vmatpush1.msra.mxu0 0.0
    %1846 = vmatprep.subr.mxu0 0.0
    %1847 = vmatpush1.msra.mxu0 0.0
    %1848 = vmatprep.subr.mxu0 0.0
    %1849 = vmatpush1.msra.mxu0 0.0
    %1850 = vmatprep.subr.mxu0 0.0
    %1851 = vmatpush1.msra.mxu0 0.0
    %1852 = vmatprep.subr.mxu0 0.0
    %1853 = vmatpush1.msra.mxu0 0.0
    %1854 = vmatprep.subr.mxu0 0.0
    %1855 = vmatpush1.msra.mxu0 0.0
    %1856 = vmatprep.subr.mxu0 0.0
    %1857 = vmatpush1.msra.mxu0 0.0
    %1858 = vmatprep.subr.mxu0 0.0
    %1859 = vmatpush1.msra.mxu0 0.0
    %1860 = vmatprep.subr.mxu0 0.0
    %1861 = vmatpush1.msra.mxu0 0.0
    %1862 = vmatprep.subr.mxu0 0.0
    %1863 = vmatpush1.msra.mxu0 0.0
    %1864 = vmatprep.mubr.f32.mxu0 0.0
    %1865 = vmatmul.mubr.f32.gmra.mrb[0].mxu0 %v1638
    %v1866 = vpop.f32.mrb[0].mxu0
    %v1867 = vadd.f32 0.0, %v1866
    %v1868 = vpop.f32.mrb[0].mxu0
    %1869 = vdwg.mxu0
    %v1871 = vrot.slane %v1867, 5
    %v1873 = vadd.f32 %v592, %v1871
    %v1874 = vtanh.pop %v1873
    %1875 = vmatprep.subr.mxu0 0.0
    %1876 = vmatpush1.msra.mxu0 %v358
    %1877 = vmatprep.subr.mxu0 0.0
    %1878 = vmatpush1.msra.mxu0 %v359
    %1879 = vmatprep.subr.mxu0 0.0
    %1880 = vmatpush1.msra.mxu0 0.0
    %1881 = vmatprep.subr.mxu0 0.0
    %1882 = vmatpush1.msra.mxu0 0.0
    %1883 = vmatprep.subr.mxu0 0.0
    %1884 = vmatpush1.msra.mxu0 0.0
    %1885 = vmatprep.subr.mxu0 0.0
    %1886 = vmatpush1.msra.mxu0 0.0
    %1887 = vmatprep.subr.mxu0 0.0
    %1888 = vmatpush1.msra.mxu0 0.0
    %1889 = vmatprep.subr.mxu0 0.0
    %1890 = vmatpush1.msra.mxu0 0.0
    %1891 = vmatprep.subr.mxu0 0.0
    %1892 = vmatpush1.msra.mxu0 0.0
    %1893 = vmatprep.subr.mxu0 0.0
    %1894 = vmatpush1.msra.mxu0 0.0
    %1895 = vmatprep.subr.mxu0 0.0
    %1896 = vmatpush1.msra.mxu0 0.0
    %1897 = vmatprep.subr.mxu0 0.0
    %1898 = vmatpush1.msra.mxu0 0.0
    %1899 = vmatprep.subr.mxu0 0.0
    %1900 = vmatpush1.msra.mxu0 0.0
    %1901 = vmatprep.subr.mxu0 0.0
    %1902 = vmatpush1.msra.mxu0 0.0
    %1903 = vmatprep.subr.mxu0 0.0
    %1904 = vmatpush1.msra.mxu0 0.0
    %1905 = vmatprep.subr.mxu0 0.0
    %1906 = vmatpush1.msra.mxu0 0.0
    %1907 = vmatprep.subr.mxu0 0.0
    %1908 = vmatpush1.msra.mxu0 0.0
    %1909 = vmatprep.subr.mxu0 0.0
    %1910 = vmatpush1.msra.mxu0 0.0
    %1911 = vmatprep.subr.mxu0 0.0
    %1912 = vmatpush1.msra.mxu0 0.0
    %1913 = vmatprep.subr.mxu0 0.0
    %1914 = vmatpush1.msra.mxu0 0.0
    %1915 = vmatprep.subr.mxu0 0.0
    %1916 = vmatpush1.msra.mxu0 0.0
    %1917 = vmatprep.subr.mxu0 0.0
    %1918 = vmatpush1.msra.mxu0 0.0
    %1919 = vmatprep.subr.mxu0 0.0
    %1920 = vmatpush1.msra.mxu0 0.0
    %1921 = vmatprep.subr.mxu0 0.0
    %1922 = vmatpush1.msra.mxu0 0.0
    %1923 = vmatprep.subr.mxu0 0.0
    %1924 = vmatpush1.msra.mxu0 0.0
    %1925 = vmatprep.subr.mxu0 0.0
    %1926 = vmatpush1.msra.mxu0 0.0
    %1927 = vmatprep.subr.mxu0 0.0
    %1928 = vmatpush1.msra.mxu0 0.0
    %1929 = vmatprep.subr.mxu0 0.0
    %1930 = vmatpush1.msra.mxu0 0.0
    %1931 = vmatprep.subr.mxu0 0.0
    %1932 = vmatpush1.msra.mxu0 0.0
    %1933 = vmatprep.subr.mxu0 0.0
    %1934 = vmatpush1.msra.mxu0 0.0
    %1935 = vmatprep.subr.mxu0 0.0
    %1936 = vmatpush1.msra.mxu0 0.0
    %1937 = vmatprep.subr.mxu0 0.0
    %1938 = vmatpush1.msra.mxu0 0.0
    %1939 = vmatprep.mubr.f32.mxu0 0.0
    %1940 = vmatmul.mubr.f32.gmra.mrb[0].mxu0 %v1638
    %v1941 = vpop.f32.mrb[0].mxu0
    %v1942 = vadd.f32 0.0, %v1941
    %v1943 = vpop.f32.mrb[0].mxu0
    %1944 = vdwg.mxu0
    %v1946 = vrot.slane %v1942, 5
    %v1948 = vadd.f32 %v668, %v1946
    %v1949 = vsub.f32 0.0, %v1948
    %v1950 = vmul.f32 %v1949, 1.442695
    %v1951 = vpow.pop %v1950
    %v1952 = vadd.f32 %v1951, 1.0
    %v1953 = vrcp.pop %v1952
    %v1954 = vmul.f32 1.0, %v1953
    %v1956 = vrot.slane %v1633, 7
    %v1958 = vmul.f32 %v1799, %v1956
    %v1959 = vmul.f32 %v1719, %v1874
    %v1960 = vadd.f32 %v1958, %v1959
    %v1961 = vtanh.pop %v1960
    %v1962 = vmul.f32 %v1954, %v1961
    %v1964 = vrot.slane %v1962, 3
    %v1965 = vsel %vm671, %v1964, 0
    %1967 = vmatprep.subr.mxu0 0.0
    %1968 = vmatpush1.msra.mxu0 %v352
    %1969 = vmatprep.subr.mxu0 0.0
    %1970 = vmatpush1.msra.mxu0 %v353
    %1971 = vmatprep.subr.mxu0 0.0
    %1972 = vmatpush1.msra.mxu0 0.0
    %1973 = vmatprep.subr.mxu0 0.0
    %1974 = vmatpush1.msra.mxu0 0.0
    %1975 = vmatprep.subr.mxu0 0.0
    %1976 = vmatpush1.msra.mxu0 0.0
    %1977 = vmatprep.subr.mxu0 0.0
    %1978 = vmatpush1.msra.mxu0 0.0
    %1979 = vmatprep.subr.mxu0 0.0
    %1980 = vmatpush1.msra.mxu0 0.0
    %1981 = vmatprep.subr.mxu0 0.0
    %1982 = vmatpush1.msra.mxu0 0.0
    %1983 = vmatprep.subr.mxu0 0.0
    %1984 = vmatpush1.msra.mxu0 0.0
    %1985 = vmatprep.subr.mxu0 0.0
    %1986 = vmatpush1.msra.mxu0 0.0
    %1987 = vmatprep.subr.mxu0 0.0
    %1988 = vmatpush1.msra.mxu0 0.0
    %1989 = vmatprep.subr.mxu0 0.0
    %1990 = vmatpush1.msra.mxu0 0.0
    %1991 = vmatprep.subr.mxu0 0.0
    %1992 = vmatpush1.msra.mxu0 0.0
    %1993 = vmatprep.subr.mxu0 0.0
    %1994 = vmatpush1.msra.mxu0 0.0
    %1995 = vmatprep.subr.mxu0 0.0
    %1996 = vmatpush1.msra.mxu0 0.0
    %1997 = vmatprep.subr.mxu0 0.0
    %1998 = vmatpush1.msra.mxu0 0.0
    %1999 = vmatprep.subr.mxu0 0.0
    %2000 = vmatpush1.msra.mxu0 0.0
    %2001 = vmatprep.subr.mxu0 0.0
    %2002 = vmatpush1.msra.mxu0 0.0
    %2003 = vmatprep.subr.mxu0 0.0
    %2004 = vmatpush1.msra.mxu0 0.0
    %2005 = vmatprep.subr.mxu0 0.0
    %2006 = vmatpush1.msra.mxu0 0.0
    %2007 = vmatprep.subr.mxu0 0.0
    %2008 = vmatpush1.msra.mxu0 0.0
    %2009 = vmatprep.subr.mxu0 0.0
    %2010 = vmatpush1.msra.mxu0 0.0
    %2011 = vmatprep.subr.mxu0 0.0
    %2012 = vmatpush1.msra.mxu0 0.0
    %2013 = vmatprep.subr.mxu0 0.0
    %2014 = vmatpush1.msra.mxu0 0.0
    %2015 = vmatprep.subr.mxu0 0.0
    %2016 = vmatpush1.msra.mxu0 0.0
    %2017 = vmatprep.subr.mxu0 0.0
    %2018 = vmatpush1.msra.mxu0 0.0
    %2019 = vmatprep.subr.mxu0 0.0
    %2020 = vmatpush1.msra.mxu0 0.0
    %2021 = vmatprep.subr.mxu0 0.0
    %2022 = vmatpush1.msra.mxu0 0.0
    %2023 = vmatprep.subr.mxu0 0.0
    %2024 = vmatpush1.msra.mxu0 0.0
    %2025 = vmatprep.subr.mxu0 0.0
    %2026 = vmatpush1.msra.mxu0 0.0
    %2027 = vmatprep.subr.mxu0 0.0
    %2028 = vmatpush1.msra.mxu0 0.0
    %2029 = vmatprep.subr.mxu0 0.0
    %2030 = vmatpush1.msra.mxu0 0.0
    %2031 = vmatprep.mubr.f32.mxu0 0.0
    %2032 = vmatmul.mubr.f32.gmra.mrb[0].mxu0 %v1965
    %v2033 = vpop.f32.mrb[0].mxu0
    %v2034 = vadd.f32 0.0, %v2033
    %v2035 = vpop.f32.mrb[0].mxu0
    %2036 = vdwg.mxu0
    %v2038 = vrot.slane %v2034, 4
    %v2040 = vadd.f32 %v440, %v2038
    %v2041 = vsub.f32 0.0, %v2040
    %v2042 = vmul.f32 %v2041, 1.442695
    %v2043 = vpow.pop %v2042
    %v2044 = vadd.f32 %v2043, 1.0
    %v2045 = vrcp.pop %v2044
    %v2046 = vmul.f32 1.0, %v2045
    %2047 = vmatprep.subr.mxu0 0.0
    %2048 = vmatpush1.msra.mxu0 %v354
    %2049 = vmatprep.subr.mxu0 0.0
    %2050 = vmatpush1.msra.mxu0 %v355
    %2051 = vmatprep.subr.mxu0 0.0
    %2052 = vmatpush1.msra.mxu0 0.0
    %2053 = vmatprep.subr.mxu0 0.0
    %2054 = vmatpush1.msra.mxu0 0.0
    %2055 = vmatprep.subr.mxu0 0.0
    %2056 = vmatpush1.msra.mxu0 0.0
    %2057 = vmatprep.subr.mxu0 0.0
    %2058 = vmatpush1.msra.mxu0 0.0
    %2059 = vmatprep.subr.mxu0 0.0
    %2060 = vmatpush1.msra.mxu0 0.0
    %2061 = vmatprep.subr.mxu0 0.0
    %2062 = vmatpush1.msra.mxu0 0.0
    %2063 = vmatprep.subr.mxu0 0.0
    %2064 = vmatpush1.msra.mxu0 0.0
    %2065 = vmatprep.subr.mxu0 0.0
    %2066 = vmatpush1.msra.mxu0 0.0
    %2067 = vmatprep.subr.mxu0 0.0
    %2068 = vmatpush1.msra.mxu0 0.0
    %2069 = vmatprep.subr.mxu0 0.0
    %2070 = vmatpush1.msra.mxu0 0.0
    %2071 = vmatprep.subr.mxu0 0.0
    %2072 = vmatpush1.msra.mxu0 0.0
    %2073 = vmatprep.subr.mxu0 0.0
    %2074 = vmatpush1.msra.mxu0 0.0
    %2075 = vmatprep.subr.mxu0 0.0
    %2076 = vmatpush1.msra.mxu0 0.0
    %2077 = vmatprep.subr.mxu0 0.0
    %2078 = vmatpush1.msra.mxu0 0.0
    %2079 = vmatprep.subr.mxu0 0.0
    %2080 = vmatpush1.msra.mxu0 0.0
    %2081 = vmatprep.subr.mxu0 0.0
    %2082 = vmatpush1.msra.mxu0 0.0
    %2083 = vmatprep.subr.mxu0 0.0
    %2084 = vmatpush1.msra.mxu0 0.0
    %2085 = vmatprep.subr.mxu0 0.0
    %2086 = vmatpush1.msra.mxu0 0.0
    %2087 = vmatprep.subr.mxu0 0.0
    %2088 = vmatpush1.msra.mxu0 0.0
    %2089 = vmatprep.subr.mxu0 0.0
    %2090 = vmatpush1.msra.mxu0 0.0
    %2091 = vmatprep.subr.mxu0 0.0
    %2092 = vmatpush1.msra.mxu0 0.0
    %2093 = vmatprep.subr.mxu0 0.0
    %2094 = vmatpush1.msra.mxu0 0.0
    %2095 = vmatprep.subr.mxu0 0.0
    %2096 = vmatpush1.msra.mxu0 0.0
    %2097 = vmatprep.subr.mxu0 0.0
    %2098 = vmatpush1.msra.mxu0 0.0
    %2099 = vmatprep.subr.mxu0 0.0
    %2100 = vmatpush1.msra.mxu0 0.0
    %2101 = vmatprep.subr.mxu0 0.0
    %2102 = vmatpush1.msra.mxu0 0.0
    %2103 = vmatprep.subr.mxu0 0.0
    %2104 = vmatpush1.msra.mxu0 0.0
    %2105 = vmatprep.subr.mxu0 0.0
    %2106 = vmatpush1.msra.mxu0 0.0
    %2107 = vmatprep.subr.mxu0 0.0
    %2108 = vmatpush1.msra.mxu0 0.0
    %2109 = vmatprep.subr.mxu0 0.0
    %2110 = vmatpush1.msra.mxu0 0.0
    %2111 = vmatprep.mubr.f32.mxu0 0.0
    %2112 = vmatmul.mubr.f32.gmra.mrb[0].mxu0 %v1965
    %v2113 = vpop.f32.mrb[0].mxu0
    %v2114 = vadd.f32 0.0, %v2113
    %v2115 = vpop.f32.mrb[0].mxu0
    %2116 = vdwg.mxu0
    %v2118 = vrot.slane %v2114, 4
    %v2120 = vadd.f32 %v516, %v2118
    %v2121 = vsub.f32 0.0, %v2120
    %v2122 = vmul.f32 %v2121, 1.442695
    %v2123 = vpow.pop %v2122
    %v2124 = vadd.f32 %v2123, 1.0
    %v2125 = vrcp.pop %v2124
    %v2126 = vmul.f32 1.0, %v2125
    %2127 = vmatprep.subr.mxu0 0.0
    %2128 = vmatpush1.msra.mxu0 %v356
    %2129 = vmatprep.subr.mxu0 0.0
    %2130 = vmatpush1.msra.mxu0 %v357
    %2131 = vmatprep.subr.mxu0 0.0
    %2132 = vmatpush1.msra.mxu0 0.0
    %2133 = vmatprep.subr.mxu0 0.0
    %2134 = vmatpush1.msra.mxu0 0.0
    %2135 = vmatprep.subr.mxu0 0.0
    %2136 = vmatpush1.msra.mxu0 0.0
    %2137 = vmatprep.subr.mxu0 0.0
    %2138 = vmatpush1.msra.mxu0 0.0
    %2139 = vmatprep.subr.mxu0 0.0
    %2140 = vmatpush1.msra.mxu0 0.0
    %2141 = vmatprep.subr.mxu0 0.0
    %2142 = vmatpush1.msra.mxu0 0.0
    %2143 = vmatprep.subr.mxu0 0.0
    %2144 = vmatpush1.msra.mxu0 0.0
    %2145 = vmatprep.subr.mxu0 0.0
    %2146 = vmatpush1.msra.mxu0 0.0
    %2147 = vmatprep.subr.mxu0 0.0
    %2148 = vmatpush1.msra.mxu0 0.0
    %2149 = vmatprep.subr.mxu0 0.0
    %2150 = vmatpush1.msra.mxu0 0.0
    %2151 = vmatprep.subr.mxu0 0.0
    %2152 = vmatpush1.msra.mxu0 0.0
    %2153 = vmatprep.subr.mxu0 0.0
    %2154 = vmatpush1.msra.mxu0 0.0
    %2155 = vmatprep.subr.mxu0 0.0
    %2156 = vmatpush1.msra.mxu0 0.0
    %2157 = vmatprep.subr.mxu0 0.0
    %2158 = vmatpush1.msra.mxu0 0.0
    %2159 = vmatprep.subr.mxu0 0.0
    %2160 = vmatpush1.msra.mxu0 0.0
    %2161 = vmatprep.subr.mxu0 0.0
    %2162 = vmatpush1.msra.mxu0 0.0
    %2163 = vmatprep.subr.mxu0 0.0
    %2164 = vmatpush1.msra.mxu0 0.0
    %2165 = vmatprep.subr.mxu0 0.0
    %2166 = vmatpush1.msra.mxu0 0.0
    %2167 = vmatprep.subr.mxu0 0.0
    %2168 = vmatpush1.msra.mxu0 0.0
    %2169 = vmatprep.subr.mxu0 0.0
    %2170 = vmatpush1.msra.mxu0 0.0
    %2171 = vmatprep.subr.mxu0 0.0
    %2172 = vmatpush1.msra.mxu0 0.0
    %2173 = vmatprep.subr.mxu0 0.0
    %2174 = vmatpush1.msra.mxu0 0.0
    %2175 = vmatprep.subr.mxu0 0.0
    %2176 = vmatpush1.msra.mxu0 0.0
    %2177 = vmatprep.subr.mxu0 0.0
    %2178 = vmatpush1.msra.mxu0 0.0
    %2179 = vmatprep.subr.mxu0 0.0
    %2180 = vmatpush1.msra.mxu0 0.0
    %2181 = vmatprep.subr.mxu0 0.0
    %2182 = vmatpush1.msra.mxu0 0.0
    %2183 = vmatprep.subr.mxu0 0.0
    %2184 = vmatpush1.msra.mxu0 0.0
    %2185 = vmatprep.subr.mxu0 0.0
    %2186 = vmatpush1.msra.mxu0 0.0
    %2187 = vmatprep.subr.mxu0 0.0
    %2188 = vmatpush1.msra.mxu0 0.0
    %2189 = vmatprep.subr.mxu0 0.0
    %2190 = vmatpush1.msra.mxu0 0.0
    %2191 = vmatprep.mubr.f32.mxu0 0.0
    %2192 = vmatmul.mubr.f32.gmra.mrb[0].mxu0 %v1965
    %v2193 = vpop.f32.mrb[0].mxu0
    %v2194 = vadd.f32 0.0, %v2193
    %v2195 = vpop.f32.mrb[0].mxu0
    %2196 = vdwg.mxu0
    %v2198 = vrot.slane %v2194, 4
    %v2200 = vadd.f32 %v592, %v2198
    %v2201 = vtanh.pop %v2200
    %2202 = vmatprep.subr.mxu0 0.0
    %2203 = vmatpush1.msra.mxu0 %v358
    %2204 = vmatprep.subr.mxu0 0.0
    %2205 = vmatpush1.msra.mxu0 %v359
    %2206 = vmatprep.subr.mxu0 0.0
    %2207 = vmatpush1.msra.mxu0 0.0
    %2208 = vmatprep.subr.mxu0 0.0
    %2209 = vmatpush1.msra.mxu0 0.0
    %2210 = vmatprep.subr.mxu0 0.0
    %2211 = vmatpush1.msra.mxu0 0.0
    %2212 = vmatprep.subr.mxu0 0.0
    %2213 = vmatpush1.msra.mxu0 0.0
    %2214 = vmatprep.subr.mxu0 0.0
    %2215 = vmatpush1.msra.mxu0 0.0
    %2216 = vmatprep.subr.mxu0 0.0
    %2217 = vmatpush1.msra.mxu0 0.0
    %2218 = vmatprep.subr.mxu0 0.0
    %2219 = vmatpush1.msra.mxu0 0.0
    %2220 = vmatprep.subr.mxu0 0.0
    %2221 = vmatpush1.msra.mxu0 0.0
    %2222 = vmatprep.subr.mxu0 0.0
    %2223 = vmatpush1.msra.mxu0 0.0
    %2224 = vmatprep.subr.mxu0 0.0
    %2225 = vmatpush1.msra.mxu0 0.0
    %2226 = vmatprep.subr.mxu0 0.0
    %2227 = vmatpush1.msra.mxu0 0.0
    %2228 = vmatprep.subr.mxu0 0.0
    %2229 = vmatpush1.msra.mxu0 0.0
    %2230 = vmatprep.subr.mxu0 0.0
    %2231 = vmatpush1.msra.mxu0 0.0
    %2232 = vmatprep.subr.mxu0 0.0
    %2233 = vmatpush1.msra.mxu0 0.0
    %2234 = vmatprep.subr.mxu0 0.0
    %2235 = vmatpush1.msra.mxu0 0.0
    %2236 = vmatprep.subr.mxu0 0.0
    %2237 = vmatpush1.msra.mxu0 0.0
    %2238 = vmatprep.subr.mxu0 0.0
    %2239 = vmatpush1.msra.mxu0 0.0
    %2240 = vmatprep.subr.mxu0 0.0
    %2241 = vmatpush1.msra.mxu0 0.0
    %2242 = vmatprep.subr.mxu0 0.0
    %2243 = vmatpush1.msra.mxu0 0.0
    %2244 = vmatprep.subr.mxu0 0.0
    %2245 = vmatpush1.msra.mxu0 0.0
    %2246 = vmatprep.subr.mxu0 0.0
    %2247 = vmatpush1.msra.mxu0 0.0
    %2248 = vmatprep.subr.mxu0 0.0
    %2249 = vmatpush1.msra.mxu0 0.0
    %2250 = vmatprep.subr.mxu0 0.0
    %2251 = vmatpush1.msra.mxu0 0.0
    %2252 = vmatprep.subr.mxu0 0.0
    %2253 = vmatpush1.msra.mxu0 0.0
    %2254 = vmatprep.subr.mxu0 0.0
    %2255 = vmatpush1.msra.mxu0 0.0
    %2256 = vmatprep.subr.mxu0 0.0
    %2257 = vmatpush1.msra.mxu0 0.0
    %2258 = vmatprep.subr.mxu0 0.0
    %2259 = vmatpush1.msra.mxu0 0.0
    %2260 = vmatprep.subr.mxu0 0.0
    %2261 = vmatpush1.msra.mxu0 0.0
    %2262 = vmatprep.subr.mxu0 0.0
    %2263 = vmatpush1.msra.mxu0 0.0
    %2264 = vmatprep.subr.mxu0 0.0
    %2265 = vmatpush1.msra.mxu0 0.0
    %2266 = vmatprep.mubr.f32.mxu0 0.0
    %2267 = vmatmul.mubr.f32.gmra.mrb[0].mxu0 %v1965
    %v2268 = vpop.f32.mrb[0].mxu0
    %v2269 = vadd.f32 0.0, %v2268
    %v2270 = vpop.f32.mrb[0].mxu0
    %2271 = vdwg.mxu0
    %v2273 = vrot.slane %v2269, 4
    %v2275 = vadd.f32 %v668, %v2273
    %v2276 = vsub.f32 0.0, %v2275
    %v2277 = vmul.f32 %v2276, 1.442695
    %v2278 = vpow.pop %v2277
    %v2279 = vadd.f32 %v2278, 1.0
    %v2280 = vrcp.pop %v2279
    %v2281 = vmul.f32 1.0, %v2280
    %v2283 = vrot.slane %v1960, 7
    %v2285 = vmul.f32 %v2126, %v2283
    %v2286 = vmul.f32 %v2046, %v2201
    %v2287 = vadd.f32 %v2285, %v2286
    %v2288 = vtanh.pop %v2287
    %v2289 = vmul.f32 %v2281, %v2288
    %v2291 = vrot.slane %v2289, 4
    %v2292 = vsel %vm671, %v2291, 0
    %2294 = vmatprep.subr.mxu0 0.0
    %2295 = vmatpush1.msra.mxu0 %v352
    %2296 = vmatprep.subr.mxu0 0.0
    %2297 = vmatpush1.msra.mxu0 %v353
    %2298 = vmatprep.subr.mxu0 0.0
    %2299 = vmatpush1.msra.mxu0 0.0
    %2300 = vmatprep.subr.mxu0 0.0
    %2301 = vmatpush1.msra.mxu0 0.0
    %2302 = vmatprep.subr.mxu0 0.0
    %2303 = vmatpush1.msra.mxu0 0.0
    %2304 = vmatprep.subr.mxu0 0.0
    %2305 = vmatpush1.msra.mxu0 0.0
    %2306 = vmatprep.subr.mxu0 0.0
    %2307 = vmatpush1.msra.mxu0 0.0
    %2308 = vmatprep.subr.mxu0 0.0
    %2309 = vmatpush1.msra.mxu0 0.0
    %2310 = vmatprep.subr.mxu0 0.0
    %2311 = vmatpush1.msra.mxu0 0.0
    %2312 = vmatprep.subr.mxu0 0.0
    %2313 = vmatpush1.msra.mxu0 0.0
    %2314 = vmatprep.subr.mxu0 0.0
    %2315 = vmatpush1.msra.mxu0 0.0
    %2316 = vmatprep.subr.mxu0 0.0
    %2317 = vmatpush1.msra.mxu0 0.0
    %2318 = vmatprep.subr.mxu0 0.0
    %2319 = vmatpush1.msra.mxu0 0.0
    %2320 = vmatprep.subr.mxu0 0.0
    %2321 = vmatpush1.msra.mxu0 0.0
    %2322 = vmatprep.subr.mxu0 0.0
    %2323 = vmatpush1.msra.mxu0 0.0
    %2324 = vmatprep.subr.mxu0 0.0
    %2325 = vmatpush1.msra.mxu0 0.0
    %2326 = vmatprep.subr.mxu0 0.0
    %2327 = vmatpush1.msra.mxu0 0.0
    %2328 = vmatprep.subr.mxu0 0.0
    %2329 = vmatpush1.msra.mxu0 0.0
    %2330 = vmatprep.subr.mxu0 0.0
    %2331 = vmatpush1.msra.mxu0 0.0
    %2332 = vmatprep.subr.mxu0 0.0
    %2333 = vmatpush1.msra.mxu0 0.0
    %2334 = vmatprep.subr.mxu0 0.0
    %2335 = vmatpush1.msra.mxu0 0.0
    %2336 = vmatprep.subr.mxu0 0.0
    %2337 = vmatpush1.msra.mxu0 0.0
    %2338 = vmatprep.subr.mxu0 0.0
    %2339 = vmatpush1.msra.mxu0 0.0
    %2340 = vmatprep.subr.mxu0 0.0
    %2341 = vmatpush1.msra.mxu0 0.0
    %2342 = vmatprep.subr.mxu0 0.0
    %2343 = vmatpush1.msra.mxu0 0.0
    %2344 = vmatprep.subr.mxu0 0.0
    %2345 = vmatpush1.msra.mxu0 0.0
    %2346 = vmatprep.subr.mxu0 0.0
    %2347 = vmatpush1.msra.mxu0 0.0
    %2348 = vmatprep.subr.mxu0 0.0
    %2349 = vmatpush1.msra.mxu0 0.0
    %2350 = vmatprep.subr.mxu0 0.0
    %2351 = vmatpush1.msra.mxu0 0.0
    %2352 = vmatprep.subr.mxu0 0.0
    %2353 = vmatpush1.msra.mxu0 0.0
    %2354 = vmatprep.subr.mxu0 0.0
    %2355 = vmatpush1.msra.mxu0 0.0
    %2356 = vmatprep.subr.mxu0 0.0
    %2357 = vmatpush1.msra.mxu0 0.0
    %2358 = vmatprep.mubr.f32.mxu0 0.0
    %2359 = vmatmul.mubr.f32.gmra.mrb[0].mxu0 %v2292
    %v2360 = vpop.f32.mrb[0].mxu0
    %v2361 = vadd.f32 0.0, %v2360
    %v2362 = vpop.f32.mrb[0].mxu0
    %2363 = vdwg.mxu0
    %v2365 = vrot.slane %v2361, 3
    %v2367 = vadd.f32 %v440, %v2365
    %v2368 = vsub.f32 0.0, %v2367
    %v2369 = vmul.f32 %v2368, 1.442695
    %v2370 = vpow.pop %v2369
    %v2371 = vadd.f32 %v2370, 1.0
    %v2372 = vrcp.pop %v2371
    %v2373 = vmul.f32 1.0, %v2372
    %2374 = vmatprep.subr.mxu0 0.0
    %2375 = vmatpush1.msra.mxu0 %v354
    %2376 = vmatprep.subr.mxu0 0.0
    %2377 = vmatpush1.msra.mxu0 %v355
    %2378 = vmatprep.subr.mxu0 0.0
    %2379 = vmatpush1.msra.mxu0 0.0
    %2380 = vmatprep.subr.mxu0 0.0
    %2381 = vmatpush1.msra.mxu0 0.0
    %2382 = vmatprep.subr.mxu0 0.0
    %2383 = vmatpush1.msra.mxu0 0.0
    %2384 = vmatprep.subr.mxu0 0.0
    %2385 = vmatpush1.msra.mxu0 0.0
    %2386 = vmatprep.subr.mxu0 0.0
    %2387 = vmatpush1.msra.mxu0 0.0
    %2388 = vmatprep.subr.mxu0 0.0
    %2389 = vmatpush1.msra.mxu0 0.0
    %2390 = vmatprep.subr.mxu0 0.0
    %2391 = vmatpush1.msra.mxu0 0.0
    %2392 = vmatprep.subr.mxu0 0.0
    %2393 = vmatpush1.msra.mxu0 0.0
    %2394 = vmatprep.subr.mxu0 0.0
    %2395 = vmatpush1.msra.mxu0 0.0
    %2396 = vmatprep.subr.mxu0 0.0
    %2397 = vmatpush1.msra.mxu0 0.0
    %2398 = vmatprep.subr.mxu0 0.0
    %2399 = vmatpush1.msra.mxu0 0.0
    %2400 = vmatprep.subr.mxu0 0.0
    %2401 = vmatpush1.msra.mxu0 0.0
    %2402 = vmatprep.subr.mxu0 0.0
    %2403 = vmatpush1.msra.mxu0 0.0
    %2404 = vmatprep.subr.mxu0 0.0
    %2405 = vmatpush1.msra.mxu0 0.0
    %2406 = vmatprep.subr.mxu0 0.0
    %2407 = vmatpush1.msra.mxu0 0.0
    %2408 = vmatprep.subr.mxu0 0.0
    %2409 = vmatpush1.msra.mxu0 0.0
    %2410 = vmatprep.subr.mxu0 0.0
    %2411 = vmatpush1.msra.mxu0 0.0
    %2412 = vmatprep.subr.mxu0 0.0
    %2413 = vmatpush1.msra.mxu0 0.0
    %2414 = vmatprep.subr.mxu0 0.0
    %2415 = vmatpush1.msra.mxu0 0.0
    %2416 = vmatprep.subr.mxu0 0.0
    %2417 = vmatpush1.msra.mxu0 0.0
    %2418 = vmatprep.subr.mxu0 0.0
    %2419 = vmatpush1.msra.mxu0 0.0
    %2420 = vmatprep.subr.mxu0 0.0
    %2421 = vmatpush1.msra.mxu0 0.0
    %2422 = vmatprep.subr.mxu0 0.0
    %2423 = vmatpush1.msra.mxu0 0.0
    %2424 = vmatprep.subr.mxu0 0.0
    %2425 = vmatpush1.msra.mxu0 0.0
    %2426 = vmatprep.subr.mxu0 0.0
    %2427 = vmatpush1.msra.mxu0 0.0
    %2428 = vmatprep.subr.mxu0 0.0
    %2429 = vmatpush1.msra.mxu0 0.0
    %2430 = vmatprep.subr.mxu0 0.0
    %2431 = vmatpush1.msra.mxu0 0.0
    %2432 = vmatprep.subr.mxu0 0.0
    %2433 = vmatpush1.msra.mxu0 0.0
    %2434 = vmatprep.subr.mxu0 0.0
    %2435 = vmatpush1.msra.mxu0 0.0
    %2436 = vmatprep.subr.mxu0 0.0
    %2437 = vmatpush1.msra.mxu0 0.0
    %2438 = vmatprep.mubr.f32.mxu0 0.0
    %2439 = vmatmul.mubr.f32.gmra.mrb[0].mxu0 %v2292
    %v2440 = vpop.f32.mrb[0].mxu0
    %v2441 = vadd.f32 0.0, %v2440
    %v2442 = vpop.f32.mrb[0].mxu0
    %2443 = vdwg.mxu0
    %v2445 = vrot.slane %v2441, 3
    %v2447 = vadd.f32 %v516, %v2445
    %v2448 = vsub.f32 0.0, %v2447
    %v2449 = vmul.f32 %v2448, 1.442695
    %v2450 = vpow.pop %v2449
    %v2451 = vadd.f32 %v2450, 1.0
    %v2452 = vrcp.pop %v2451
    %v2453 = vmul.f32 1.0, %v2452
    %2454 = vmatprep.subr.mxu0 0.0
    %2455 = vmatpush1.msra.mxu0 %v356
    %2456 = vmatprep.subr.mxu0 0.0
    %2457 = vmatpush1.msra.mxu0 %v357
    %2458 = vmatprep.subr.mxu0 0.0
    %2459 = vmatpush1.msra.mxu0 0.0
    %2460 = vmatprep.subr.mxu0 0.0
    %2461 = vmatpush1.msra.mxu0 0.0
    %2462 = vmatprep.subr.mxu0 0.0
    %2463 = vmatpush1.msra.mxu0 0.0
    %2464 = vmatprep.subr.mxu0 0.0
    %2465 = vmatpush1.msra.mxu0 0.0
    %2466 = vmatprep.subr.mxu0 0.0
    %2467 = vmatpush1.msra.mxu0 0.0
    %2468 = vmatprep.subr.mxu0 0.0
    %2469 = vmatpush1.msra.mxu0 0.0
    %2470 = vmatprep.subr.mxu0 0.0
    %2471 = vmatpush1.msra.mxu0 0.0
    %2472 = vmatprep.subr.mxu0 0.0
    %2473 = vmatpush1.msra.mxu0 0.0
    %2474 = vmatprep.subr.mxu0 0.0
    %2475 = vmatpush1.msra.mxu0 0.0
    %2476 = vmatprep.subr.mxu0 0.0
    %2477 = vmatpush1.msra.mxu0 0.0
    %2478 = vmatprep.subr.mxu0 0.0
    %2479 = vmatpush1.msra.mxu0 0.0
    %2480 = vmatprep.subr.mxu0 0.0
    %2481 = vmatpush1.msra.mxu0 0.0
    %2482 = vmatprep.subr.mxu0 0.0
    %2483 = vmatpush1.msra.mxu0 0.0
    %2484 = vmatprep.subr.mxu0 0.0
    %2485 = vmatpush1.msra.mxu0 0.0
    %2486 = vmatprep.subr.mxu0 0.0
    %2487 = vmatpush1.msra.mxu0 0.0
    %2488 = vmatprep.subr.mxu0 0.0
    %2489 = vmatpush1.msra.mxu0 0.0
    %2490 = vmatprep.subr.mxu0 0.0
    %2491 = vmatpush1.msra.mxu0 0.0
    %2492 = vmatprep.subr.mxu0 0.0
    %2493 = vmatpush1.msra.mxu0 0.0
    %2494 = vmatprep.subr.mxu0 0.0
    %2495 = vmatpush1.msra.mxu0 0.0
    %2496 = vmatprep.subr.mxu0 0.0
    %2497 = vmatpush1.msra.mxu0 0.0
    %2498 = vmatprep.subr.mxu0 0.0
    %2499 = vmatpush1.msra.mxu0 0.0
    %2500 = vmatprep.subr.mxu0 0.0
    %2501 = vmatpush1.msra.mxu0 0.0
    %2502 = vmatprep.subr.mxu0 0.0
    %2503 = vmatpush1.msra.mxu0 0.0
    %2504 = vmatprep.subr.mxu0 0.0
    %2505 = vmatpush1.msra.mxu0 0.0
    %2506 = vmatprep.subr.mxu0 0.0
    %2507 = vmatpush1.msra.mxu0 0.0
    %2508 = vmatprep.subr.mxu0 0.0
    %2509 = vmatpush1.msra.mxu0 0.0
    %2510 = vmatprep.subr.mxu0 0.0
    %2511 = vmatpush1.msra.mxu0 0.0
    %2512 = vmatprep.subr.mxu0 0.0
    %2513 = vmatpush1.msra.mxu0 0.0
    %2514 = vmatprep.subr.mxu0 0.0
    %2515 = vmatpush1.msra.mxu0 0.0
    %2516 = vmatprep.subr.mxu0 0.0
    %2517 = vmatpush1.msra.mxu0 0.0
    %2518 = vmatprep.mubr.f32.mxu0 0.0
    %2519 = vmatmul.mubr.f32.gmra.mrb[0].mxu0 %v2292
    %v2520 = vpop.f32.mrb[0].mxu0
    %v2521 = vadd.f32 0.0, %v2520
    %v2522 = vpop.f32.mrb[0].mxu0
    %2523 = vdwg.mxu0
    %v2525 = vrot.slane %v2521, 3
    %v2527 = vadd.f32 %v592, %v2525
    %v2528 = vtanh.pop %v2527
    %2529 = vmatprep.subr.mxu0 0.0
    %2530 = vmatpush1.msra.mxu0 %v358
    %2531 = vmatprep.subr.mxu0 0.0
    %2532 = vmatpush1.msra.mxu0 %v359
    %2533 = vmatprep.subr.mxu0 0.0
    %2534 = vmatpush1.msra.mxu0 0.0
    %2535 = vmatprep.subr.mxu0 0.0
    %2536 = vmatpush1.msra.mxu0 0.0
    %2537 = vmatprep.subr.mxu0 0.0
    %2538 = vmatpush1.msra.mxu0 0.0
    %2539 = vmatprep.subr.mxu0 0.0
    %2540 = vmatpush1.msra.mxu0 0.0
    %2541 = vmatprep.subr.mxu0 0.0
    %2542 = vmatpush1.msra.mxu0 0.0
    %2543 = vmatprep.subr.mxu0 0.0
    %2544 = vmatpush1.msra.mxu0 0.0
    %2545 = vmatprep.subr.mxu0 0.0
    %2546 = vmatpush1.msra.mxu0 0.0
    %2547 = vmatprep.subr.mxu0 0.0
    %2548 = vmatpush1.msra.mxu0 0.0
    %2549 = vmatprep.subr.mxu0 0.0
    %2550 = vmatpush1.msra.mxu0 0.0
    %2551 = vmatprep.subr.mxu0 0.0
    %2552 = vmatpush1.msra.mxu0 0.0
    %2553 = vmatprep.subr.mxu0 0.0
    %2554 = vmatpush1.msra.mxu0 0.0
    %2555 = vmatprep.subr.mxu0 0.0
    %2556 = vmatpush1.msra.mxu0 0.0
    %2557 = vmatprep.subr.mxu0 0.0
    %2558 = vmatpush1.msra.mxu0 0.0
    %2559 = vmatprep.subr.mxu0 0.0
    %2560 = vmatpush1.msra.mxu0 0.0
    %2561 = vmatprep.subr.mxu0 0.0
    %2562 = vmatpush1.msra.mxu0 0.0
    %2563 = vmatprep.subr.mxu0 0.0
    %2564 = vmatpush1.msra.mxu0 0.0
    %2565 = vmatprep.subr.mxu0 0.0
    %2566 = vmatpush1.msra.mxu0 0.0
    %2567 = vmatprep.subr.mxu0 0.0
    %2568 = vmatpush1.msra.mxu0 0.0
    %2569 = vmatprep.subr.mxu0 0.0
    %2570 = vmatpush1.msra.mxu0 0.0
    %2571 = vmatprep.subr.mxu0 0.0
    %2572 = vmatpush1.msra.mxu0 0.0
    %2573 = vmatprep.subr.mxu0 0.0
    %2574 = vmatpush1.msra.mxu0 0.0
    %2575 = vmatprep.subr.mxu0 0.0
    %2576 = vmatpush1.msra.mxu0 0.0
    %2577 = vmatprep.subr.mxu0 0.0
    %2578 = vmatpush1.msra.mxu0 0.0
    %2579 = vmatprep.subr.mxu0 0.0
    %2580 = vmatpush1.msra.mxu0 0.0
    %2581 = vmatprep.subr.mxu0 0.0
    %2582 = vmatpush1.msra.mxu0 0.0
    %2583 = vmatprep.subr.mxu0 0.0
    %2584 = vmatpush1.msra.mxu0 0.0
    %2585 = vmatprep.subr.mxu0 0.0
    %2586 = vmatpush1.msra.mxu0 0.0
    %2587 = vmatprep.subr.mxu0 0.0
    %2588 = vmatpush1.msra.mxu0 0.0
    %2589 = vmatprep.subr.mxu0 0.0
    %2590 = vmatpush1.msra.mxu0 0.0
    %2591 = vmatprep.subr.mxu0 0.0
    %2592 = vmatpush1.msra.mxu0 0.0
    %2593 = vmatprep.mubr.f32.mxu0 0.0
    %2594 = vmatmul.mubr.f32.gmra.mrb[0].mxu0 %v2292
    %v2595 = vpop.f32.mrb[0].mxu0
    %v2596 = vadd.f32 0.0, %v2595
    %v2597 = vpop.f32.mrb[0].mxu0
    %2598 = vdwg.mxu0
    %v2600 = vrot.slane %v2596, 3
    %v2602 = vadd.f32 %v668, %v2600
    %v2603 = vsub.f32 0.0, %v2602
    %v2604 = vmul.f32 %v2603, 1.442695
    %v2605 = vpow.pop %v2604
    %v2606 = vadd.f32 %v2605, 1.0
    %v2607 = vrcp.pop %v2606
    %v2608 = vmul.f32 1.0, %v2607
    %v2610 = vrot.slane %v2287, 7
    %v2612 = vmul.f32 %v2453, %v2610
    %v2613 = vmul.f32 %v2373, %v2528
    %v2614 = vadd.f32 %v2612, %v2613
    %v2615 = vtanh.pop %v2614
    %v2616 = vmul.f32 %v2608, %v2615
    %v2618 = vrot.slane %v2616, 5
    %v2619 = vsel %vm671, %v2618, 0
    %2621 = vmatprep.subr.mxu0 0.0
    %2622 = vmatpush1.msra.mxu0 %v352
    %2623 = vmatprep.subr.mxu0 0.0
    %2624 = vmatpush1.msra.mxu0 %v353
    %2625 = vmatprep.subr.mxu0 0.0
    %2626 = vmatpush1.msra.mxu0 0.0
    %2627 = vmatprep.subr.mxu0 0.0
    %2628 = vmatpush1.msra.mxu0 0.0
    %2629 = vmatprep.subr.mxu0 0.0
    %2630 = vmatpush1.msra.mxu0 0.0
    %2631 = vmatprep.subr.mxu0 0.0
    %2632 = vmatpush1.msra.mxu0 0.0
    %2633 = vmatprep.subr.mxu0 0.0
    %2634 = vmatpush1.msra.mxu0 0.0
    %2635 = vmatprep.subr.mxu0 0.0
    %2636 = vmatpush1.msra.mxu0 0.0
    %2637 = vmatprep.subr.mxu0 0.0
    %2638 = vmatpush1.msra.mxu0 0.0
    %2639 = vmatprep.subr.mxu0 0.0
    %2640 = vmatpush1.msra.mxu0 0.0
    %2641 = vmatprep.subr.mxu0 0.0
    %2642 = vmatpush1.msra.mxu0 0.0
    %2643 = vmatprep.subr.mxu0 0.0
    %2644 = vmatpush1.msra.mxu0 0.0
    %2645 = vmatprep.subr.mxu0 0.0
    %2646 = vmatpush1.msra.mxu0 0.0
    %2647 = vmatprep.subr.mxu0 0.0
    %2648 = vmatpush1.msra.mxu0 0.0
    %2649 = vmatprep.subr.mxu0 0.0
    %2650 = vmatpush1.msra.mxu0 0.0
    %2651 = vmatprep.subr.mxu0 0.0
    %2652 = vmatpush1.msra.mxu0 0.0
    %2653 = vmatprep.subr.mxu0 0.0
    %2654 = vmatpush1.msra.mxu0 0.0
    %2655 = vmatprep.subr.mxu0 0.0
    %2656 = vmatpush1.msra.mxu0 0.0
    %2657 = vmatprep.subr.mxu0 0.0
    %2658 = vmatpush1.msra.mxu0 0.0
    %2659 = vmatprep.subr.mxu0 0.0
    %2660 = vmatpush1.msra.mxu0 0.0
    %2661 = vmatprep.subr.mxu0 0.0
    %2662 = vmatpush1.msra.mxu0 0.0
    %2663 = vmatprep.subr.mxu0 0.0
    %2664 = vmatpush1.msra.mxu0 0.0
    %2665 = vmatprep.subr.mxu0 0.0
    %2666 = vmatpush1.msra.mxu0 0.0
    %2667 = vmatprep.subr.mxu0 0.0
    %2668 = vmatpush1.msra.mxu0 0.0
    %2669 = vmatprep.subr.mxu0 0.0
    %2670 = vmatpush1.msra.mxu0 0.0
    %2671 = vmatprep.subr.mxu0 0.0
    %2672 = vmatpush1.msra.mxu0 0.0
    %2673 = vmatprep.subr.mxu0 0.0
    %2674 = vmatpush1.msra.mxu0 0.0
    %2675 = vmatprep.subr.mxu0 0.0
    %2676 = vmatpush1.msra.mxu0 0.0
    %2677 = vmatprep.subr.mxu0 0.0
    %2678 = vmatpush1.msra.mxu0 0.0
    %2679 = vmatprep.subr.mxu0 0.0
    %2680 = vmatpush1.msra.mxu0 0.0
    %2681 = vmatprep.subr.mxu0 0.0
    %2682 = vmatpush1.msra.mxu0 0.0
    %2683 = vmatprep.subr.mxu0 0.0
    %2684 = vmatpush1.msra.mxu0 0.0
    %2685 = vmatprep.mubr.f32.mxu0 0.0
    %2686 = vmatmul.mubr.f32.gmra.mrb[0].mxu0 %v2619
    %v2687 = vpop.f32.mrb[0].mxu0
    %v2688 = vadd.f32 0.0, %v2687
    %v2689 = vpop.f32.mrb[0].mxu0
    %2690 = vdwg.mxu0
    %v2692 = vrot.slane %v2688, 2
    %v2694 = vadd.f32 %v440, %v2692
    %v2695 = vsub.f32 0.0, %v2694
    %v2696 = vmul.f32 %v2695, 1.442695
    %v2697 = vpow.pop %v2696
    %v2698 = vadd.f32 %v2697, 1.0
    %v2699 = vrcp.pop %v2698
    %v2700 = vmul.f32 1.0, %v2699
    %2701 = vmatprep.subr.mxu0 0.0
    %2702 = vmatpush1.msra.mxu0 %v354
    %2703 = vmatprep.subr.mxu0 0.0
    %2704 = vmatpush1.msra.mxu0 %v355
    %2705 = vmatprep.subr.mxu0 0.0
    %2706 = vmatpush1.msra.mxu0 0.0
    %2707 = vmatprep.subr.mxu0 0.0
    %2708 = vmatpush1.msra.mxu0 0.0
    %2709 = vmatprep.subr.mxu0 0.0
    %2710 = vmatpush1.msra.mxu0 0.0
    %2711 = vmatprep.subr.mxu0 0.0
    %2712 = vmatpush1.msra.mxu0 0.0
    %2713 = vmatprep.subr.mxu0 0.0
    %2714 = vmatpush1.msra.mxu0 0.0
    %2715 = vmatprep.subr.mxu0 0.0
    %2716 = vmatpush1.msra.mxu0 0.0
    %2717 = vmatprep.subr.mxu0 0.0
    %2718 = vmatpush1.msra.mxu0 0.0
    %2719 = vmatprep.subr.mxu0 0.0
    %2720 = vmatpush1.msra.mxu0 0.0
    %2721 = vmatprep.subr.mxu0 0.0
    %2722 = vmatpush1.msra.mxu0 0.0
    %2723 = vmatprep.subr.mxu0 0.0
    %2724 = vmatpush1.msra.mxu0 0.0
    %2725 = vmatprep.subr.mxu0 0.0
    %2726 = vmatpush1.msra.mxu0 0.0
    %2727 = vmatprep.subr.mxu0 0.0
    %2728 = vmatpush1.msra.mxu0 0.0
    %2729 = vmatprep.subr.mxu0 0.0
    %2730 = vmatpush1.msra.mxu0 0.0
    %2731 = vmatprep.subr.mxu0 0.0
    %2732 = vmatpush1.msra.mxu0 0.0
    %2733 = vmatprep.subr.mxu0 0.0
    %2734 = vmatpush1.msra.mxu0 0.0
    %2735 = vmatprep.subr.mxu0 0.0
    %2736 = vmatpush1.msra.mxu0 0.0
    %2737 = vmatprep.subr.mxu0 0.0
    %2738 = vmatpush1.msra.mxu0 0.0
    %2739 = vmatprep.subr.mxu0 0.0
    %2740 = vmatpush1.msra.mxu0 0.0
    %2741 = vmatprep.subr.mxu0 0.0
    %2742 = vmatpush1.msra.mxu0 0.0
    %2743 = vmatprep.subr.mxu0 0.0
    %2744 = vmatpush1.msra.mxu0 0.0
    %2745 = vmatprep.subr.mxu0 0.0
    %2746 = vmatpush1.msra.mxu0 0.0
    %2747 = vmatprep.subr.mxu0 0.0
    %2748 = vmatpush1.msra.mxu0 0.0
    %2749 = vmatprep.subr.mxu0 0.0
    %2750 = vmatpush1.msra.mxu0 0.0
    %2751 = vmatprep.subr.mxu0 0.0
    %2752 = vmatpush1.msra.mxu0 0.0
    %2753 = vmatprep.subr.mxu0 0.0
    %2754 = vmatpush1.msra.mxu0 0.0
    %2755 = vmatprep.subr.mxu0 0.0
    %2756 = vmatpush1.msra.mxu0 0.0
    %2757 = vmatprep.subr.mxu0 0.0
    %2758 = vmatpush1.msra.mxu0 0.0
    %2759 = vmatprep.subr.mxu0 0.0
    %2760 = vmatpush1.msra.mxu0 0.0
    %2761 = vmatprep.subr.mxu0 0.0
    %2762 = vmatpush1.msra.mxu0 0.0
    %2763 = vmatprep.subr.mxu0 0.0
    %2764 = vmatpush1.msra.mxu0 0.0
    %2765 = vmatprep.mubr.f32.mxu0 0.0
    %2766 = vmatmul.mubr.f32.gmra.mrb[0].mxu0 %v2619
    %v2767 = vpop.f32.mrb[0].mxu0
    %v2768 = vadd.f32 0.0, %v2767
    %v2769 = vpop.f32.mrb[0].mxu0
    %2770 = vdwg.mxu0
    %v2772 = vrot.slane %v2768, 2
    %v2774 = vadd.f32 %v516, %v2772
    %v2775 = vsub.f32 0.0, %v2774
    %v2776 = vmul.f32 %v2775, 1.442695
    %v2777 = vpow.pop %v2776
    %v2778 = vadd.f32 %v2777, 1.0
    %v2779 = vrcp.pop %v2778
    %v2780 = vmul.f32 1.0, %v2779
    %2781 = vmatprep.subr.mxu0 0.0
    %2782 = vmatpush1.msra.mxu0 %v356
    %2783 = vmatprep.subr.mxu0 0.0
    %2784 = vmatpush1.msra.mxu0 %v357
    %2785 = vmatprep.subr.mxu0 0.0
    %2786 = vmatpush1.msra.mxu0 0.0
    %2787 = vmatprep.subr.mxu0 0.0
    %2788 = vmatpush1.msra.mxu0 0.0
    %2789 = vmatprep.subr.mxu0 0.0
    %2790 = vmatpush1.msra.mxu0 0.0
    %2791 = vmatprep.subr.mxu0 0.0
    %2792 = vmatpush1.msra.mxu0 0.0
    %2793 = vmatprep.subr.mxu0 0.0
    %2794 = vmatpush1.msra.mxu0 0.0
    %2795 = vmatprep.subr.mxu0 0.0
    %2796 = vmatpush1.msra.mxu0 0.0
    %2797 = vmatprep.subr.mxu0 0.0
    %2798 = vmatpush1.msra.mxu0 0.0
    %2799 = vmatprep.subr.mxu0 0.0
    %2800 = vmatpush1.msra.mxu0 0.0
    %2801 = vmatprep.subr.mxu0 0.0
    %2802 = vmatpush1.msra.mxu0 0.0
    %2803 = vmatprep.subr.mxu0 0.0
    %2804 = vmatpush1.msra.mxu0 0.0
    %2805 = vmatprep.subr.mxu0 0.0
    %2806 = vmatpush1.msra.mxu0 0.0
    %2807 = vmatprep.subr.mxu0 0.0
    %2808 = vmatpush1.msra.mxu0 0.0
    %2809 = vmatprep.subr.mxu0 0.0
    %2810 = vmatpush1.msra.mxu0 0.0
    %2811 = vmatprep.subr.mxu0 0.0
    %2812 = vmatpush1.msra.mxu0 0.0
    %2813 = vmatprep.subr.mxu0 0.0
    %2814 = vmatpush1.msra.mxu0 0.0
    %2815 = vmatprep.subr.mxu0 0.0
    %2816 = vmatpush1.msra.mxu0 0.0
    %2817 = vmatprep.subr.mxu0 0.0
    %2818 = vmatpush1.msra.mxu0 0.0
    %2819 = vmatprep.subr.mxu0 0.0
    %2820 = vmatpush1.msra.mxu0 0.0
    %2821 = vmatprep.subr.mxu0 0.0
    %2822 = vmatpush1.msra.mxu0 0.0
    %2823 = vmatprep.subr.mxu0 0.0
    %2824 = vmatpush1.msra.mxu0 0.0
    %2825 = vmatprep.subr.mxu0 0.0
    %2826 = vmatpush1.msra.mxu0 0.0
    %2827 = vmatprep.subr.mxu0 0.0
    %2828 = vmatpush1.msra.mxu0 0.0
    %2829 = vmatprep.subr.mxu0 0.0
    %2830 = vmatpush1.msra.mxu0 0.0
    %2831 = vmatprep.subr.mxu0 0.0
    %2832 = vmatpush1.msra.mxu0 0.0
    %2833 = vmatprep.subr.mxu0 0.0
    %2834 = vmatpush1.msra.mxu0 0.0
    %2835 = vmatprep.subr.mxu0 0.0
    %2836 = vmatpush1.msra.mxu0 0.0
    %2837 = vmatprep.subr.mxu0 0.0
    %2838 = vmatpush1.msra.mxu0 0.0
    %2839 = vmatprep.subr.mxu0 0.0
    %2840 = vmatpush1.msra.mxu0 0.0
    %2841 = vmatprep.subr.mxu0 0.0
    %2842 = vmatpush1.msra.mxu0 0.0
    %2843 = vmatprep.subr.mxu0 0.0
    %2844 = vmatpush1.msra.mxu0 0.0
    %2845 = vmatprep.mubr.f32.mxu0 0.0
    %2846 = vmatmul.mubr.f32.gmra.mrb[0].mxu0 %v2619
    %v2847 = vpop.f32.mrb[0].mxu0
    %v2848 = vadd.f32 0.0, %v2847
    %v2849 = vpop.f32.mrb[0].mxu0
    %2850 = vdwg.mxu0
    %v2852 = vrot.slane %v2848, 2
    %v2854 = vadd.f32 %v592, %v2852
    %v2855 = vtanh.pop %v2854
    %2856 = vmatprep.subr.mxu0 0.0
    %2857 = vmatpush1.msra.mxu0 %v358
    %2858 = vmatprep.subr.mxu0 0.0
    %2859 = vmatpush1.msra.mxu0 %v359
    %2860 = vmatprep.subr.mxu0 0.0
    %2861 = vmatpush1.msra.mxu0 0.0
    %2862 = vmatprep.subr.mxu0 0.0
    %2863 = vmatpush1.msra.mxu0 0.0
    %2864 = vmatprep.subr.mxu0 0.0
    %2865 = vmatpush1.msra.mxu0 0.0
    %2866 = vmatprep.subr.mxu0 0.0
    %2867 = vmatpush1.msra.mxu0 0.0
    %2868 = vmatprep.subr.mxu0 0.0
    %2869 = vmatpush1.msra.mxu0 0.0
    %2870 = vmatprep.subr.mxu0 0.0
    %2871 = vmatpush1.msra.mxu0 0.0
    %2872 = vmatprep.subr.mxu0 0.0
    %2873 = vmatpush1.msra.mxu0 0.0
    %2874 = vmatprep.subr.mxu0 0.0
    %2875 = vmatpush1.msra.mxu0 0.0
    %2876 = vmatprep.subr.mxu0 0.0
    %2877 = vmatpush1.msra.mxu0 0.0
    %2878 = vmatprep.subr.mxu0 0.0
    %2879 = vmatpush1.msra.mxu0 0.0
    %2880 = vmatprep.subr.mxu0 0.0
    %2881 = vmatpush1.msra.mxu0 0.0
    %2882 = vmatprep.subr.mxu0 0.0
    %2883 = vmatpush1.msra.mxu0 0.0
    %2884 = vmatprep.subr.mxu0 0.0
    %2885 = vmatpush1.msra.mxu0 0.0
    %2886 = vmatprep.subr.mxu0 0.0
    %2887 = vmatpush1.msra.mxu0 0.0
    %2888 = vmatprep.subr.mxu0 0.0
    %2889 = vmatpush1.msra.mxu0 0.0
    %2890 = vmatprep.subr.mxu0 0.0
    %2891 = vmatpush1.msra.mxu0 0.0
    %2892 = vmatprep.subr.mxu0 0.0
    %2893 = vmatpush1.msra.mxu0 0.0
    %2894 = vmatprep.subr.mxu0 0.0
    %2895 = vmatpush1.msra.mxu0 0.0
    %2896 = vmatprep.subr.mxu0 0.0
    %2897 = vmatpush1.msra.mxu0 0.0
    %2898 = vmatprep.subr.mxu0 0.0
    %2899 = vmatpush1.msra.mxu0 0.0
    %2900 = vmatprep.subr.mxu0 0.0
    %2901 = vmatpush1.msra.mxu0 0.0
    %2902 = vmatprep.subr.mxu0 0.0
    %2903 = vmatpush1.msra.mxu0 0.0
    %2904 = vmatprep.subr.mxu0 0.0
    %2905 = vmatpush1.msra.mxu0 0.0
    %2906 = vmatprep.subr.mxu0 0.0
    %2907 = vmatpush1.msra.mxu0 0.0
    %2908 = vmatprep.subr.mxu0 0.0
    %2909 = vmatpush1.msra.mxu0 0.0
    %2910 = vmatprep.subr.mxu0 0.0
    %2911 = vmatpush1.msra.mxu0 0.0
    %2912 = vmatprep.subr.mxu0 0.0
    %2913 = vmatpush1.msra.mxu0 0.0
    %2914 = vmatprep.subr.mxu0 0.0
    %2915 = vmatpush1.msra.mxu0 0.0
    %2916 = vmatprep.subr.mxu0 0.0
    %2917 = vmatpush1.msra.mxu0 0.0
    %2918 = vmatprep.subr.mxu0 0.0
    %2919 = vmatpush1.msra.mxu0 0.0
    %2920 = vmatprep.mubr.f32.mxu0 0.0
    %2921 = vmatmul.mubr.f32.gmra.mrb[0].mxu0 %v2619
    %v2922 = vpop.f32.mrb[0].mxu0
    %v2923 = vadd.f32 0.0, %v2922
    %v2924 = vpop.f32.mrb[0].mxu0
    %2925 = vdwg.mxu0
    %v2927 = vrot.slane %v2923, 2
    %v2929 = vadd.f32 %v668, %v2927
    %v2930 = vsub.f32 0.0, %v2929
    %v2931 = vmul.f32 %v2930, 1.442695
    %v2932 = vpow.pop %v2931
    %v2933 = vadd.f32 %v2932, 1.0
    %v2934 = vrcp.pop %v2933
    %v2935 = vmul.f32 1.0, %v2934
    %v2937 = vrot.slane %v2614, 7
    %v2939 = vmul.f32 %v2780, %v2937
    %v2940 = vmul.f32 %v2700, %v2855
    %v2941 = vadd.f32 %v2939, %v2940
    %v2942 = vtanh.pop %v2941
    %v2943 = vmul.f32 %v2935, %v2942
    %v2945 = vrot.slane %v2943, 6
    %v2946 = vsel %vm671, %v2945, 0
    %2948 = vmatprep.subr.mxu0 0.0
    %2949 = vmatpush1.msra.mxu0 %v352
    %2950 = vmatprep.subr.mxu0 0.0
    %2951 = vmatpush1.msra.mxu0 %v353
    %2952 = vmatprep.subr.mxu0 0.0
    %2953 = vmatpush1.msra.mxu0 0.0
    %2954 = vmatprep.subr.mxu0 0.0
    %2955 = vmatpush1.msra.mxu0 0.0
    %2956 = vmatprep.subr.mxu0 0.0
    %2957 = vmatpush1.msra.mxu0 0.0
    %2958 = vmatprep.subr.mxu0 0.0
    %2959 = vmatpush1.msra.mxu0 0.0
    %2960 = vmatprep.subr.mxu0 0.0
    %2961 = vmatpush1.msra.mxu0 0.0
    %2962 = vmatprep.subr.mxu0 0.0
    %2963 = vmatpush1.msra.mxu0 0.0
    %2964 = vmatprep.subr.mxu0 0.0
    %2965 = vmatpush1.msra.mxu0 0.0
    %2966 = vmatprep.subr.mxu0 0.0
    %2967 = vmatpush1.msra.mxu0 0.0
    %2968 = vmatprep.subr.mxu0 0.0
    %2969 = vmatpush1.msra.mxu0 0.0
    %2970 = vmatprep.subr.mxu0 0.0
    %2971 = vmatpush1.msra.mxu0 0.0
    %2972 = vmatprep.subr.mxu0 0.0
    %2973 = vmatpush1.msra.mxu0 0.0
    %2974 = vmatprep.subr.mxu0 0.0
    %2975 = vmatpush1.msra.mxu0 0.0
    %2976 = vmatprep.subr.mxu0 0.0
    %2977 = vmatpush1.msra.mxu0 0.0
    %2978 = vmatprep.subr.mxu0 0.0
    %2979 = vmatpush1.msra.mxu0 0.0
    %2980 = vmatprep.subr.mxu0 0.0
    %2981 = vmatpush1.msra.mxu0 0.0
    %2982 = vmatprep.subr.mxu0 0.0
    %2983 = vmatpush1.msra.mxu0 0.0
    %2984 = vmatprep.subr.mxu0 0.0
    %2985 = vmatpush1.msra.mxu0 0.0
    %2986 = vmatprep.subr.mxu0 0.0
    %2987 = vmatpush1.msra.mxu0 0.0
    %2988 = vmatprep.subr.mxu0 0.0
    %2989 = vmatpush1.msra.mxu0 0.0
    %2990 = vmatprep.subr.mxu0 0.0
    %2991 = vmatpush1.msra.mxu0 0.0
    %2992 = vmatprep.subr.mxu0 0.0
    %2993 = vmatpush1.msra.mxu0 0.0
    %2994 = vmatprep.subr.mxu0 0.0
    %2995 = vmatpush1.msra.mxu0 0.0
    %2996 = vmatprep.subr.mxu0 0.0
    %2997 = vmatpush1.msra.mxu0 0.0
    %2998 = vmatprep.subr.mxu0 0.0
    %2999 = vmatpush1.msra.mxu0 0.0
    %3000 = vmatprep.subr.mxu0 0.0
    %3001 = vmatpush1.msra.mxu0 0.0
    %3002 = vmatprep.subr.mxu0 0.0
    %3003 = vmatpush1.msra.mxu0 0.0
    %3004 = vmatprep.subr.mxu0 0.0
    %3005 = vmatpush1.msra.mxu0 0.0
    %3006 = vmatprep.subr.mxu0 0.0
    %3007 = vmatpush1.msra.mxu0 0.0
    %3008 = vmatprep.subr.mxu0 0.0
    %3009 = vmatpush1.msra.mxu0 0.0
    %3010 = vmatprep.subr.mxu0 0.0
    %3011 = vmatpush1.msra.mxu0 0.0
    %3012 = vmatprep.mubr.f32.mxu0 0.0
    %3013 = vmatmul.mubr.f32.gmra.mrb[0].mxu0 %v2946
    %v3014 = vpop.f32.mrb[0].mxu0
    %v3015 = vadd.f32 0.0, %v3014
    %v3016 = vpop.f32.mrb[0].mxu0
    %3017 = vdwg.mxu0
    %v3019 = vrot.slane %v3015, 1
    %v3021 = vadd.f32 %v440, %v3019
    %v3022 = vsub.f32 0.0, %v3021
    %v3023 = vmul.f32 %v3022, 1.442695
    %v3024 = vpow.pop %v3023
    %v3025 = vadd.f32 %v3024, 1.0
    %v3026 = vrcp.pop %v3025
    %v3027 = vmul.f32 1.0, %v3026
    %3028 = vmatprep.subr.mxu0 0.0
    %3029 = vmatpush1.msra.mxu0 %v354
    %3030 = vmatprep.subr.mxu0 0.0
    %3031 = vmatpush1.msra.mxu0 %v355
    %3032 = vmatprep.subr.mxu0 0.0
    %3033 = vmatpush1.msra.mxu0 0.0
    %3034 = vmatprep.subr.mxu0 0.0
    %3035 = vmatpush1.msra.mxu0 0.0
    %3036 = vmatprep.subr.mxu0 0.0
    %3037 = vmatpush1.msra.mxu0 0.0
    %3038 = vmatprep.subr.mxu0 0.0
    %3039 = vmatpush1.msra.mxu0 0.0
    %3040 = vmatprep.subr.mxu0 0.0
    %3041 = vmatpush1.msra.mxu0 0.0
    %3042 = vmatprep.subr.mxu0 0.0
    %3043 = vmatpush1.msra.mxu0 0.0
    %3044 = vmatprep.subr.mxu0 0.0
    %3045 = vmatpush1.msra.mxu0 0.0
    %3046 = vmatprep.subr.mxu0 0.0
    %3047 = vmatpush1.msra.mxu0 0.0
    %3048 = vmatprep.subr.mxu0 0.0
    %3049 = vmatpush1.msra.mxu0 0.0
    %3050 = vmatprep.subr.mxu0 0.0
    %3051 = vmatpush1.msra.mxu0 0.0
    %3052 = vmatprep.subr.mxu0 0.0
    %3053 = vmatpush1.msra.mxu0 0.0
    %3054 = vmatprep.subr.mxu0 0.0
    %3055 = vmatpush1.msra.mxu0 0.0
    %3056 = vmatprep.subr.mxu0 0.0
    %3057 = vmatpush1.msra.mxu0 0.0
    %3058 = vmatprep.subr.mxu0 0.0
    %3059 = vmatpush1.msra.mxu0 0.0
    %3060 = vmatprep.subr.mxu0 0.0
    %3061 = vmatpush1.msra.mxu0 0.0
    %3062 = vmatprep.subr.mxu0 0.0
    %3063 = vmatpush1.msra.mxu0 0.0
    %3064 = vmatprep.subr.mxu0 0.0
    %3065 = vmatpush1.msra.mxu0 0.0
    %3066 = vmatprep.subr.mxu0 0.0
    %3067 = vmatpush1.msra.mxu0 0.0
    %3068 = vmatprep.subr.mxu0 0.0
    %3069 = vmatpush1.msra.mxu0 0.0
    %3070 = vmatprep.subr.mxu0 0.0
    %3071 = vmatpush1.msra.mxu0 0.0
    %3072 = vmatprep.subr.mxu0 0.0
    %3073 = vmatpush1.msra.mxu0 0.0
    %3074 = vmatprep.subr.mxu0 0.0
    %3075 = vmatpush1.msra.mxu0 0.0
    %3076 = vmatprep.subr.mxu0 0.0
    %3077 = vmatpush1.msra.mxu0 0.0
    %3078 = vmatprep.subr.mxu0 0.0
    %3079 = vmatpush1.msra.mxu0 0.0
    %3080 = vmatprep.subr.mxu0 0.0
    %3081 = vmatpush1.msra.mxu0 0.0
    %3082 = vmatprep.subr.mxu0 0.0
    %3083 = vmatpush1.msra.mxu0 0.0
    %3084 = vmatprep.subr.mxu0 0.0
    %3085 = vmatpush1.msra.mxu0 0.0
    %3086 = vmatprep.subr.mxu0 0.0
    %3087 = vmatpush1.msra.mxu0 0.0
    %3088 = vmatprep.subr.mxu0 0.0
    %3089 = vmatpush1.msra.mxu0 0.0
    %3090 = vmatprep.subr.mxu0 0.0
    %3091 = vmatpush1.msra.mxu0 0.0
    %3092 = vmatprep.mubr.f32.mxu0 0.0
    %3093 = vmatmul.mubr.f32.gmra.mrb[0].mxu0 %v2946
    %v3094 = vpop.f32.mrb[0].mxu0
    %v3095 = vadd.f32 0.0, %v3094
    %v3096 = vpop.f32.mrb[0].mxu0
    %3097 = vdwg.mxu0
    %v3099 = vrot.slane %v3095, 1
    %v3101 = vadd.f32 %v516, %v3099
    %v3102 = vsub.f32 0.0, %v3101
    %v3103 = vmul.f32 %v3102, 1.442695
    %v3104 = vpow.pop %v3103
    %v3105 = vadd.f32 %v3104, 1.0
    %v3106 = vrcp.pop %v3105
    %v3107 = vmul.f32 1.0, %v3106
    %3108 = vmatprep.subr.mxu0 0.0
    %3109 = vmatpush1.msra.mxu0 %v356
    %3110 = vmatprep.subr.mxu0 0.0
    %3111 = vmatpush1.msra.mxu0 %v357
    %3112 = vmatprep.subr.mxu0 0.0
    %3113 = vmatpush1.msra.mxu0 0.0
    %3114 = vmatprep.subr.mxu0 0.0
    %3115 = vmatpush1.msra.mxu0 0.0
    %3116 = vmatprep.subr.mxu0 0.0
    %3117 = vmatpush1.msra.mxu0 0.0
    %3118 = vmatprep.subr.mxu0 0.0
    %3119 = vmatpush1.msra.mxu0 0.0
    %3120 = vmatprep.subr.mxu0 0.0
    %3121 = vmatpush1.msra.mxu0 0.0
    %3122 = vmatprep.subr.mxu0 0.0
    %3123 = vmatpush1.msra.mxu0 0.0
    %3124 = vmatprep.subr.mxu0 0.0
    %3125 = vmatpush1.msra.mxu0 0.0
    %3126 = vmatprep.subr.mxu0 0.0
    %3127 = vmatpush1.msra.mxu0 0.0
    %3128 = vmatprep.subr.mxu0 0.0
    %3129 = vmatpush1.msra.mxu0 0.0
    %3130 = vmatprep.subr.mxu0 0.0
    %3131 = vmatpush1.msra.mxu0 0.0
    %3132 = vmatprep.subr.mxu0 0.0
    %3133 = vmatpush1.msra.mxu0 0.0
    %3134 = vmatprep.subr.mxu0 0.0
    %3135 = vmatpush1.msra.mxu0 0.0
    %3136 = vmatprep.subr.mxu0 0.0
    %3137 = vmatpush1.msra.mxu0 0.0
    %3138 = vmatprep.subr.mxu0 0.0
    %3139 = vmatpush1.msra.mxu0 0.0
    %3140 = vmatprep.subr.mxu0 0.0
    %3141 = vmatpush1.msra.mxu0 0.0
    %3142 = vmatprep.subr.mxu0 0.0
    %3143 = vmatpush1.msra.mxu0 0.0
    %3144 = vmatprep.subr.mxu0 0.0
    %3145 = vmatpush1.msra.mxu0 0.0
    %3146 = vmatprep.subr.mxu0 0.0
    %3147 = vmatpush1.msra.mxu0 0.0
    %3148 = vmatprep.subr.mxu0 0.0
    %3149 = vmatpush1.msra.mxu0 0.0
    %3150 = vmatprep.subr.mxu0 0.0
    %3151 = vmatpush1.msra.mxu0 0.0
    %3152 = vmatprep.subr.mxu0 0.0
    %3153 = vmatpush1.msra.mxu0 0.0
    %3154 = vmatprep.subr.mxu0 0.0
    %3155 = vmatpush1.msra.mxu0 0.0
    %3156 = vmatprep.subr.mxu0 0.0
    %3157 = vmatpush1.msra.mxu0 0.0
    %3158 = vmatprep.subr.mxu0 0.0
    %3159 = vmatpush1.msra.mxu0 0.0
    %3160 = vmatprep.subr.mxu0 0.0
    %3161 = vmatpush1.msra.mxu0 0.0
    %3162 = vmatprep.subr.mxu0 0.0
    %3163 = vmatpush1.msra.mxu0 0.0
    %3164 = vmatprep.subr.mxu0 0.0
    %3165 = vmatpush1.msra.mxu0 0.0
    %3166 = vmatprep.subr.mxu0 0.0
    %3167 = vmatpush1.msra.mxu0 0.0
    %3168 = vmatprep.subr.mxu0 0.0
    %3169 = vmatpush1.msra.mxu0 0.0
    %3170 = vmatprep.subr.mxu0 0.0
    %3171 = vmatpush1.msra.mxu0 0.0
    %3172 = vmatprep.mubr.f32.mxu0 0.0
    %3173 = vmatmul.mubr.f32.gmra.mrb[0].mxu0 %v2946
    %v3174 = vpop.f32.mrb[0].mxu0
    %v3175 = vadd.f32 0.0, %v3174
    %v3176 = vpop.f32.mrb[0].mxu0
    %3177 = vdwg.mxu0
    %v3179 = vrot.slane %v3175, 1
    %v3181 = vadd.f32 %v592, %v3179
    %v3182 = vtanh.pop %v3181
    %3183 = vmatprep.subr.mxu0 0.0
    %3184 = vmatpush1.msra.mxu0 %v358
    %3185 = vmatprep.subr.mxu0 0.0
    %3186 = vmatpush1.msra.mxu0 %v359
    %3187 = vmatprep.subr.mxu0 0.0
    %3188 = vmatpush1.msra.mxu0 0.0
    %3189 = vmatprep.subr.mxu0 0.0
    %3190 = vmatpush1.msra.mxu0 0.0
    %3191 = vmatprep.subr.mxu0 0.0
    %3192 = vmatpush1.msra.mxu0 0.0
    %3193 = vmatprep.subr.mxu0 0.0
    %3194 = vmatpush1.msra.mxu0 0.0
    %3195 = vmatprep.subr.mxu0 0.0
    %3196 = vmatpush1.msra.mxu0 0.0
    %3197 = vmatprep.subr.mxu0 0.0
    %3198 = vmatpush1.msra.mxu0 0.0
    %3199 = vmatprep.subr.mxu0 0.0
    %3200 = vmatpush1.msra.mxu0 0.0
    %3201 = vmatprep.subr.mxu0 0.0
    %3202 = vmatpush1.msra.mxu0 0.0
    %3203 = vmatprep.subr.mxu0 0.0
    %3204 = vmatpush1.msra.mxu0 0.0
    %3205 = vmatprep.subr.mxu0 0.0
    %3206 = vmatpush1.msra.mxu0 0.0
    %3207 = vmatprep.subr.mxu0 0.0
    %3208 = vmatpush1.msra.mxu0 0.0
    %3209 = vmatprep.subr.mxu0 0.0
    %3210 = vmatpush1.msra.mxu0 0.0
    %3211 = vmatprep.subr.mxu0 0.0
    %3212 = vmatpush1.msra.mxu0 0.0
    %3213 = vmatprep.subr.mxu0 0.0
    %3214 = vmatpush1.msra.mxu0 0.0
    %3215 = vmatprep.subr.mxu0 0.0
    %3216 = vmatpush1.msra.mxu0 0.0
    %3217 = vmatprep.subr.mxu0 0.0
    %3218 = vmatpush1.msra.mxu0 0.0
    %3219 = vmatprep.subr.mxu0 0.0
    %3220 = vmatpush1.msra.mxu0 0.0
    %3221 = vmatprep.subr.mxu0 0.0
    %3222 = vmatpush1.msra.mxu0 0.0
    %3223 = vmatprep.subr.mxu0 0.0
    %3224 = vmatpush1.msra.mxu0 0.0
    %3225 = vmatprep.subr.mxu0 0.0
    %3226 = vmatpush1.msra.mxu0 0.0
    %3227 = vmatprep.subr.mxu0 0.0
    %3228 = vmatpush1.msra.mxu0 0.0
    %3229 = vmatprep.subr.mxu0 0.0
    %3230 = vmatpush1.msra.mxu0 0.0
    %3231 = vmatprep.subr.mxu0 0.0
    %3232 = vmatpush1.msra.mxu0 0.0
    %3233 = vmatprep.subr.mxu0 0.0
    %3234 = vmatpush1.msra.mxu0 0.0
    %3235 = vmatprep.subr.mxu0 0.0
    %3236 = vmatpush1.msra.mxu0 0.0
    %3237 = vmatprep.subr.mxu0 0.0
    %3238 = vmatpush1.msra.mxu0 0.0
    %3239 = vmatprep.subr.mxu0 0.0
    %3240 = vmatpush1.msra.mxu0 0.0
    %3241 = vmatprep.subr.mxu0 0.0
    %3242 = vmatpush1.msra.mxu0 0.0
    %3243 = vmatprep.subr.mxu0 0.0
    %3244 = vmatpush1.msra.mxu0 0.0
    %3245 = vmatprep.subr.mxu0 0.0
    %3246 = vmatpush1.msra.mxu0 0.0
    %3247 = vmatprep.mubr.f32.mxu0 0.0
    %3248 = vmatmul.mubr.f32.gmra.mrb[0].mxu0 %v2946
    %v3249 = vpop.f32.mrb[0].mxu0
    %v3250 = vadd.f32 0.0, %v3249
    %v3251 = vpop.f32.mrb[0].mxu0
    %3252 = vdwg.mxu0
    %v3254 = vrot.slane %v3250, 1
    %v3256 = vadd.f32 %v668, %v3254
    %v3257 = vsub.f32 0.0, %v3256
    %v3258 = vmul.f32 %v3257, 1.442695
    %v3259 = vpow.pop %v3258
    %v3260 = vadd.f32 %v3259, 1.0
    %v3261 = vrcp.pop %v3260
    %v3262 = vmul.f32 1.0, %v3261
    %v3264 = vrot.slane %v2941, 7
    %v3266 = vmul.f32 %v3107, %v3264
    %v3267 = vmul.f32 %v3027, %v3182
    %v3268 = vadd.f32 %v3266, %v3267
    %v3269 = vtanh.pop %v3268
    %v3270 = vmul.f32 %v3262, %v3269
    %vm3271 = vcmask 1040384
    %v3272 = vsel %vm3271, %v982, %v1308
    %vm3273 = vcmask 1041408
    %v3274 = vsel %vm3273, %v3272, %v1635
    %vm3275 = vcmask 1042432
    %v3276 = vsel %vm3275, %v3274, %v1962
    %vm3277 = vcmask 1043456
    %v3278 = vsel %vm3277, %v3276, %v2289
    %vm3279 = vcmask 1044480
    %v3280 = vsel %vm3279, %v3278, %v2616
    %vm3281 = vcmask 1045504
    %v3282 = vsel %vm3281, %v3280, %v2943
    %vm3283 = vcmask 1046528
    %v3284 = vsel %vm3283, %v3282, %v3270
    %v3285 = vld [vmem:[%s11] sm:$0xff]
    %v3286 = vld [vmem:[%s11 + $0x8] sm:$0xff]
    %v3287 = vld [vmem:[%s11 + $0x10] sm:$0xff]
    %v3288 = vld [vmem:[%s11 + $0x18] sm:$0xff]
    %v3289 = vld [vmem:[%s11 + $0x20] sm:$0xff]
    %v3290 = vld [vmem:[%s11 + $0x28] sm:$0xff]
    %v3291 = vld [vmem:[%s11 + $0x30] sm:$0xff]
    %v3292 = vld [vmem:[%s11 + $0x38] sm:$0xff]
    %v3293 = vld [vmem:[%s11 + $0x40] sm:$0xff]
    %v3294 = vld [vmem:[%s11 + $0x48] sm:$0xff]
    %v3295 = vld [vmem:[%s11 + $0x50] sm:$0xff]
    %v3296 = vld [vmem:[%s11 + $0x58] sm:$0xff]
    %v3297 = vld [vmem:[%s11 + $0x60] sm:$0xff]
    %v3298 = vld [vmem:[%s11 + $0x68] sm:$0xff]
    %v3299 = vld [vmem:[%s11 + $0x70] sm:$0xff]
    %v3300 = vld [vmem:[%s11 + $0x78] sm:$0xff]
    %v3301 = vld [vmem:[%s12] sm:$0xff]
    %v3302 = vld [vmem:[%s12 + $0x8] sm:$0xff]
    %v3303 = vld [vmem:[%s12 + $0x10] sm:$0xff]
    %v3304 = vld [vmem:[%s12 + $0x18] sm:$0xff]
    %v3305 = vld [vmem:[%s12 + $0x20] sm:$0xff]
    %v3306 = vld [vmem:[%s12 + $0x28] sm:$0xff]
    %v3307 = vld [vmem:[%s12 + $0x30] sm:$0xff]
    %v3308 = vld [vmem:[%s12 + $0x38] sm:$0xff]
    %v3309 = vld [vmem:[%s13] sm:$0x1]
    %v3310 = vld [vmem:[%s13 + $0x1] sm:$0x1]
    %v3311 = vld [vmem:[%s13 + $0x2] sm:$0x1]
    %v3312 = vld [vmem:[%s13 + $0x3] sm:$0x1]
    %v3314 = vlaneseq
    %v3315 = vshrl.u32 %v3314, 7
    %v3316 = vsub.s32 0, %v3315
    %v3317 = vrot.slane %v3309, %v3316
    %3319 = vmatprep.subr.mxu0 0.0
    %3320 = vmatpush1.msra.mxu0 %v3285
    %3321 = vmatprep.subr.mxu0 0.0
    %3322 = vmatpush1.msra.mxu0 %v3286
    %3323 = vmatprep.subr.mxu0 0.0
    %3324 = vmatpush1.msra.mxu0 %v3287
    %3325 = vmatprep.subr.mxu0 0.0
    %3326 = vmatpush1.msra.mxu0 %v3288
    %3327 = vmatprep.subr.mxu0 0.0
    %3328 = vmatpush1.msra.mxu0 0.0
    %3329 = vmatprep.subr.mxu0 0.0
    %3330 = vmatpush1.msra.mxu0 0.0
    %3331 = vmatprep.subr.mxu0 0.0
    %3332 = vmatpush1.msra.mxu0 0.0
    %3333 = vmatprep.subr.mxu0 0.0
    %3334 = vmatpush1.msra.mxu0 0.0
    %3335 = vmatprep.subr.mxu0 0.0
    %3336 = vmatpush1.msra.mxu0 0.0
    %3337 = vmatprep.subr.mxu0 0.0
    %3338 = vmatpush1.msra.mxu0 0.0
    %3339 = vmatprep.subr.mxu0 0.0
    %3340 = vmatpush1.msra.mxu0 0.0
    %3341 = vmatprep.subr.mxu0 0.0
    %3342 = vmatpush1.msra.mxu0 0.0
    %3343 = vmatprep.subr.mxu0 0.0
    %3344 = vmatpush1.msra.mxu0 0.0
    %3345 = vmatprep.subr.mxu0 0.0
    %3346 = vmatpush1.msra.mxu0 0.0
    %3347 = vmatprep.subr.mxu0 0.0
    %3348 = vmatpush1.msra.mxu0 0.0
    %3349 = vmatprep.subr.mxu0 0.0
    %3350 = vmatpush1.msra.mxu0 0.0
    %3351 = vmatprep.subr.mxu0 0.0
    %3352 = vmatpush1.msra.mxu0 0.0
    %3353 = vmatprep.subr.mxu0 0.0
    %3354 = vmatpush1.msra.mxu0 0.0
    %3355 = vmatprep.subr.mxu0 0.0
    %3356 = vmatpush1.msra.mxu0 0.0
    %3357 = vmatprep.subr.mxu0 0.0
    %3358 = vmatpush1.msra.mxu0 0.0
    %3359 = vmatprep.subr.mxu0 0.0
    %3360 = vmatpush1.msra.mxu0 0.0
    %3361 = vmatprep.subr.mxu0 0.0
    %3362 = vmatpush1.msra.mxu0 0.0
    %3363 = vmatprep.subr.mxu0 0.0
    %3364 = vmatpush1.msra.mxu0 0.0
    %3365 = vmatprep.subr.mxu0 0.0
    %3366 = vmatpush1.msra.mxu0 0.0
    %3367 = vmatprep.subr.mxu0 0.0
    %3368 = vmatpush1.msra.mxu0 0.0
    %3369 = vmatprep.subr.mxu0 0.0
    %3370 = vmatpush1.msra.mxu0 0.0
    %3371 = vmatprep.subr.mxu0 0.0
    %3372 = vmatpush1.msra.mxu0 0.0
    %3373 = vmatprep.subr.mxu0 0.0
    %3374 = vmatpush1.msra.mxu0 0.0
    %3375 = vmatprep.subr.mxu0 0.0
    %3376 = vmatpush1.msra.mxu0 0.0
    %3377 = vmatprep.subr.mxu0 0.0
    %3378 = vmatpush1.msra.mxu0 0.0
    %3379 = vmatprep.subr.mxu0 0.0
    %3380 = vmatpush1.msra.mxu0 0.0
    %3381 = vmatprep.subr.mxu0 0.0
    %3382 = vmatpush1.msra.mxu0 0.0
    %3383 = vmatprep.mubr.f32.mxu0 0.0
    %3384 = vmatmul.mubr.f32.gmra.mrb[0].mxu0 %v371
    %v3385 = vpop.f32.mrb[0].mxu0
    %v3386 = vadd.f32 %v3317, %v3385
    %v3387 = vpop.f32.mrb[0].mxu0
    %3388 = vdwg.mxu0
    %v3390 = vlaneseq
    %v3391 = vshrl.u32 %v3390, 7
    %v3392 = vsub.s32 0, %v3391
    %v3393 = vrot.slane %v3310, %v3392
    %3395 = vmatprep.subr.mxu0 0.0
    %3396 = vmatpush1.msra.mxu0 %v3289
    %3397 = vmatprep.subr.mxu0 0.0
    %3398 = vmatpush1.msra.mxu0 %v3290
    %3399 = vmatprep.subr.mxu0 0.0
    %3400 = vmatpush1.msra.mxu0 %v3291
    %3401 = vmatprep.subr.mxu0 0.0
    %3402 = vmatpush1.msra.mxu0 %v3292
    %3403 = vmatprep.subr.mxu0 0.0
    %3404 = vmatpush1.msra.mxu0 0.0
    %3405 = vmatprep.subr.mxu0 0.0
    %3406 = vmatpush1.msra.mxu0 0.0
    %3407 = vmatprep.subr.mxu0 0.0
    %3408 = vmatpush1.msra.mxu0 0.0
    %3409 = vmatprep.subr.mxu0 0.0
    %3410 = vmatpush1.msra.mxu0 0.0
    %3411 = vmatprep.subr.mxu0 0.0
    %3412 = vmatpush1.msra.mxu0 0.0
    %3413 = vmatprep.subr.mxu0 0.0
    %3414 = vmatpush1.msra.mxu0 0.0
    %3415 = vmatprep.subr.mxu0 0.0
    %3416 = vmatpush1.msra.mxu0 0.0
    %3417 = vmatprep.subr.mxu0 0.0
    %3418 = vmatpush1.msra.mxu0 0.0
    %3419 = vmatprep.subr.mxu0 0.0
    %3420 = vmatpush1.msra.mxu0 0.0
    %3421 = vmatprep.subr.mxu0 0.0
    %3422 = vmatpush1.msra.mxu0 0.0
    %3423 = vmatprep.subr.mxu0 0.0
    %3424 = vmatpush1.msra.mxu0 0.0
    %3425 = vmatprep.subr.mxu0 0.0
    %3426 = vmatpush1.msra.mxu0 0.0
    %3427 = vmatprep.subr.mxu0 0.0
    %3428 = vmatpush1.msra.mxu0 0.0
    %3429 = vmatprep.subr.mxu0 0.0
    %3430 = vmatpush1.msra.mxu0 0.0
    %3431 = vmatprep.subr.mxu0 0.0
    %3432 = vmatpush1.msra.mxu0 0.0
    %3433 = vmatprep.subr.mxu0 0.0
    %3434 = vmatpush1.msra.mxu0 0.0
    %3435 = vmatprep.subr.mxu0 0.0
    %3436 = vmatpush1.msra.mxu0 0.0
    %3437 = vmatprep.subr.mxu0 0.0
    %3438 = vmatpush1.msra.mxu0 0.0
    %3439 = vmatprep.subr.mxu0 0.0
    %3440 = vmatpush1.msra.mxu0 0.0
    %3441 = vmatprep.subr.mxu0 0.0
    %3442 = vmatpush1.msra.mxu0 0.0
    %3443 = vmatprep.subr.mxu0 0.0
    %3444 = vmatpush1.msra.mxu0 0.0
    %3445 = vmatprep.subr.mxu0 0.0
    %3446 = vmatpush1.msra.mxu0 0.0
    %3447 = vmatprep.subr.mxu0 0.0
    %3448 = vmatpush1.msra.mxu0 0.0
    %3449 = vmatprep.subr.mxu0 0.0
    %3450 = vmatpush1.msra.mxu0 0.0
    %3451 = vmatprep.subr.mxu0 0.0
    %3452 = vmatpush1.msra.mxu0 0.0
    %3453 = vmatprep.subr.mxu0 0.0
    %3454 = vmatpush1.msra.mxu0 0.0
    %3455 = vmatprep.subr.mxu0 0.0
    %3456 = vmatpush1.msra.mxu0 0.0
    %3457 = vmatprep.subr.mxu0 0.0
    %3458 = vmatpush1.msra.mxu0 0.0
    %3459 = vmatprep.mubr.f32.mxu0 0.0
    %3460 = vmatmul.mubr.f32.gmra.mrb[0].mxu0 %v371
    %v3461 = vpop.f32.mrb[0].mxu0
    %v3462 = vadd.f32 %v3393, %v3461
    %v3463 = vpop.f32.mrb[0].mxu0
    %3464 = vdwg.mxu0
    %v3466 = vlaneseq
    %v3467 = vshrl.u32 %v3466, 7
    %v3468 = vsub.s32 0, %v3467
    %v3469 = vrot.slane %v3311, %v3468
    %3471 = vmatprep.subr.mxu0 0.0
    %3472 = vmatpush1.msra.mxu0 %v3293
    %3473 = vmatprep.subr.mxu0 0.0
    %3474 = vmatpush1.msra.mxu0 %v3294
    %3475 = vmatprep.subr.mxu0 0.0
    %3476 = vmatpush1.msra.mxu0 %v3295
    %3477 = vmatprep.subr.mxu0 0.0
    %3478 = vmatpush1.msra.mxu0 %v3296
    %3479 = vmatprep.subr.mxu0 0.0
    %3480 = vmatpush1.msra.mxu0 0.0
    %3481 = vmatprep.subr.mxu0 0.0
    %3482 = vmatpush1.msra.mxu0 0.0
    %3483 = vmatprep.subr.mxu0 0.0
    %3484 = vmatpush1.msra.mxu0 0.0
    %3485 = vmatprep.subr.mxu0 0.0
    %3486 = vmatpush1.msra.mxu0 0.0
    %3487 = vmatprep.subr.mxu0 0.0
    %3488 = vmatpush1.msra.mxu0 0.0
    %3489 = vmatprep.subr.mxu0 0.0
    %3490 = vmatpush1.msra.mxu0 0.0
    %3491 = vmatprep.subr.mxu0 0.0
    %3492 = vmatpush1.msra.mxu0 0.0
    %3493 = vmatprep.subr.mxu0 0.0
    %3494 = vmatpush1.msra.mxu0 0.0
    %3495 = vmatprep.subr.mxu0 0.0
    %3496 = vmatpush1.msra.mxu0 0.0
    %3497 = vmatprep.subr.mxu0 0.0
    %3498 = vmatpush1.msra.mxu0 0.0
    %3499 = vmatprep.subr.mxu0 0.0
    %3500 = vmatpush1.msra.mxu0 0.0
    %3501 = vmatprep.subr.mxu0 0.0
    %3502 = vmatpush1.msra.mxu0 0.0
    %3503 = vmatprep.subr.mxu0 0.0
    %3504 = vmatpush1.msra.mxu0 0.0
    %3505 = vmatprep.subr.mxu0 0.0
    %3506 = vmatpush1.msra.mxu0 0.0
    %3507 = vmatprep.subr.mxu0 0.0
    %3508 = vmatpush1.msra.mxu0 0.0
    %3509 = vmatprep.subr.mxu0 0.0
    %3510 = vmatpush1.msra.mxu0 0.0
    %3511 = vmatprep.subr.mxu0 0.0
    %3512 = vmatpush1.msra.mxu0 0.0
    %3513 = vmatprep.subr.mxu0 0.0
    %3514 = vmatpush1.msra.mxu0 0.0
    %3515 = vmatprep.subr.mxu0 0.0
    %3516 = vmatpush1.msra.mxu0 0.0
    %3517 = vmatprep.subr.mxu0 0.0
    %3518 = vmatpush1.msra.mxu0 0.0
    %3519 = vmatprep.subr.mxu0 0.0
    %3520 = vmatpush1.msra.mxu0 0.0
    %3521 = vmatprep.subr.mxu0 0.0
    %3522 = vmatpush1.msra.mxu0 0.0
    %3523 = vmatprep.subr.mxu0 0.0
    %3524 = vmatpush1.msra.mxu0 0.0
    %3525 = vmatprep.subr.mxu0 0.0
    %3526 = vmatpush1.msra.mxu0 0.0
    %3527 = vmatprep.subr.mxu0 0.0
    %3528 = vmatpush1.msra.mxu0 0.0
    %3529 = vmatprep.subr.mxu0 0.0
    %3530 = vmatpush1.msra.mxu0 0.0
    %3531 = vmatprep.subr.mxu0 0.0
    %3532 = vmatpush1.msra.mxu0 0.0
    %3533 = vmatprep.subr.mxu0 0.0
    %3534 = vmatpush1.msra.mxu0 0.0
    %3535 = vmatprep.mubr.f32.mxu0 0.0
    %3536 = vmatmul.mubr.f32.gmra.mrb[0].mxu0 %v371
    %v3537 = vpop.f32.mrb[0].mxu0
    %v3538 = vadd.f32 %v3469, %v3537
    %v3539 = vpop.f32.mrb[0].mxu0
    %3540 = vdwg.mxu0
    %v3542 = vlaneseq
    %v3543 = vshrl.u32 %v3542, 7
    %v3544 = vsub.s32 0, %v3543
    %v3545 = vrot.slane %v3312, %v3544
    %3547 = vmatprep.subr.mxu0 0.0
    %3548 = vmatpush1.msra.mxu0 %v3297
    %3549 = vmatprep.subr.mxu0 0.0
    %3550 = vmatpush1.msra.mxu0 %v3298
    %3551 = vmatprep.subr.mxu0 0.0
    %3552 = vmatpush1.msra.mxu0 %v3299
    %3553 = vmatprep.subr.mxu0 0.0
    %3554 = vmatpush1.msra.mxu0 %v3300
    %3555 = vmatprep.subr.mxu0 0.0
    %3556 = vmatpush1.msra.mxu0 0.0
    %3557 = vmatprep.subr.mxu0 0.0
    %3558 = vmatpush1.msra.mxu0 0.0
    %3559 = vmatprep.subr.mxu0 0.0
    %3560 = vmatpush1.msra.mxu0 0.0
    %3561 = vmatprep.subr.mxu0 0.0
    %3562 = vmatpush1.msra.mxu0 0.0
    %3563 = vmatprep.subr.mxu0 0.0
    %3564 = vmatpush1.msra.mxu0 0.0
    %3565 = vmatprep.subr.mxu0 0.0
    %3566 = vmatpush1.msra.mxu0 0.0
    %3567 = vmatprep.subr.mxu0 0.0
    %3568 = vmatpush1.msra.mxu0 0.0
    %3569 = vmatprep.subr.mxu0 0.0
    %3570 = vmatpush1.msra.mxu0 0.0
    %3571 = vmatprep.subr.mxu0 0.0
    %3572 = vmatpush1.msra.mxu0 0.0
    %3573 = vmatprep.subr.mxu0 0.0
    %3574 = vmatpush1.msra.mxu0 0.0
    %3575 = vmatprep.subr.mxu0 0.0
    %3576 = vmatpush1.msra.mxu0 0.0
    %3577 = vmatprep.subr.mxu0 0.0
    %3578 = vmatpush1.msra.mxu0 0.0
    %3579 = vmatprep.subr.mxu0 0.0
    %3580 = vmatpush1.msra.mxu0 0.0
    %3581 = vmatprep.subr.mxu0 0.0
    %3582 = vmatpush1.msra.mxu0 0.0
    %3583 = vmatprep.subr.mxu0 0.0
    %3584 = vmatpush1.msra.mxu0 0.0
    %3585 = vmatprep.subr.mxu0 0.0
    %3586 = vmatpush1.msra.mxu0 0.0
    %3587 = vmatprep.subr.mxu0 0.0
    %3588 = vmatpush1.msra.mxu0 0.0
    %3589 = vmatprep.subr.mxu0 0.0
    %3590 = vmatpush1.msra.mxu0 0.0
    %3591 = vmatprep.subr.mxu0 0.0
    %3592 = vmatpush1.msra.mxu0 0.0
    %3593 = vmatprep.subr.mxu0 0.0
    %3594 = vmatpush1.msra.mxu0 0.0
    %3595 = vmatprep.subr.mxu0 0.0
    %3596 = vmatpush1.msra.mxu0 0.0
    %3597 = vmatprep.subr.mxu0 0.0
    %3598 = vmatpush1.msra.mxu0 0.0
    %3599 = vmatprep.subr.mxu0 0.0
    %3600 = vmatpush1.msra.mxu0 0.0
    %3601 = vmatprep.subr.mxu0 0.0
    %3602 = vmatpush1.msra.mxu0 0.0
    %3603 = vmatprep.subr.mxu0 0.0
    %3604 = vmatpush1.msra.mxu0 0.0
    %3605 = vmatprep.subr.mxu0 0.0
    %3606 = vmatpush1.msra.mxu0 0.0
    %3607 = vmatprep.subr.mxu0 0.0
    %3608 = vmatpush1.msra.mxu0 0.0
    %3609 = vmatprep.subr.mxu0 0.0
    %3610 = vmatpush1.msra.mxu0 0.0
    %3611 = vmatprep.mubr.f32.mxu0 0.0
    %3612 = vmatmul.mubr.f32.gmra.mrb[0].mxu0 %v371
    %v3613 = vpop.f32.mrb[0].mxu0
    %v3614 = vadd.f32 %v3545, %v3613
    %v3615 = vpop.f32.mrb[0].mxu0
    %3616 = vdwg.mxu0
    %3617 = vmatprep.subr.mxu0 0.0
    %3618 = vmatpush1.msra.mxu0 %v3301
    %3619 = vmatprep.subr.mxu0 0.0
    %3620 = vmatpush1.msra.mxu0 %v3302
    %3621 = vmatprep.subr.mxu0 0.0
    %3622 = vmatpush1.msra.mxu0 0.0
    %3623 = vmatprep.subr.mxu0 0.0
    %3624 = vmatpush1.msra.mxu0 0.0
    %3625 = vmatprep.subr.mxu0 0.0
    %3626 = vmatpush1.msra.mxu0 0.0
    %3627 = vmatprep.subr.mxu0 0.0
    %3628 = vmatpush1.msra.mxu0 0.0
    %3629 = vmatprep.subr.mxu0 0.0
    %3630 = vmatpush1.msra.mxu0 0.0
    %3631 = vmatprep.subr.mxu0 0.0
    %3632 = vmatpush1.msra.mxu0 0.0
    %3633 = vmatprep.subr.mxu0 0.0
    %3634 = vmatpush1.msra.mxu0 0.0
    %3635 = vmatprep.subr.mxu0 0.0
    %3636 = vmatpush1.msra.mxu0 0.0
    %3637 = vmatprep.subr.mxu0 0.0
    %3638 = vmatpush1.msra.mxu0 0.0
    %3639 = vmatprep.subr.mxu0 0.0
    %3640 = vmatpush1.msra.mxu0 0.0
    %3641 = vmatprep.subr.mxu0 0.0
    %3642 = vmatpush1.msra.mxu0 0.0
    %3643 = vmatprep.subr.mxu0 0.0
    %3644 = vmatpush1.msra.mxu0 0.0
    %3645 = vmatprep.subr.mxu0 0.0
    %3646 = vmatpush1.msra.mxu0 0.0
    %3647 = vmatprep.subr.mxu0 0.0
    %3648 = vmatpush1.msra.mxu0 0.0
    %3649 = vmatprep.subr.mxu0 0.0
    %3650 = vmatpush1.msra.mxu0 0.0
    %3651 = vmatprep.subr.mxu0 0.0
    %3652 = vmatpush1.msra.mxu0 0.0
    %3653 = vmatprep.subr.mxu0 0.0
    %3654 = vmatpush1.msra.mxu0 0.0
    %3655 = vmatprep.subr.mxu0 0.0
    %3656 = vmatpush1.msra.mxu0 0.0
    %3657 = vmatprep.subr.mxu0 0.0
    %3658 = vmatpush1.msra.mxu0 0.0
    %3659 = vmatprep.subr.mxu0 0.0
    %3660 = vmatpush1.msra.mxu0 0.0
    %3661 = vmatprep.subr.mxu0 0.0
    %3662 = vmatpush1.msra.mxu0 0.0
    %3663 = vmatprep.subr.mxu0 0.0
    %3664 = vmatpush1.msra.mxu0 0.0
    %3665 = vmatprep.subr.mxu0 0.0
    %3666 = vmatpush1.msra.mxu0 0.0
    %3667 = vmatprep.subr.mxu0 0.0
    %3668 = vmatpush1.msra.mxu0 0.0
    %3669 = vmatprep.subr.mxu0 0.0
    %3670 = vmatpush1.msra.mxu0 0.0
    %3671 = vmatprep.subr.mxu0 0.0
    %3672 = vmatpush1.msra.mxu0 0.0
    %3673 = vmatprep.subr.mxu0 0.0
    %3674 = vmatpush1.msra.mxu0 0.0
    %3675 = vmatprep.subr.mxu0 0.0
    %3676 = vmatpush1.msra.mxu0 0.0
    %3677 = vmatprep.subr.mxu0 0.0
    %3678 = vmatpush1.msra.mxu0 0.0
    %3679 = vmatprep.subr.mxu0 0.0
    %3680 = vmatpush1.msra.mxu0 0.0
    %3681 = vmatprep.mubr.f32.mxu0 0.0
    %3682 = vmatmul.mubr.f32.gmra.mrb[0].mxu0 %v673
    %v3683 = vpop.f32.mrb[0].mxu0
    %v3684 = vadd.f32 0.0, %v3683
    %v3685 = vpop.f32.mrb[0].mxu0
    %3686 = vdwg.mxu0
    %v3688 = vrot.slane %v3684, 1
    %v3690 = vadd.f32 %v3386, %v3688
    %v3691 = vsub.f32 0.0, %v3690
    %v3692 = vmul.f32 %v3691, 1.442695
    %v3693 = vpow.pop %v3692
    %v3694 = vadd.f32 %v3693, 1.0
    %v3695 = vrcp.pop %v3694
    %v3696 = vmul.f32 1.0, %v3695
    %3697 = vmatprep.subr.mxu0 0.0
    %3698 = vmatpush1.msra.mxu0 %v3303
    %3699 = vmatprep.subr.mxu0 0.0
    %3700 = vmatpush1.msra.mxu0 %v3304
    %3701 = vmatprep.subr.mxu0 0.0
    %3702 = vmatpush1.msra.mxu0 0.0
    %3703 = vmatprep.subr.mxu0 0.0
    %3704 = vmatpush1.msra.mxu0 0.0
    %3705 = vmatprep.subr.mxu0 0.0
    %3706 = vmatpush1.msra.mxu0 0.0
    %3707 = vmatprep.subr.mxu0 0.0
    %3708 = vmatpush1.msra.mxu0 0.0
    %3709 = vmatprep.subr.mxu0 0.0
    %3710 = vmatpush1.msra.mxu0 0.0
    %3711 = vmatprep.subr.mxu0 0.0
    %3712 = vmatpush1.msra.mxu0 0.0
    %3713 = vmatprep.subr.mxu0 0.0
    %3714 = vmatpush1.msra.mxu0 0.0
    %3715 = vmatprep.subr.mxu0 0.0
    %3716 = vmatpush1.msra.mxu0 0.0
    %3717 = vmatprep.subr.mxu0 0.0
    %3718 = vmatpush1.msra.mxu0 0.0
    %3719 = vmatprep.subr.mxu0 0.0
    %3720 = vmatpush1.msra.mxu0 0.0
    %3721 = vmatprep.subr.mxu0 0.0
    %3722 = vmatpush1.msra.mxu0 0.0
    %3723 = vmatprep.subr.mxu0 0.0
    %3724 = vmatpush1.msra.mxu0 0.0
    %3725 = vmatprep.subr.mxu0 0.0
    %3726 = vmatpush1.msra.mxu0 0.0
    %3727 = vmatprep.subr.mxu0 0.0
    %3728 = vmatpush1.msra.mxu0 0.0
    %3729 = vmatprep.subr.mxu0 0.0
    %3730 = vmatpush1.msra.mxu0 0.0
    %3731 = vmatprep.subr.mxu0 0.0
    %3732 = vmatpush1.msra.mxu0 0.0
    %3733 = vmatprep.subr.mxu0 0.0
    %3734 = vmatpush1.msra.mxu0 0.0
    %3735 = vmatprep.subr.mxu0 0.0
    %3736 = vmatpush1.msra.mxu0 0.0
    %3737 = vmatprep.subr.mxu0 0.0
    %3738 = vmatpush1.msra.mxu0 0.0
    %3739 = vmatprep.subr.mxu0 0.0
    %3740 = vmatpush1.msra.mxu0 0.0
    %3741 = vmatprep.subr.mxu0 0.0
    %3742 = vmatpush1.msra.mxu0 0.0
    %3743 = vmatprep.subr.mxu0 0.0
    %3744 = vmatpush1.msra.mxu0 0.0
    %3745 = vmatprep.subr.mxu0 0.0
    %3746 = vmatpush1.msra.mxu0 0.0
    %3747 = vmatprep.subr.mxu0 0.0
    %3748 = vmatpush1.msra.mxu0 0.0
    %3749 = vmatprep.subr.mxu0 0.0
    %3750 = vmatpush1.msra.mxu0 0.0
    %3751 = vmatprep.subr.mxu0 0.0
    %3752 = vmatpush1.msra.mxu0 0.0
    %3753 = vmatprep.subr.mxu0 0.0
    %3754 = vmatpush1.msra.mxu0 0.0
    %3755 = vmatprep.subr.mxu0 0.0
    %3756 = vmatpush1.msra.mxu0 0.0
    %3757 = vmatprep.subr.mxu0 0.0
    %3758 = vmatpush1.msra.mxu0 0.0
    %3759 = vmatprep.subr.mxu0 0.0
    %3760 = vmatpush1.msra.mxu0 0.0
    %3761 = vmatprep.mubr.f32.mxu0 0.0
    %3762 = vmatmul.mubr.f32.gmra.mrb[0].mxu0 %v673
    %v3763 = vpop.f32.mrb[0].mxu0
    %v3764 = vadd.f32 0.0, %v3763
    %v3765 = vpop.f32.mrb[0].mxu0
    %3766 = vdwg.mxu0
    %v3768 = vrot.slane %v3764, 1
    %v3770 = vadd.f32 %v3462, %v3768
    %v3771 = vsub.f32 0.0, %v3770
    %v3772 = vmul.f32 %v3771, 1.442695
    %v3773 = vpow.pop %v3772
    %v3774 = vadd.f32 %v3773, 1.0
    %v3775 = vrcp.pop %v3774
    %v3776 = vmul.f32 1.0, %v3775
    %3777 = vmatprep.subr.mxu0 0.0
    %3778 = vmatpush1.msra.mxu0 %v3305
    %3779 = vmatprep.subr.mxu0 0.0
    %3780 = vmatpush1.msra.mxu0 %v3306
    %3781 = vmatprep.subr.mxu0 0.0
    %3782 = vmatpush1.msra.mxu0 0.0
    %3783 = vmatprep.subr.mxu0 0.0
    %3784 = vmatpush1.msra.mxu0 0.0
    %3785 = vmatprep.subr.mxu0 0.0
    %3786 = vmatpush1.msra.mxu0 0.0
    %3787 = vmatprep.subr.mxu0 0.0
    %3788 = vmatpush1.msra.mxu0 0.0
    %3789 = vmatprep.subr.mxu0 0.0
    %3790 = vmatpush1.msra.mxu0 0.0
    %3791 = vmatprep.subr.mxu0 0.0
    %3792 = vmatpush1.msra.mxu0 0.0
    %3793 = vmatprep.subr.mxu0 0.0
    %3794 = vmatpush1.msra.mxu0 0.0
    %3795 = vmatprep.subr.mxu0 0.0
    %3796 = vmatpush1.msra.mxu0 0.0
    %3797 = vmatprep.subr.mxu0 0.0
    %3798 = vmatpush1.msra.mxu0 0.0
    %3799 = vmatprep.subr.mxu0 0.0
    %3800 = vmatpush1.msra.mxu0 0.0
    %3801 = vmatprep.subr.mxu0 0.0
    %3802 = vmatpush1.msra.mxu0 0.0
    %3803 = vmatprep.subr.mxu0 0.0
    %3804 = vmatpush1.msra.mxu0 0.0
    %3805 = vmatprep.subr.mxu0 0.0
    %3806 = vmatpush1.msra.mxu0 0.0
    %3807 = vmatprep.subr.mxu0 0.0
    %3808 = vmatpush1.msra.mxu0 0.0
    %3809 = vmatprep.subr.mxu0 0.0
    %3810 = vmatpush1.msra.mxu0 0.0
    %3811 = vmatprep.subr.mxu0 0.0
    %3812 = vmatpush1.msra.mxu0 0.0
    %3813 = vmatprep.subr.mxu0 0.0
    %3814 = vmatpush1.msra.mxu0 0.0
    %3815 = vmatprep.subr.mxu0 0.0
    %3816 = vmatpush1.msra.mxu0 0.0
    %3817 = vmatprep.subr.mxu0 0.0
    %3818 = vmatpush1.msra.mxu0 0.0
    %3819 = vmatprep.subr.mxu0 0.0
    %3820 = vmatpush1.msra.mxu0 0.0
    %3821 = vmatprep.subr.mxu0 0.0
    %3822 = vmatpush1.msra.mxu0 0.0
    %3823 = vmatprep.subr.mxu0 0.0
    %3824 = vmatpush1.msra.mxu0 0.0
    %3825 = vmatprep.subr.mxu0 0.0
    %3826 = vmatpush1.msra.mxu0 0.0
    %3827 = vmatprep.subr.mxu0 0.0
    %3828 = vmatpush1.msra.mxu0 0.0
    %3829 = vmatprep.subr.mxu0 0.0
    %3830 = vmatpush1.msra.mxu0 0.0
    %3831 = vmatprep.subr.mxu0 0.0
    %3832 = vmatpush1.msra.mxu0 0.0
    %3833 = vmatprep.subr.mxu0 0.0
    %3834 = vmatpush1.msra.mxu0 0.0
    %3835 = vmatprep.subr.mxu0 0.0
    %3836 = vmatpush1.msra.mxu0 0.0
    %3837 = vmatprep.subr.mxu0 0.0
    %3838 = vmatpush1.msra.mxu0 0.0
    %3839 = vmatprep.subr.mxu0 0.0
    %3840 = vmatpush1.msra.mxu0 0.0
    %3841 = vmatprep.mubr.f32.mxu0 0.0
    %3842 = vmatmul.mubr.f32.gmra.mrb[0].mxu0 %v673
    %v3843 = vpop.f32.mrb[0].mxu0
    %v3844 = vadd.f32 0.0, %v3843
    %v3845 = vpop.f32.mrb[0].mxu0
    %3846 = vdwg.mxu0
    %v3848 = vrot.slane %v3844, 1
    %v3850 = vadd.f32 %v3538, %v3848
    %v3851 = vtanh.pop %v3850
    %3852 = vmatprep.subr.mxu0 0.0
    %3853 = vmatpush1.msra.mxu0 %v3307
    %3854 = vmatprep.subr.mxu0 0.0
    %3855 = vmatpush1.msra.mxu0 %v3308
    %3856 = vmatprep.subr.mxu0 0.0
    %3857 = vmatpush1.msra.mxu0 0.0
    %3858 = vmatprep.subr.mxu0 0.0
    %3859 = vmatpush1.msra.mxu0 0.0
    %3860 = vmatprep.subr.mxu0 0.0
    %3861 = vmatpush1.msra.mxu0 0.0
    %3862 = vmatprep.subr.mxu0 0.0
    %3863 = vmatpush1.msra.mxu0 0.0
    %3864 = vmatprep.subr.mxu0 0.0
    %3865 = vmatpush1.msra.mxu0 0.0
    %3866 = vmatprep.subr.mxu0 0.0
    %3867 = vmatpush1.msra.mxu0 0.0
    %3868 = vmatprep.subr.mxu0 0.0
    %3869 = vmatpush1.msra.mxu0 0.0
    %3870 = vmatprep.subr.mxu0 0.0
    %3871 = vmatpush1.msra.mxu0 0.0
    %3872 = vmatprep.subr.mxu0 0.0
    %3873 = vmatpush1.msra.mxu0 0.0
    %3874 = vmatprep.subr.mxu0 0.0
    %3875 = vmatpush1.msra.mxu0 0.0
    %3876 = vmatprep.subr.mxu0 0.0
    %3877 = vmatpush1.msra.mxu0 0.0
    %3878 = vmatprep.subr.mxu0 0.0
    %3879 = vmatpush1.msra.mxu0 0.0
    %3880 = vmatprep.subr.mxu0 0.0
    %3881 = vmatpush1.msra.mxu0 0.0
    %3882 = vmatprep.subr.mxu0 0.0
    %3883 = vmatpush1.msra.mxu0 0.0
    %3884 = vmatprep.subr.mxu0 0.0
    %3885 = vmatpush1.msra.mxu0 0.0
    %3886 = vmatprep.subr.mxu0 0.0
    %3887 = vmatpush1.msra.mxu0 0.0
    %3888 = vmatprep.subr.mxu0 0.0
    %3889 = vmatpush1.msra.mxu0 0.0
    %3890 = vmatprep.subr.mxu0 0.0
    %3891 = vmatpush1.msra.mxu0 0.0
    %3892 = vmatprep.subr.mxu0 0.0
    %3893 = vmatpush1.msra.mxu0 0.0
    %3894 = vmatprep.subr.mxu0 0.0
    %3895 = vmatpush1.msra.mxu0 0.0
    %3896 = vmatprep.subr.mxu0 0.0
    %3897 = vmatpush1.msra.mxu0 0.0
    %3898 = vmatprep.subr.mxu0 0.0
    %3899 = vmatpush1.msra.mxu0 0.0
    %3900 = vmatprep.subr.mxu0 0.0
    %3901 = vmatpush1.msra.mxu0 0.0
    %3902 = vmatprep.subr.mxu0 0.0
    %3903 = vmatpush1.msra.mxu0 0.0
    %3904 = vmatprep.subr.mxu0 0.0
    %3905 = vmatpush1.msra.mxu0 0.0
    %3906 = vmatprep.subr.mxu0 0.0
    %3907 = vmatpush1.msra.mxu0 0.0
    %3908 = vmatprep.subr.mxu0 0.0
    %3909 = vmatpush1.msra.mxu0 0.0
    %3910 = vmatprep.subr.mxu0 0.0
    %3911 = vmatpush1.msra.mxu0 0.0
    %3912 = vmatprep.subr.mxu0 0.0
    %3913 = vmatpush1.msra.mxu0 0.0
    %3914 = vmatprep.subr.mxu0 0.0
    %3915 = vmatpush1.msra.mxu0 0.0
    %3916 = vmatprep.mubr.f32.mxu0 0.0
    %3917 = vmatmul.mubr.f32.gmra.mrb[0].mxu0 %v673
    %v3918 = vpop.f32.mrb[0].mxu0
    %v3919 = vadd.f32 0.0, %v3918
    %v3920 = vpop.f32.mrb[0].mxu0
    %3921 = vdwg.mxu0
    %v3923 = vrot.slane %v3919, 1
    %v3925 = vadd.f32 %v3614, %v3923
    %v3926 = vsub.f32 0.0, %v3925
    %v3927 = vmul.f32 %v3926, 1.442695
    %v3928 = vpow.pop %v3927
    %v3929 = vadd.f32 %v3928, 1.0
    %v3930 = vrcp.pop %v3929
    %v3931 = vmul.f32 1.0, %v3930
    %v3932 = vmul.f32 %v3776, 0.0
    %v3933 = vmul.f32 %v3696, %v3851
    %v3934 = vadd.f32 %v3932, %v3933
    %v3935 = vtanh.pop %v3934
    %v3936 = vmul.f32 %v3931, %v3935
    %v3938 = vrot.slane %v3936, 7
    %v3939 = vsel %vm671, %v3938, 0
    %3941 = vmatprep.subr.mxu0 0.0
    %3942 = vmatpush1.msra.mxu0 %v3301
    %3943 = vmatprep.subr.mxu0 0.0
    %3944 = vmatpush1.msra.mxu0 %v3302
    %3945 = vmatprep.subr.mxu0 0.0
    %3946 = vmatpush1.msra.mxu0 0.0
    %3947 = vmatprep.subr.mxu0 0.0
    %3948 = vmatpush1.msra.mxu0 0.0
    %3949 = vmatprep.subr.mxu0 0.0
    %3950 = vmatpush1.msra.mxu0 0.0
    %3951 = vmatprep.subr.mxu0 0.0
    %3952 = vmatpush1.msra.mxu0 0.0
    %3953 = vmatprep.subr.mxu0 0.0
    %3954 = vmatpush1.msra.mxu0 0.0
    %3955 = vmatprep.subr.mxu0 0.0
    %3956 = vmatpush1.msra.mxu0 0.0
    %3957 = vmatprep.subr.mxu0 0.0
    %3958 = vmatpush1.msra.mxu0 0.0
    %3959 = vmatprep.subr.mxu0 0.0
    %3960 = vmatpush1.msra.mxu0 0.0
    %3961 = vmatprep.subr.mxu0 0.0
    %3962 = vmatpush1.msra.mxu0 0.0
    %3963 = vmatprep.subr.mxu0 0.0
    %3964 = vmatpush1.msra.mxu0 0.0
    %3965 = vmatprep.subr.mxu0 0.0
    %3966 = vmatpush1.msra.mxu0 0.0
    %3967 = vmatprep.subr.mxu0 0.0
    %3968 = vmatpush1.msra.mxu0 0.0
    %3969 = vmatprep.subr.mxu0 0.0
    %3970 = vmatpush1.msra.mxu0 0.0
    %3971 = vmatprep.subr.mxu0 0.0
    %3972 = vmatpush1.msra.mxu0 0.0
    %3973 = vmatprep.subr.mxu0 0.0
    %3974 = vmatpush1.msra.mxu0 0.0
    %3975 = vmatprep.subr.mxu0 0.0
    %3976 = vmatpush1.msra.mxu0 0.0
    %3977 = vmatprep.subr.mxu0 0.0
    %3978 = vmatpush1.msra.mxu0 0.0
    %3979 = vmatprep.subr.mxu0 0.0
    %3980 = vmatpush1.msra.mxu0 0.0
    %3981 = vmatprep.subr.mxu0 0.0
    %3982 = vmatpush1.msra.mxu0 0.0
    %3983 = vmatprep.subr.mxu0 0.0
    %3984 = vmatpush1.msra.mxu0 0.0
    %3985 = vmatprep.subr.mxu0 0.0
    %3986 = vmatpush1.msra.mxu0 0.0
    %3987 = vmatprep.subr.mxu0 0.0
    %3988 = vmatpush1.msra.mxu0 0.0
    %3989 = vmatprep.subr.mxu0 0.0
    %3990 = vmatpush1.msra.mxu0 0.0
    %3991 = vmatprep.subr.mxu0 0.0
    %3992 = vmatpush1.msra.mxu0 0.0
    %3993 = vmatprep.subr.mxu0 0.0
    %3994 = vmatpush1.msra.mxu0 0.0
    %3995 = vmatprep.subr.mxu0 0.0
    %3996 = vmatpush1.msra.mxu0 0.0
    %3997 = vmatprep.subr.mxu0 0.0
    %3998 = vmatpush1.msra.mxu0 0.0
    %3999 = vmatprep.subr.mxu0 0.0
    %4000 = vmatpush1.msra.mxu0 0.0
    %4001 = vmatprep.subr.mxu0 0.0
    %4002 = vmatpush1.msra.mxu0 0.0
    %4003 = vmatprep.subr.mxu0 0.0
    %4004 = vmatpush1.msra.mxu0 0.0
    %4005 = vmatprep.mubr.f32.mxu0 0.0
    %4006 = vmatmul.mubr.f32.gmra.mrb[0].mxu0 %v3939
    %v4007 = vpop.f32.mrb[0].mxu0
    %v4008 = vadd.f32 0.0, %v4007
    %v4009 = vpop.f32.mrb[0].mxu0
    %4010 = vdwg.mxu0
    %v4012 = vrot.slane %v4008, 2
    %v4014 = vadd.f32 %v3386, %v4012
    %v4015 = vsub.f32 0.0, %v4014
    %v4016 = vmul.f32 %v4015, 1.442695
    %v4017 = vpow.pop %v4016
    %v4018 = vadd.f32 %v4017, 1.0
    %v4019 = vrcp.pop %v4018
    %v4020 = vmul.f32 1.0, %v4019
    %4021 = vmatprep.subr.mxu0 0.0
    %4022 = vmatpush1.msra.mxu0 %v3303
    %4023 = vmatprep.subr.mxu0 0.0
    %4024 = vmatpush1.msra.mxu0 %v3304
    %4025 = vmatprep.subr.mxu0 0.0
    %4026 = vmatpush1.msra.mxu0 0.0
    %4027 = vmatprep.subr.mxu0 0.0
    %4028 = vmatpush1.msra.mxu0 0.0
    %4029 = vmatprep.subr.mxu0 0.0
    %4030 = vmatpush1.msra.mxu0 0.0
    %4031 = vmatprep.subr.mxu0 0.0
    %4032 = vmatpush1.msra.mxu0 0.0
    %4033 = vmatprep.subr.mxu0 0.0
    %4034 = vmatpush1.msra.mxu0 0.0
    %4035 = vmatprep.subr.mxu0 0.0
    %4036 = vmatpush1.msra.mxu0 0.0
    %4037 = vmatprep.subr.mxu0 0.0
    %4038 = vmatpush1.msra.mxu0 0.0
    %4039 = vmatprep.subr.mxu0 0.0
    %4040 = vmatpush1.msra.mxu0 0.0
    %4041 = vmatprep.subr.mxu0 0.0
    %4042 = vmatpush1.msra.mxu0 0.0
    %4043 = vmatprep.subr.mxu0 0.0
    %4044 = vmatpush1.msra.mxu0 0.0
    %4045 = vmatprep.subr.mxu0 0.0
    %4046 = vmatpush1.msra.mxu0 0.0
    %4047 = vmatprep.subr.mxu0 0.0
    %4048 = vmatpush1.msra.mxu0 0.0
    %4049 = vmatprep.subr.mxu0 0.0
    %4050 = vmatpush1.msra.mxu0 0.0
    %4051 = vmatprep.subr.mxu0 0.0
    %4052 = vmatpush1.msra.mxu0 0.0
    %4053 = vmatprep.subr.mxu0 0.0
    %4054 = vmatpush1.msra.mxu0 0.0
    %4055 = vmatprep.subr.mxu0 0.0
    %4056 = vmatpush1.msra.mxu0 0.0
    %4057 = vmatprep.subr.mxu0 0.0
    %4058 = vmatpush1.msra.mxu0 0.0
    %4059 = vmatprep.subr.mxu0 0.0
    %4060 = vmatpush1.msra.mxu0 0.0
    %4061 = vmatprep.subr.mxu0 0.0
    %4062 = vmatpush1.msra.mxu0 0.0
    %4063 = vmatprep.subr.mxu0 0.0
    %4064 = vmatpush1.msra.mxu0 0.0
    %4065 = vmatprep.subr.mxu0 0.0
    %4066 = vmatpush1.msra.mxu0 0.0
    %4067 = vmatprep.subr.mxu0 0.0
    %4068 = vmatpush1.msra.mxu0 0.0
    %4069 = vmatprep.subr.mxu0 0.0
    %4070 = vmatpush1.msra.mxu0 0.0
    %4071 = vmatprep.subr.mxu0 0.0
    %4072 = vmatpush1.msra.mxu0 0.0
    %4073 = vmatprep.subr.mxu0 0.0
    %4074 = vmatpush1.msra.mxu0 0.0
    %4075 = vmatprep.subr.mxu0 0.0
    %4076 = vmatpush1.msra.mxu0 0.0
    %4077 = vmatprep.subr.mxu0 0.0
    %4078 = vmatpush1.msra.mxu0 0.0
    %4079 = vmatprep.subr.mxu0 0.0
    %4080 = vmatpush1.msra.mxu0 0.0
    %4081 = vmatprep.subr.mxu0 0.0
    %4082 = vmatpush1.msra.mxu0 0.0
    %4083 = vmatprep.subr.mxu0 0.0
    %4084 = vmatpush1.msra.mxu0 0.0
    %4085 = vmatprep.mubr.f32.mxu0 0.0
    %4086 = vmatmul.mubr.f32.gmra.mrb[0].mxu0 %v3939
    %v4087 = vpop.f32.mrb[0].mxu0
    %v4088 = vadd.f32 0.0, %v4087
    %v4089 = vpop.f32.mrb[0].mxu0
    %4090 = vdwg.mxu0
    %v4092 = vrot.slane %v4088, 2
    %v4094 = vadd.f32 %v3462, %v4092
    %v4095 = vsub.f32 0.0, %v4094
    %v4096 = vmul.f32 %v4095, 1.442695
    %v4097 = vpow.pop %v4096
    %v4098 = vadd.f32 %v4097, 1.0
    %v4099 = vrcp.pop %v4098
    %v4100 = vmul.f32 1.0, %v4099
    %4101 = vmatprep.subr.mxu0 0.0
    %4102 = vmatpush1.msra.mxu0 %v3305
    %4103 = vmatprep.subr.mxu0 0.0
    %4104 = vmatpush1.msra.mxu0 %v3306
    %4105 = vmatprep.subr.mxu0 0.0
    %4106 = vmatpush1.msra.mxu0 0.0
    %4107 = vmatprep.subr.mxu0 0.0
    %4108 = vmatpush1.msra.mxu0 0.0
    %4109 = vmatprep.subr.mxu0 0.0
    %4110 = vmatpush1.msra.mxu0 0.0
    %4111 = vmatprep.subr.mxu0 0.0
    %4112 = vmatpush1.msra.mxu0 0.0
    %4113 = vmatprep.subr.mxu0 0.0
    %4114 = vmatpush1.msra.mxu0 0.0
    %4115 = vmatprep.subr.mxu0 0.0
    %4116 = vmatpush1.msra.mxu0 0.0
    %4117 = vmatprep.subr.mxu0 0.0
    %4118 = vmatpush1.msra.mxu0 0.0
    %4119 = vmatprep.subr.mxu0 0.0
    %4120 = vmatpush1.msra.mxu0 0.0
    %4121 = vmatprep.subr.mxu0 0.0
    %4122 = vmatpush1.msra.mxu0 0.0
    %4123 = vmatprep.subr.mxu0 0.0
    %4124 = vmatpush1.msra.mxu0 0.0
    %4125 = vmatprep.subr.mxu0 0.0
    %4126 = vmatpush1.msra.mxu0 0.0
    %4127 = vmatprep.subr.mxu0 0.0
    %4128 = vmatpush1.msra.mxu0 0.0
    %4129 = vmatprep.subr.mxu0 0.0
    %4130 = vmatpush1.msra.mxu0 0.0
    %4131 = vmatprep.subr.mxu0 0.0
    %4132 = vmatpush1.msra.mxu0 0.0
    %4133 = vmatprep.subr.mxu0 0.0
    %4134 = vmatpush1.msra.mxu0 0.0
    %4135 = vmatprep.subr.mxu0 0.0
    %4136 = vmatpush1.msra.mxu0 0.0
    %4137 = vmatprep.subr.mxu0 0.0
    %4138 = vmatpush1.msra.mxu0 0.0
    %4139 = vmatprep.subr.mxu0 0.0
    %4140 = vmatpush1.msra.mxu0 0.0
    %4141 = vmatprep.subr.mxu0 0.0
    %4142 = vmatpush1.msra.mxu0 0.0
    %4143 = vmatprep.subr.mxu0 0.0
    %4144 = vmatpush1.msra.mxu0 0.0
    %4145 = vmatprep.subr.mxu0 0.0
    %4146 = vmatpush1.msra.mxu0 0.0
    %4147 = vmatprep.subr.mxu0 0.0
    %4148 = vmatpush1.msra.mxu0 0.0
    %4149 = vmatprep.subr.mxu0 0.0
    %4150 = vmatpush1.msra.mxu0 0.0
    %4151 = vmatprep.subr.mxu0 0.0
    %4152 = vmatpush1.msra.mxu0 0.0
    %4153 = vmatprep.subr.mxu0 0.0
    %4154 = vmatpush1.msra.mxu0 0.0
    %4155 = vmatprep.subr.mxu0 0.0
    %4156 = vmatpush1.msra.mxu0 0.0
    %4157 = vmatprep.subr.mxu0 0.0
    %4158 = vmatpush1.msra.mxu0 0.0
    %4159 = vmatprep.subr.mxu0 0.0
    %4160 = vmatpush1.msra.mxu0 0.0
    %4161 = vmatprep.subr.mxu0 0.0
    %4162 = vmatpush1.msra.mxu0 0.0
    %4163 = vmatprep.subr.mxu0 0.0
    %4164 = vmatpush1.msra.mxu0 0.0
    %4165 = vmatprep.mubr.f32.mxu0 0.0
    %4166 = vmatmul.mubr.f32.gmra.mrb[0].mxu0 %v3939
    %v4167 = vpop.f32.mrb[0].mxu0
    %v4168 = vadd.f32 0.0, %v4167
    %v4169 = vpop.f32.mrb[0].mxu0
    %4170 = vdwg.mxu0
    %v4172 = vrot.slane %v4168, 2
    %v4174 = vadd.f32 %v3538, %v4172
    %v4175 = vtanh.pop %v4174
    %4176 = vmatprep.subr.mxu0 0.0
    %4177 = vmatpush1.msra.mxu0 %v3307
    %4178 = vmatprep.subr.mxu0 0.0
    %4179 = vmatpush1.msra.mxu0 %v3308
    %4180 = vmatprep.subr.mxu0 0.0
    %4181 = vmatpush1.msra.mxu0 0.0
    %4182 = vmatprep.subr.mxu0 0.0
    %4183 = vmatpush1.msra.mxu0 0.0
    %4184 = vmatprep.subr.mxu0 0.0
    %4185 = vmatpush1.msra.mxu0 0.0
    %4186 = vmatprep.subr.mxu0 0.0
    %4187 = vmatpush1.msra.mxu0 0.0
    %4188 = vmatprep.subr.mxu0 0.0
    %4189 = vmatpush1.msra.mxu0 0.0
    %4190 = vmatprep.subr.mxu0 0.0
    %4191 = vmatpush1.msra.mxu0 0.0
    %4192 = vmatprep.subr.mxu0 0.0
    %4193 = vmatpush1.msra.mxu0 0.0
    %4194 = vmatprep.subr.mxu0 0.0
    %4195 = vmatpush1.msra.mxu0 0.0
    %4196 = vmatprep.subr.mxu0 0.0
    %4197 = vmatpush1.msra.mxu0 0.0
    %4198 = vmatprep.subr.mxu0 0.0
    %4199 = vmatpush1.msra.mxu0 0.0
    %4200 = vmatprep.subr.mxu0 0.0
    %4201 = vmatpush1.msra.mxu0 0.0
    %4202 = vmatprep.subr.mxu0 0.0
    %4203 = vmatpush1.msra.mxu0 0.0
    %4204 = vmatprep.subr.mxu0 0.0
    %4205 = vmatpush1.msra.mxu0 0.0
    %4206 = vmatprep.subr.mxu0 0.0
    %4207 = vmatpush1.msra.mxu0 0.0
    %4208 = vmatprep.subr.mxu0 0.0
    %4209 = vmatpush1.msra.mxu0 0.0
    %4210 = vmatprep.subr.mxu0 0.0
    %4211 = vmatpush1.msra.mxu0 0.0
    %4212 = vmatprep.subr.mxu0 0.0
    %4213 = vmatpush1.msra.mxu0 0.0
    %4214 = vmatprep.subr.mxu0 0.0
    %4215 = vmatpush1.msra.mxu0 0.0
    %4216 = vmatprep.subr.mxu0 0.0
    %4217 = vmatpush1.msra.mxu0 0.0
    %4218 = vmatprep.subr.mxu0 0.0
    %4219 = vmatpush1.msra.mxu0 0.0
    %4220 = vmatprep.subr.mxu0 0.0
    %4221 = vmatpush1.msra.mxu0 0.0
    %4222 = vmatprep.subr.mxu0 0.0
    %4223 = vmatpush1.msra.mxu0 0.0
    %4224 = vmatprep.subr.mxu0 0.0
    %4225 = vmatpush1.msra.mxu0 0.0
    %4226 = vmatprep.subr.mxu0 0.0
    %4227 = vmatpush1.msra.mxu0 0.0
    %4228 = vmatprep.subr.mxu0 0.0
    %4229 = vmatpush1.msra.mxu0 0.0
    %4230 = vmatprep.subr.mxu0 0.0
    %4231 = vmatpush1.msra.mxu0 0.0
    %4232 = vmatprep.subr.mxu0 0.0
    %4233 = vmatpush1.msra.mxu0 0.0
    %4234 = vmatprep.subr.mxu0 0.0
    %4235 = vmatpush1.msra.mxu0 0.0
    %4236 = vmatprep.subr.mxu0 0.0
    %4237 = vmatpush1.msra.mxu0 0.0
    %4238 = vmatprep.subr.mxu0 0.0
    %4239 = vmatpush1.msra.mxu0 0.0
    %4240 = vmatprep.mubr.f32.mxu0 0.0
    %4241 = vmatmul.mubr.f32.gmra.mrb[0].mxu0 %v3939
    %v4242 = vpop.f32.mrb[0].mxu0
    %v4243 = vadd.f32 0.0, %v4242
    %v4244 = vpop.f32.mrb[0].mxu0
    %4245 = vdwg.mxu0
    %v4247 = vrot.slane %v4243, 2
    %v4249 = vadd.f32 %v3614, %v4247
    %v4250 = vsub.f32 0.0, %v4249
    %v4251 = vmul.f32 %v4250, 1.442695
    %v4252 = vpow.pop %v4251
    %v4253 = vadd.f32 %v4252, 1.0
    %v4254 = vrcp.pop %v4253
    %v4255 = vmul.f32 1.0, %v4254
    %v4257 = vrot.slane %v3934, 1
    %v4259 = vmul.f32 %v4100, %v4257
    %v4260 = vmul.f32 %v4020, %v4175
    %v4261 = vadd.f32 %v4259, %v4260
    %v4262 = vtanh.pop %v4261
    %v4263 = vmul.f32 %v4255, %v4262
    %v4265 = vrot.slane %v4263, 6
    %v4266 = vsel %vm671, %v4265, 0
    %4268 = vmatprep.subr.mxu0 0.0
    %4269 = vmatpush1.msra.mxu0 %v3301
    %4270 = vmatprep.subr.mxu0 0.0
    %4271 = vmatpush1.msra.mxu0 %v3302
    %4272 = vmatprep.subr.mxu0 0.0
    %4273 = vmatpush1.msra.mxu0 0.0
    %4274 = vmatprep.subr.mxu0 0.0
    %4275 = vmatpush1.msra.mxu0 0.0
    %4276 = vmatprep.subr.mxu0 0.0
    %4277 = vmatpush1.msra.mxu0 0.0
    %4278 = vmatprep.subr.mxu0 0.0
    %4279 = vmatpush1.msra.mxu0 0.0
    %4280 = vmatprep.subr.mxu0 0.0
    %4281 = vmatpush1.msra.mxu0 0.0
    %4282 = vmatprep.subr.mxu0 0.0
    %4283 = vmatpush1.msra.mxu0 0.0
    %4284 = vmatprep.subr.mxu0 0.0
    %4285 = vmatpush1.msra.mxu0 0.0
    %4286 = vmatprep.subr.mxu0 0.0
    %4287 = vmatpush1.msra.mxu0 0.0
    %4288 = vmatprep.subr.mxu0 0.0
    %4289 = vmatpush1.msra.mxu0 0.0
    %4290 = vmatprep.subr.mxu0 0.0
    %4291 = vmatpush1.msra.mxu0 0.0
    %4292 = vmatprep.subr.mxu0 0.0
    %4293 = vmatpush1.msra.mxu0 0.0
    %4294 = vmatprep.subr.mxu0 0.0
    %4295 = vmatpush1.msra.mxu0 0.0
    %4296 = vmatprep.subr.mxu0 0.0
    %4297 = vmatpush1.msra.mxu0 0.0
    %4298 = vmatprep.subr.mxu0 0.0
    %4299 = vmatpush1.msra.mxu0 0.0
    %4300 = vmatprep.subr.mxu0 0.0
    %4301 = vmatpush1.msra.mxu0 0.0
    %4302 = vmatprep.subr.mxu0 0.0
    %4303 = vmatpush1.msra.mxu0 0.0
    %4304 = vmatprep.subr.mxu0 0.0
    %4305 = vmatpush1.msra.mxu0 0.0
    %4306 = vmatprep.subr.mxu0 0.0
    %4307 = vmatpush1.msra.mxu0 0.0
    %4308 = vmatprep.subr.mxu0 0.0
    %4309 = vmatpush1.msra.mxu0 0.0
    %4310 = vmatprep.subr.mxu0 0.0
    %4311 = vmatpush1.msra.mxu0 0.0
    %4312 = vmatprep.subr.mxu0 0.0
    %4313 = vmatpush1.msra.mxu0 0.0
    %4314 = vmatprep.subr.mxu0 0.0
    %4315 = vmatpush1.msra.mxu0 0.0
    %4316 = vmatprep.subr.mxu0 0.0
    %4317 = vmatpush1.msra.mxu0 0.0
    %4318 = vmatprep.subr.mxu0 0.0
    %4319 = vmatpush1.msra.mxu0 0.0
    %4320 = vmatprep.subr.mxu0 0.0
    %4321 = vmatpush1.msra.mxu0 0.0
    %4322 = vmatprep.subr.mxu0 0.0
    %4323 = vmatpush1.msra.mxu0 0.0
    %4324 = vmatprep.subr.mxu0 0.0
    %4325 = vmatpush1.msra.mxu0 0.0
    %4326 = vmatprep.subr.mxu0 0.0
    %4327 = vmatpush1.msra.mxu0 0.0
    %4328 = vmatprep.subr.mxu0 0.0
    %4329 = vmatpush1.msra.mxu0 0.0
    %4330 = vmatprep.subr.mxu0 0.0
    %4331 = vmatpush1.msra.mxu0 0.0
    %4332 = vmatprep.mubr.f32.mxu0 0.0
    %4333 = vmatmul.mubr.f32.gmra.mrb[0].mxu0 %v4266
    %v4334 = vpop.f32.mrb[0].mxu0
    %v4335 = vadd.f32 0.0, %v4334
    %v4336 = vpop.f32.mrb[0].mxu0
    %4337 = vdwg.mxu0
    %v4339 = vrot.slane %v4335, 3
    %v4341 = vadd.f32 %v3386, %v4339
    %v4342 = vsub.f32 0.0, %v4341
    %v4343 = vmul.f32 %v4342, 1.442695
    %v4344 = vpow.pop %v4343
    %v4345 = vadd.f32 %v4344, 1.0
    %v4346 = vrcp.pop %v4345
    %v4347 = vmul.f32 1.0, %v4346
    %4348 = vmatprep.subr.mxu0 0.0
    %4349 = vmatpush1.msra.mxu0 %v3303
    %4350 = vmatprep.subr.mxu0 0.0
    %4351 = vmatpush1.msra.mxu0 %v3304
    %4352 = vmatprep.subr.mxu0 0.0
    %4353 = vmatpush1.msra.mxu0 0.0
    %4354 = vmatprep.subr.mxu0 0.0
    %4355 = vmatpush1.msra.mxu0 0.0
    %4356 = vmatprep.subr.mxu0 0.0
    %4357 = vmatpush1.msra.mxu0 0.0
    %4358 = vmatprep.subr.mxu0 0.0
    %4359 = vmatpush1.msra.mxu0 0.0
    %4360 = vmatprep.subr.mxu0 0.0
    %4361 = vmatpush1.msra.mxu0 0.0
    %4362 = vmatprep.subr.mxu0 0.0
    %4363 = vmatpush1.msra.mxu0 0.0
    %4364 = vmatprep.subr.mxu0 0.0
    %4365 = vmatpush1.msra.mxu0 0.0
    %4366 = vmatprep.subr.mxu0 0.0
    %4367 = vmatpush1.msra.mxu0 0.0
    %4368 = vmatprep.subr.mxu0 0.0
    %4369 = vmatpush1.msra.mxu0 0.0
    %4370 = vmatprep.subr.mxu0 0.0
    %4371 = vmatpush1.msra.mxu0 0.0
    %4372 = vmatprep.subr.mxu0 0.0
    %4373 = vmatpush1.msra.mxu0 0.0
    %4374 = vmatprep.subr.mxu0 0.0
    %4375 = vmatpush1.msra.mxu0 0.0
    %4376 = vmatprep.subr.mxu0 0.0
    %4377 = vmatpush1.msra.mxu0 0.0
    %4378 = vmatprep.subr.mxu0 0.0
    %4379 = vmatpush1.msra.mxu0 0.0
    %4380 = vmatprep.subr.mxu0 0.0
    %4381 = vmatpush1.msra.mxu0 0.0
    %4382 = vmatprep.subr.mxu0 0.0
    %4383 = vmatpush1.msra.mxu0 0.0
    %4384 = vmatprep.subr.mxu0 0.0
    %4385 = vmatpush1.msra.mxu0 0.0
    %4386 = vmatprep.subr.mxu0 0.0
    %4387 = vmatpush1.msra.mxu0 0.0
    %4388 = vmatprep.subr.mxu0 0.0
    %4389 = vmatpush1.msra.mxu0 0.0
    %4390 = vmatprep.subr.mxu0 0.0
    %4391 = vmatpush1.msra.mxu0 0.0
    %4392 = vmatprep.subr.mxu0 0.0
    %4393 = vmatpush1.msra.mxu0 0.0
    %4394 = vmatprep.subr.mxu0 0.0
    %4395 = vmatpush1.msra.mxu0 0.0
    %4396 = vmatprep.subr.mxu0 0.0
    %4397 = vmatpush1.msra.mxu0 0.0
    %4398 = vmatprep.subr.mxu0 0.0
    %4399 = vmatpush1.msra.mxu0 0.0
    %4400 = vmatprep.subr.mxu0 0.0
    %4401 = vmatpush1.msra.mxu0 0.0
    %4402 = vmatprep.subr.mxu0 0.0
    %4403 = vmatpush1.msra.mxu0 0.0
    %4404 = vmatprep.subr.mxu0 0.0
    %4405 = vmatpush1.msra.mxu0 0.0
    %4406 = vmatprep.subr.mxu0 0.0
    %4407 = vmatpush1.msra.mxu0 0.0
    %4408 = vmatprep.subr.mxu0 0.0
    %4409 = vmatpush1.msra.mxu0 0.0
    %4410 = vmatprep.subr.mxu0 0.0
    %4411 = vmatpush1.msra.mxu0 0.0
    %4412 = vmatprep.mubr.f32.mxu0 0.0
    %4413 = vmatmul.mubr.f32.gmra.mrb[0].mxu0 %v4266
    %v4414 = vpop.f32.mrb[0].mxu0
    %v4415 = vadd.f32 0.0, %v4414
    %v4416 = vpop.f32.mrb[0].mxu0
    %4417 = vdwg.mxu0
    %v4419 = vrot.slane %v4415, 3
    %v4421 = vadd.f32 %v3462, %v4419
    %v4422 = vsub.f32 0.0, %v4421
    %v4423 = vmul.f32 %v4422, 1.442695
    %v4424 = vpow.pop %v4423
    %v4425 = vadd.f32 %v4424, 1.0
    %v4426 = vrcp.pop %v4425
    %v4427 = vmul.f32 1.0, %v4426
    %4428 = vmatprep.subr.mxu0 0.0
    %4429 = vmatpush1.msra.mxu0 %v3305
    %4430 = vmatprep.subr.mxu0 0.0
    %4431 = vmatpush1.msra.mxu0 %v3306
    %4432 = vmatprep.subr.mxu0 0.0
    %4433 = vmatpush1.msra.mxu0 0.0
    %4434 = vmatprep.subr.mxu0 0.0
    %4435 = vmatpush1.msra.mxu0 0.0
    %4436 = vmatprep.subr.mxu0 0.0
    %4437 = vmatpush1.msra.mxu0 0.0
    %4438 = vmatprep.subr.mxu0 0.0
    %4439 = vmatpush1.msra.mxu0 0.0
    %4440 = vmatprep.subr.mxu0 0.0
    %4441 = vmatpush1.msra.mxu0 0.0
    %4442 = vmatprep.subr.mxu0 0.0
    %4443 = vmatpush1.msra.mxu0 0.0
    %4444 = vmatprep.subr.mxu0 0.0
    %4445 = vmatpush1.msra.mxu0 0.0
    %4446 = vmatprep.subr.mxu0 0.0
    %4447 = vmatpush1.msra.mxu0 0.0
    %4448 = vmatprep.subr.mxu0 0.0
    %4449 = vmatpush1.msra.mxu0 0.0
    %4450 = vmatprep.subr.mxu0 0.0
    %4451 = vmatpush1.msra.mxu0 0.0
    %4452 = vmatprep.subr.mxu0 0.0
    %4453 = vmatpush1.msra.mxu0 0.0
    %4454 = vmatprep.subr.mxu0 0.0
    %4455 = vmatpush1.msra.mxu0 0.0
    %4456 = vmatprep.subr.mxu0 0.0
    %4457 = vmatpush1.msra.mxu0 0.0
    %4458 = vmatprep.subr.mxu0 0.0
    %4459 = vmatpush1.msra.mxu0 0.0
    %4460 = vmatprep.subr.mxu0 0.0
    %4461 = vmatpush1.msra.mxu0 0.0
    %4462 = vmatprep.subr.mxu0 0.0
    %4463 = vmatpush1.msra.mxu0 0.0
    %4464 = vmatprep.subr.mxu0 0.0
    %4465 = vmatpush1.msra.mxu0 0.0
    %4466 = vmatprep.subr.mxu0 0.0
    %4467 = vmatpush1.msra.mxu0 0.0
    %4468 = vmatprep.subr.mxu0 0.0
    %4469 = vmatpush1.msra.mxu0 0.0
    %4470 = vmatprep.subr.mxu0 0.0
    %4471 = vmatpush1.msra.mxu0 0.0
    %4472 = vmatprep.subr.mxu0 0.0
    %4473 = vmatpush1.msra.mxu0 0.0
    %4474 = vmatprep.subr.mxu0 0.0
    %4475 = vmatpush1.msra.mxu0 0.0
    %4476 = vmatprep.subr.mxu0 0.0
    %4477 = vmatpush1.msra.mxu0 0.0
    %4478 = vmatprep.subr.mxu0 0.0
    %4479 = vmatpush1.msra.mxu0 0.0
    %4480 = vmatprep.subr.mxu0 0.0
    %4481 = vmatpush1.msra.mxu0 0.0
    %4482 = vmatprep.subr.mxu0 0.0
    %4483 = vmatpush1.msra.mxu0 0.0
    %4484 = vmatprep.subr.mxu0 0.0
    %4485 = vmatpush1.msra.mxu0 0.0
    %4486 = vmatprep.subr.mxu0 0.0
    %4487 = vmatpush1.msra.mxu0 0.0
    %4488 = vmatprep.subr.mxu0 0.0
    %4489 = vmatpush1.msra.mxu0 0.0
    %4490 = vmatprep.subr.mxu0 0.0
    %4491 = vmatpush1.msra.mxu0 0.0
    %4492 = vmatprep.mubr.f32.mxu0 0.0
    %4493 = vmatmul.mubr.f32.gmra.mrb[0].mxu0 %v4266
    %v4494 = vpop.f32.mrb[0].mxu0
    %v4495 = vadd.f32 0.0, %v4494
    %v4496 = vpop.f32.mrb[0].mxu0
    %4497 = vdwg.mxu0
    %v4499 = vrot.slane %v4495, 3
    %v4501 = vadd.f32 %v3538, %v4499
    %v4502 = vtanh.pop %v4501
    %4503 = vmatprep.subr.mxu0 0.0
    %4504 = vmatpush1.msra.mxu0 %v3307
    %4505 = vmatprep.subr.mxu0 0.0
    %4506 = vmatpush1.msra.mxu0 %v3308
    %4507 = vmatprep.subr.mxu0 0.0
    %4508 = vmatpush1.msra.mxu0 0.0
    %4509 = vmatprep.subr.mxu0 0.0
    %4510 = vmatpush1.msra.mxu0 0.0
    %4511 = vmatprep.subr.mxu0 0.0
    %4512 = vmatpush1.msra.mxu0 0.0
    %4513 = vmatprep.subr.mxu0 0.0
    %4514 = vmatpush1.msra.mxu0 0.0
    %4515 = vmatprep.subr.mxu0 0.0
    %4516 = vmatpush1.msra.mxu0 0.0
    %4517 = vmatprep.subr.mxu0 0.0
    %4518 = vmatpush1.msra.mxu0 0.0
    %4519 = vmatprep.subr.mxu0 0.0
    %4520 = vmatpush1.msra.mxu0 0.0
    %4521 = vmatprep.subr.mxu0 0.0
    %4522 = vmatpush1.msra.mxu0 0.0
    %4523 = vmatprep.subr.mxu0 0.0
    %4524 = vmatpush1.msra.mxu0 0.0
    %4525 = vmatprep.subr.mxu0 0.0
    %4526 = vmatpush1.msra.mxu0 0.0
    %4527 = vmatprep.subr.mxu0 0.0
    %4528 = vmatpush1.msra.mxu0 0.0
    %4529 = vmatprep.subr.mxu0 0.0
    %4530 = vmatpush1.msra.mxu0 0.0
    %4531 = vmatprep.subr.mxu0 0.0
    %4532 = vmatpush1.msra.mxu0 0.0
    %4533 = vmatprep.subr.mxu0 0.0
    %4534 = vmatpush1.msra.mxu0 0.0
    %4535 = vmatprep.subr.mxu0 0.0
    %4536 = vmatpush1.msra.mxu0 0.0
    %4537 = vmatprep.subr.mxu0 0.0
    %4538 = vmatpush1.msra.mxu0 0.0
    %4539 = vmatprep.subr.mxu0 0.0
    %4540 = vmatpush1.msra.mxu0 0.0
    %4541 = vmatprep.subr.mxu0 0.0
    %4542 = vmatpush1.msra.mxu0 0.0
    %4543 = vmatprep.subr.mxu0 0.0
    %4544 = vmatpush1.msra.mxu0 0.0
    %4545 = vmatprep.subr.mxu0 0.0
    %4546 = vmatpush1.msra.mxu0 0.0
    %4547 = vmatprep.subr.mxu0 0.0
    %4548 = vmatpush1.msra.mxu0 0.0
    %4549 = vmatprep.subr.mxu0 0.0
    %4550 = vmatpush1.msra.mxu0 0.0
    %4551 = vmatprep.subr.mxu0 0.0
    %4552 = vmatpush1.msra.mxu0 0.0
    %4553 = vmatprep.subr.mxu0 0.0
    %4554 = vmatpush1.msra.mxu0 0.0
    %4555 = vmatprep.subr.mxu0 0.0
    %4556 = vmatpush1.msra.mxu0 0.0
    %4557 = vmatprep.subr.mxu0 0.0
    %4558 = vmatpush1.msra.mxu0 0.0
    %4559 = vmatprep.subr.mxu0 0.0
    %4560 = vmatpush1.msra.mxu0 0.0
    %4561 = vmatprep.subr.mxu0 0.0
    %4562 = vmatpush1.msra.mxu0 0.0
    %4563 = vmatprep.subr.mxu0 0.0
    %4564 = vmatpush1.msra.mxu0 0.0
    %4565 = vmatprep.subr.mxu0 0.0
    %4566 = vmatpush1.msra.mxu0 0.0
    %4567 = vmatprep.mubr.f32.mxu0 0.0
    %4568 = vmatmul.mubr.f32.gmra.mrb[0].mxu0 %v4266
    %v4569 = vpop.f32.mrb[0].mxu0
    %v4570 = vadd.f32 0.0, %v4569
    %v4571 = vpop.f32.mrb[0].mxu0
    %4572 = vdwg.mxu0
    %v4574 = vrot.slane %v4570, 3
    %v4576 = vadd.f32 %v3614, %v4574
    %v4577 = vsub.f32 0.0, %v4576
    %v4578 = vmul.f32 %v4577, 1.442695
    %v4579 = vpow.pop %v4578
    %v4580 = vadd.f32 %v4579, 1.0
    %v4581 = vrcp.pop %v4580
    %v4582 = vmul.f32 1.0, %v4581
    %v4584 = vrot.slane %v4261, 1
    %v4586 = vmul.f32 %v4427, %v4584
    %v4587 = vmul.f32 %v4347, %v4502
    %v4588 = vadd.f32 %v4586, %v4587
    %v4589 = vtanh.pop %v4588
    %v4590 = vmul.f32 %v4582, %v4589
    %v4592 = vrot.slane %v4590, 5
    %v4593 = vsel %vm671, %v4592, 0
    %4595 = vmatprep.subr.mxu0 0.0
    %4596 = vmatpush1.msra.mxu0 %v3301
    %4597 = vmatprep.subr.mxu0 0.0
    %4598 = vmatpush1.msra.mxu0 %v3302
    %4599 = vmatprep.subr.mxu0 0.0
    %4600 = vmatpush1.msra.mxu0 0.0
    %4601 = vmatprep.subr.mxu0 0.0
    %4602 = vmatpush1.msra.mxu0 0.0
    %4603 = vmatprep.subr.mxu0 0.0
    %4604 = vmatpush1.msra.mxu0 0.0
    %4605 = vmatprep.subr.mxu0 0.0
    %4606 = vmatpush1.msra.mxu0 0.0
    %4607 = vmatprep.subr.mxu0 0.0
    %4608 = vmatpush1.msra.mxu0 0.0
    %4609 = vmatprep.subr.mxu0 0.0
    %4610 = vmatpush1.msra.mxu0 0.0
    %4611 = vmatprep.subr.mxu0 0.0
    %4612 = vmatpush1.msra.mxu0 0.0
    %4613 = vmatprep.subr.mxu0 0.0
    %4614 = vmatpush1.msra.mxu0 0.0
    %4615 = vmatprep.subr.mxu0 0.0
    %4616 = vmatpush1.msra.mxu0 0.0
    %4617 = vmatprep.subr.mxu0 0.0
    %4618 = vmatpush1.msra.mxu0 0.0
    %4619 = vmatprep.subr.mxu0 0.0
    %4620 = vmatpush1.msra.mxu0 0.0
    %4621 = vmatprep.subr.mxu0 0.0
    %4622 = vmatpush1.msra.mxu0 0.0
    %4623 = vmatprep.subr.mxu0 0.0
    %4624 = vmatpush1.msra.mxu0 0.0
    %4625 = vmatprep.subr.mxu0 0.0
    %4626 = vmatpush1.msra.mxu0 0.0
    %4627 = vmatprep.subr.mxu0 0.0
    %4628 = vmatpush1.msra.mxu0 0.0
    %4629 = vmatprep.subr.mxu0 0.0
    %4630 = vmatpush1.msra.mxu0 0.0
    %4631 = vmatprep.subr.mxu0 0.0
    %4632 = vmatpush1.msra.mxu0 0.0
    %4633 = vmatprep.subr.mxu0 0.0
    %4634 = vmatpush1.msra.mxu0 0.0
    %4635 = vmatprep.subr.mxu0 0.0
    %4636 = vmatpush1.msra.mxu0 0.0
    %4637 = vmatprep.subr.mxu0 0.0
    %4638 = vmatpush1.msra.mxu0 0.0
    %4639 = vmatprep.subr.mxu0 0.0
    %4640 = vmatpush1.msra.mxu0 0.0
    %4641 = vmatprep.subr.mxu0 0.0
    %4642 = vmatpush1.msra.mxu0 0.0
    %4643 = vmatprep.subr.mxu0 0.0
    %4644 = vmatpush1.msra.mxu0 0.0
    %4645 = vmatprep.subr.mxu0 0.0
    %4646 = vmatpush1.msra.mxu0 0.0
    %4647 = vmatprep.subr.mxu0 0.0
    %4648 = vmatpush1.msra.mxu0 0.0
    %4649 = vmatprep.subr.mxu0 0.0
    %4650 = vmatpush1.msra.mxu0 0.0
    %4651 = vmatprep.subr.mxu0 0.0
    %4652 = vmatpush1.msra.mxu0 0.0
    %4653 = vmatprep.subr.mxu0 0.0
    %4654 = vmatpush1.msra.mxu0 0.0
    %4655 = vmatprep.subr.mxu0 0.0
    %4656 = vmatpush1.msra.mxu0 0.0
    %4657 = vmatprep.subr.mxu0 0.0
    %4658 = vmatpush1.msra.mxu0 0.0
    %4659 = vmatprep.mubr.f32.mxu0 0.0
    %4660 = vmatmul.mubr.f32.gmra.mrb[0].mxu0 %v4593
    %v4661 = vpop.f32.mrb[0].mxu0
    %v4662 = vadd.f32 0.0, %v4661
    %v4663 = vpop.f32.mrb[0].mxu0
    %4664 = vdwg.mxu0
    %v4666 = vrot.slane %v4662, 4
    %v4668 = vadd.f32 %v3386, %v4666
    %v4669 = vsub.f32 0.0, %v4668
    %v4670 = vmul.f32 %v4669, 1.442695
    %v4671 = vpow.pop %v4670
    %v4672 = vadd.f32 %v4671, 1.0
    %v4673 = vrcp.pop %v4672
    %v4674 = vmul.f32 1.0, %v4673
    %4675 = vmatprep.subr.mxu0 0.0
    %4676 = vmatpush1.msra.mxu0 %v3303
    %4677 = vmatprep.subr.mxu0 0.0
    %4678 = vmatpush1.msra.mxu0 %v3304
    %4679 = vmatprep.subr.mxu0 0.0
    %4680 = vmatpush1.msra.mxu0 0.0
    %4681 = vmatprep.subr.mxu0 0.0
    %4682 = vmatpush1.msra.mxu0 0.0
    %4683 = vmatprep.subr.mxu0 0.0
    %4684 = vmatpush1.msra.mxu0 0.0
    %4685 = vmatprep.subr.mxu0 0.0
    %4686 = vmatpush1.msra.mxu0 0.0
    %4687 = vmatprep.subr.mxu0 0.0
    %4688 = vmatpush1.msra.mxu0 0.0
    %4689 = vmatprep.subr.mxu0 0.0
    %4690 = vmatpush1.msra.mxu0 0.0
    %4691 = vmatprep.subr.mxu0 0.0
    %4692 = vmatpush1.msra.mxu0 0.0
    %4693 = vmatprep.subr.mxu0 0.0
    %4694 = vmatpush1.msra.mxu0 0.0
    %4695 = vmatprep.subr.mxu0 0.0
    %4696 = vmatpush1.msra.mxu0 0.0
    %4697 = vmatprep.subr.mxu0 0.0
    %4698 = vmatpush1.msra.mxu0 0.0
    %4699 = vmatprep.subr.mxu0 0.0
    %4700 = vmatpush1.msra.mxu0 0.0
    %4701 = vmatprep.subr.mxu0 0.0
    %4702 = vmatpush1.msra.mxu0 0.0
    %4703 = vmatprep.subr.mxu0 0.0
    %4704 = vmatpush1.msra.mxu0 0.0
    %4705 = vmatprep.subr.mxu0 0.0
    %4706 = vmatpush1.msra.mxu0 0.0
    %4707 = vmatprep.subr.mxu0 0.0
    %4708 = vmatpush1.msra.mxu0 0.0
    %4709 = vmatprep.subr.mxu0 0.0
    %4710 = vmatpush1.msra.mxu0 0.0
    %4711 = vmatprep.subr.mxu0 0.0
    %4712 = vmatpush1.msra.mxu0 0.0
    %4713 = vmatprep.subr.mxu0 0.0
    %4714 = vmatpush1.msra.mxu0 0.0
    %4715 = vmatprep.subr.mxu0 0.0
    %4716 = vmatpush1.msra.mxu0 0.0
    %4717 = vmatprep.subr.mxu0 0.0
    %4718 = vmatpush1.msra.mxu0 0.0
    %4719 = vmatprep.subr.mxu0 0.0
    %4720 = vmatpush1.msra.mxu0 0.0
    %4721 = vmatprep.subr.mxu0 0.0
    %4722 = vmatpush1.msra.mxu0 0.0
    %4723 = vmatprep.subr.mxu0 0.0
    %4724 = vmatpush1.msra.mxu0 0.0
    %4725 = vmatprep.subr.mxu0 0.0
    %4726 = vmatpush1.msra.mxu0 0.0
    %4727 = vmatprep.subr.mxu0 0.0
    %4728 = vmatpush1.msra.mxu0 0.0
    %4729 = vmatprep.subr.mxu0 0.0
    %4730 = vmatpush1.msra.mxu0 0.0
    %4731 = vmatprep.subr.mxu0 0.0
    %4732 = vmatpush1.msra.mxu0 0.0
    %4733 = vmatprep.subr.mxu0 0.0
    %4734 = vmatpush1.msra.mxu0 0.0
    %4735 = vmatprep.subr.mxu0 0.0
    %4736 = vmatpush1.msra.mxu0 0.0
    %4737 = vmatprep.subr.mxu0 0.0
    %4738 = vmatpush1.msra.mxu0 0.0
    %4739 = vmatprep.mubr.f32.mxu0 0.0
    %4740 = vmatmul.mubr.f32.gmra.mrb[0].mxu0 %v4593
    %v4741 = vpop.f32.mrb[0].mxu0
    %v4742 = vadd.f32 0.0, %v4741
    %v4743 = vpop.f32.mrb[0].mxu0
    %4744 = vdwg.mxu0
    %v4746 = vrot.slane %v4742, 4
    %v4748 = vadd.f32 %v3462, %v4746
    %v4749 = vsub.f32 0.0, %v4748
    %v4750 = vmul.f32 %v4749, 1.442695
    %v4751 = vpow.pop %v4750
    %v4752 = vadd.f32 %v4751, 1.0
    %v4753 = vrcp.pop %v4752
    %v4754 = vmul.f32 1.0, %v4753
    %4755 = vmatprep.subr.mxu0 0.0
    %4756 = vmatpush1.msra.mxu0 %v3305
    %4757 = vmatprep.subr.mxu0 0.0
    %4758 = vmatpush1.msra.mxu0 %v3306
    %4759 = vmatprep.subr.mxu0 0.0
    %4760 = vmatpush1.msra.mxu0 0.0
    %4761 = vmatprep.subr.mxu0 0.0
    %4762 = vmatpush1.msra.mxu0 0.0
    %4763 = vmatprep.subr.mxu0 0.0
    %4764 = vmatpush1.msra.mxu0 0.0
    %4765 = vmatprep.subr.mxu0 0.0
    %4766 = vmatpush1.msra.mxu0 0.0
    %4767 = vmatprep.subr.mxu0 0.0
    %4768 = vmatpush1.msra.mxu0 0.0
    %4769 = vmatprep.subr.mxu0 0.0
    %4770 = vmatpush1.msra.mxu0 0.0
    %4771 = vmatprep.subr.mxu0 0.0
    %4772 = vmatpush1.msra.mxu0 0.0
    %4773 = vmatprep.subr.mxu0 0.0
    %4774 = vmatpush1.msra.mxu0 0.0
    %4775 = vmatprep.subr.mxu0 0.0
    %4776 = vmatpush1.msra.mxu0 0.0
    %4777 = vmatprep.subr.mxu0 0.0
    %4778 = vmatpush1.msra.mxu0 0.0
    %4779 = vmatprep.subr.mxu0 0.0
    %4780 = vmatpush1.msra.mxu0 0.0
    %4781 = vmatprep.subr.mxu0 0.0
    %4782 = vmatpush1.msra.mxu0 0.0
    %4783 = vmatprep.subr.mxu0 0.0
    %4784 = vmatpush1.msra.mxu0 0.0
    %4785 = vmatprep.subr.mxu0 0.0
    %4786 = vmatpush1.msra.mxu0 0.0
    %4787 = vmatprep.subr.mxu0 0.0
    %4788 = vmatpush1.msra.mxu0 0.0
    %4789 = vmatprep.subr.mxu0 0.0
    %4790 = vmatpush1.msra.mxu0 0.0
    %4791 = vmatprep.subr.mxu0 0.0
    %4792 = vmatpush1.msra.mxu0 0.0
    %4793 = vmatprep.subr.mxu0 0.0
    %4794 = vmatpush1.msra.mxu0 0.0
    %4795 = vmatprep.subr.mxu0 0.0
    %4796 = vmatpush1.msra.mxu0 0.0
    %4797 = vmatprep.subr.mxu0 0.0
    %4798 = vmatpush1.msra.mxu0 0.0
    %4799 = vmatprep.subr.mxu0 0.0
    %4800 = vmatpush1.msra.mxu0 0.0
    %4801 = vmatprep.subr.mxu0 0.0
    %4802 = vmatpush1.msra.mxu0 0.0
    %4803 = vmatprep.subr.mxu0 0.0
    %4804 = vmatpush1.msra.mxu0 0.0
    %4805 = vmatprep.subr.mxu0 0.0
    %4806 = vmatpush1.msra.mxu0 0.0
    %4807 = vmatprep.subr.mxu0 0.0
    %4808 = vmatpush1.msra.mxu0 0.0
    %4809 = vmatprep.subr.mxu0 0.0
    %4810 = vmatpush1.msra.mxu0 0.0
    %4811 = vmatprep.subr.mxu0 0.0
    %4812 = vmatpush1.msra.mxu0 0.0
    %4813 = vmatprep.subr.mxu0 0.0
    %4814 = vmatpush1.msra.mxu0 0.0
    %4815 = vmatprep.subr.mxu0 0.0
    %4816 = vmatpush1.msra.mxu0 0.0
    %4817 = vmatprep.subr.mxu0 0.0
    %4818 = vmatpush1.msra.mxu0 0.0
    %4819 = vmatprep.mubr.f32.mxu0 0.0
    %4820 = vmatmul.mubr.f32.gmra.mrb[0].mxu0 %v4593
    %v4821 = vpop.f32.mrb[0].mxu0
    %v4822 = vadd.f32 0.0, %v4821
    %v4823 = vpop.f32.mrb[0].mxu0
    %4824 = vdwg.mxu0
    %v4826 = vrot.slane %v4822, 4
    %v4828 = vadd.f32 %v3538, %v4826
    %v4829 = vtanh.pop %v4828
    %4830 = vmatprep.subr.mxu0 0.0
    %4831 = vmatpush1.msra.mxu0 %v3307
    %4832 = vmatprep.subr.mxu0 0.0
    %4833 = vmatpush1.msra.mxu0 %v3308
    %4834 = vmatprep.subr.mxu0 0.0
    %4835 = vmatpush1.msra.mxu0 0.0
    %4836 = vmatprep.subr.mxu0 0.0
    %4837 = vmatpush1.msra.mxu0 0.0
    %4838 = vmatprep.subr.mxu0 0.0
    %4839 = vmatpush1.msra.mxu0 0.0
    %4840 = vmatprep.subr.mxu0 0.0
    %4841 = vmatpush1.msra.mxu0 0.0
    %4842 = vmatprep.subr.mxu0 0.0
    %4843 = vmatpush1.msra.mxu0 0.0
    %4844 = vmatprep.subr.mxu0 0.0
    %4845 = vmatpush1.msra.mxu0 0.0
    %4846 = vmatprep.subr.mxu0 0.0
    %4847 = vmatpush1.msra.mxu0 0.0
    %4848 = vmatprep.subr.mxu0 0.0
    %4849 = vmatpush1.msra.mxu0 0.0
    %4850 = vmatprep.subr.mxu0 0.0
    %4851 = vmatpush1.msra.mxu0 0.0
    %4852 = vmatprep.subr.mxu0 0.0
    %4853 = vmatpush1.msra.mxu0 0.0
    %4854 = vmatprep.subr.mxu0 0.0
    %4855 = vmatpush1.msra.mxu0 0.0
    %4856 = vmatprep.subr.mxu0 0.0
    %4857 = vmatpush1.msra.mxu0 0.0
    %4858 = vmatprep.subr.mxu0 0.0
    %4859 = vmatpush1.msra.mxu0 0.0
    %4860 = vmatprep.subr.mxu0 0.0
    %4861 = vmatpush1.msra.mxu0 0.0
    %4862 = vmatprep.subr.mxu0 0.0
    %4863 = vmatpush1.msra.mxu0 0.0
    %4864 = vmatprep.subr.mxu0 0.0
    %4865 = vmatpush1.msra.mxu0 0.0
    %4866 = vmatprep.subr.mxu0 0.0
    %4867 = vmatpush1.msra.mxu0 0.0
    %4868 = vmatprep.subr.mxu0 0.0
    %4869 = vmatpush1.msra.mxu0 0.0
    %4870 = vmatprep.subr.mxu0 0.0
    %4871 = vmatpush1.msra.mxu0 0.0
    %4872 = vmatprep.subr.mxu0 0.0
    %4873 = vmatpush1.msra.mxu0 0.0
    %4874 = vmatprep.subr.mxu0 0.0
    %4875 = vmatpush1.msra.mxu0 0.0
    %4876 = vmatprep.subr.mxu0 0.0
    %4877 = vmatpush1.msra.mxu0 0.0
    %4878 = vmatprep.subr.mxu0 0.0
    %4879 = vmatpush1.msra.mxu0 0.0
    %4880 = vmatprep.subr.mxu0 0.0
    %4881 = vmatpush1.msra.mxu0 0.0
    %4882 = vmatprep.subr.mxu0 0.0
    %4883 = vmatpush1.msra.mxu0 0.0
    %4884 = vmatprep.subr.mxu0 0.0
    %4885 = vmatpush1.msra.mxu0 0.0
    %4886 = vmatprep.subr.mxu0 0.0
    %4887 = vmatpush1.msra.mxu0 0.0
    %4888 = vmatprep.subr.mxu0 0.0
    %4889 = vmatpush1.msra.mxu0 0.0
    %4890 = vmatprep.subr.mxu0 0.0
    %4891 = vmatpush1.msra.mxu0 0.0
    %4892 = vmatprep.subr.mxu0 0.0
    %4893 = vmatpush1.msra.mxu0 0.0
    %4894 = vmatprep.mubr.f32.mxu0 0.0
    %4895 = vmatmul.mubr.f32.gmra.mrb[0].mxu0 %v4593
    %v4896 = vpop.f32.mrb[0].mxu0
    %v4897 = vadd.f32 0.0, %v4896
    %v4898 = vpop.f32.mrb[0].mxu0
    %4899 = vdwg.mxu0
    %v4901 = vrot.slane %v4897, 4
    %v4903 = vadd.f32 %v3614, %v4901
    %v4904 = vsub.f32 0.0, %v4903
    %v4905 = vmul.f32 %v4904, 1.442695
    %v4906 = vpow.pop %v4905
    %v4907 = vadd.f32 %v4906, 1.0
    %v4908 = vrcp.pop %v4907
    %v4909 = vmul.f32 1.0, %v4908
    %v4911 = vrot.slane %v4588, 1
    %v4913 = vmul.f32 %v4754, %v4911
    %v4914 = vmul.f32 %v4674, %v4829
    %v4915 = vadd.f32 %v4913, %v4914
    %v4916 = vtanh.pop %v4915
    %v4917 = vmul.f32 %v4909, %v4916
    %v4919 = vrot.slane %v4917, 4
    %v4920 = vsel %vm671, %v4919, 0
    %4922 = vmatprep.subr.mxu0 0.0
    %4923 = vmatpush1.msra.mxu0 %v3301
    %4924 = vmatprep.subr.mxu0 0.0
    %4925 = vmatpush1.msra.mxu0 %v3302
    %4926 = vmatprep.subr.mxu0 0.0
    %4927 = vmatpush1.msra.mxu0 0.0
    %4928 = vmatprep.subr.mxu0 0.0
    %4929 = vmatpush1.msra.mxu0 0.0
    %4930 = vmatprep.subr.mxu0 0.0
    %4931 = vmatpush1.msra.mxu0 0.0
    %4932 = vmatprep.subr.mxu0 0.0
    %4933 = vmatpush1.msra.mxu0 0.0
    %4934 = vmatprep.subr.mxu0 0.0
    %4935 = vmatpush1.msra.mxu0 0.0
    %4936 = vmatprep.subr.mxu0 0.0
    %4937 = vmatpush1.msra.mxu0 0.0
    %4938 = vmatprep.subr.mxu0 0.0
    %4939 = vmatpush1.msra.mxu0 0.0
    %4940 = vmatprep.subr.mxu0 0.0
    %4941 = vmatpush1.msra.mxu0 0.0
    %4942 = vmatprep.subr.mxu0 0.0
    %4943 = vmatpush1.msra.mxu0 0.0
    %4944 = vmatprep.subr.mxu0 0.0
    %4945 = vmatpush1.msra.mxu0 0.0
    %4946 = vmatprep.subr.mxu0 0.0
    %4947 = vmatpush1.msra.mxu0 0.0
    %4948 = vmatprep.subr.mxu0 0.0
    %4949 = vmatpush1.msra.mxu0 0.0
    %4950 = vmatprep.subr.mxu0 0.0
    %4951 = vmatpush1.msra.mxu0 0.0
    %4952 = vmatprep.subr.mxu0 0.0
    %4953 = vmatpush1.msra.mxu0 0.0
    %4954 = vmatprep.subr.mxu0 0.0
    %4955 = vmatpush1.msra.mxu0 0.0
    %4956 = vmatprep.subr.mxu0 0.0
    %4957 = vmatpush1.msra.mxu0 0.0
    %4958 = vmatprep.subr.mxu0 0.0
    %4959 = vmatpush1.msra.mxu0 0.0
    %4960 = vmatprep.subr.mxu0 0.0
    %4961 = vmatpush1.msra.mxu0 0.0
    %4962 = vmatprep.subr.mxu0 0.0
    %4963 = vmatpush1.msra.mxu0 0.0
    %4964 = vmatprep.subr.mxu0 0.0
    %4965 = vmatpush1.msra.mxu0 0.0
    %4966 = vmatprep.subr.mxu0 0.0
    %4967 = vmatpush1.msra.mxu0 0.0
    %4968 = vmatprep.subr.mxu0 0.0
    %4969 = vmatpush1.msra.mxu0 0.0
    %4970 = vmatprep.subr.mxu0 0.0
    %4971 = vmatpush1.msra.mxu0 0.0
    %4972 = vmatprep.subr.mxu0 0.0
    %4973 = vmatpush1.msra.mxu0 0.0
    %4974 = vmatprep.subr.mxu0 0.0
    %4975 = vmatpush1.msra.mxu0 0.0
    %4976 = vmatprep.subr.mxu0 0.0
    %4977 = vmatpush1.msra.mxu0 0.0
    %4978 = vmatprep.subr.mxu0 0.0
    %4979 = vmatpush1.msra.mxu0 0.0
    %4980 = vmatprep.subr.mxu0 0.0
    %4981 = vmatpush1.msra.mxu0 0.0
    %4982 = vmatprep.subr.mxu0 0.0
    %4983 = vmatpush1.msra.mxu0 0.0
    %4984 = vmatprep.subr.mxu0 0.0
    %4985 = vmatpush1.msra.mxu0 0.0
    %4986 = vmatprep.mubr.f32.mxu0 0.0
    %4987 = vmatmul.mubr.f32.gmra.mrb[0].mxu0 %v4920
    %v4988 = vpop.f32.mrb[0].mxu0
    %v4989 = vadd.f32 0.0, %v4988
    %v4990 = vpop.f32.mrb[0].mxu0
    %4991 = vdwg.mxu0
    %v4993 = vrot.slane %v4989, 5
    %v4995 = vadd.f32 %v3386, %v4993
    %v4996 = vsub.f32 0.0, %v4995
    %v4997 = vmul.f32 %v4996, 1.442695
    %v4998 = vpow.pop %v4997
    %v4999 = vadd.f32 %v4998, 1.0
    %v5000 = vrcp.pop %v4999
    %v5001 = vmul.f32 1.0, %v5000
    %5002 = vmatprep.subr.mxu0 0.0
    %5003 = vmatpush1.msra.mxu0 %v3303
    %5004 = vmatprep.subr.mxu0 0.0
    %5005 = vmatpush1.msra.mxu0 %v3304
    %5006 = vmatprep.subr.mxu0 0.0
    %5007 = vmatpush1.msra.mxu0 0.0
    %5008 = vmatprep.subr.mxu0 0.0
    %5009 = vmatpush1.msra.mxu0 0.0
    %5010 = vmatprep.subr.mxu0 0.0
    %5011 = vmatpush1.msra.mxu0 0.0
    %5012 = vmatprep.subr.mxu0 0.0
    %5013 = vmatpush1.msra.mxu0 0.0
    %5014 = vmatprep.subr.mxu0 0.0
    %5015 = vmatpush1.msra.mxu0 0.0
    %5016 = vmatprep.subr.mxu0 0.0
    %5017 = vmatpush1.msra.mxu0 0.0
    %5018 = vmatprep.subr.mxu0 0.0
    %5019 = vmatpush1.msra.mxu0 0.0
    %5020 = vmatprep.subr.mxu0 0.0
    %5021 = vmatpush1.msra.mxu0 0.0
    %5022 = vmatprep.subr.mxu0 0.0
    %5023 = vmatpush1.msra.mxu0 0.0
    %5024 = vmatprep.subr.mxu0 0.0
    %5025 = vmatpush1.msra.mxu0 0.0
    %5026 = vmatprep.subr.mxu0 0.0
    %5027 = vmatpush1.msra.mxu0 0.0
    %5028 = vmatprep.subr.mxu0 0.0
    %5029 = vmatpush1.msra.mxu0 0.0
    %5030 = vmatprep.subr.mxu0 0.0
    %5031 = vmatpush1.msra.mxu0 0.0
    %5032 = vmatprep.subr.mxu0 0.0
    %5033 = vmatpush1.msra.mxu0 0.0
    %5034 = vmatprep.subr.mxu0 0.0
    %5035 = vmatpush1.msra.mxu0 0.0
    %5036 = vmatprep.subr.mxu0 0.0
    %5037 = vmatpush1.msra.mxu0 0.0
    %5038 = vmatprep.subr.mxu0 0.0
    %5039 = vmatpush1.msra.mxu0 0.0
    %5040 = vmatprep.subr.mxu0 0.0
    %5041 = vmatpush1.msra.mxu0 0.0
    %5042 = vmatprep.subr.mxu0 0.0
    %5043 = vmatpush1.msra.mxu0 0.0
    %5044 = vmatprep.subr.mxu0 0.0
    %5045 = vmatpush1.msra.mxu0 0.0
    %5046 = vmatprep.subr.mxu0 0.0
    %5047 = vmatpush1.msra.mxu0 0.0
    %5048 = vmatprep.subr.mxu0 0.0
    %5049 = vmatpush1.msra.mxu0 0.0
    %5050 = vmatprep.subr.mxu0 0.0
    %5051 = vmatpush1.msra.mxu0 0.0
    %5052 = vmatprep.subr.mxu0 0.0
    %5053 = vmatpush1.msra.mxu0 0.0
    %5054 = vmatprep.subr.mxu0 0.0
    %5055 = vmatpush1.msra.mxu0 0.0
    %5056 = vmatprep.subr.mxu0 0.0
    %5057 = vmatpush1.msra.mxu0 0.0
    %5058 = vmatprep.subr.mxu0 0.0
    %5059 = vmatpush1.msra.mxu0 0.0
    %5060 = vmatprep.subr.mxu0 0.0
    %5061 = vmatpush1.msra.mxu0 0.0
    %5062 = vmatprep.subr.mxu0 0.0
    %5063 = vmatpush1.msra.mxu0 0.0
    %5064 = vmatprep.subr.mxu0 0.0
    %5065 = vmatpush1.msra.mxu0 0.0
    %5066 = vmatprep.mubr.f32.mxu0 0.0
    %5067 = vmatmul.mubr.f32.gmra.mrb[0].mxu0 %v4920
    %v5068 = vpop.f32.mrb[0].mxu0
    %v5069 = vadd.f32 0.0, %v5068
    %v5070 = vpop.f32.mrb[0].mxu0
    %5071 = vdwg.mxu0
    %v5073 = vrot.slane %v5069, 5
    %v5075 = vadd.f32 %v3462, %v5073
    %v5076 = vsub.f32 0.0, %v5075
    %v5077 = vmul.f32 %v5076, 1.442695
    %v5078 = vpow.pop %v5077
    %v5079 = vadd.f32 %v5078, 1.0
    %v5080 = vrcp.pop %v5079
    %v5081 = vmul.f32 1.0, %v5080
    %5082 = vmatprep.subr.mxu0 0.0
    %5083 = vmatpush1.msra.mxu0 %v3305
    %5084 = vmatprep.subr.mxu0 0.0
    %5085 = vmatpush1.msra.mxu0 %v3306
    %5086 = vmatprep.subr.mxu0 0.0
    %5087 = vmatpush1.msra.mxu0 0.0
    %5088 = vmatprep.subr.mxu0 0.0
    %5089 = vmatpush1.msra.mxu0 0.0
    %5090 = vmatprep.subr.mxu0 0.0
    %5091 = vmatpush1.msra.mxu0 0.0
    %5092 = vmatprep.subr.mxu0 0.0
    %5093 = vmatpush1.msra.mxu0 0.0
    %5094 = vmatprep.subr.mxu0 0.0
    %5095 = vmatpush1.msra.mxu0 0.0
    %5096 = vmatprep.subr.mxu0 0.0
    %5097 = vmatpush1.msra.mxu0 0.0
    %5098 = vmatprep.subr.mxu0 0.0
    %5099 = vmatpush1.msra.mxu0 0.0
    %5100 = vmatprep.subr.mxu0 0.0
    %5101 = vmatpush1.msra.mxu0 0.0
    %5102 = vmatprep.subr.mxu0 0.0
    %5103 = vmatpush1.msra.mxu0 0.0
    %5104 = vmatprep.subr.mxu0 0.0
    %5105 = vmatpush1.msra.mxu0 0.0
    %5106 = vmatprep.subr.mxu0 0.0
    %5107 = vmatpush1.msra.mxu0 0.0
    %5108 = vmatprep.subr.mxu0 0.0
    %5109 = vmatpush1.msra.mxu0 0.0
    %5110 = vmatprep.subr.mxu0 0.0
    %5111 = vmatpush1.msra.mxu0 0.0
    %5112 = vmatprep.subr.mxu0 0.0
    %5113 = vmatpush1.msra.mxu0 0.0
    %5114 = vmatprep.subr.mxu0 0.0
    %5115 = vmatpush1.msra.mxu0 0.0
    %5116 = vmatprep.subr.mxu0 0.0
    %5117 = vmatpush1.msra.mxu0 0.0
    %5118 = vmatprep.subr.mxu0 0.0
    %5119 = vmatpush1.msra.mxu0 0.0
    %5120 = vmatprep.subr.mxu0 0.0
    %5121 = vmatpush1.msra.mxu0 0.0
    %5122 = vmatprep.subr.mxu0 0.0
    %5123 = vmatpush1.msra.mxu0 0.0
    %5124 = vmatprep.subr.mxu0 0.0
    %5125 = vmatpush1.msra.mxu0 0.0
    %5126 = vmatprep.subr.mxu0 0.0
    %5127 = vmatpush1.msra.mxu0 0.0
    %5128 = vmatprep.subr.mxu0 0.0
    %5129 = vmatpush1.msra.mxu0 0.0
    %5130 = vmatprep.subr.mxu0 0.0
    %5131 = vmatpush1.msra.mxu0 0.0
    %5132 = vmatprep.subr.mxu0 0.0
    %5133 = vmatpush1.msra.mxu0 0.0
    %5134 = vmatprep.subr.mxu0 0.0
    %5135 = vmatpush1.msra.mxu0 0.0
    %5136 = vmatprep.subr.mxu0 0.0
    %5137 = vmatpush1.msra.mxu0 0.0
    %5138 = vmatprep.subr.mxu0 0.0
    %5139 = vmatpush1.msra.mxu0 0.0
    %5140 = vmatprep.subr.mxu0 0.0
    %5141 = vmatpush1.msra.mxu0 0.0
    %5142 = vmatprep.subr.mxu0 0.0
    %5143 = vmatpush1.msra.mxu0 0.0
    %5144 = vmatprep.subr.mxu0 0.0
    %5145 = vmatpush1.msra.mxu0 0.0
    %5146 = vmatprep.mubr.f32.mxu0 0.0
    %5147 = vmatmul.mubr.f32.gmra.mrb[0].mxu0 %v4920
    %v5148 = vpop.f32.mrb[0].mxu0
    %v5149 = vadd.f32 0.0, %v5148
    %v5150 = vpop.f32.mrb[0].mxu0
    %5151 = vdwg.mxu0
    %v5153 = vrot.slane %v5149, 5
    %v5155 = vadd.f32 %v3538, %v5153
    %v5156 = vtanh.pop %v5155
    %5157 = vmatprep.subr.mxu0 0.0
    %5158 = vmatpush1.msra.mxu0 %v3307
    %5159 = vmatprep.subr.mxu0 0.0
    %5160 = vmatpush1.msra.mxu0 %v3308
    %5161 = vmatprep.subr.mxu0 0.0
    %5162 = vmatpush1.msra.mxu0 0.0
    %5163 = vmatprep.subr.mxu0 0.0
    %5164 = vmatpush1.msra.mxu0 0.0
    %5165 = vmatprep.subr.mxu0 0.0
    %5166 = vmatpush1.msra.mxu0 0.0
    %5167 = vmatprep.subr.mxu0 0.0
    %5168 = vmatpush1.msra.mxu0 0.0
    %5169 = vmatprep.subr.mxu0 0.0
    %5170 = vmatpush1.msra.mxu0 0.0
    %5171 = vmatprep.subr.mxu0 0.0
    %5172 = vmatpush1.msra.mxu0 0.0
    %5173 = vmatprep.subr.mxu0 0.0
    %5174 = vmatpush1.msra.mxu0 0.0
    %5175 = vmatprep.subr.mxu0 0.0
    %5176 = vmatpush1.msra.mxu0 0.0
    %5177 = vmatprep.subr.mxu0 0.0
    %5178 = vmatpush1.msra.mxu0 0.0
    %5179 = vmatprep.subr.mxu0 0.0
    %5180 = vmatpush1.msra.mxu0 0.0
    %5181 = vmatprep.subr.mxu0 0.0
    %5182 = vmatpush1.msra.mxu0 0.0
    %5183 = vmatprep.subr.mxu0 0.0
    %5184 = vmatpush1.msra.mxu0 0.0
    %5185 = vmatprep.subr.mxu0 0.0
    %5186 = vmatpush1.msra.mxu0 0.0
    %5187 = vmatprep.subr.mxu0 0.0
    %5188 = vmatpush1.msra.mxu0 0.0
    %5189 = vmatprep.subr.mxu0 0.0
    %5190 = vmatpush1.msra.mxu0 0.0
    %5191 = vmatprep.subr.mxu0 0.0
    %5192 = vmatpush1.msra.mxu0 0.0
    %5193 = vmatprep.subr.mxu0 0.0
    %5194 = vmatpush1.msra.mxu0 0.0
    %5195 = vmatprep.subr.mxu0 0.0
    %5196 = vmatpush1.msra.mxu0 0.0
    %5197 = vmatprep.subr.mxu0 0.0
    %5198 = vmatpush1.msra.mxu0 0.0
    %5199 = vmatprep.subr.mxu0 0.0
    %5200 = vmatpush1.msra.mxu0 0.0
    %5201 = vmatprep.subr.mxu0 0.0
    %5202 = vmatpush1.msra.mxu0 0.0
    %5203 = vmatprep.subr.mxu0 0.0
    %5204 = vmatpush1.msra.mxu0 0.0
    %5205 = vmatprep.subr.mxu0 0.0
    %5206 = vmatpush1.msra.mxu0 0.0
    %5207 = vmatprep.subr.mxu0 0.0
    %5208 = vmatpush1.msra.mxu0 0.0
    %5209 = vmatprep.subr.mxu0 0.0
    %5210 = vmatpush1.msra.mxu0 0.0
    %5211 = vmatprep.subr.mxu0 0.0
    %5212 = vmatpush1.msra.mxu0 0.0
    %5213 = vmatprep.subr.mxu0 0.0
    %5214 = vmatpush1.msra.mxu0 0.0
    %5215 = vmatprep.subr.mxu0 0.0
    %5216 = vmatpush1.msra.mxu0 0.0
    %5217 = vmatprep.subr.mxu0 0.0
    %5218 = vmatpush1.msra.mxu0 0.0
    %5219 = vmatprep.subr.mxu0 0.0
    %5220 = vmatpush1.msra.mxu0 0.0
    %5221 = vmatprep.mubr.f32.mxu0 0.0
    %5222 = vmatmul.mubr.f32.gmra.mrb[0].mxu0 %v4920
    %v5223 = vpop.f32.mrb[0].mxu0
    %v5224 = vadd.f32 0.0, %v5223
    %v5225 = vpop.f32.mrb[0].mxu0
    %5226 = vdwg.mxu0
    %v5228 = vrot.slane %v5224, 5
    %v5230 = vadd.f32 %v3614, %v5228
    %v5231 = vsub.f32 0.0, %v5230
    %v5232 = vmul.f32 %v5231, 1.442695
    %v5233 = vpow.pop %v5232
    %v5234 = vadd.f32 %v5233, 1.0
    %v5235 = vrcp.pop %v5234
    %v5236 = vmul.f32 1.0, %v5235
    %v5238 = vrot.slane %v4915, 1
    %v5240 = vmul.f32 %v5081, %v5238
    %v5241 = vmul.f32 %v5001, %v5156
    %v5242 = vadd.f32 %v5240, %v5241
    %v5243 = vtanh.pop %v5242
    %v5244 = vmul.f32 %v5236, %v5243
    %v5246 = vrot.slane %v5244, 3
    %v5247 = vsel %vm671, %v5246, 0
    %5249 = vmatprep.subr.mxu0 0.0
    %5250 = vmatpush1.msra.mxu0 %v3301
    %5251 = vmatprep.subr.mxu0 0.0
    %5252 = vmatpush1.msra.mxu0 %v3302
    %5253 = vmatprep.subr.mxu0 0.0
    %5254 = vmatpush1.msra.mxu0 0.0
    %5255 = vmatprep.subr.mxu0 0.0
    %5256 = vmatpush1.msra.mxu0 0.0
    %5257 = vmatprep.subr.mxu0 0.0
    %5258 = vmatpush1.msra.mxu0 0.0
    %5259 = vmatprep.subr.mxu0 0.0
    %5260 = vmatpush1.msra.mxu0 0.0
    %5261 = vmatprep.subr.mxu0 0.0
    %5262 = vmatpush1.msra.mxu0 0.0
    %5263 = vmatprep.subr.mxu0 0.0
    %5264 = vmatpush1.msra.mxu0 0.0
    %5265 = vmatprep.subr.mxu0 0.0
    %5266 = vmatpush1.msra.mxu0 0.0
    %5267 = vmatprep.subr.mxu0 0.0
    %5268 = vmatpush1.msra.mxu0 0.0
    %5269 = vmatprep.subr.mxu0 0.0
    %5270 = vmatpush1.msra.mxu0 0.0
    %5271 = vmatprep.subr.mxu0 0.0
    %5272 = vmatpush1.msra.mxu0 0.0
    %5273 = vmatprep.subr.mxu0 0.0
    %5274 = vmatpush1.msra.mxu0 0.0
    %5275 = vmatprep.subr.mxu0 0.0
    %5276 = vmatpush1.msra.mxu0 0.0
    %5277 = vmatprep.subr.mxu0 0.0
    %5278 = vmatpush1.msra.mxu0 0.0
    %5279 = vmatprep.subr.mxu0 0.0
    %5280 = vmatpush1.msra.mxu0 0.0
    %5281 = vmatprep.subr.mxu0 0.0
    %5282 = vmatpush1.msra.mxu0 0.0
    %5283 = vmatprep.subr.mxu0 0.0
    %5284 = vmatpush1.msra.mxu0 0.0
    %5285 = vmatprep.subr.mxu0 0.0
    %5286 = vmatpush1.msra.mxu0 0.0
    %5287 = vmatprep.subr.mxu0 0.0
    %5288 = vmatpush1.msra.mxu0 0.0
    %5289 = vmatprep.subr.mxu0 0.0
    %5290 = vmatpush1.msra.mxu0 0.0
    %5291 = vmatprep.subr.mxu0 0.0
    %5292 = vmatpush1.msra.mxu0 0.0
    %5293 = vmatprep.subr.mxu0 0.0
    %5294 = vmatpush1.msra.mxu0 0.0
    %5295 = vmatprep.subr.mxu0 0.0
    %5296 = vmatpush1.msra.mxu0 0.0
    %5297 = vmatprep.subr.mxu0 0.0
    %5298 = vmatpush1.msra.mxu0 0.0
    %5299 = vmatprep.subr.mxu0 0.0
    %5300 = vmatpush1.msra.mxu0 0.0
    %5301 = vmatprep.subr.mxu0 0.0
    %5302 = vmatpush1.msra.mxu0 0.0
    %5303 = vmatprep.subr.mxu0 0.0
    %5304 = vmatpush1.msra.mxu0 0.0
    %5305 = vmatprep.subr.mxu0 0.0
    %5306 = vmatpush1.msra.mxu0 0.0
    %5307 = vmatprep.subr.mxu0 0.0
    %5308 = vmatpush1.msra.mxu0 0.0
    %5309 = vmatprep.subr.mxu0 0.0
    %5310 = vmatpush1.msra.mxu0 0.0
    %5311 = vmatprep.subr.mxu0 0.0
    %5312 = vmatpush1.msra.mxu0 0.0
    %5313 = vmatprep.mubr.f32.mxu0 0.0
    %5314 = vmatmul.mubr.f32.gmra.mrb[0].mxu0 %v5247
    %v5315 = vpop.f32.mrb[0].mxu0
    %v5316 = vadd.f32 0.0, %v5315
    %v5317 = vpop.f32.mrb[0].mxu0
    %5318 = vdwg.mxu0
    %v5320 = vrot.slane %v5316, 6
    %v5322 = vadd.f32 %v3386, %v5320
    %v5323 = vsub.f32 0.0, %v5322
    %v5324 = vmul.f32 %v5323, 1.442695
    %v5325 = vpow.pop %v5324
    %v5326 = vadd.f32 %v5325, 1.0
    %v5327 = vrcp.pop %v5326
    %v5328 = vmul.f32 1.0, %v5327
    %5329 = vmatprep.subr.mxu0 0.0
    %5330 = vmatpush1.msra.mxu0 %v3303
    %5331 = vmatprep.subr.mxu0 0.0
    %5332 = vmatpush1.msra.mxu0 %v3304
    %5333 = vmatprep.subr.mxu0 0.0
    %5334 = vmatpush1.msra.mxu0 0.0
    %5335 = vmatprep.subr.mxu0 0.0
    %5336 = vmatpush1.msra.mxu0 0.0
    %5337 = vmatprep.subr.mxu0 0.0
    %5338 = vmatpush1.msra.mxu0 0.0
    %5339 = vmatprep.subr.mxu0 0.0
    %5340 = vmatpush1.msra.mxu0 0.0
    %5341 = vmatprep.subr.mxu0 0.0
    %5342 = vmatpush1.msra.mxu0 0.0
    %5343 = vmatprep.subr.mxu0 0.0
    %5344 = vmatpush1.msra.mxu0 0.0
    %5345 = vmatprep.subr.mxu0 0.0
    %5346 = vmatpush1.msra.mxu0 0.0
    %5347 = vmatprep.subr.mxu0 0.0
    %5348 = vmatpush1.msra.mxu0 0.0
    %5349 = vmatprep.subr.mxu0 0.0
    %5350 = vmatpush1.msra.mxu0 0.0
    %5351 = vmatprep.subr.mxu0 0.0
    %5352 = vmatpush1.msra.mxu0 0.0
    %5353 = vmatprep.subr.mxu0 0.0
    %5354 = vmatpush1.msra.mxu0 0.0
    %5355 = vmatprep.subr.mxu0 0.0
    %5356 = vmatpush1.msra.mxu0 0.0
    %5357 = vmatprep.subr.mxu0 0.0
    %5358 = vmatpush1.msra.mxu0 0.0
    %5359 = vmatprep.subr.mxu0 0.0
    %5360 = vmatpush1.msra.mxu0 0.0
    %5361 = vmatprep.subr.mxu0 0.0
    %5362 = vmatpush1.msra.mxu0 0.0
    %5363 = vmatprep.subr.mxu0 0.0
    %5364 = vmatpush1.msra.mxu0 0.0
    %5365 = vmatprep.subr.mxu0 0.0
    %5366 = vmatpush1.msra.mxu0 0.0
    %5367 = vmatprep.subr.mxu0 0.0
    %5368 = vmatpush1.msra.mxu0 0.0
    %5369 = vmatprep.subr.mxu0 0.0
    %5370 = vmatpush1.msra.mxu0 0.0
    %5371 = vmatprep.subr.mxu0 0.0
    %5372 = vmatpush1.msra.mxu0 0.0
    %5373 = vmatprep.subr.mxu0 0.0
    %5374 = vmatpush1.msra.mxu0 0.0
    %5375 = vmatprep.subr.mxu0 0.0
    %5376 = vmatpush1.msra.mxu0 0.0
    %5377 = vmatprep.subr.mxu0 0.0
    %5378 = vmatpush1.msra.mxu0 0.0
    %5379 = vmatprep.subr.mxu0 0.0
    %5380 = vmatpush1.msra.mxu0 0.0
    %5381 = vmatprep.subr.mxu0 0.0
    %5382 = vmatpush1.msra.mxu0 0.0
    %5383 = vmatprep.subr.mxu0 0.0
    %5384 = vmatpush1.msra.mxu0 0.0
    %5385 = vmatprep.subr.mxu0 0.0
    %5386 = vmatpush1.msra.mxu0 0.0
    %5387 = vmatprep.subr.mxu0 0.0
    %5388 = vmatpush1.msra.mxu0 0.0
    %5389 = vmatprep.subr.mxu0 0.0
    %5390 = vmatpush1.msra.mxu0 0.0
    %5391 = vmatprep.subr.mxu0 0.0
    %5392 = vmatpush1.msra.mxu0 0.0
    %5393 = vmatprep.mubr.f32.mxu0 0.0
    %5394 = vmatmul.mubr.f32.gmra.mrb[0].mxu0 %v5247
    %v5395 = vpop.f32.mrb[0].mxu0
    %v5396 = vadd.f32 0.0, %v5395
    %v5397 = vpop.f32.mrb[0].mxu0
    %5398 = vdwg.mxu0
    %v5400 = vrot.slane %v5396, 6
    %v5402 = vadd.f32 %v3462, %v5400
    %v5403 = vsub.f32 0.0, %v5402
    %v5404 = vmul.f32 %v5403, 1.442695
    %v5405 = vpow.pop %v5404
    %v5406 = vadd.f32 %v5405, 1.0
    %v5407 = vrcp.pop %v5406
    %v5408 = vmul.f32 1.0, %v5407
    %5409 = vmatprep.subr.mxu0 0.0
    %5410 = vmatpush1.msra.mxu0 %v3305
    %5411 = vmatprep.subr.mxu0 0.0
    %5412 = vmatpush1.msra.mxu0 %v3306
    %5413 = vmatprep.subr.mxu0 0.0
    %5414 = vmatpush1.msra.mxu0 0.0
    %5415 = vmatprep.subr.mxu0 0.0
    %5416 = vmatpush1.msra.mxu0 0.0
    %5417 = vmatprep.subr.mxu0 0.0
    %5418 = vmatpush1.msra.mxu0 0.0
    %5419 = vmatprep.subr.mxu0 0.0
    %5420 = vmatpush1.msra.mxu0 0.0
    %5421 = vmatprep.subr.mxu0 0.0
    %5422 = vmatpush1.msra.mxu0 0.0
    %5423 = vmatprep.subr.mxu0 0.0
    %5424 = vmatpush1.msra.mxu0 0.0
    %5425 = vmatprep.subr.mxu0 0.0
    %5426 = vmatpush1.msra.mxu0 0.0
    %5427 = vmatprep.subr.mxu0 0.0
    %5428 = vmatpush1.msra.mxu0 0.0
    %5429 = vmatprep.subr.mxu0 0.0
    %5430 = vmatpush1.msra.mxu0 0.0
    %5431 = vmatprep.subr.mxu0 0.0
    %5432 = vmatpush1.msra.mxu0 0.0
    %5433 = vmatprep.subr.mxu0 0.0
    %5434 = vmatpush1.msra.mxu0 0.0
    %5435 = vmatprep.subr.mxu0 0.0
    %5436 = vmatpush1.msra.mxu0 0.0
    %5437 = vmatprep.subr.mxu0 0.0
    %5438 = vmatpush1.msra.mxu0 0.0
    %5439 = vmatprep.subr.mxu0 0.0
    %5440 = vmatpush1.msra.mxu0 0.0
    %5441 = vmatprep.subr.mxu0 0.0
    %5442 = vmatpush1.msra.mxu0 0.0
    %5443 = vmatprep.subr.mxu0 0.0
    %5444 = vmatpush1.msra.mxu0 0.0
    %5445 = vmatprep.subr.mxu0 0.0
    %5446 = vmatpush1.msra.mxu0 0.0
    %5447 = vmatprep.subr.mxu0 0.0
    %5448 = vmatpush1.msra.mxu0 0.0
    %5449 = vmatprep.subr.mxu0 0.0
    %5450 = vmatpush1.msra.mxu0 0.0
    %5451 = vmatprep.subr.mxu0 0.0
    %5452 = vmatpush1.msra.mxu0 0.0
    %5453 = vmatprep.subr.mxu0 0.0
    %5454 = vmatpush1.msra.mxu0 0.0
    %5455 = vmatprep.subr.mxu0 0.0
    %5456 = vmatpush1.msra.mxu0 0.0
    %5457 = vmatprep.subr.mxu0 0.0
    %5458 = vmatpush1.msra.mxu0 0.0
    %5459 = vmatprep.subr.mxu0 0.0
    %5460 = vmatpush1.msra.mxu0 0.0
    %5461 = vmatprep.subr.mxu0 0.0
    %5462 = vmatpush1.msra.mxu0 0.0
    %5463 = vmatprep.subr.mxu0 0.0
    %5464 = vmatpush1.msra.mxu0 0.0
    %5465 = vmatprep.subr.mxu0 0.0
    %5466 = vmatpush1.msra.mxu0 0.0
    %5467 = vmatprep.subr.mxu0 0.0
    %5468 = vmatpush1.msra.mxu0 0.0
    %5469 = vmatprep.subr.mxu0 0.0
    %5470 = vmatpush1.msra.mxu0 0.0
    %5471 = vmatprep.subr.mxu0 0.0
    %5472 = vmatpush1.msra.mxu0 0.0
    %5473 = vmatprep.mubr.f32.mxu0 0.0
    %5474 = vmatmul.mubr.f32.gmra.mrb[0].mxu0 %v5247
    %v5475 = vpop.f32.mrb[0].mxu0
    %v5476 = vadd.f32 0.0, %v5475
    %v5477 = vpop.f32.mrb[0].mxu0
    %5478 = vdwg.mxu0
    %v5480 = vrot.slane %v5476, 6
    %v5482 = vadd.f32 %v3538, %v5480
    %v5483 = vtanh.pop %v5482
    %5484 = vmatprep.subr.mxu0 0.0
    %5485 = vmatpush1.msra.mxu0 %v3307
    %5486 = vmatprep.subr.mxu0 0.0
    %5487 = vmatpush1.msra.mxu0 %v3308
    %5488 = vmatprep.subr.mxu0 0.0
    %5489 = vmatpush1.msra.mxu0 0.0
    %5490 = vmatprep.subr.mxu0 0.0
    %5491 = vmatpush1.msra.mxu0 0.0
    %5492 = vmatprep.subr.mxu0 0.0
    %5493 = vmatpush1.msra.mxu0 0.0
    %5494 = vmatprep.subr.mxu0 0.0
    %5495 = vmatpush1.msra.mxu0 0.0
    %5496 = vmatprep.subr.mxu0 0.0
    %5497 = vmatpush1.msra.mxu0 0.0
    %5498 = vmatprep.subr.mxu0 0.0
    %5499 = vmatpush1.msra.mxu0 0.0
    %5500 = vmatprep.subr.mxu0 0.0
    %5501 = vmatpush1.msra.mxu0 0.0
    %5502 = vmatprep.subr.mxu0 0.0
    %5503 = vmatpush1.msra.mxu0 0.0
    %5504 = vmatprep.subr.mxu0 0.0
    %5505 = vmatpush1.msra.mxu0 0.0
    %5506 = vmatprep.subr.mxu0 0.0
    %5507 = vmatpush1.msra.mxu0 0.0
    %5508 = vmatprep.subr.mxu0 0.0
    %5509 = vmatpush1.msra.mxu0 0.0
    %5510 = vmatprep.subr.mxu0 0.0
    %5511 = vmatpush1.msra.mxu0 0.0
    %5512 = vmatprep.subr.mxu0 0.0
    %5513 = vmatpush1.msra.mxu0 0.0
    %5514 = vmatprep.subr.mxu0 0.0
    %5515 = vmatpush1.msra.mxu0 0.0
    %5516 = vmatprep.subr.mxu0 0.0
    %5517 = vmatpush1.msra.mxu0 0.0
    %5518 = vmatprep.subr.mxu0 0.0
    %5519 = vmatpush1.msra.mxu0 0.0
    %5520 = vmatprep.subr.mxu0 0.0
    %5521 = vmatpush1.msra.mxu0 0.0
    %5522 = vmatprep.subr.mxu0 0.0
    %5523 = vmatpush1.msra.mxu0 0.0
    %5524 = vmatprep.subr.mxu0 0.0
    %5525 = vmatpush1.msra.mxu0 0.0
    %5526 = vmatprep.subr.mxu0 0.0
    %5527 = vmatpush1.msra.mxu0 0.0
    %5528 = vmatprep.subr.mxu0 0.0
    %5529 = vmatpush1.msra.mxu0 0.0
    %5530 = vmatprep.subr.mxu0 0.0
    %5531 = vmatpush1.msra.mxu0 0.0
    %5532 = vmatprep.subr.mxu0 0.0
    %5533 = vmatpush1.msra.mxu0 0.0
    %5534 = vmatprep.subr.mxu0 0.0
    %5535 = vmatpush1.msra.mxu0 0.0
    %5536 = vmatprep.subr.mxu0 0.0
    %5537 = vmatpush1.msra.mxu0 0.0
    %5538 = vmatprep.subr.mxu0 0.0
    %5539 = vmatpush1.msra.mxu0 0.0
    %5540 = vmatprep.subr.mxu0 0.0
    %5541 = vmatpush1.msra.mxu0 0.0
    %5542 = vmatprep.subr.mxu0 0.0
    %5543 = vmatpush1.msra.mxu0 0.0
    %5544 = vmatprep.subr.mxu0 0.0
    %5545 = vmatpush1.msra.mxu0 0.0
    %5546 = vmatprep.subr.mxu0 0.0
    %5547 = vmatpush1.msra.mxu0 0.0
    %5548 = vmatprep.mubr.f32.mxu0 0.0
    %5549 = vmatmul.mubr.f32.gmra.mrb[0].mxu0 %v5247
    %v5550 = vpop.f32.mrb[0].mxu0
    %v5551 = vadd.f32 0.0, %v5550
    %v5552 = vpop.f32.mrb[0].mxu0
    %5553 = vdwg.mxu0
    %v5555 = vrot.slane %v5551, 6
    %v5557 = vadd.f32 %v3614, %v5555
    %v5558 = vsub.f32 0.0, %v5557
    %v5559 = vmul.f32 %v5558, 1.442695
    %v5560 = vpow.pop %v5559
    %v5561 = vadd.f32 %v5560, 1.0
    %v5562 = vrcp.pop %v5561
    %v5563 = vmul.f32 1.0, %v5562
    %v5565 = vrot.slane %v5242, 1
    %v5567 = vmul.f32 %v5408, %v5565
    %v5568 = vmul.f32 %v5328, %v5483
    %v5569 = vadd.f32 %v5567, %v5568
    %v5570 = vtanh.pop %v5569
    %v5571 = vmul.f32 %v5563, %v5570
    %v5573 = vrot.slane %v5571, 2
    %v5574 = vsel %vm671, %v5573, 0
    %5576 = vmatprep.subr.mxu0 0.0
    %5577 = vmatpush1.msra.mxu0 %v3301
    %5578 = vmatprep.subr.mxu0 0.0
    %5579 = vmatpush1.msra.mxu0 %v3302
    %5580 = vmatprep.subr.mxu0 0.0
    %5581 = vmatpush1.msra.mxu0 0.0
    %5582 = vmatprep.subr.mxu0 0.0
    %5583 = vmatpush1.msra.mxu0 0.0
    %5584 = vmatprep.subr.mxu0 0.0
    %5585 = vmatpush1.msra.mxu0 0.0
    %5586 = vmatprep.subr.mxu0 0.0
    %5587 = vmatpush1.msra.mxu0 0.0
    %5588 = vmatprep.subr.mxu0 0.0
    %5589 = vmatpush1.msra.mxu0 0.0
    %5590 = vmatprep.subr.mxu0 0.0
    %5591 = vmatpush1.msra.mxu0 0.0
    %5592 = vmatprep.subr.mxu0 0.0
    %5593 = vmatpush1.msra.mxu0 0.0
    %5594 = vmatprep.subr.mxu0 0.0
    %5595 = vmatpush1.msra.mxu0 0.0
    %5596 = vmatprep.subr.mxu0 0.0
    %5597 = vmatpush1.msra.mxu0 0.0
    %5598 = vmatprep.subr.mxu0 0.0
    %5599 = vmatpush1.msra.mxu0 0.0
    %5600 = vmatprep.subr.mxu0 0.0
    %5601 = vmatpush1.msra.mxu0 0.0
    %5602 = vmatprep.subr.mxu0 0.0
    %5603 = vmatpush1.msra.mxu0 0.0
    %5604 = vmatprep.subr.mxu0 0.0
    %5605 = vmatpush1.msra.mxu0 0.0
    %5606 = vmatprep.subr.mxu0 0.0
    %5607 = vmatpush1.msra.mxu0 0.0
    %5608 = vmatprep.subr.mxu0 0.0
    %5609 = vmatpush1.msra.mxu0 0.0
    %5610 = vmatprep.subr.mxu0 0.0
    %5611 = vmatpush1.msra.mxu0 0.0
    %5612 = vmatprep.subr.mxu0 0.0
    %5613 = vmatpush1.msra.mxu0 0.0
    %5614 = vmatprep.subr.mxu0 0.0
    %5615 = vmatpush1.msra.mxu0 0.0
    %5616 = vmatprep.subr.mxu0 0.0
    %5617 = vmatpush1.msra.mxu0 0.0
    %5618 = vmatprep.subr.mxu0 0.0
    %5619 = vmatpush1.msra.mxu0 0.0
    %5620 = vmatprep.subr.mxu0 0.0
    %5621 = vmatpush1.msra.mxu0 0.0
    %5622 = vmatprep.subr.mxu0 0.0
    %5623 = vmatpush1.msra.mxu0 0.0
    %5624 = vmatprep.subr.mxu0 0.0
    %5625 = vmatpush1.msra.mxu0 0.0
    %5626 = vmatprep.subr.mxu0 0.0
    %5627 = vmatpush1.msra.mxu0 0.0
    %5628 = vmatprep.subr.mxu0 0.0
    %5629 = vmatpush1.msra.mxu0 0.0
    %5630 = vmatprep.subr.mxu0 0.0
    %5631 = vmatpush1.msra.mxu0 0.0
    %5632 = vmatprep.subr.mxu0 0.0
    %5633 = vmatpush1.msra.mxu0 0.0
    %5634 = vmatprep.subr.mxu0 0.0
    %5635 = vmatpush1.msra.mxu0 0.0
    %5636 = vmatprep.subr.mxu0 0.0
    %5637 = vmatpush1.msra.mxu0 0.0
    %5638 = vmatprep.subr.mxu0 0.0
    %5639 = vmatpush1.msra.mxu0 0.0
    %5640 = vmatprep.mubr.f32.mxu0 0.0
    %5641 = vmatmul.mubr.f32.gmra.mrb[0].mxu0 %v5574
    %v5642 = vpop.f32.mrb[0].mxu0
    %v5643 = vadd.f32 0.0, %v5642
    %v5644 = vpop.f32.mrb[0].mxu0
    %5645 = vdwg.mxu0
    %v5647 = vrot.slane %v5643, 7
    %v5649 = vadd.f32 %v3386, %v5647
    %v5650 = vsub.f32 0.0, %v5649
    %v5651 = vmul.f32 %v5650, 1.442695
    %v5652 = vpow.pop %v5651
    %v5653 = vadd.f32 %v5652, 1.0
    %v5654 = vrcp.pop %v5653
    %v5655 = vmul.f32 1.0, %v5654
    %5656 = vmatprep.subr.mxu0 0.0
    %5657 = vmatpush1.msra.mxu0 %v3303
    %5658 = vmatprep.subr.mxu0 0.0
    %5659 = vmatpush1.msra.mxu0 %v3304
    %5660 = vmatprep.subr.mxu0 0.0
    %5661 = vmatpush1.msra.mxu0 0.0
    %5662 = vmatprep.subr.mxu0 0.0
    %5663 = vmatpush1.msra.mxu0 0.0
    %5664 = vmatprep.subr.mxu0 0.0
    %5665 = vmatpush1.msra.mxu0 0.0
    %5666 = vmatprep.subr.mxu0 0.0
    %5667 = vmatpush1.msra.mxu0 0.0
    %5668 = vmatprep.subr.mxu0 0.0
    %5669 = vmatpush1.msra.mxu0 0.0
    %5670 = vmatprep.subr.mxu0 0.0
    %5671 = vmatpush1.msra.mxu0 0.0
    %5672 = vmatprep.subr.mxu0 0.0
    %5673 = vmatpush1.msra.mxu0 0.0
    %5674 = vmatprep.subr.mxu0 0.0
    %5675 = vmatpush1.msra.mxu0 0.0
    %5676 = vmatprep.subr.mxu0 0.0
    %5677 = vmatpush1.msra.mxu0 0.0
    %5678 = vmatprep.subr.mxu0 0.0
    %5679 = vmatpush1.msra.mxu0 0.0
    %5680 = vmatprep.subr.mxu0 0.0
    %5681 = vmatpush1.msra.mxu0 0.0
    %5682 = vmatprep.subr.mxu0 0.0
    %5683 = vmatpush1.msra.mxu0 0.0
    %5684 = vmatprep.subr.mxu0 0.0
    %5685 = vmatpush1.msra.mxu0 0.0
    %5686 = vmatprep.subr.mxu0 0.0
    %5687 = vmatpush1.msra.mxu0 0.0
    %5688 = vmatprep.subr.mxu0 0.0
    %5689 = vmatpush1.msra.mxu0 0.0
    %5690 = vmatprep.subr.mxu0 0.0
    %5691 = vmatpush1.msra.mxu0 0.0
    %5692 = vmatprep.subr.mxu0 0.0
    %5693 = vmatpush1.msra.mxu0 0.0
    %5694 = vmatprep.subr.mxu0 0.0
    %5695 = vmatpush1.msra.mxu0 0.0
    %5696 = vmatprep.subr.mxu0 0.0
    %5697 = vmatpush1.msra.mxu0 0.0
    %5698 = vmatprep.subr.mxu0 0.0
    %5699 = vmatpush1.msra.mxu0 0.0
    %5700 = vmatprep.subr.mxu0 0.0
    %5701 = vmatpush1.msra.mxu0 0.0
    %5702 = vmatprep.subr.mxu0 0.0
    %5703 = vmatpush1.msra.mxu0 0.0
    %5704 = vmatprep.subr.mxu0 0.0
    %5705 = vmatpush1.msra.mxu0 0.0
    %5706 = vmatprep.subr.mxu0 0.0
    %5707 = vmatpush1.msra.mxu0 0.0
    %5708 = vmatprep.subr.mxu0 0.0
    %5709 = vmatpush1.msra.mxu0 0.0
    %5710 = vmatprep.subr.mxu0 0.0
    %5711 = vmatpush1.msra.mxu0 0.0
    %5712 = vmatprep.subr.mxu0 0.0
    %5713 = vmatpush1.msra.mxu0 0.0
    %5714 = vmatprep.subr.mxu0 0.0
    %5715 = vmatpush1.msra.mxu0 0.0
    %5716 = vmatprep.subr.mxu0 0.0
    %5717 = vmatpush1.msra.mxu0 0.0
    %5718 = vmatprep.subr.mxu0 0.0
    %5719 = vmatpush1.msra.mxu0 0.0
    %5720 = vmatprep.mubr.f32.mxu0 0.0
    %5721 = vmatmul.mubr.f32.gmra.mrb[0].mxu0 %v5574
    %v5722 = vpop.f32.mrb[0].mxu0
    %v5723 = vadd.f32 0.0, %v5722
    %v5724 = vpop.f32.mrb[0].mxu0
    %5725 = vdwg.mxu0
    %v5727 = vrot.slane %v5723, 7
    %v5729 = vadd.f32 %v3462, %v5727
    %v5730 = vsub.f32 0.0, %v5729
    %v5731 = vmul.f32 %v5730, 1.442695
    %v5732 = vpow.pop %v5731
    %v5733 = vadd.f32 %v5732, 1.0
    %v5734 = vrcp.pop %v5733
    %v5735 = vmul.f32 1.0, %v5734
    %5736 = vmatprep.subr.mxu0 0.0
    %5737 = vmatpush1.msra.mxu0 %v3305
    %5738 = vmatprep.subr.mxu0 0.0
    %5739 = vmatpush1.msra.mxu0 %v3306
    %5740 = vmatprep.subr.mxu0 0.0
    %5741 = vmatpush1.msra.mxu0 0.0
    %5742 = vmatprep.subr.mxu0 0.0
    %5743 = vmatpush1.msra.mxu0 0.0
    %5744 = vmatprep.subr.mxu0 0.0
    %5745 = vmatpush1.msra.mxu0 0.0
    %5746 = vmatprep.subr.mxu0 0.0
    %5747 = vmatpush1.msra.mxu0 0.0
    %5748 = vmatprep.subr.mxu0 0.0
    %5749 = vmatpush1.msra.mxu0 0.0
    %5750 = vmatprep.subr.mxu0 0.0
    %5751 = vmatpush1.msra.mxu0 0.0
    %5752 = vmatprep.subr.mxu0 0.0
    %5753 = vmatpush1.msra.mxu0 0.0
    %5754 = vmatprep.subr.mxu0 0.0
    %5755 = vmatpush1.msra.mxu0 0.0
    %5756 = vmatprep.subr.mxu0 0.0
    %5757 = vmatpush1.msra.mxu0 0.0
    %5758 = vmatprep.subr.mxu0 0.0
    %5759 = vmatpush1.msra.mxu0 0.0
    %5760 = vmatprep.subr.mxu0 0.0
    %5761 = vmatpush1.msra.mxu0 0.0
    %5762 = vmatprep.subr.mxu0 0.0
    %5763 = vmatpush1.msra.mxu0 0.0
    %5764 = vmatprep.subr.mxu0 0.0
    %5765 = vmatpush1.msra.mxu0 0.0
    %5766 = vmatprep.subr.mxu0 0.0
    %5767 = vmatpush1.msra.mxu0 0.0
    %5768 = vmatprep.subr.mxu0 0.0
    %5769 = vmatpush1.msra.mxu0 0.0
    %5770 = vmatprep.subr.mxu0 0.0
    %5771 = vmatpush1.msra.mxu0 0.0
    %5772 = vmatprep.subr.mxu0 0.0
    %5773 = vmatpush1.msra.mxu0 0.0
    %5774 = vmatprep.subr.mxu0 0.0
    %5775 = vmatpush1.msra.mxu0 0.0
    %5776 = vmatprep.subr.mxu0 0.0
    %5777 = vmatpush1.msra.mxu0 0.0
    %5778 = vmatprep.subr.mxu0 0.0
    %5779 = vmatpush1.msra.mxu0 0.0
    %5780 = vmatprep.subr.mxu0 0.0
    %5781 = vmatpush1.msra.mxu0 0.0
    %5782 = vmatprep.subr.mxu0 0.0
    %5783 = vmatpush1.msra.mxu0 0.0
    %5784 = vmatprep.subr.mxu0 0.0
    %5785 = vmatpush1.msra.mxu0 0.0
    %5786 = vmatprep.subr.mxu0 0.0
    %5787 = vmatpush1.msra.mxu0 0.0
    %5788 = vmatprep.subr.mxu0 0.0
    %5789 = vmatpush1.msra.mxu0 0.0
    %5790 = vmatprep.subr.mxu0 0.0
    %5791 = vmatpush1.msra.mxu0 0.0
    %5792 = vmatprep.subr.mxu0 0.0
    %5793 = vmatpush1.msra.mxu0 0.0
    %5794 = vmatprep.subr.mxu0 0.0
    %5795 = vmatpush1.msra.mxu0 0.0
    %5796 = vmatprep.subr.mxu0 0.0
    %5797 = vmatpush1.msra.mxu0 0.0
    %5798 = vmatprep.subr.mxu0 0.0
    %5799 = vmatpush1.msra.mxu0 0.0
    %5800 = vmatprep.mubr.f32.mxu0 0.0
    %5801 = vmatmul.mubr.f32.gmra.mrb[0].mxu0 %v5574
    %v5802 = vpop.f32.mrb[0].mxu0
    %v5803 = vadd.f32 0.0, %v5802
    %v5804 = vpop.f32.mrb[0].mxu0
    %5805 = vdwg.mxu0
    %v5807 = vrot.slane %v5803, 7
    %v5809 = vadd.f32 %v3538, %v5807
    %v5810 = vtanh.pop %v5809
    %5811 = vmatprep.subr.mxu0 0.0
    %5812 = vmatpush1.msra.mxu0 %v3307
    %5813 = vmatprep.subr.mxu0 0.0
    %5814 = vmatpush1.msra.mxu0 %v3308
    %5815 = vmatprep.subr.mxu0 0.0
    %5816 = vmatpush1.msra.mxu0 0.0
    %5817 = vmatprep.subr.mxu0 0.0
    %5818 = vmatpush1.msra.mxu0 0.0
    %5819 = vmatprep.subr.mxu0 0.0
    %5820 = vmatpush1.msra.mxu0 0.0
    %5821 = vmatprep.subr.mxu0 0.0
    %5822 = vmatpush1.msra.mxu0 0.0
    %5823 = vmatprep.subr.mxu0 0.0
    %5824 = vmatpush1.msra.mxu0 0.0
    %5825 = vmatprep.subr.mxu0 0.0
    %5826 = vmatpush1.msra.mxu0 0.0
    %5827 = vmatprep.subr.mxu0 0.0
    %5828 = vmatpush1.msra.mxu0 0.0
    %5829 = vmatprep.subr.mxu0 0.0
    %5830 = vmatpush1.msra.mxu0 0.0
    %5831 = vmatprep.subr.mxu0 0.0
    %5832 = vmatpush1.msra.mxu0 0.0
    %5833 = vmatprep.subr.mxu0 0.0
    %5834 = vmatpush1.msra.mxu0 0.0
    %5835 = vmatprep.subr.mxu0 0.0
    %5836 = vmatpush1.msra.mxu0 0.0
    %5837 = vmatprep.subr.mxu0 0.0
    %5838 = vmatpush1.msra.mxu0 0.0
    %5839 = vmatprep.subr.mxu0 0.0
    %5840 = vmatpush1.msra.mxu0 0.0
    %5841 = vmatprep.subr.mxu0 0.0
    %5842 = vmatpush1.msra.mxu0 0.0
    %5843 = vmatprep.subr.mxu0 0.0
    %5844 = vmatpush1.msra.mxu0 0.0
    %5845 = vmatprep.subr.mxu0 0.0
    %5846 = vmatpush1.msra.mxu0 0.0
    %5847 = vmatprep.subr.mxu0 0.0
    %5848 = vmatpush1.msra.mxu0 0.0
    %5849 = vmatprep.subr.mxu0 0.0
    %5850 = vmatpush1.msra.mxu0 0.0
    %5851 = vmatprep.subr.mxu0 0.0
    %5852 = vmatpush1.msra.mxu0 0.0
    %5853 = vmatprep.subr.mxu0 0.0
    %5854 = vmatpush1.msra.mxu0 0.0
    %5855 = vmatprep.subr.mxu0 0.0
    %5856 = vmatpush1.msra.mxu0 0.0
    %5857 = vmatprep.subr.mxu0 0.0
    %5858 = vmatpush1.msra.mxu0 0.0
    %5859 = vmatprep.subr.mxu0 0.0
    %5860 = vmatpush1.msra.mxu0 0.0
    %5861 = vmatprep.subr.mxu0 0.0
    %5862 = vmatpush1.msra.mxu0 0.0
    %5863 = vmatprep.subr.mxu0 0.0
    %5864 = vmatpush1.msra.mxu0 0.0
    %5865 = vmatprep.subr.mxu0 0.0
    %5866 = vmatpush1.msra.mxu0 0.0
    %5867 = vmatprep.subr.mxu0 0.0
    %5868 = vmatpush1.msra.mxu0 0.0
    %5869 = vmatprep.subr.mxu0 0.0
    %5870 = vmatpush1.msra.mxu0 0.0
    %5871 = vmatprep.subr.mxu0 0.0
    %5872 = vmatpush1.msra.mxu0 0.0
    %5873 = vmatprep.subr.mxu0 0.0
    %5874 = vmatpush1.msra.mxu0 0.0
    %5875 = vmatprep.mubr.f32.mxu0 0.0
    %5876 = vmatmul.mubr.f32.gmra.mrb[0].mxu0 %v5574
    %v5877 = vpop.f32.mrb[0].mxu0
    %v5878 = vadd.f32 0.0, %v5877
    %v5879 = vpop.f32.mrb[0].mxu0
    %5880 = vdwg.mxu0
    %v5882 = vrot.slane %v5878, 7
    %v5884 = vadd.f32 %v3614, %v5882
    %v5885 = vsub.f32 0.0, %v5884
    %v5886 = vmul.f32 %v5885, 1.442695
    %v5887 = vpow.pop %v5886
    %v5888 = vadd.f32 %v5887, 1.0
    %v5889 = vrcp.pop %v5888
    %v5890 = vmul.f32 1.0, %v5889
    %v5892 = vrot.slane %v5569, 1
    %v5894 = vmul.f32 %v5735, %v5892
    %v5895 = vmul.f32 %v5655, %v5810
    %v5896 = vadd.f32 %v5894, %v5895
    %v5897 = vtanh.pop %v5896
    %v5898 = vmul.f32 %v5890, %v5897
    %v5900 = vrot.slane %v5898, 1
    %v5901 = vsel %vm671, %v5900, 0
    %5903 = vmatprep.subr.mxu0 0.0
    %5904 = vmatpush1.msra.mxu0 %v3301
    %5905 = vmatprep.subr.mxu0 0.0
    %5906 = vmatpush1.msra.mxu0 %v3302
    %5907 = vmatprep.subr.mxu0 0.0
    %5908 = vmatpush1.msra.mxu0 0.0
    %5909 = vmatprep.subr.mxu0 0.0
    %5910 = vmatpush1.msra.mxu0 0.0
    %5911 = vmatprep.subr.mxu0 0.0
    %5912 = vmatpush1.msra.mxu0 0.0
    %5913 = vmatprep.subr.mxu0 0.0
    %5914 = vmatpush1.msra.mxu0 0.0
    %5915 = vmatprep.subr.mxu0 0.0
    %5916 = vmatpush1.msra.mxu0 0.0
    %5917 = vmatprep.subr.mxu0 0.0
    %5918 = vmatpush1.msra.mxu0 0.0
    %5919 = vmatprep.subr.mxu0 0.0
    %5920 = vmatpush1.msra.mxu0 0.0
    %5921 = vmatprep.subr.mxu0 0.0
    %5922 = vmatpush1.msra.mxu0 0.0
    %5923 = vmatprep.subr.mxu0 0.0
    %5924 = vmatpush1.msra.mxu0 0.0
    %5925 = vmatprep.subr.mxu0 0.0
    %5926 = vmatpush1.msra.mxu0 0.0
    %5927 = vmatprep.subr.mxu0 0.0
    %5928 = vmatpush1.msra.mxu0 0.0
    %5929 = vmatprep.subr.mxu0 0.0
    %5930 = vmatpush1.msra.mxu0 0.0
    %5931 = vmatprep.subr.mxu0 0.0
    %5932 = vmatpush1.msra.mxu0 0.0
    %5933 = vmatprep.subr.mxu0 0.0
    %5934 = vmatpush1.msra.mxu0 0.0
    %5935 = vmatprep.subr.mxu0 0.0
    %5936 = vmatpush1.msra.mxu0 0.0
    %5937 = vmatprep.subr.mxu0 0.0
    %5938 = vmatpush1.msra.mxu0 0.0
    %5939 = vmatprep.subr.mxu0 0.0
    %5940 = vmatpush1.msra.mxu0 0.0
    %5941 = vmatprep.subr.mxu0 0.0
    %5942 = vmatpush1.msra.mxu0 0.0
    %5943 = vmatprep.subr.mxu0 0.0
    %5944 = vmatpush1.msra.mxu0 0.0
    %5945 = vmatprep.subr.mxu0 0.0
    %5946 = vmatpush1.msra.mxu0 0.0
    %5947 = vmatprep.subr.mxu0 0.0
    %5948 = vmatpush1.msra.mxu0 0.0
    %5949 = vmatprep.subr.mxu0 0.0
    %5950 = vmatpush1.msra.mxu0 0.0
    %5951 = vmatprep.subr.mxu0 0.0
    %5952 = vmatpush1.msra.mxu0 0.0
    %5953 = vmatprep.subr.mxu0 0.0
    %5954 = vmatpush1.msra.mxu0 0.0
    %5955 = vmatprep.subr.mxu0 0.0
    %5956 = vmatpush1.msra.mxu0 0.0
    %5957 = vmatprep.subr.mxu0 0.0
    %5958 = vmatpush1.msra.mxu0 0.0
    %5959 = vmatprep.subr.mxu0 0.0
    %5960 = vmatpush1.msra.mxu0 0.0
    %5961 = vmatprep.subr.mxu0 0.0
    %5962 = vmatpush1.msra.mxu0 0.0
    %5963 = vmatprep.subr.mxu0 0.0
    %5964 = vmatpush1.msra.mxu0 0.0
    %5965 = vmatprep.subr.mxu0 0.0
    %5966 = vmatpush1.msra.mxu0 0.0
    %5967 = vmatprep.mubr.f32.mxu0 0.0
    %5968 = vmatmul.mubr.f32.gmra.mrb[0].mxu0 %v5901
    %v5969 = vpop.f32.mrb[0].mxu0
    %v5970 = vadd.f32 0.0, %v5969
    %v5971 = vpop.f32.mrb[0].mxu0
    %5972 = vdwg.mxu0
    %v5973 = vadd.f32 %v3386, %v5970
    %v5974 = vsub.f32 0.0, %v5973
    %v5975 = vmul.f32 %v5974, 1.442695
    %v5976 = vpow.pop %v5975
    %v5977 = vadd.f32 %v5976, 1.0
    %v5978 = vrcp.pop %v5977
    %v5979 = vmul.f32 1.0, %v5978
    %5980 = vmatprep.subr.mxu0 0.0
    %5981 = vmatpush1.msra.mxu0 %v3303
    %5982 = vmatprep.subr.mxu0 0.0
    %5983 = vmatpush1.msra.mxu0 %v3304
    %5984 = vmatprep.subr.mxu0 0.0
    %5985 = vmatpush1.msra.mxu0 0.0
    %5986 = vmatprep.subr.mxu0 0.0
    %5987 = vmatpush1.msra.mxu0 0.0
    %5988 = vmatprep.subr.mxu0 0.0
    %5989 = vmatpush1.msra.mxu0 0.0
    %5990 = vmatprep.subr.mxu0 0.0
    %5991 = vmatpush1.msra.mxu0 0.0
    %5992 = vmatprep.subr.mxu0 0.0
    %5993 = vmatpush1.msra.mxu0 0.0
    %5994 = vmatprep.subr.mxu0 0.0
    %5995 = vmatpush1.msra.mxu0 0.0
    %5996 = vmatprep.subr.mxu0 0.0
    %5997 = vmatpush1.msra.mxu0 0.0
    %5998 = vmatprep.subr.mxu0 0.0
    %5999 = vmatpush1.msra.mxu0 0.0
    %6000 = vmatprep.subr.mxu0 0.0
    %6001 = vmatpush1.msra.mxu0 0.0
    %6002 = vmatprep.subr.mxu0 0.0
    %6003 = vmatpush1.msra.mxu0 0.0
    %6004 = vmatprep.subr.mxu0 0.0
    %6005 = vmatpush1.msra.mxu0 0.0
    %6006 = vmatprep.subr.mxu0 0.0
    %6007 = vmatpush1.msra.mxu0 0.0
    %6008 = vmatprep.subr.mxu0 0.0
    %6009 = vmatpush1.msra.mxu0 0.0
    %6010 = vmatprep.subr.mxu0 0.0
    %6011 = vmatpush1.msra.mxu0 0.0
    %6012 = vmatprep.subr.mxu0 0.0
    %6013 = vmatpush1.msra.mxu0 0.0
    %6014 = vmatprep.subr.mxu0 0.0
    %6015 = vmatpush1.msra.mxu0 0.0
    %6016 = vmatprep.subr.mxu0 0.0
    %6017 = vmatpush1.msra.mxu0 0.0
    %6018 = vmatprep.subr.mxu0 0.0
    %6019 = vmatpush1.msra.mxu0 0.0
    %6020 = vmatprep.subr.mxu0 0.0
    %6021 = vmatpush1.msra.mxu0 0.0
    %6022 = vmatprep.subr.mxu0 0.0
    %6023 = vmatpush1.msra.mxu0 0.0
    %6024 = vmatprep.subr.mxu0 0.0
    %6025 = vmatpush1.msra.mxu0 0.0
    %6026 = vmatprep.subr.mxu0 0.0
    %6027 = vmatpush1.msra.mxu0 0.0
    %6028 = vmatprep.subr.mxu0 0.0
    %6029 = vmatpush1.msra.mxu0 0.0
    %6030 = vmatprep.subr.mxu0 0.0
    %6031 = vmatpush1.msra.mxu0 0.0
    %6032 = vmatprep.subr.mxu0 0.0
    %6033 = vmatpush1.msra.mxu0 0.0
    %6034 = vmatprep.subr.mxu0 0.0
    %6035 = vmatpush1.msra.mxu0 0.0
    %6036 = vmatprep.subr.mxu0 0.0
    %6037 = vmatpush1.msra.mxu0 0.0
    %6038 = vmatprep.subr.mxu0 0.0
    %6039 = vmatpush1.msra.mxu0 0.0
    %6040 = vmatprep.subr.mxu0 0.0
    %6041 = vmatpush1.msra.mxu0 0.0
    %6042 = vmatprep.subr.mxu0 0.0
    %6043 = vmatpush1.msra.mxu0 0.0
    %6044 = vmatprep.mubr.f32.mxu0 0.0
    %6045 = vmatmul.mubr.f32.gmra.mrb[0].mxu0 %v5901
    %v6046 = vpop.f32.mrb[0].mxu0
    %v6047 = vadd.f32 0.0, %v6046
    %v6048 = vpop.f32.mrb[0].mxu0
    %6049 = vdwg.mxu0
    %v6050 = vadd.f32 %v3462, %v6047
    %v6051 = vsub.f32 0.0, %v6050
    %v6052 = vmul.f32 %v6051, 1.442695
    %v6053 = vpow.pop %v6052
    %v6054 = vadd.f32 %v6053, 1.0
    %v6055 = vrcp.pop %v6054
    %v6056 = vmul.f32 1.0, %v6055
    %6057 = vmatprep.subr.mxu0 0.0
    %6058 = vmatpush1.msra.mxu0 %v3305
    %6059 = vmatprep.subr.mxu0 0.0
    %6060 = vmatpush1.msra.mxu0 %v3306
    %6061 = vmatprep.subr.mxu0 0.0
    %6062 = vmatpush1.msra.mxu0 0.0
    %6063 = vmatprep.subr.mxu0 0.0
    %6064 = vmatpush1.msra.mxu0 0.0
    %6065 = vmatprep.subr.mxu0 0.0
    %6066 = vmatpush1.msra.mxu0 0.0
    %6067 = vmatprep.subr.mxu0 0.0
    %6068 = vmatpush1.msra.mxu0 0.0
    %6069 = vmatprep.subr.mxu0 0.0
    %6070 = vmatpush1.msra.mxu0 0.0
    %6071 = vmatprep.subr.mxu0 0.0
    %6072 = vmatpush1.msra.mxu0 0.0
    %6073 = vmatprep.subr.mxu0 0.0
    %6074 = vmatpush1.msra.mxu0 0.0
    %6075 = vmatprep.subr.mxu0 0.0
    %6076 = vmatpush1.msra.mxu0 0.0
    %6077 = vmatprep.subr.mxu0 0.0
    %6078 = vmatpush1.msra.mxu0 0.0
    %6079 = vmatprep.subr.mxu0 0.0
    %6080 = vmatpush1.msra.mxu0 0.0
    %6081 = vmatprep.subr.mxu0 0.0
    %6082 = vmatpush1.msra.mxu0 0.0
    %6083 = vmatprep.subr.mxu0 0.0
    %6084 = vmatpush1.msra.mxu0 0.0
    %6085 = vmatprep.subr.mxu0 0.0
    %6086 = vmatpush1.msra.mxu0 0.0
    %6087 = vmatprep.subr.mxu0 0.0
    %6088 = vmatpush1.msra.mxu0 0.0
    %6089 = vmatprep.subr.mxu0 0.0
    %6090 = vmatpush1.msra.mxu0 0.0
    %6091 = vmatprep.subr.mxu0 0.0
    %6092 = vmatpush1.msra.mxu0 0.0
    %6093 = vmatprep.subr.mxu0 0.0
    %6094 = vmatpush1.msra.mxu0 0.0
    %6095 = vmatprep.subr.mxu0 0.0
    %6096 = vmatpush1.msra.mxu0 0.0
    %6097 = vmatprep.subr.mxu0 0.0
    %6098 = vmatpush1.msra.mxu0 0.0
    %6099 = vmatprep.subr.mxu0 0.0
    %6100 = vmatpush1.msra.mxu0 0.0
    %6101 = vmatprep.subr.mxu0 0.0
    %6102 = vmatpush1.msra.mxu0 0.0
    %6103 = vmatprep.subr.mxu0 0.0
    %6104 = vmatpush1.msra.mxu0 0.0
    %6105 = vmatprep.subr.mxu0 0.0
    %6106 = vmatpush1.msra.mxu0 0.0
    %6107 = vmatprep.subr.mxu0 0.0
    %6108 = vmatpush1.msra.mxu0 0.0
    %6109 = vmatprep.subr.mxu0 0.0
    %6110 = vmatpush1.msra.mxu0 0.0
    %6111 = vmatprep.subr.mxu0 0.0
    %6112 = vmatpush1.msra.mxu0 0.0
    %6113 = vmatprep.subr.mxu0 0.0
    %6114 = vmatpush1.msra.mxu0 0.0
    %6115 = vmatprep.subr.mxu0 0.0
    %6116 = vmatpush1.msra.mxu0 0.0
    %6117 = vmatprep.subr.mxu0 0.0
    %6118 = vmatpush1.msra.mxu0 0.0
    %6119 = vmatprep.subr.mxu0 0.0
    %6120 = vmatpush1.msra.mxu0 0.0
    %6121 = vmatprep.mubr.f32.mxu0 0.0
    %6122 = vmatmul.mubr.f32.gmra.mrb[0].mxu0 %v5901
    %v6123 = vpop.f32.mrb[0].mxu0
    %v6124 = vadd.f32 0.0, %v6123
    %v6125 = vpop.f32.mrb[0].mxu0
    %6126 = vdwg.mxu0
    %v6127 = vadd.f32 %v3538, %v6124
    %v6128 = vtanh.pop %v6127
    %6129 = vmatprep.subr.mxu0 0.0
    %6130 = vmatpush1.msra.mxu0 %v3307
    %6131 = vmatprep.subr.mxu0 0.0
    %6132 = vmatpush1.msra.mxu0 %v3308
    %6133 = vmatprep.subr.mxu0 0.0
    %6134 = vmatpush1.msra.mxu0 0.0
    %6135 = vmatprep.subr.mxu0 0.0
    %6136 = vmatpush1.msra.mxu0 0.0
    %6137 = vmatprep.subr.mxu0 0.0
    %6138 = vmatpush1.msra.mxu0 0.0
    %6139 = vmatprep.subr.mxu0 0.0
    %6140 = vmatpush1.msra.mxu0 0.0
    %6141 = vmatprep.subr.mxu0 0.0
    %6142 = vmatpush1.msra.mxu0 0.0
    %6143 = vmatprep.subr.mxu0 0.0
    %6144 = vmatpush1.msra.mxu0 0.0
    %6145 = vmatprep.subr.mxu0 0.0
    %6146 = vmatpush1.msra.mxu0 0.0
    %6147 = vmatprep.subr.mxu0 0.0
    %6148 = vmatpush1.msra.mxu0 0.0
    %6149 = vmatprep.subr.mxu0 0.0
    %6150 = vmatpush1.msra.mxu0 0.0
    %6151 = vmatprep.subr.mxu0 0.0
    %6152 = vmatpush1.msra.mxu0 0.0
    %6153 = vmatprep.subr.mxu0 0.0
    %6154 = vmatpush1.msra.mxu0 0.0
    %6155 = vmatprep.subr.mxu0 0.0
    %6156 = vmatpush1.msra.mxu0 0.0
    %6157 = vmatprep.subr.mxu0 0.0
    %6158 = vmatpush1.msra.mxu0 0.0
    %6159 = vmatprep.subr.mxu0 0.0
    %6160 = vmatpush1.msra.mxu0 0.0
    %6161 = vmatprep.subr.mxu0 0.0
    %6162 = vmatpush1.msra.mxu0 0.0
    %6163 = vmatprep.subr.mxu0 0.0
    %6164 = vmatpush1.msra.mxu0 0.0
    %6165 = vmatprep.subr.mxu0 0.0
    %6166 = vmatpush1.msra.mxu0 0.0
    %6167 = vmatprep.subr.mxu0 0.0
    %6168 = vmatpush1.msra.mxu0 0.0
    %6169 = vmatprep.subr.mxu0 0.0
    %6170 = vmatpush1.msra.mxu0 0.0
    %6171 = vmatprep.subr.mxu0 0.0
    %6172 = vmatpush1.msra.mxu0 0.0
    %6173 = vmatprep.subr.mxu0 0.0
    %6174 = vmatpush1.msra.mxu0 0.0
    %6175 = vmatprep.subr.mxu0 0.0
    %6176 = vmatpush1.msra.mxu0 0.0
    %6177 = vmatprep.subr.mxu0 0.0
    %6178 = vmatpush1.msra.mxu0 0.0
    %6179 = vmatprep.subr.mxu0 0.0
    %6180 = vmatpush1.msra.mxu0 0.0
    %6181 = vmatprep.subr.mxu0 0.0
    %6182 = vmatpush1.msra.mxu0 0.0
    %6183 = vmatprep.subr.mxu0 0.0
    %6184 = vmatpush1.msra.mxu0 0.0
    %6185 = vmatprep.subr.mxu0 0.0
    %6186 = vmatpush1.msra.mxu0 0.0
    %6187 = vmatprep.subr.mxu0 0.0
    %6188 = vmatpush1.msra.mxu0 0.0
    %6189 = vmatprep.subr.mxu0 0.0
    %6190 = vmatpush1.msra.mxu0 0.0
    %6191 = vmatprep.subr.mxu0 0.0
    %6192 = vmatpush1.msra.mxu0 0.0
    %6193 = vmatprep.mubr.f32.mxu0 0.0
    %6194 = vmatmul.mubr.f32.gmra.mrb[0].mxu0 %v5901
    %v6195 = vpop.f32.mrb[0].mxu0
    %v6196 = vadd.f32 0.0, %v6195
    %v6197 = vpop.f32.mrb[0].mxu0
    %6198 = vdwg.mxu0
    %v6199 = vadd.f32 %v3614, %v6196
    %v6200 = vsub.f32 0.0, %v6199
    %v6201 = vmul.f32 %v6200, 1.442695
    %v6202 = vpow.pop %v6201
    %v6203 = vadd.f32 %v6202, 1.0
    %v6204 = vrcp.pop %v6203
    %v6205 = vmul.f32 1.0, %v6204
    %v6207 = vrot.slane %v5896, 1
    %v6209 = vmul.f32 %v6056, %v6207
    %v6210 = vmul.f32 %v5979, %v6128
    %v6211 = vadd.f32 %v6209, %v6210
    %v6212 = vtanh.pop %v6211
    %v6213 = vmul.f32 %v6205, %v6212
    %v6214 = vsel %vm3271, %v6213, %v5898
    %v6215 = vsel %vm3273, %v6214, %v5571
    %v6216 = vsel %vm3275, %v6215, %v5244
    %v6217 = vsel %vm3277, %v6216, %v4917
    %v6218 = vsel %vm3279, %v6217, %v4590
    %v6219 = vsel %vm3281, %v6218, %v4263
    %v6220 = vsel %vm3283, %v6219, %v3936
    %6222 = vrot.lane.b32.xlu0 %v6220, 16
    %v6223 = vpop.permute.xlu0 %6222
    %v6225 = vsel %vm671, %v3284, %v6223
    %6226 = vst.msk [vmem:[#allocation4] sm:$0xff] %vm157, %v6225
    %v6228 = vrot.slane %v6213, 1
    %6229 = vrot.lane.b32.xlu0 %v6228, 16
    %v6230 = vpop.permute.xlu0 %6229
    %v6232 = vsel %vm671, %v3270, %v6230
    %vm6233 = vcmask 261127
    %6234 = vst.msk [vmem:[#allocation6 - $0x7] sm:$0x80] %vm6233, %v6232
    // Predicated region
    $region58: #{tpu_custom_call.1} parent=1 // pred_check
      _
    $region59: #{tpu_custom_call.1} parent=1 // pred_check_branch
      %6236 = sbr.rel (0) target = $region61
    $region60: #{tpu_custom_call.1} parent=1 // pred_region
      %s6238 = ssub.s32 256, 256
      %6239 = vsyncadd [#allocation3], %s6238
      %s6240 = sshll.u32 [#allocation2], 4
      %s6241 = int_to_ptr.vmem [resolvable:$true] %s6240
      %6246 = dma.vmem_to_hbm [thread:$0]  %s6241, 256, %s14, [#allocation3], 128, 128, 8
    $region61: #{tpu_custom_call.1} parent=1 // pred_fallthru
      _
    // Predicated region
    $region62: #{tpu_custom_call.1} parent=1 // pred_check
      _
    $region63: #{tpu_custom_call.1} parent=1 // pred_check_branch
      %6248 = sbr.rel (0) target = $region65
    $region64: #{tpu_custom_call.1} parent=1 // pred_region
      %s6250 = ssub.s32 128, 128
      %6251 = vsyncadd [#allocation5], %s6250
      %s6253 = sshll.u32 [#allocation4], 4
      %s6254 = int_to_ptr.vmem [resolvable:$true] %s6253
      %6256 = dma.vmem_to_hbm [thread:$0]  %s6254, 128, %s15, [#allocation5]
    $region65: #{tpu_custom_call.1} parent=1 // pred_fallthru
      _
    // Predicated region
    $region66: #{tpu_custom_call.1} parent=1 // pred_check
      _
    $region67: #{tpu_custom_call.1} parent=1 // pred_check_branch
      %6258 = sbr.rel (0) target = $region69
    $region68: #{tpu_custom_call.1} parent=1 // pred_region
      %s6260 = ssub.s32 16, 16
      %6261 = vsyncadd [#allocation5], %s6260
      %s6263 = sshll.u32 [#allocation6], 4
      %s6264 = int_to_ptr.vmem [resolvable:$true] %s6263
      %6266 = dma.vmem_to_hbm [thread:$0]  %s6264, 16, %s16, [#allocation5]
    $region69: #{tpu_custom_call.1} parent=1 // pred_fallthru
      _
    // Predicated region
    $region70: #{tpu_custom_call.1} parent=1 // pred_check
      _
    $region71: #{tpu_custom_call.1} parent=1 // pred_check_branch
      %6268 = sbr.rel (0) target = $region73
    $region72: #{tpu_custom_call.1} parent=1 // pred_region
      %6269 = dma.done [#allocation3], 256
    $region73: #{tpu_custom_call.1} parent=1 // pred_fallthru
      _
    // Predicated region
    $region74: #{tpu_custom_call.1} parent=1 // pred_check
      _
    $region75: #{tpu_custom_call.1} parent=1 // pred_check_branch
      %6271 = sbr.rel (0) target = $region77
    $region76: #{tpu_custom_call.1} parent=1 // pred_region
      %6272 = dma.done [#allocation5], 128
    $region77: #{tpu_custom_call.1} parent=1 // pred_fallthru
      _
    // Predicated region
    $region78: #{tpu_custom_call.1} parent=1 // pred_check
      _
    $region79: #{tpu_custom_call.1} parent=1 // pred_check_branch
      %6274 = sbr.rel (0) target = $region81
    $region80: #{tpu_custom_call.1} parent=1 // pred_region
      %6275 = dma.done [#allocation5], 16
    $region81: #{tpu_custom_call.1} parent=1 // pred_fallthru
      _
    %6276 = vsyncpa [#allocation3], 1
    %6277 = vsyncpa [#allocation5], 1

</llo_original>
